<compile_context>
chip_gen: v7x
topology: tpu7x:2x2x1
jax: 0.10.0
libtpu: 0.0.40
codegen_flags: <defaults>
</compile_context>

<pallas_src>
import functools
import math

import jax
import jax.numpy as jnp
from jax.experimental import pallas as pl
from jax.experimental.pallas import tpu as pltpu


NEG_INF = -1e30                       # finite mask value (avoids inf-inf NaNs)


def _vmem_limit_bytes():
    """Per-generation scoped-VMEM budget (v5e/v6e: 128 MiB phys -> ~96 MiB,
    v7x: 64 MiB phys -> ~48 MiB)."""
    try:
        cap = int(pltpu.get_tpu_info().vmem_capacity_bytes)
        return max(32 * 1024 * 1024, min(100 * 1024 * 1024, (cap * 3) // 4))
    except Exception:
        return 48 * 1024 * 1024


VMEM_LIMIT = _vmem_limit_bytes()


# ----------------------------- in-kernel helpers -----------------------------

def _layernorm(x, g, b, eps=1e-5):
    x = x.astype(jnp.float32)
    mu = jnp.mean(x, axis=-1, keepdims=True)
    var = jnp.mean((x - mu) ** 2, axis=-1, keepdims=True)
    return (x - mu) * jax.lax.rsqrt(var + eps) * g + b


def _gelu_tanh(x):
    c = math.sqrt(2.0 / math.pi)
    return 0.5 * x * (1.0 + jnp.tanh(c * (x + 0.044715 * x * x * x)))


def _rep_spec(shape):
    """Fully-resident, constant-index weight: single-buffered (the block index
    never changes, so double-buffering only doubles VMEM)."""
    zeros = (0,) * len(shape)
    return pl.BlockSpec(shape, lambda *_: zeros, pipeline_mode=pl.Buffered(1))


def _tile(total, target, quantum):
    """Largest divisor of `total` that is <= target and a multiple of `quantum`
    (falls back to one full-extent block)."""
    if total <= target:
        return total
    target = (target // quantum) * quantum
    for cand in range(target, quantum - 1, -quantum):
        if total % cand == 0:
            return cand
    return total


# --------------------------- kernel 1: LN1 + fused QKV ------------------------

def ln_qkv_kernel(x_ref, g_ref, b_ref, w_ref, bias_ref, q_ref, k_ref, v_ref):
    H, hd = q_ref.shape[1], q_ref.shape[3]
    C = H * hd
    x = x_ref[0]                                             # (ts, C) f32
    h = _layernorm(x, g_ref[0], b_ref[0]).astype(jnp.bfloat16)
    qkv = jnp.dot(h, w_ref[...], preferred_element_type=jnp.float32) + bias_ref[0]
    qkv = qkv.astype(jnp.bfloat16)
    # Head split happens here in VMEM -> no XLA transpose / extra HBM round trip.
    for hh in range(H):
        q_ref[0, hh] = qkv[:, hh * hd:(hh + 1) * hd]
        k_ref[0, hh] = qkv[:, C + hh * hd:C + (hh + 1) * hd]
        v_ref[0, hh] = qkv[:, 2 * C + hh * hd:2 * C + (hh + 1) * hd]


def ln_qkv(x, g, b, w_qkv, b_qkv, *, n_head, ts):
    B, T, C = x.shape
    hd = C // n_head
    in_spec = pl.BlockSpec((1, ts, C), lambda bi, si: (bi, si, 0))
    head_spec = pl.BlockSpec((1, n_head, ts, hd), lambda bi, si: (bi, 0, si, 0))
    act = jax.ShapeDtypeStruct((B, n_head, T, hd), jnp.bfloat16)
    return pl.pallas_call(
        ln_qkv_kernel,
        grid=(B, T // ts),
        in_specs=[in_spec, _rep_spec(g.shape), _rep_spec(b.shape),
                  _rep_spec(w_qkv.shape), _rep_spec(b_qkv.shape)],
        out_specs=(head_spec, head_spec, head_spec),
        out_shape=(act, act, act),
        compiler_params=pltpu.CompilerParams(
            dimension_semantics=("parallel", "parallel"),
            vmem_limit_bytes=VMEM_LIMIT),
    )(x, g, b, w_qkv, b_qkv)


# ---------------------- kernel 2: flash causal attention ----------------------

def flash_attn_kernel(q_ref, k_ref, v_ref, o_ref, m_scr, l_scr, acc_scr):
    qi = pl.program_id(1)
    ki = pl.program_id(2)
    _, H, tq, hd = q_ref.shape
    tk = k_ref.shape[2]
    scale = 1.0 / math.sqrt(hd)

    @pl.when(ki == 0)
    def _():
        m_scr[...] = jnp.full_like(m_scr, NEG_INF)
        l_scr[...] = jnp.zeros_like(l_scr)
        acc_scr[...] = jnp.zeros_like(acc_scr)

    def step(masked):
        q = q_ref[0]                                         # (H, tq, hd) bf16
        k = k_ref[0]                                         # (H, tk, hd) bf16
        v = v_ref[0]
        # All heads in one batched contraction: (H, tq, tk), f32 accumulation.
        s = jnp.einsum('hqd,hkd->hqk', q, k,
                       preferred_element_type=jnp.float32) * scale
        if masked:
            # Mask only needed on the diagonal tile (tq == tk, ki == qi):
            # intra-tile indices suffice.
            row = jax.lax.broadcasted_iota(jnp.int32, (tq, tk), 0)
            col = jax.lax.broadcasted_iota(jnp.int32, (tq, tk), 1)
            s = jnp.where((col <= row)[None], s, NEG_INF)
        m_prev = m_scr[...]
        m_new = jnp.maximum(m_prev, jnp.max(s, axis=-1, keepdims=True))
        alpha = jnp.exp(m_prev - m_new)
        p = jnp.exp(s - m_new)
        l_scr[...] = alpha * l_scr[...] + jnp.sum(p, axis=-1, keepdims=True)
        pv = jnp.einsum('hqk,hkd->hqd', p.astype(v.dtype), v,
                        preferred_element_type=jnp.float32)
        acc_scr[...] = alpha * acc_scr[...] + pv
        m_scr[...] = m_new

    @pl.when(ki < qi)       # strictly below the diagonal: no mask needed
    def _():
        step(False)

    @pl.when(ki == qi)      # diagonal tile: mask, then finalize (later ki no-op)
    def _():
        step(True)
        o = acc_scr[...] * pl.reciprocal(l_scr[...], approx=False)
        o_ref[0] = o.astype(o_ref.dtype)


def flash_attention(q, k, v, *, tq, tk):
    assert tq == tk, "causal tiling assumes equal q/kv tiles"
    B, H, T, hd = q.shape
    q_spec = pl.BlockSpec((1, H, tq, hd), lambda bi, qi, ki: (bi, 0, qi, 0))
    # Clamp the KV block index so fully-masked above-diagonal tiles reuse the
    # already-resident block and are never DMA'd.
    kv_spec = pl.BlockSpec((1, H, tk, hd),
                           lambda bi, qi, ki: (bi, 0, jnp.minimum(ki, qi), 0))
    return pl.pallas_call(
        flash_attn_kernel,
        grid=(B, T // tq, T // tk),
        in_specs=[q_spec, kv_spec, kv_spec],
        out_specs=q_spec,
        out_shape=jax.ShapeDtypeStruct((B, H, T, hd), jnp.bfloat16),
        scratch_shapes=[pltpu.VMEM((H, tq, 1), jnp.float32),
                        pltpu.VMEM((H, tq, 1), jnp.float32),
                        pltpu.VMEM((H, tq, hd), jnp.float32)],
        compiler_params=pltpu.CompilerParams(
            dimension_semantics=("parallel", "parallel", "arbitrary"),
            vmem_limit_bytes=VMEM_LIMIT),
    )(q, k, v)


# --------------- kernel 3: attn c_proj + residual + LN2 + MLP + residual ------

def proj_mlp_kernel(x_ref, y_ref, wo_ref, bo_ref, g2_ref, b2_ref,
                    wfc_ref, bfc_ref, wpr_ref, bpr_ref, o_ref,
                    xres_scr, h_scr, acc_scr):
    hi = pl.program_id(2)
    H = y_ref.shape[1]

    @pl.when(hi == 0)
    def _():
        # Attention c_proj: heads merged by per-head matmuls against the
        # (H, hd, C)-reshaped weight (no transpose / reshape of activations).
        attn = jnp.dot(y_ref[0, 0], wo_ref[0], preferred_element_type=jnp.float32)
        for hh in range(1, H):
            attn = attn + jnp.dot(y_ref[0, hh], wo_ref[hh],
                                  preferred_element_type=jnp.float32)
        xr = x_ref[0] + attn + bo_ref[0]                     # residual (f32)
        xres_scr[...] = xr
        h_scr[...] = _layernorm(xr, g2_ref[0], b2_ref[0]).astype(jnp.bfloat16)
        acc_scr[...] = jnp.zeros_like(acc_scr)

    # Streamed 4C-hidden tile: c_fc + GELU + partial c_proj, accumulated in f32.
    f = jnp.dot(h_scr[...], wfc_ref[...], preferred_element_type=jnp.float32) + bfc_ref[0]
    f = _gelu_tanh(f).astype(jnp.bfloat16)
    acc_scr[...] += jnp.dot(f, wpr_ref[...], preferred_element_type=jnp.float32)

    @pl.when(hi == pl.num_programs(2) - 1)
    def _():
        o_ref[0] = xres_scr[...] + acc_scr[...] + bpr_ref[0]


def proj_mlp(x, y, p, *, ts, th):
    B, T, C = x.shape
    H = y.shape[1]
    hd = C // H
    H4 = p["wfc"].shape[1]
    x_spec = pl.BlockSpec((1, ts, C), lambda bi, si, hi: (bi, si, 0))
    y_spec = pl.BlockSpec((1, H, ts, hd), lambda bi, si, hi: (bi, 0, si, 0))
    return pl.pallas_call(
        proj_mlp_kernel,
        grid=(B, T // ts, H4 // th),
        in_specs=[x_spec, y_spec,
                  _rep_spec(p["wo"].shape), _rep_spec(p["bo"].shape),
                  _rep_spec(p["ln2_g"].shape), _rep_spec(p["ln2_b"].shape),
                  pl.BlockSpec((C, th), lambda bi, si, hi: (0, hi)),
                  pl.BlockSpec((1, th), lambda bi, si, hi: (0, hi)),
                  pl.BlockSpec((th, C), lambda bi, si, hi: (hi, 0)),
                  _rep_spec(p["bpr"].shape)],
        out_specs=x_spec,
        out_shape=jax.ShapeDtypeStruct((B, T, C), jnp.float32),
        scratch_shapes=[pltpu.VMEM((ts, C), jnp.float32),   # residual
                        pltpu.VMEM((ts, C), jnp.bfloat16),  # LN2 output
                        pltpu.VMEM((ts, C), jnp.float32)],  # MLP accumulator
        compiler_params=pltpu.CompilerParams(
            dimension_semantics=("parallel", "parallel", "arbitrary"),
            vmem_limit_bytes=VMEM_LIMIT),
    )(x, y, p["wo"], p["bo"], p["ln2_g"], p["ln2_b"],
      p["wfc"], p["bfc"], p["wpr"], p["bpr"])


# ---------------- kernel 4: final LayerNorm + vocab-tiled lm_head -------------

def lm_head_kernel(x_ref, g_ref, b_ref, w_ref, o_ref, h_scr):
    @pl.when(pl.program_id(2) == 0)
    def _():
        # Final LayerNorm computed once per (batch, seq-tile) and reused for
        # every vocab tile (hoisted out of the innermost vocab loop).
        h_scr[...] = _layernorm(x_ref[0], g_ref[0], b_ref[0]).astype(jnp.bfloat16)
    o_ref[0] = jnp.dot(h_scr[...], w_ref[...], preferred_element_type=jnp.float32)


def lm_head(x, g, b, w_lm, *, ts, tn):
    B, T, C = x.shape
    V = w_lm.shape[1]
    return pl.pallas_call(
        lm_head_kernel,
        grid=(B, T // ts, V // tn),
        in_specs=[pl.BlockSpec((1, ts, C), lambda bi, si, vi: (bi, si, 0)),
                  _rep_spec(g.shape), _rep_spec(b.shape),
                  pl.BlockSpec((C, tn), lambda bi, si, vi: (0, vi))],
        out_specs=pl.BlockSpec((1, ts, tn), lambda bi, si, vi: (bi, si, vi)),
        out_shape=jax.ShapeDtypeStruct((B, T, V), jnp.float32),
        scratch_shapes=[pltpu.VMEM((ts, C), jnp.bfloat16)],
        compiler_params=pltpu.CompilerParams(
            # vocab axis must be sequential so the LN scratch filled at vi==0
            # is valid for vi>0 on the same core.
            dimension_semantics=("parallel", "parallel", "arbitrary"),
            vmem_limit_bytes=VMEM_LIMIT),
    )(x, g, b, w_lm)


# ------------------------------- parameter init -------------------------------

def init_params(key, *, vocab_size, block_size, n_layer, n_head, n_embd):
    C = n_embd
    hd = C // n_head
    std = 0.02
    std_proj = std * (2 * n_layer) ** (-0.5)   # GPT_SCALE_INIT layers
    keys = iter(jax.random.split(key, 2 + 4 * n_layer))

    def normal(shape, s, dtype=jnp.bfloat16):
        return (s * jax.random.normal(next(keys), shape, dtype=jnp.float32)).astype(dtype)

    wte = normal((vocab_size, C), std, jnp.float32)
    params = {
        "wte": wte,                                   # (V, C) f32 for the gather
        "w_lm": wte.T.astype(jnp.bfloat16),           # tied lm_head weight, pre-transposed once
        "wpe": normal((block_size, C), std, jnp.float32),
        "lnf_g": jnp.ones((1, C), jnp.float32),
        "lnf_b": jnp.zeros((1, C), jnp.float32),
        "blocks": [],
    }
    for _ in range(n_layer):
        blk = {
            "ln1_g": jnp.ones((1, C), jnp.float32),
            "ln1_b": jnp.zeros((1, C), jnp.float32),
            "w_qkv": normal((C, 3 * C), std),                       # fused q|k|v
            "b_qkv": jnp.zeros((1, 3 * C), jnp.float32),
            "wo": normal((C, C), std_proj).reshape(n_head, hd, C),  # per-head c_proj
            "bo": jnp.zeros((1, C), jnp.float32),
            "ln2_g": jnp.ones((1, C), jnp.float32),
            "ln2_b": jnp.zeros((1, C), jnp.float32),
            "wfc": normal((C, 4 * C), std),
            "bfc": jnp.zeros((1, 4 * C), jnp.float32),
            "wpr": normal((4 * C, C), std_proj),
            "bpr": jnp.zeros((1, C), jnp.float32),
        }
        params["blocks"].append(blk)
    return params


# ----------------------------------- forward ----------------------------------

def transformer_block(x, p, *, n_head, ts, th):
    q, k, v = ln_qkv(x, p["ln1_g"], p["ln1_b"], p["w_qkv"], p["b_qkv"],
                     n_head=n_head, ts=ts)                  # (B, H, T, hd) bf16
    y = flash_attention(q, k, v, tq=ts, tk=ts)              # (B, H, T, hd) bf16
    return proj_mlp(x, y, p, ts=ts, th=th)                  # (B, T, C) f32


def gpt_forward(idx, params, *, n_head, seq_tile=256, vocab_tile=1024,
                hidden_tile=1024):
    B, T = idx.shape
    C = params["wte"].shape[1]
    tok = jnp.take(params["wte"], idx, axis=0)               # embedding gather (glue)
    pos = params["wpe"][:T]
    x = (tok + pos[None, :, :]).astype(jnp.float32)
    ts = _tile(T, seq_tile, 8)
    th = _tile(4 * C, hidden_tile, 128)
    for blk in params["blocks"]:
        x = transformer_block(x, blk, n_head=n_head, ts=ts, th=th)
    V = params["w_lm"].shape[1]
    tn = _tile(V, vocab_tile, 128)
    logits = lm_head(x, params["lnf_g"], params["lnf_b"], params["w_lm"],
                     ts=ts, tn=tn)
    # TODO(synk): cross-entropy loss path (targets is not None) not implemented;
    # fusing it into lm_head would also avoid the full f32 logits HBM write.
    return logits, None


# ------------------------------------ main ------------------------------------

if __name__ == "__main__":
    vocab_size = 512
    block_size = 128
    n_layer = 2
    n_head = 4
    n_embd = 128
    B, T = 2, 64
    seq_tile = 32          # small tiles so multi-tile / causal-skip / clamp paths run
    vocab_tile = 256       # two vocab tiles -> exercises the hoisted-LN scratch reuse
    hidden_tile = 256      # 4C=512 -> two hidden tiles -> exercises MLP accumulation

    key = jax.random.PRNGKey(0)
    k_params, k_idx = jax.random.split(key)
    params = init_params(k_params, vocab_size=vocab_size, block_size=block_size,
                         n_layer=n_layer, n_head=n_head, n_embd=n_embd)
    idx = jax.random.randint(k_idx, (B, T), 0, vocab_size, dtype=jnp.int32)

    fwd = jax.jit(functools.partial(gpt_forward, n_head=n_head,
                                    seq_tile=seq_tile, vocab_tile=vocab_tile,
                                    hidden_tile=hidden_tile))
    logits, loss = fwd(idx, params)
    logits = jax.block_until_ready(logits)

    assert logits.shape == (B, T, vocab_size)
    assert bool(jnp.all(jnp.isfinite(logits)))
    print("KERNEL_OK")
</pallas_src>

<mosaic_0001>
module attributes {stable_mosaic.version = 11 : i64} {
  func.func @ln_qkv_kernel(%arg0: i32, %arg1: i32, %arg2: memref<1x32x128xf32, #tpu.memory_space<vmem>>, %arg3: memref<1x128xf32, #tpu.memory_space<vmem>>, %arg4: memref<1x128xf32, #tpu.memory_space<vmem>>, %arg5: memref<128x384xbf16, #tpu.memory_space<vmem>>, %arg6: memref<1x384xf32, #tpu.memory_space<vmem>>, %arg7: memref<1x4x32x32xbf16, #tpu.memory_space<vmem>>, %arg8: memref<1x4x32x32xbf16, #tpu.memory_space<vmem>>, %arg9: memref<1x4x32x32xbf16, #tpu.memory_space<vmem>>) attributes {dimension_semantics = [#tpu.dimension_semantics<parallel>, #tpu.dimension_semantics<parallel>], iteration_bounds = array<i64: 2, 2>, scalar_prefetch = 0 : i64, scratch_operands = 0 : i64, tpu.core_type = #tpu.core_type<tc>, window_params = [{transform_indices = @transform_0, window_bounds = array<i64: 1, 32, 128>}, {pipeline_mode = #tpu.pipeline_mode<synchronous>, transform_indices = @transform_1, window_bounds = array<i64: 1, 128>}, {pipeline_mode = #tpu.pipeline_mode<synchronous>, transform_indices = @transform_2, window_bounds = array<i64: 1, 128>}, {pipeline_mode = #tpu.pipeline_mode<synchronous>, transform_indices = @transform_3, window_bounds = array<i64: 128, 384>}, {pipeline_mode = #tpu.pipeline_mode<synchronous>, transform_indices = @transform_4, window_bounds = array<i64: 1, 384>}, {transform_indices = @transform_5, window_bounds = array<i64: 1, 4, 32, 32>}, {transform_indices = @transform_6, window_bounds = array<i64: 1, 4, 32, 32>}, {transform_indices = @transform_7, window_bounds = array<i64: 1, 4, 32, 32>}]} {
    %c0 = arith.constant 0 : index
    %c0_0 = arith.constant 0 : index
    %c0_1 = arith.constant 0 : index
    %0 = vector.load %arg2[%c0, %c0_0, %c0_1] : memref<1x32x128xf32, #tpu.memory_space<vmem>>, vector<1x32x128xf32>
    %1 = vector.shape_cast %0 : vector<1x32x128xf32> to vector<32x128xf32>
    %c0_2 = arith.constant 0 : index
    %c0_3 = arith.constant 0 : index
    %2 = vector.load %arg3[%c0_2, %c0_3] : memref<1x128xf32, #tpu.memory_space<vmem>>, vector<1x128xf32>
    %3 = vector.shape_cast %2 : vector<1x128xf32> to vector<128xf32>
    %c0_4 = arith.constant 0 : index
    %c0_5 = arith.constant 0 : index
    %4 = vector.load %arg4[%c0_4, %c0_5] : memref<1x128xf32, #tpu.memory_space<vmem>>, vector<1x128xf32>
    %5 = vector.shape_cast %4 : vector<1x128xf32> to vector<128xf32>
    %cst = arith.constant dense<0.000000e+00> : vector<32xf32>
    %6 = vector.multi_reduction <add>, %1, %cst [1] : vector<32x128xf32> to vector<32xf32>
    %7 = vector.shape_cast %6 : vector<32xf32> to vector<32x1xf32>
    %cst_6 = arith.constant 1.280000e+02 : f32
    %8 = vector.broadcast %cst_6 : f32 to vector<32x1xf32>
    %9 = arith.divf %7, %8 : vector<32x1xf32>
    %10 = vector.broadcast %9 : vector<32x1xf32> to vector<32x128xf32>
    %11 = arith.subf %1, %10 : vector<32x128xf32>
    %12 = arith.mulf %11, %11 : vector<32x128xf32>
    %cst_7 = arith.constant dense<0.000000e+00> : vector<32xf32>
    %13 = vector.multi_reduction <add>, %12, %cst_7 [1] : vector<32x128xf32> to vector<32xf32>
    %14 = vector.shape_cast %13 : vector<32xf32> to vector<32x1xf32>
    %cst_8 = arith.constant 1.280000e+02 : f32
    %15 = vector.broadcast %cst_8 : f32 to vector<32x1xf32>
    %16 = arith.divf %14, %15 : vector<32x1xf32>
    %17 = vector.broadcast %9 : vector<32x1xf32> to vector<32x128xf32>
    %18 = arith.subf %1, %17 : vector<32x128xf32>
    %cst_9 = arith.constant 9.99999974E-6 : f32
    %19 = vector.broadcast %cst_9 : f32 to vector<32x1xf32>
    %20 = arith.addf %16, %19 : vector<32x1xf32>
    %21 = math.rsqrt %20 : vector<32x1xf32>
    %22 = vector.broadcast %21 : vector<32x1xf32> to vector<32x128xf32>
    %23 = arith.mulf %18, %22 : vector<32x128xf32>
    %24 = vector.shape_cast %3 : vector<128xf32> to vector<1x128xf32>
    %25 = vector.broadcast %24 : vector<1x128xf32> to vector<32x128xf32>
    %26 = arith.mulf %23, %25 : vector<32x128xf32>
    %27 = vector.shape_cast %5 : vector<128xf32> to vector<1x128xf32>
    %28 = vector.broadcast %27 : vector<1x128xf32> to vector<32x128xf32>
    %29 = arith.addf %26, %28 : vector<32x128xf32>
    %30 = arith.truncf %29 : vector<32x128xf32> to vector<32x128xbf16>
    %c0_10 = arith.constant 0 : index
    %c0_11 = arith.constant 0 : index
    %31 = vector.load %arg5[%c0_10, %c0_11] : memref<128x384xbf16, #tpu.memory_space<vmem>>, vector<128x384xbf16>
    %cst_12 = arith.constant dense<0.000000e+00> : vector<32x384xf32>
    %32 = tpu.matmul %30, %31, %cst_12 {dimension_numbers = #tpu.dot_dimension_numbers<[1], [0], [0], [1], [0, 0, 1, 1], [], []>} : vector<32x128xbf16>, vector<128x384xbf16>, vector<32x384xf32> -> vector<32x384xf32>
    %c0_13 = arith.constant 0 : index
    %c0_14 = arith.constant 0 : index
    %33 = vector.load %arg6[%c0_13, %c0_14] : memref<1x384xf32, #tpu.memory_space<vmem>>, vector<1x384xf32>
    %34 = vector.shape_cast %33 : vector<1x384xf32> to vector<384xf32>
    %35 = vector.shape_cast %34 : vector<384xf32> to vector<1x384xf32>
    %36 = vector.broadcast %35 : vector<1x384xf32> to vector<32x384xf32>
    %37 = arith.addf %32, %36 : vector<32x384xf32>
    %38 = arith.truncf %37 : vector<32x384xf32> to vector<32x384xbf16>
    %39 = vector.extract_strided_slice %38 {offsets = [0, 0], sizes = [32, 32], strides = [1, 1]} : vector<32x384xbf16> to vector<32x32xbf16>
    %c0_15 = arith.constant 0 : index
    %c0_16 = arith.constant 0 : index
    %c0_17 = arith.constant 0 : index
    %c0_18 = arith.constant 0 : index
    %40 = vector.load %arg7[%c0_15, %c0_16, %c0_17, %c0_18] : memref<1x4x32x32xbf16, #tpu.memory_space<vmem>>, vector<1x1x32x32xbf16>
    %41 = vector.shape_cast %40 : vector<1x1x32x32xbf16> to vector<32x32xbf16>
    %42 = vector.shape_cast %39 : vector<32x32xbf16> to vector<1x1x32x32xbf16>
    tpu.vector_store %arg7[%c0_15, %c0_16, %c0_17, %c0_18], %42 {strides = array<i32>} : memref<1x4x32x32xbf16, #tpu.memory_space<vmem>>, vector<1x1x32x32xbf16>,
    %43 = vector.extract_strided_slice %38 {offsets = [0, 128], sizes = [32, 32], strides = [1, 1]} : vector<32x384xbf16> to vector<32x32xbf16>
    %c0_19 = arith.constant 0 : index
    %c0_20 = arith.constant 0 : index
    %c0_21 = arith.constant 0 : index
    %c0_22 = arith.constant 0 : index
    %44 = vector.load %arg8[%c0_19, %c0_20, %c0_21, %c0_22] : memref<1x4x32x32xbf16, #tpu.memory_space<vmem>>, vector<1x1x32x32xbf16>
    %45 = vector.shape_cast %44 : vector<1x1x32x32xbf16> to vector<32x32xbf16>
    %46 = vector.shape_cast %43 : vector<32x32xbf16> to vector<1x1x32x32xbf16>
    tpu.vector_store %arg8[%c0_19, %c0_20, %c0_21, %c0_22], %46 {strides = array<i32>} : memref<1x4x32x32xbf16, #tpu.memory_space<vmem>>, vector<1x1x32x32xbf16>,
    %47 = vector.extract_strided_slice %38 {offsets = [0, 256], sizes = [32, 32], strides = [1, 1]} : vector<32x384xbf16> to vector<32x32xbf16>
    %c0_23 = arith.constant 0 : index
    %c0_24 = arith.constant 0 : index
    %c0_25 = arith.constant 0 : index
    %c0_26 = arith.constant 0 : index
    %48 = vector.load %arg9[%c0_23, %c0_24, %c0_25, %c0_26] : memref<1x4x32x32xbf16, #tpu.memory_space<vmem>>, vector<1x1x32x32xbf16>
    %49 = vector.shape_cast %48 : vector<1x1x32x32xbf16> to vector<32x32xbf16>
    %50 = vector.shape_cast %47 : vector<32x32xbf16> to vector<1x1x32x32xbf16>
    tpu.vector_store %arg9[%c0_23, %c0_24, %c0_25, %c0_26], %50 {strides = array<i32>} : memref<1x4x32x32xbf16, #tpu.memory_space<vmem>>, vector<1x1x32x32xbf16>,
    %51 = vector.extract_strided_slice %38 {offsets = [0, 32], sizes = [32, 32], strides = [1, 1]} : vector<32x384xbf16> to vector<32x32xbf16>
    %c0_27 = arith.constant 0 : index
    %c1 = arith.constant 1 : index
    %c0_28 = arith.constant 0 : index
    %c0_29 = arith.constant 0 : index
    %52 = vector.load %arg7[%c0_27, %c1, %c0_28, %c0_29] : memref<1x4x32x32xbf16, #tpu.memory_space<vmem>>, vector<1x1x32x32xbf16>
    %53 = vector.shape_cast %52 : vector<1x1x32x32xbf16> to vector<32x32xbf16>
    %54 = vector.shape_cast %51 : vector<32x32xbf16> to vector<1x1x32x32xbf16>
    tpu.vector_store %arg7[%c0_27, %c1, %c0_28, %c0_29], %54 {strides = array<i32>} : memref<1x4x32x32xbf16, #tpu.memory_space<vmem>>, vector<1x1x32x32xbf16>,
    %55 = vector.extract_strided_slice %38 {offsets = [0, 160], sizes = [32, 32], strides = [1, 1]} : vector<32x384xbf16> to vector<32x32xbf16>
    %c0_30 = arith.constant 0 : index
    %c1_31 = arith.constant 1 : index
    %c0_32 = arith.constant 0 : index
    %c0_33 = arith.constant 0 : index
    %56 = vector.load %arg8[%c0_30, %c1_31, %c0_32, %c0_33] : memref<1x4x32x32xbf16, #tpu.memory_space<vmem>>, vector<1x1x32x32xbf16>
    %57 = vector.shape_cast %56 : vector<1x1x32x32xbf16> to vector<32x32xbf16>
    %58 = vector.shape_cast %55 : vector<32x32xbf16> to vector<1x1x32x32xbf16>
    tpu.vector_store %arg8[%c0_30, %c1_31, %c0_32, %c0_33], %58 {strides = array<i32>} : memref<1x4x32x32xbf16, #tpu.memory_space<vmem>>, vector<1x1x32x32xbf16>,
    %59 = vector.extract_strided_slice %38 {offsets = [0, 288], sizes = [32, 32], strides = [1, 1]} : vector<32x384xbf16> to vector<32x32xbf16>
    %c0_34 = arith.constant 0 : index
    %c1_35 = arith.constant 1 : index
    %c0_36 = arith.constant 0 : index
    %c0_37 = arith.constant 0 : index
    %60 = vector.load %arg9[%c0_34, %c1_35, %c0_36, %c0_37] : memref<1x4x32x32xbf16, #tpu.memory_space<vmem>>, vector<1x1x32x32xbf16>
    %61 = vector.shape_cast %60 : vector<1x1x32x32xbf16> to vector<32x32xbf16>
    %62 = vector.shape_cast %59 : vector<32x32xbf16> to vector<1x1x32x32xbf16>
    tpu.vector_store %arg9[%c0_34, %c1_35, %c0_36, %c0_37], %62 {strides = array<i32>} : memref<1x4x32x32xbf16, #tpu.memory_space<vmem>>, vector<1x1x32x32xbf16>,
    %63 = vector.extract_strided_slice %38 {offsets = [0, 64], sizes = [32, 32], strides = [1, 1]} : vector<32x384xbf16> to vector<32x32xbf16>
    %c0_38 = arith.constant 0 : index
    %c2 = arith.constant 2 : index
    %c0_39 = arith.constant 0 : index
    %c0_40 = arith.constant 0 : index
    %64 = vector.load %arg7[%c0_38, %c2, %c0_39, %c0_40] : memref<1x4x32x32xbf16, #tpu.memory_space<vmem>>, vector<1x1x32x32xbf16>
    %65 = vector.shape_cast %64 : vector<1x1x32x32xbf16> to vector<32x32xbf16>
    %66 = vector.shape_cast %63 : vector<32x32xbf16> to vector<1x1x32x32xbf16>
    tpu.vector_store %arg7[%c0_38, %c2, %c0_39, %c0_40], %66 {strides = array<i32>} : memref<1x4x32x32xbf16, #tpu.memory_space<vmem>>, vector<1x1x32x32xbf16>,
    %67 = vector.extract_strided_slice %38 {offsets = [0, 192], sizes = [32, 32], strides = [1, 1]} : vector<32x384xbf16> to vector<32x32xbf16>
    %c0_41 = arith.constant 0 : index
    %c2_42 = arith.constant 2 : index
    %c0_43 = arith.constant 0 : index
    %c0_44 = arith.constant 0 : index
    %68 = vector.load %arg8[%c0_41, %c2_42, %c0_43, %c0_44] : memref<1x4x32x32xbf16, #tpu.memory_space<vmem>>, vector<1x1x32x32xbf16>
    %69 = vector.shape_cast %68 : vector<1x1x32x32xbf16> to vector<32x32xbf16>
    %70 = vector.shape_cast %67 : vector<32x32xbf16> to vector<1x1x32x32xbf16>
    tpu.vector_store %arg8[%c0_41, %c2_42, %c0_43, %c0_44], %70 {strides = array<i32>} : memref<1x4x32x32xbf16, #tpu.memory_space<vmem>>, vector<1x1x32x32xbf16>,
    %71 = vector.extract_strided_slice %38 {offsets = [0, 320], sizes = [32, 32], strides = [1, 1]} : vector<32x384xbf16> to vector<32x32xbf16>
    %c0_45 = arith.constant 0 : index
    %c2_46 = arith.constant 2 : index
    %c0_47 = arith.constant 0 : index
    %c0_48 = arith.constant 0 : index
    %72 = vector.load %arg9[%c0_45, %c2_46, %c0_47, %c0_48] : memref<1x4x32x32xbf16, #tpu.memory_space<vmem>>, vector<1x1x32x32xbf16>
    %73 = vector.shape_cast %72 : vector<1x1x32x32xbf16> to vector<32x32xbf16>
    %74 = vector.shape_cast %71 : vector<32x32xbf16> to vector<1x1x32x32xbf16>
    tpu.vector_store %arg9[%c0_45, %c2_46, %c0_47, %c0_48], %74 {strides = array<i32>} : memref<1x4x32x32xbf16, #tpu.memory_space<vmem>>, vector<1x1x32x32xbf16>,
    %75 = vector.extract_strided_slice %38 {offsets = [0, 96], sizes = [32, 32], strides = [1, 1]} : vector<32x384xbf16> to vector<32x32xbf16>
    %c0_49 = arith.constant 0 : index
    %c3 = arith.constant 3 : index
    %c0_50 = arith.constant 0 : index
    %c0_51 = arith.constant 0 : index
    %76 = vector.load %arg7[%c0_49, %c3, %c0_50, %c0_51] : memref<1x4x32x32xbf16, #tpu.memory_space<vmem>>, vector<1x1x32x32xbf16>
    %77 = vector.shape_cast %76 : vector<1x1x32x32xbf16> to vector<32x32xbf16>
    %78 = vector.shape_cast %75 : vector<32x32xbf16> to vector<1x1x32x32xbf16>
    tpu.vector_store %arg7[%c0_49, %c3, %c0_50, %c0_51], %78 {strides = array<i32>} : memref<1x4x32x32xbf16, #tpu.memory_space<vmem>>, vector<1x1x32x32xbf16>,
    %79 = vector.extract_strided_slice %38 {offsets = [0, 224], sizes = [32, 32], strides = [1, 1]} : vector<32x384xbf16> to vector<32x32xbf16>
    %c0_52 = arith.constant 0 : index
    %c3_53 = arith.constant 3 : index
    %c0_54 = arith.constant 0 : index
    %c0_55 = arith.constant 0 : index
    %80 = vector.load %arg8[%c0_52, %c3_53, %c0_54, %c0_55] : memref<1x4x32x32xbf16, #tpu.memory_space<vmem>>, vector<1x1x32x32xbf16>
    %81 = vector.shape_cast %80 : vector<1x1x32x32xbf16> to vector<32x32xbf16>
    %82 = vector.shape_cast %79 : vector<32x32xbf16> to vector<1x1x32x32xbf16>
    tpu.vector_store %arg8[%c0_52, %c3_53, %c0_54, %c0_55], %82 {strides = array<i32>} : memref<1x4x32x32xbf16, #tpu.memory_space<vmem>>, vector<1x1x32x32xbf16>,
    %83 = vector.extract_strided_slice %38 {offsets = [0, 352], sizes = [32, 32], strides = [1, 1]} : vector<32x384xbf16> to vector<32x32xbf16>
    %c0_56 = arith.constant 0 : index
    %c3_57 = arith.constant 3 : index
    %c0_58 = arith.constant 0 : index
    %c0_59 = arith.constant 0 : index
    %84 = vector.load %arg9[%c0_56, %c3_57, %c0_58, %c0_59] : memref<1x4x32x32xbf16, #tpu.memory_space<vmem>>, vector<1x1x32x32xbf16>
    %85 = vector.shape_cast %84 : vector<1x1x32x32xbf16> to vector<32x32xbf16>
    %86 = vector.shape_cast %83 : vector<32x32xbf16> to vector<1x1x32x32xbf16>
    tpu.vector_store %arg9[%c0_56, %c3_57, %c0_58, %c0_59], %86 {strides = array<i32>} : memref<1x4x32x32xbf16, #tpu.memory_space<vmem>>, vector<1x1x32x32xbf16>,
    return
  }
  func.func @transform_0(%arg0: i32, %arg1: i32) -> (i32, i32, i32) {
    %c0_i32 = arith.constant 0 : i32
    %c0_i32_0 = arith.constant 0 : i32
    return %arg0, %arg1, %c0_i32 : i32, i32, i32
  }
  func.func @transform_1(%arg0: i32, %arg1: i32) -> (i32, i32) {
    %c0_i32 = arith.constant 0 : i32
    %c0_i32_0 = arith.constant 0 : i32
    %c0_i32_1 = arith.constant 0 : i32
    return %c0_i32, %c0_i32_0 : i32, i32
  }
  func.func @transform_2(%arg0: i32, %arg1: i32) -> (i32, i32) {
    %c0_i32 = arith.constant 0 : i32
    %c0_i32_0 = arith.constant 0 : i32
    %c0_i32_1 = arith.constant 0 : i32
    return %c0_i32, %c0_i32_0 : i32, i32
  }
  func.func @transform_3(%arg0: i32, %arg1: i32) -> (i32, i32) {
    %c0_i32 = arith.constant 0 : i32
    %c0_i32_0 = arith.constant 0 : i32
    %c0_i32_1 = arith.constant 0 : i32
    return %c0_i32, %c0_i32_0 : i32, i32
  }
  func.func @transform_4(%arg0: i32, %arg1: i32) -> (i32, i32) {
    %c0_i32 = arith.constant 0 : i32
    %c0_i32_0 = arith.constant 0 : i32
    %c0_i32_1 = arith.constant 0 : i32
    return %c0_i32, %c0_i32_0 : i32, i32
  }
  func.func @transform_5(%arg0: i32, %arg1: i32) -> (i32, i32, i32, i32) {
    %c0_i32 = arith.constant 0 : i32
    %c0_i32_0 = arith.constant 0 : i32
    %c0_i32_1 = arith.constant 0 : i32
    return %arg0, %c0_i32, %arg1, %c0_i32_0 : i32, i32, i32, i32
  }
  func.func @transform_6(%arg0: i32, %arg1: i32) -> (i32, i32, i32, i32) {
    %c0_i32 = arith.constant 0 : i32
    %c0_i32_0 = arith.constant 0 : i32
    %c0_i32_1 = arith.constant 0 : i32
    return %arg0, %c0_i32, %arg1, %c0_i32_0 : i32, i32, i32, i32
  }
  func.func @transform_7(%arg0: i32, %arg1: i32) -> (i32, i32, i32, i32) {
    %c0_i32 = arith.constant 0 : i32
    %c0_i32_0 = arith.constant 0 : i32
    %c0_i32_1 = arith.constant 0 : i32
    return %arg0, %c0_i32, %arg1, %c0_i32_0 : i32, i32, i32, i32
  }
}

module attributes {stable_mosaic.version = 11 : i64} {
  func.func @proj_mlp_kernel(%arg0: i32, %arg1: i32, %arg2: i32, %arg3: memref<1x32x128xf32, #tpu.memory_space<vmem>>, %arg4: memref<1x4x32x32xbf16, #tpu.memory_space<vmem>>, %arg5: memref<4x32x128xbf16, #tpu.memory_space<vmem>>, %arg6: memref<1x128xf32, #tpu.memory_space<vmem>>, %arg7: memref<1x128xf32, #tpu.memory_space<vmem>>, %arg8: memref<1x128xf32, #tpu.memory_space<vmem>>, %arg9: memref<128x256xbf16, #tpu.memory_space<vmem>>, %arg10: memref<1x256xf32, #tpu.memory_space<vmem>>, %arg11: memref<256x128xbf16, #tpu.memory_space<vmem>>, %arg12: memref<1x128xf32, #tpu.memory_space<vmem>>, %arg13: memref<1x32x128xf32, #tpu.memory_space<vmem>>, %arg14: memref<32x128xf32, #tpu.memory_space<vmem>>, %arg15: memref<32x128xbf16, #tpu.memory_space<vmem>>, %arg16: memref<32x128xf32, #tpu.memory_space<vmem>>) attributes {dimension_semantics = [#tpu.dimension_semantics<parallel>, #tpu.dimension_semantics<parallel>, #tpu.dimension_semantics<arbitrary>], iteration_bounds = array<i64: 2, 2, 2>, scalar_prefetch = 0 : i64, scratch_operands = 3 : i64, tpu.core_type = #tpu.core_type<tc>, window_params = [{transform_indices = @transform_0, window_bounds = array<i64: 1, 32, 128>}, {transform_indices = @transform_1, window_bounds = array<i64: 1, 4, 32, 32>}, {pipeline_mode = #tpu.pipeline_mode<synchronous>, transform_indices = @transform_2, window_bounds = array<i64: 4, 32, 128>}, {pipeline_mode = #tpu.pipeline_mode<synchronous>, transform_indices = @transform_3, window_bounds = array<i64: 1, 128>}, {pipeline_mode = #tpu.pipeline_mode<synchronous>, transform_indices = @transform_4, window_bounds = array<i64: 1, 128>}, {pipeline_mode = #tpu.pipeline_mode<synchronous>, transform_indices = @transform_5, window_bounds = array<i64: 1, 128>}, {transform_indices = @transform_6, window_bounds = array<i64: 128, 256>}, {transform_indices = @transform_7, window_bounds = array<i64: 1, 256>}, {transform_indices = @transform_8, window_bounds = array<i64: 256, 128>}, {pipeline_mode = #tpu.pipeline_mode<synchronous>, transform_indices = @transform_9, window_bounds = array<i64: 1, 128>}, {transform_indices = @transform_10, window_bounds = array<i64: 1, 32, 128>}]} {
    %c0_i32 = arith.constant 0 : i32
    %0 = arith.cmpi eq, %arg2, %c0_i32 : i32
    %1 = arith.extui %0 : i1 to i32
    %c0_i32_0 = arith.constant 0 : i32
    %2 = arith.cmpi ne, %1, %c0_i32_0 : i32
    scf.if %2 {
      %c0_18 = arith.constant 0 : index
      %c0_19 = arith.constant 0 : index
      %c0_20 = arith.constant 0 : index
      %c0_21 = arith.constant 0 : index
      %33 = vector.load %arg4[%c0_18, %c0_19, %c0_20, %c0_21] : memref<1x4x32x32xbf16, #tpu.memory_space<vmem>>, vector<1x1x32x32xbf16>
      %34 = vector.shape_cast %33 : vector<1x1x32x32xbf16> to vector<32x32xbf16>
      %c0_22 = arith.constant 0 : index
      %c0_23 = arith.constant 0 : index
      %c0_24 = arith.constant 0 : index
      %35 = vector.load %arg5[%c0_22, %c0_23, %c0_24] : memref<4x32x128xbf16, #tpu.memory_space<vmem>>, vector<1x32x128xbf16>
      %36 = vector.shape_cast %35 : vector<1x32x128xbf16> to vector<32x128xbf16>
      %cst_25 = arith.constant dense<0.000000e+00> : vector<32x128xf32>
      %37 = tpu.matmul %34, %36, %cst_25 {dimension_numbers = #tpu.dot_dimension_numbers<[1], [0], [0], [1], [0, 0, 1, 1], [], []>} : vector<32x32xbf16>, vector<32x128xbf16>, vector<32x128xf32> -> vector<32x128xf32>
      %c0_26 = arith.constant 0 : index
      %c1 = arith.constant 1 : index
      %c0_27 = arith.constant 0 : index
      %c0_28 = arith.constant 0 : index
      %38 = vector.load %arg4[%c0_26, %c1, %c0_27, %c0_28] : memref<1x4x32x32xbf16, #tpu.memory_space<vmem>>, vector<1x1x32x32xbf16>
      %39 = vector.shape_cast %38 : vector<1x1x32x32xbf16> to vector<32x32xbf16>
      %c1_29 = arith.constant 1 : index
      %c0_30 = arith.constant 0 : index
      %c0_31 = arith.constant 0 : index
      %40 = vector.load %arg5[%c1_29, %c0_30, %c0_31] : memref<4x32x128xbf16, #tpu.memory_space<vmem>>, vector<1x32x128xbf16>
      %41 = vector.shape_cast %40 : vector<1x32x128xbf16> to vector<32x128xbf16>
      %cst_32 = arith.constant dense<0.000000e+00> : vector<32x128xf32>
      %42 = tpu.matmul %39, %41, %cst_32 {dimension_numbers = #tpu.dot_dimension_numbers<[1], [0], [0], [1], [0, 0, 1, 1], [], []>} : vector<32x32xbf16>, vector<32x128xbf16>, vector<32x128xf32> -> vector<32x128xf32>
      %43 = arith.addf %37, %42 : vector<32x128xf32>
      %c0_33 = arith.constant 0 : index
      %c2 = arith.constant 2 : index
      %c0_34 = arith.constant 0 : index
      %c0_35 = arith.constant 0 : index
      %44 = vector.load %arg4[%c0_33, %c2, %c0_34, %c0_35] : memref<1x4x32x32xbf16, #tpu.memory_space<vmem>>, vector<1x1x32x32xbf16>
      %45 = vector.shape_cast %44 : vector<1x1x32x32xbf16> to vector<32x32xbf16>
      %c2_36 = arith.constant 2 : index
      %c0_37 = arith.constant 0 : index
      %c0_38 = arith.constant 0 : index
      %46 = vector.load %arg5[%c2_36, %c0_37, %c0_38] : memref<4x32x128xbf16, #tpu.memory_space<vmem>>, vector<1x32x128xbf16>
      %47 = vector.shape_cast %46 : vector<1x32x128xbf16> to vector<32x128xbf16>
      %cst_39 = arith.constant dense<0.000000e+00> : vector<32x128xf32>
      %48 = tpu.matmul %45, %47, %cst_39 {dimension_numbers = #tpu.dot_dimension_numbers<[1], [0], [0], [1], [0, 0, 1, 1], [], []>} : vector<32x32xbf16>, vector<32x128xbf16>, vector<32x128xf32> -> vector<32x128xf32>
      %49 = arith.addf %43, %48 : vector<32x128xf32>
      %c0_40 = arith.constant 0 : index
      %c3 = arith.constant 3 : index
      %c0_41 = arith.constant 0 : index
      %c0_42 = arith.constant 0 : index
      %50 = vector.load %arg4[%c0_40, %c3, %c0_41, %c0_42] : memref<1x4x32x32xbf16, #tpu.memory_space<vmem>>, vector<1x1x32x32xbf16>
      %51 = vector.shape_cast %50 : vector<1x1x32x32xbf16> to vector<32x32xbf16>
      %c3_43 = arith.constant 3 : index
      %c0_44 = arith.constant 0 : index
      %c0_45 = arith.constant 0 : index
      %52 = vector.load %arg5[%c3_43, %c0_44, %c0_45] : memref<4x32x128xbf16, #tpu.memory_space<vmem>>, vector<1x32x128xbf16>
      %53 = vector.shape_cast %52 : vector<1x32x128xbf16> to vector<32x128xbf16>
      %cst_46 = arith.constant dense<0.000000e+00> : vector<32x128xf32>
      %54 = tpu.matmul %51, %53, %cst_46 {dimension_numbers = #tpu.dot_dimension_numbers<[1], [0], [0], [1], [0, 0, 1, 1], [], []>} : vector<32x32xbf16>, vector<32x128xbf16>, vector<32x128xf32> -> vector<32x128xf32>
      %55 = arith.addf %49, %54 : vector<32x128xf32>
      %c0_47 = arith.constant 0 : index
      %c0_48 = arith.constant 0 : index
      %c0_49 = arith.constant 0 : index
      %56 = vector.load %arg3[%c0_47, %c0_48, %c0_49] : memref<1x32x128xf32, #tpu.memory_space<vmem>>, vector<1x32x128xf32>
      %57 = vector.shape_cast %56 : vector<1x32x128xf32> to vector<32x128xf32>
      %58 = arith.addf %57, %55 : vector<32x128xf32>
      %c0_50 = arith.constant 0 : index
      %c0_51 = arith.constant 0 : index
      %59 = vector.load %arg6[%c0_50, %c0_51] : memref<1x128xf32, #tpu.memory_space<vmem>>, vector<1x128xf32>
      %60 = vector.shape_cast %59 : vector<1x128xf32> to vector<128xf32>
      %61 = vector.shape_cast %60 : vector<128xf32> to vector<1x128xf32>
      %62 = vector.broadcast %61 : vector<1x128xf32> to vector<32x128xf32>
      %63 = arith.addf %58, %62 : vector<32x128xf32>
      %c0_52 = arith.constant 0 : index
      %c0_53 = arith.constant 0 : index
      %64 = vector.load %arg14[%c0_52, %c0_53] : memref<32x128xf32, #tpu.memory_space<vmem>>, vector<32x128xf32>
      tpu.vector_store %arg14[%c0_52, %c0_53], %63 {strides = array<i32>} : memref<32x128xf32, #tpu.memory_space<vmem>>, vector<32x128xf32>,
      %c0_54 = arith.constant 0 : index
      %c0_55 = arith.constant 0 : index
      %65 = vector.load %arg7[%c0_54, %c0_55] : memref<1x128xf32, #tpu.memory_space<vmem>>, vector<1x128xf32>
      %66 = vector.shape_cast %65 : vector<1x128xf32> to vector<128xf32>
      %c0_56 = arith.constant 0 : index
      %c0_57 = arith.constant 0 : index
      %67 = vector.load %arg8[%c0_56, %c0_57] : memref<1x128xf32, #tpu.memory_space<vmem>>, vector<1x128xf32>
      %68 = vector.shape_cast %67 : vector<1x128xf32> to vector<128xf32>
      %cst_58 = arith.constant dense<0.000000e+00> : vector<32xf32>
      %69 = vector.multi_reduction <add>, %63, %cst_58 [1] : vector<32x128xf32> to vector<32xf32>
      %70 = vector.shape_cast %69 : vector<32xf32> to vector<32x1xf32>
      %cst_59 = arith.constant 1.280000e+02 : f32
      %71 = vector.broadcast %cst_59 : f32 to vector<32x1xf32>
      %72 = arith.divf %70, %71 : vector<32x1xf32>
      %73 = vector.broadcast %72 : vector<32x1xf32> to vector<32x128xf32>
      %74 = arith.subf %63, %73 : vector<32x128xf32>
      %75 = arith.mulf %74, %74 : vector<32x128xf32>
      %cst_60 = arith.constant dense<0.000000e+00> : vector<32xf32>
      %76 = vector.multi_reduction <add>, %75, %cst_60 [1] : vector<32x128xf32> to vector<32xf32>
      %77 = vector.shape_cast %76 : vector<32xf32> to vector<32x1xf32>
      %cst_61 = arith.constant 1.280000e+02 : f32
      %78 = vector.broadcast %cst_61 : f32 to vector<32x1xf32>
      %79 = arith.divf %77, %78 : vector<32x1xf32>
      %80 = vector.broadcast %72 : vector<32x1xf32> to vector<32x128xf32>
      %81 = arith.subf %63, %80 : vector<32x128xf32>
      %cst_62 = arith.constant 9.99999974E-6 : f32
      %82 = vector.broadcast %cst_62 : f32 to vector<32x1xf32>
      %83 = arith.addf %79, %82 : vector<32x1xf32>
      %84 = math.rsqrt %83 : vector<32x1xf32>
      %85 = vector.broadcast %84 : vector<32x1xf32> to vector<32x128xf32>
      %86 = arith.mulf %81, %85 : vector<32x128xf32>
      %87 = vector.shape_cast %66 : vector<128xf32> to vector<1x128xf32>
      %88 = vector.broadcast %87 : vector<1x128xf32> to vector<32x128xf32>
      %89 = arith.mulf %86, %88 : vector<32x128xf32>
      %90 = vector.shape_cast %68 : vector<128xf32> to vector<1x128xf32>
      %91 = vector.broadcast %90 : vector<1x128xf32> to vector<32x128xf32>
      %92 = arith.addf %89, %91 : vector<32x128xf32>
      %93 = arith.truncf %92 : vector<32x128xf32> to vector<32x128xbf16>
      %c0_63 = arith.constant 0 : index
      %c0_64 = arith.constant 0 : index
      %94 = vector.load %arg15[%c0_63, %c0_64] : memref<32x128xbf16, #tpu.memory_space<vmem>>, vector<32x128xbf16>
      tpu.vector_store %arg15[%c0_63, %c0_64], %93 {strides = array<i32>} : memref<32x128xbf16, #tpu.memory_space<vmem>>, vector<32x128xbf16>,
      %cst_65 = arith.constant 0.000000e+00 : f32
      %95 = vector.broadcast %cst_65 : f32 to vector<32x128xf32>
      %c0_66 = arith.constant 0 : index
      %c0_67 = arith.constant 0 : index
      %96 = vector.load %arg16[%c0_66, %c0_67] : memref<32x128xf32, #tpu.memory_space<vmem>>, vector<32x128xf32>
      tpu.vector_store %arg16[%c0_66, %c0_67], %95 {strides = array<i32>} : memref<32x128xf32, #tpu.memory_space<vmem>>, vector<32x128xf32>,
    } else {
    }
    %c0 = arith.constant 0 : index
    %c0_1 = arith.constant 0 : index
    %3 = vector.load %arg15[%c0, %c0_1] : memref<32x128xbf16, #tpu.memory_space<vmem>>, vector<32x128xbf16>
    %c0_2 = arith.constant 0 : index
    %c0_3 = arith.constant 0 : index
    %4 = vector.load %arg9[%c0_2, %c0_3] : memref<128x256xbf16, #tpu.memory_space<vmem>>, vector<128x256xbf16>
    %cst = arith.constant dense<0.000000e+00> : vector<32x256xf32>
    %5 = tpu.matmul %3, %4, %cst {dimension_numbers = #tpu.dot_dimension_numbers<[1], [0], [0], [1], [0, 0, 1, 1], [], []>} : vector<32x128xbf16>, vector<128x256xbf16>, vector<32x256xf32> -> vector<32x256xf32>
    %c0_4 = arith.constant 0 : index
    %c0_5 = arith.constant 0 : index
    %6 = vector.load %arg10[%c0_4, %c0_5] : memref<1x256xf32, #tpu.memory_space<vmem>>, vector<1x256xf32>
    %7 = vector.shape_cast %6 : vector<1x256xf32> to vector<256xf32>
    %8 = vector.shape_cast %7 : vector<256xf32> to vector<1x256xf32>
    %9 = vector.broadcast %8 : vector<1x256xf32> to vector<32x256xf32>
    %10 = arith.addf %5, %9 : vector<32x256xf32>
    %cst_6 = arith.constant 5.000000e-01 : f32
    %11 = vector.broadcast %cst_6 : f32 to vector<32x256xf32>
    %12 = arith.mulf %11, %10 : vector<32x256xf32>
    %cst_7 = arith.constant 4.471500e-02 : f32
    %13 = vector.broadcast %cst_7 : f32 to vector<32x256xf32>
    %14 = arith.mulf %13, %10 : vector<32x256xf32>
    %15 = arith.mulf %14, %10 : vector<32x256xf32>
    %16 = arith.mulf %15, %10 : vector<32x256xf32>
    %17 = arith.addf %10, %16 : vector<32x256xf32>
    %cst_8 = arith.constant 0.797884583 : f32
    %18 = vector.broadcast %cst_8 : f32 to vector<32x256xf32>
    %19 = arith.mulf %18, %17 : vector<32x256xf32>
    %20 = math.tanh %19 : vector<32x256xf32>
    %cst_9 = arith.constant 1.000000e+00 : f32
    %21 = vector.broadcast %cst_9 : f32 to vector<32x256xf32>
    %22 = arith.addf %21, %20 : vector<32x256xf32>
    %23 = arith.mulf %12, %22 : vector<32x256xf32>
    %24 = arith.truncf %23 : vector<32x256xf32> to vector<32x256xbf16>
    %c0_10 = arith.constant 0 : index
    %c0_11 = arith.constant 0 : index
    %25 = vector.load %arg16[%c0_10, %c0_11] : memref<32x128xf32, #tpu.memory_space<vmem>>, vector<32x128xf32>
    %c0_12 = arith.constant 0 : index
    %c0_13 = arith.constant 0 : index
    %26 = vector.load %arg11[%c0_12, %c0_13] : memref<256x128xbf16, #tpu.memory_space<vmem>>, vector<256x128xbf16>
    %cst_14 = arith.constant dense<0.000000e+00> : vector<32x128xf32>
    %27 = tpu.matmul %24, %26, %cst_14 {dimension_numbers = #tpu.dot_dimension_numbers<[1], [0], [0], [1], [0, 0, 1, 1], [], []>} : vector<32x256xbf16>, vector<256x128xbf16>, vector<32x128xf32> -> vector<32x128xf32>
    %28 = arith.addf %25, %27 : vector<32x128xf32>
    %c0_15 = arith.constant 0 : index
    %c0_16 = arith.constant 0 : index
    %29 = vector.load %arg16[%c0_15, %c0_16] : memref<32x128xf32, #tpu.memory_space<vmem>>, vector<32x128xf32>
    tpu.vector_store %arg16[%c0_15, %c0_16], %28 {strides = array<i32>} : memref<32x128xf32, #tpu.memory_space<vmem>>, vector<32x128xf32>,
    %c1_i32 = arith.constant 1 : i32
    %30 = arith.cmpi eq, %arg2, %c1_i32 : i32
    %31 = arith.extui %30 : i1 to i32
    %c0_i32_17 = arith.constant 0 : i32
    %32 = arith.cmpi ne, %31, %c0_i32_17 : i32
    scf.if %32 {
      %c0_18 = arith.constant 0 : index
      %c0_19 = arith.constant 0 : index
      %33 = vector.load %arg14[%c0_18, %c0_19] : memref<32x128xf32, #tpu.memory_space<vmem>>, vector<32x128xf32>
      %c0_20 = arith.constant 0 : index
      %c0_21 = arith.constant 0 : index
      %34 = vector.load %arg16[%c0_20, %c0_21] : memref<32x128xf32, #tpu.memory_space<vmem>>, vector<32x128xf32>
      %35 = arith.addf %33, %34 : vector<32x128xf32>
      %c0_22 = arith.constant 0 : index
      %c0_23 = arith.constant 0 : index
      %36 = vector.load %arg12[%c0_22, %c0_23] : memref<1x128xf32, #tpu.memory_space<vmem>>, vector<1x128xf32>
      %37 = vector.shape_cast %36 : vector<1x128xf32> to vector<128xf32>
      %38 = vector.shape_cast %37 : vector<128xf32> to vector<1x128xf32>
      %39 = vector.broadcast %38 : vector<1x128xf32> to vector<32x128xf32>
      %40 = arith.addf %35, %39 : vector<32x128xf32>
      %c0_24 = arith.constant 0 : index
      %c0_25 = arith.constant 0 : index
      %c0_26 = arith.constant 0 : index
      %41 = vector.load %arg13[%c0_24, %c0_25, %c0_26] : memref<1x32x128xf32, #tpu.memory_space<vmem>>, vector<1x32x128xf32>
      %42 = vector.shape_cast %41 : vector<1x32x128xf32> to vector<32x128xf32>
      %43 = vector.shape_cast %40 : vector<32x128xf32> to vector<1x32x128xf32>
      tpu.vector_store %arg13[%c0_24, %c0_25, %c0_26], %43 {strides = array<i32>} : memref<1x32x128xf32, #tpu.memory_space<vmem>>, vector<1x32x128xf32>,
    } else {
    }
    return
  }
  func.func @transform_0(%arg0: i32, %arg1: i32, %arg2: i32) -> (i32, i32, i32) {
    %c0_i32 = arith.constant 0 : i32
    %c0_i32_0 = arith.constant 0 : i32
    return %arg0, %arg1, %c0_i32 : i32, i32, i32
  }
  func.func @transform_1(%arg0: i32, %arg1: i32, %arg2: i32) -> (i32, i32, i32, i32) {
    %c0_i32 = arith.constant 0 : i32
    %c0_i32_0 = arith.constant 0 : i32
    %c0_i32_1 = arith.constant 0 : i32
    return %arg0, %c0_i32, %arg1, %c0_i32_0 : i32, i32, i32, i32
  }
  func.func @transform_2(%arg0: i32, %arg1: i32, %arg2: i32) -> (i32, i32, i32) {
    %c0_i32 = arith.constant 0 : i32
    %c0_i32_0 = arith.constant 0 : i32
    %c0_i32_1 = arith.constant 0 : i32
    %c0_i32_2 = arith.constant 0 : i32
    return %c0_i32, %c0_i32_0, %c0_i32_1 : i32, i32, i32
  }
  func.func @transform_3(%arg0: i32, %arg1: i32, %arg2: i32) -> (i32, i32) {
    %c0_i32 = arith.constant 0 : i32
    %c0_i32_0 = arith.constant 0 : i32
    %c0_i32_1 = arith.constant 0 : i32
    return %c0_i32, %c0_i32_0 : i32, i32
  }
  func.func @transform_4(%arg0: i32, %arg1: i32, %arg2: i32) -> (i32, i32) {
    %c0_i32 = arith.constant 0 : i32
    %c0_i32_0 = arith.constant 0 : i32
    %c0_i32_1 = arith.constant 0 : i32
    return %c0_i32, %c0_i32_0 : i32, i32
  }
  func.func @transform_5(%arg0: i32, %arg1: i32, %arg2: i32) -> (i32, i32) {
    %c0_i32 = arith.constant 0 : i32
    %c0_i32_0 = arith.constant 0 : i32
    %c0_i32_1 = arith.constant 0 : i32
    return %c0_i32, %c0_i32_0 : i32, i32
  }
  func.func @transform_6(%arg0: i32, %arg1: i32, %arg2: i32) -> (i32, i32) {
    %c0_i32 = arith.constant 0 : i32
    %c0_i32_0 = arith.constant 0 : i32
    return %c0_i32, %arg2 : i32, i32
  }
  func.func @transform_7(%arg0: i32, %arg1: i32, %arg2: i32) -> (i32, i32) {
    %c0_i32 = arith.constant 0 : i32
    %c0_i32_0 = arith.constant 0 : i32
    return %c0_i32, %arg2 : i32, i32
  }
  func.func @transform_8(%arg0: i32, %arg1: i32, %arg2: i32) -> (i32, i32) {
    %c0_i32 = arith.constant 0 : i32
    %c0_i32_0 = arith.constant 0 : i32
    return %arg2, %c0_i32 : i32, i32
  }
  func.func @transform_9(%arg0: i32, %arg1: i32, %arg2: i32) -> (i32, i32) {
    %c0_i32 = arith.constant 0 : i32
    %c0_i32_0 = arith.constant 0 : i32
    %c0_i32_1 = arith.constant 0 : i32
    return %c0_i32, %c0_i32_0 : i32, i32
  }
  func.func @transform_10(%arg0: i32, %arg1: i32, %arg2: i32) -> (i32, i32, i32) {
    %c0_i32 = arith.constant 0 : i32
    %c0_i32_0 = arith.constant 0 : i32
    return %arg0, %arg1, %c0_i32 : i32, i32, i32
  }
}

module attributes {stable_mosaic.version = 11 : i64} {
  func.func @flash_attn_kernel(%arg0: i32, %arg1: i32, %arg2: i32, %arg3: memref<1x4x32x32xbf16, #tpu.memory_space<vmem>>, %arg4: memref<1x4x32x32xbf16, #tpu.memory_space<vmem>>, %arg5: memref<1x4x32x32xbf16, #tpu.memory_space<vmem>>, %arg6: memref<1x4x32x32xbf16, #tpu.memory_space<vmem>>, %arg7: memref<4x32x1xf32, #tpu.memory_space<vmem>>, %arg8: memref<4x32x1xf32, #tpu.memory_space<vmem>>, %arg9: memref<4x32x32xf32, #tpu.memory_space<vmem>>) attributes {dimension_semantics = [#tpu.dimension_semantics<parallel>, #tpu.dimension_semantics<parallel>, #tpu.dimension_semantics<arbitrary>], iteration_bounds = array<i64: 2, 2, 2>, scalar_prefetch = 0 : i64, scratch_operands = 3 : i64, tpu.core_type = #tpu.core_type<tc>, window_params = [{transform_indices = @transform_0, window_bounds = array<i64: 1, 4, 32, 32>}, {transform_indices = @transform_1, window_bounds = array<i64: 1, 4, 32, 32>}, {transform_indices = @transform_2, window_bounds = array<i64: 1, 4, 32, 32>}, {transform_indices = @transform_3, window_bounds = array<i64: 1, 4, 32, 32>}]} {
    %c0_i32 = arith.constant 0 : i32
    %0 = arith.cmpi eq, %arg2, %c0_i32 : i32
    %1 = arith.extui %0 : i1 to i32
    %c0_i32_0 = arith.constant 0 : i32
    %2 = arith.cmpi ne, %1, %c0_i32_0 : i32
    scf.if %2 {
      %cst = arith.constant -1.000000e+30 : f32
      %9 = vector.broadcast %cst : f32 to vector<4x32x1xf32>
      %c0 = arith.constant 0 : index
      %c0_3 = arith.constant 0 : index
      %c0_4 = arith.constant 0 : index
      %10 = vector.load %arg7[%c0, %c0_3, %c0_4] : memref<4x32x1xf32, #tpu.memory_space<vmem>>, vector<4x32x1xf32>
      tpu.vector_store %arg7[%c0, %c0_3, %c0_4], %9 {strides = array<i32>} : memref<4x32x1xf32, #tpu.memory_space<vmem>>, vector<4x32x1xf32>,
      %cst_5 = arith.constant 0.000000e+00 : f32
      %11 = vector.broadcast %cst_5 : f32 to vector<4x32x1xf32>
      %c0_6 = arith.constant 0 : index
      %c0_7 = arith.constant 0 : index
      %c0_8 = arith.constant 0 : index
      %12 = vector.load %arg8[%c0_6, %c0_7, %c0_8] : memref<4x32x1xf32, #tpu.memory_space<vmem>>, vector<4x32x1xf32>
      tpu.vector_store %arg8[%c0_6, %c0_7, %c0_8], %11 {strides = array<i32>} : memref<4x32x1xf32, #tpu.memory_space<vmem>>, vector<4x32x1xf32>,
      %cst_9 = arith.constant 0.000000e+00 : f32
      %13 = vector.broadcast %cst_9 : f32 to vector<4x32x32xf32>
      %c0_10 = arith.constant 0 : index
      %c0_11 = arith.constant 0 : index
      %c0_12 = arith.constant 0 : index
      %14 = vector.load %arg9[%c0_10, %c0_11, %c0_12] : memref<4x32x32xf32, #tpu.memory_space<vmem>>, vector<4x32x32xf32>
      tpu.vector_store %arg9[%c0_10, %c0_11, %c0_12], %13 {strides = array<i32>} : memref<4x32x32xf32, #tpu.memory_space<vmem>>, vector<4x32x32xf32>,
    } else {
    }
    %3 = arith.cmpi slt, %arg2, %arg1 : i32
    %4 = arith.extui %3 : i1 to i32
    %c0_i32_1 = arith.constant 0 : i32
    %5 = arith.cmpi ne, %4, %c0_i32_1 : i32
    scf.if %5 {
      %c0 = arith.constant 0 : index
      %c0_3 = arith.constant 0 : index
      %c0_4 = arith.constant 0 : index
      %c0_5 = arith.constant 0 : index
      %9 = vector.load %arg3[%c0, %c0_3, %c0_4, %c0_5] : memref<1x4x32x32xbf16, #tpu.memory_space<vmem>>, vector<1x4x32x32xbf16>
      %10 = vector.shape_cast %9 : vector<1x4x32x32xbf16> to vector<4x32x32xbf16>
      %c0_6 = arith.constant 0 : index
      %c0_7 = arith.constant 0 : index
      %c0_8 = arith.constant 0 : index
      %c0_9 = arith.constant 0 : index
      %11 = vector.load %arg4[%c0_6, %c0_7, %c0_8, %c0_9] : memref<1x4x32x32xbf16, #tpu.memory_space<vmem>>, vector<1x4x32x32xbf16>
      %12 = vector.shape_cast %11 : vector<1x4x32x32xbf16> to vector<4x32x32xbf16>
      %c0_10 = arith.constant 0 : index
      %c0_11 = arith.constant 0 : index
      %c0_12 = arith.constant 0 : index
      %c0_13 = arith.constant 0 : index
      %13 = vector.load %arg5[%c0_10, %c0_11, %c0_12, %c0_13] : memref<1x4x32x32xbf16, #tpu.memory_space<vmem>>, vector<1x4x32x32xbf16>
      %14 = vector.shape_cast %13 : vector<1x4x32x32xbf16> to vector<4x32x32xbf16>
      "tpu.trace_start"() <{level = 10 : i32, message = "hqd,hkd->hqk"}> : () -> ()
      %cst = arith.constant dense<0.000000e+00> : vector<4x32x32xf32>
      %15 = tpu.matmul %10, %12, %cst {dimension_numbers = #tpu.dot_dimension_numbers<[2], [2], [1], [1], [0, 0, 0, 1, 1, 1], [0], [0]>} : vector<4x32x32xbf16>, vector<4x32x32xbf16>, vector<4x32x32xf32> -> vector<4x32x32xf32>
      "tpu.trace_stop"() : () -> ()
      %cst_14 = arith.constant 0.176776692 : f32
      %16 = vector.broadcast %cst_14 : f32 to vector<4x32x32xf32>
      %17 = arith.mulf %15, %16 : vector<4x32x32xf32>
      %c0_15 = arith.constant 0 : index
      %c0_16 = arith.constant 0 : index
      %c0_17 = arith.constant 0 : index
      %18 = vector.load %arg7[%c0_15, %c0_16, %c0_17] : memref<4x32x1xf32, #tpu.memory_space<vmem>>, vector<4x32x1xf32>
      %cst_18 = arith.constant dense<0xFF800000> : vector<4x32xf32>
      %19 = vector.multi_reduction <maximumf>, %17, %cst_18 [2] : vector<4x32x32xf32> to vector<4x32xf32>
      %20 = vector.shape_cast %19 : vector<4x32xf32> to vector<4x32x1xf32>
      %21 = arith.maximumf %18, %20 : vector<4x32x1xf32>
      %22 = arith.subf %18, %21 : vector<4x32x1xf32>
      %23 = math.exp %22 : vector<4x32x1xf32>
      %24 = vector.broadcast %21 : vector<4x32x1xf32> to vector<4x32x32xf32>
      %25 = arith.subf %17, %24 : vector<4x32x32xf32>
      %26 = math.exp %25 : vector<4x32x32xf32>
      %c0_19 = arith.constant 0 : index
      %c0_20 = arith.constant 0 : index
      %c0_21 = arith.constant 0 : index
      %27 = vector.load %arg8[%c0_19, %c0_20, %c0_21] : memref<4x32x1xf32, #tpu.memory_space<vmem>>, vector<4x32x1xf32>
      %28 = arith.mulf %23, %27 : vector<4x32x1xf32>
      %cst_22 = arith.constant dense<0.000000e+00> : vector<4x32xf32>
      %29 = vector.multi_reduction <add>, %26, %cst_22 [2] : vector<4x32x32xf32> to vector<4x32xf32>
      %30 = vector.shape_cast %29 : vector<4x32xf32> to vector<4x32x1xf32>
      %31 = arith.addf %28, %30 : vector<4x32x1xf32>
      %c0_23 = arith.constant 0 : index
      %c0_24 = arith.constant 0 : index
      %c0_25 = arith.constant 0 : index
      %32 = vector.load %arg8[%c0_23, %c0_24, %c0_25] : memref<4x32x1xf32, #tpu.memory_space<vmem>>, vector<4x32x1xf32>
      tpu.vector_store %arg8[%c0_23, %c0_24, %c0_25], %31 {strides = array<i32>} : memref<4x32x1xf32, #tpu.memory_space<vmem>>, vector<4x32x1xf32>,
      %33 = arith.truncf %26 : vector<4x32x32xf32> to vector<4x32x32xbf16>
      "tpu.trace_start"() <{level = 10 : i32, message = "hqk,hkd->hqd"}> : () -> ()
      %cst_26 = arith.constant dense<0.000000e+00> : vector<4x32x32xf32>
      %34 = tpu.matmul %33, %14, %cst_26 {dimension_numbers = #tpu.dot_dimension_numbers<[2], [1], [1], [2], [0, 0, 0, 1, 1, 2], [0], [0]>} : vector<4x32x32xbf16>, vector<4x32x32xbf16>, vector<4x32x32xf32> -> vector<4x32x32xf32>
      "tpu.trace_stop"() : () -> ()
      %c0_27 = arith.constant 0 : index
      %c0_28 = arith.constant 0 : index
      %c0_29 = arith.constant 0 : index
      %35 = vector.load %arg9[%c0_27, %c0_28, %c0_29] : memref<4x32x32xf32, #tpu.memory_space<vmem>>, vector<4x32x32xf32>
      %36 = vector.broadcast %23 : vector<4x32x1xf32> to vector<4x32x32xf32>
      %37 = arith.mulf %36, %35 : vector<4x32x32xf32>
      %38 = arith.addf %37, %34 : vector<4x32x32xf32>
      %c0_30 = arith.constant 0 : index
      %c0_31 = arith.constant 0 : index
      %c0_32 = arith.constant 0 : index
      %39 = vector.load %arg9[%c0_30, %c0_31, %c0_32] : memref<4x32x32xf32, #tpu.memory_space<vmem>>, vector<4x32x32xf32>
      tpu.vector_store %arg9[%c0_30, %c0_31, %c0_32], %38 {strides = array<i32>} : memref<4x32x32xf32, #tpu.memory_space<vmem>>, vector<4x32x32xf32>,
      %c0_33 = arith.constant 0 : index
      %c0_34 = arith.constant 0 : index
      %c0_35 = arith.constant 0 : index
      %40 = vector.load %arg7[%c0_33, %c0_34, %c0_35] : memref<4x32x1xf32, #tpu.memory_space<vmem>>, vector<4x32x1xf32>
      tpu.vector_store %arg7[%c0_33, %c0_34, %c0_35], %21 {strides = array<i32>} : memref<4x32x1xf32, #tpu.memory_space<vmem>>, vector<4x32x1xf32>,
    } else {
    }
    %6 = arith.cmpi eq, %arg2, %arg1 : i32
    %7 = arith.extui %6 : i1 to i32
    %c0_i32_2 = arith.constant 0 : i32
    %8 = arith.cmpi ne, %7, %c0_i32_2 : i32
    scf.if %8 {
      %c0 = arith.constant 0 : index
      %c0_3 = arith.constant 0 : index
      %c0_4 = arith.constant 0 : index
      %c0_5 = arith.constant 0 : index
      %9 = vector.load %arg3[%c0, %c0_3, %c0_4, %c0_5] : memref<1x4x32x32xbf16, #tpu.memory_space<vmem>>, vector<1x4x32x32xbf16>
      %10 = vector.shape_cast %9 : vector<1x4x32x32xbf16> to vector<4x32x32xbf16>
      %c0_6 = arith.constant 0 : index
      %c0_7 = arith.constant 0 : index
      %c0_8 = arith.constant 0 : index
      %c0_9 = arith.constant 0 : index
      %11 = vector.load %arg4[%c0_6, %c0_7, %c0_8, %c0_9] : memref<1x4x32x32xbf16, #tpu.memory_space<vmem>>, vector<1x4x32x32xbf16>
      %12 = vector.shape_cast %11 : vector<1x4x32x32xbf16> to vector<4x32x32xbf16>
      %c0_10 = arith.constant 0 : index
      %c0_11 = arith.constant 0 : index
      %c0_12 = arith.constant 0 : index
      %c0_13 = arith.constant 0 : index
      %13 = vector.load %arg5[%c0_10, %c0_11, %c0_12, %c0_13] : memref<1x4x32x32xbf16, #tpu.memory_space<vmem>>, vector<1x4x32x32xbf16>
      %14 = vector.shape_cast %13 : vector<1x4x32x32xbf16> to vector<4x32x32xbf16>
      "tpu.trace_start"() <{level = 10 : i32, message = "hqd,hkd->hqk"}> : () -> ()
      %cst = arith.constant dense<0.000000e+00> : vector<4x32x32xf32>
      %15 = tpu.matmul %10, %12, %cst {dimension_numbers = #tpu.dot_dimension_numbers<[2], [2], [1], [1], [0, 0, 0, 1, 1, 1], [0], [0]>} : vector<4x32x32xbf16>, vector<4x32x32xbf16>, vector<4x32x32xf32> -> vector<4x32x32xf32>
      "tpu.trace_stop"() : () -> ()
      %cst_14 = arith.constant 0.176776692 : f32
      %16 = vector.broadcast %cst_14 : f32 to vector<4x32x32xf32>
      %17 = arith.mulf %15, %16 : vector<4x32x32xf32>
      %18 = tpu.iota {dimensions = array<i32: 0>} : vector<32x32xi32>
      %19 = tpu.iota {dimensions = array<i32: 1>} : vector<32x32xi32>
      %20 = arith.cmpi sle, %19, %18 : vector<32x32xi32>
      %21 = vector.shape_cast %20 : vector<32x32xi1> to vector<1x32x32xi1>
      %cst_15 = arith.constant -1.000000e+30 : f32
      %22 = vector.shape_cast %21 : vector<1x32x32xi1> to vector<1x32x32xi1>
      %23 = vector.broadcast %22 : vector<1x32x32xi1> to vector<4x32x32xi1>
      %24 = vector.broadcast %cst_15 : f32 to vector<4x32x32xf32>
      %25 = arith.select %23, %17, %24 : vector<4x32x32xi1>, vector<4x32x32xf32>
      %c0_16 = arith.constant 0 : index
      %c0_17 = arith.constant 0 : index
      %c0_18 = arith.constant 0 : index
      %26 = vector.load %arg7[%c0_16, %c0_17, %c0_18] : memref<4x32x1xf32, #tpu.memory_space<vmem>>, vector<4x32x1xf32>
      %cst_19 = arith.constant dense<0xFF800000> : vector<4x32xf32>
      %27 = vector.multi_reduction <maximumf>, %25, %cst_19 [2] : vector<4x32x32xf32> to vector<4x32xf32>
      %28 = vector.shape_cast %27 : vector<4x32xf32> to vector<4x32x1xf32>
      %29 = arith.maximumf %26, %28 : vector<4x32x1xf32>
      %30 = arith.subf %26, %29 : vector<4x32x1xf32>
      %31 = math.exp %30 : vector<4x32x1xf32>
      %32 = vector.broadcast %29 : vector<4x32x1xf32> to vector<4x32x32xf32>
      %33 = arith.subf %25, %32 : vector<4x32x32xf32>
      %34 = math.exp %33 : vector<4x32x32xf32>
      %c0_20 = arith.constant 0 : index
      %c0_21 = arith.constant 0 : index
      %c0_22 = arith.constant 0 : index
      %35 = vector.load %arg8[%c0_20, %c0_21, %c0_22] : memref<4x32x1xf32, #tpu.memory_space<vmem>>, vector<4x32x1xf32>
      %36 = arith.mulf %31, %35 : vector<4x32x1xf32>
      %cst_23 = arith.constant dense<0.000000e+00> : vector<4x32xf32>
      %37 = vector.multi_reduction <add>, %34, %cst_23 [2] : vector<4x32x32xf32> to vector<4x32xf32>
      %38 = vector.shape_cast %37 : vector<4x32xf32> to vector<4x32x1xf32>
      %39 = arith.addf %36, %38 : vector<4x32x1xf32>
      %c0_24 = arith.constant 0 : index
      %c0_25 = arith.constant 0 : index
      %c0_26 = arith.constant 0 : index
      %40 = vector.load %arg8[%c0_24, %c0_25, %c0_26] : memref<4x32x1xf32, #tpu.memory_space<vmem>>, vector<4x32x1xf32>
      tpu.vector_store %arg8[%c0_24, %c0_25, %c0_26], %39 {strides = array<i32>} : memref<4x32x1xf32, #tpu.memory_space<vmem>>, vector<4x32x1xf32>,
      %41 = arith.truncf %34 : vector<4x32x32xf32> to vector<4x32x32xbf16>
      "tpu.trace_start"() <{level = 10 : i32, message = "hqk,hkd->hqd"}> : () -> ()
      %cst_27 = arith.constant dense<0.000000e+00> : vector<4x32x32xf32>
      %42 = tpu.matmul %41, %14, %cst_27 {dimension_numbers = #tpu.dot_dimension_numbers<[2], [1], [1], [2], [0, 0, 0, 1, 1, 2], [0], [0]>} : vector<4x32x32xbf16>, vector<4x32x32xbf16>, vector<4x32x32xf32> -> vector<4x32x32xf32>
      "tpu.trace_stop"() : () -> ()
      %c0_28 = arith.constant 0 : index
      %c0_29 = arith.constant 0 : index
      %c0_30 = arith.constant 0 : index
      %43 = vector.load %arg9[%c0_28, %c0_29, %c0_30] : memref<4x32x32xf32, #tpu.memory_space<vmem>>, vector<4x32x32xf32>
      %44 = vector.broadcast %31 : vector<4x32x1xf32> to vector<4x32x32xf32>
      %45 = arith.mulf %44, %43 : vector<4x32x32xf32>
      %46 = arith.addf %45, %42 : vector<4x32x32xf32>
      %c0_31 = arith.constant 0 : index
      %c0_32 = arith.constant 0 : index
      %c0_33 = arith.constant 0 : index
      %47 = vector.load %arg9[%c0_31, %c0_32, %c0_33] : memref<4x32x32xf32, #tpu.memory_space<vmem>>, vector<4x32x32xf32>
      tpu.vector_store %arg9[%c0_31, %c0_32, %c0_33], %46 {strides = array<i32>} : memref<4x32x32xf32, #tpu.memory_space<vmem>>, vector<4x32x32xf32>,
      %c0_34 = arith.constant 0 : index
      %c0_35 = arith.constant 0 : index
      %c0_36 = arith.constant 0 : index
      %48 = vector.load %arg7[%c0_34, %c0_35, %c0_36] : memref<4x32x1xf32, #tpu.memory_space<vmem>>, vector<4x32x1xf32>
      tpu.vector_store %arg7[%c0_34, %c0_35, %c0_36], %29 {strides = array<i32>} : memref<4x32x1xf32, #tpu.memory_space<vmem>>, vector<4x32x1xf32>,
      %c0_37 = arith.constant 0 : index
      %c0_38 = arith.constant 0 : index
      %c0_39 = arith.constant 0 : index
      %49 = vector.load %arg9[%c0_37, %c0_38, %c0_39] : memref<4x32x32xf32, #tpu.memory_space<vmem>>, vector<4x32x32xf32>
      %c0_40 = arith.constant 0 : index
      %c0_41 = arith.constant 0 : index
      %c0_42 = arith.constant 0 : index
      %50 = vector.load %arg8[%c0_40, %c0_41, %c0_42] : memref<4x32x1xf32, #tpu.memory_space<vmem>>, vector<4x32x1xf32>
      %51 = tpu.reciprocal %50 : vector<4x32x1xf32> -> vector<4x32x1xf32>
      %52 = vector.broadcast %51 : vector<4x32x1xf32> to vector<4x32x32xf32>
      %53 = arith.mulf %49, %52 : vector<4x32x32xf32>
      %54 = arith.truncf %53 : vector<4x32x32xf32> to vector<4x32x32xbf16>
      %c0_43 = arith.constant 0 : index
      %c0_44 = arith.constant 0 : index
      %c0_45 = arith.constant 0 : index
      %c0_46 = arith.constant 0 : index
      %55 = vector.load %arg6[%c0_43, %c0_44, %c0_45, %c0_46] : memref<1x4x32x32xbf16, #tpu.memory_space<vmem>>, vector<1x4x32x32xbf16>
      %56 = vector.shape_cast %55 : vector<1x4x32x32xbf16> to vector<4x32x32xbf16>
      %57 = vector.shape_cast %54 : vector<4x32x32xbf16> to vector<1x4x32x32xbf16>
      tpu.vector_store %arg6[%c0_43, %c0_44, %c0_45, %c0_46], %57 {strides = array<i32>} : memref<1x4x32x32xbf16, #tpu.memory_space<vmem>>, vector<1x4x32x32xbf16>,
    } else {
    }
    return
  }
  func.func @transform_0(%arg0: i32, %arg1: i32, %arg2: i32) -> (i32, i32, i32, i32) {
    %c0_i32 = arith.constant 0 : i32
    %c0_i32_0 = arith.constant 0 : i32
    %c0_i32_1 = arith.constant 0 : i32
    return %arg0, %c0_i32, %arg1, %c0_i32_0 : i32, i32, i32, i32
  }
  func.func @transform_1(%arg0: i32, %arg1: i32, %arg2: i32) -> (i32, i32, i32, i32) {
    %0 = arith.minsi %arg2, %arg1 : i32
    %c0_i32 = arith.constant 0 : i32
    %c0_i32_0 = arith.constant 0 : i32
    %c0_i32_1 = arith.constant 0 : i32
    return %arg0, %c0_i32, %0, %c0_i32_0 : i32, i32, i32, i32
  }
  func.func @transform_2(%arg0: i32, %arg1: i32, %arg2: i32) -> (i32, i32, i32, i32) {
    %0 = arith.minsi %arg2, %arg1 : i32
    %c0_i32 = arith.constant 0 : i32
    %c0_i32_0 = arith.constant 0 : i32
    %c0_i32_1 = arith.constant 0 : i32
    return %arg0, %c0_i32, %0, %c0_i32_0 : i32, i32, i32, i32
  }
  func.func @transform_3(%arg0: i32, %arg1: i32, %arg2: i32) -> (i32, i32, i32, i32) {
    %c0_i32 = arith.constant 0 : i32
    %c0_i32_0 = arith.constant 0 : i32
    %c0_i32_1 = arith.constant 0 : i32
    return %arg0, %c0_i32, %arg1, %c0_i32_0 : i32, i32, i32, i32
  }
}

module attributes {stable_mosaic.version = 11 : i64} {
  func.func @lm_head_kernel(%arg0: i32, %arg1: i32, %arg2: i32, %arg3: memref<1x32x128xf32, #tpu.memory_space<vmem>>, %arg4: memref<1x128xf32, #tpu.memory_space<vmem>>, %arg5: memref<1x128xf32, #tpu.memory_space<vmem>>, %arg6: memref<128x256xbf16, #tpu.memory_space<vmem>>, %arg7: memref<1x32x256xf32, #tpu.memory_space<vmem>>, %arg8: memref<32x128xbf16, #tpu.memory_space<vmem>>) attributes {dimension_semantics = [#tpu.dimension_semantics<parallel>, #tpu.dimension_semantics<parallel>, #tpu.dimension_semantics<arbitrary>], iteration_bounds = array<i64: 2, 2, 2>, scalar_prefetch = 0 : i64, scratch_operands = 1 : i64, tpu.core_type = #tpu.core_type<tc>, window_params = [{transform_indices = @transform_0, window_bounds = array<i64: 1, 32, 128>}, {pipeline_mode = #tpu.pipeline_mode<synchronous>, transform_indices = @transform_1, window_bounds = array<i64: 1, 128>}, {pipeline_mode = #tpu.pipeline_mode<synchronous>, transform_indices = @transform_2, window_bounds = array<i64: 1, 128>}, {transform_indices = @transform_3, window_bounds = array<i64: 128, 256>}, {transform_indices = @transform_4, window_bounds = array<i64: 1, 32, 256>}]} {
    %c0_i32 = arith.constant 0 : i32
    %0 = arith.cmpi eq, %arg2, %c0_i32 : i32
    %1 = arith.extui %0 : i1 to i32
    %c0_i32_0 = arith.constant 0 : i32
    %2 = arith.cmpi ne, %1, %c0_i32_0 : i32
    scf.if %2 {
      %c0_7 = arith.constant 0 : index
      %c0_8 = arith.constant 0 : index
      %c0_9 = arith.constant 0 : index
      %9 = vector.load %arg3[%c0_7, %c0_8, %c0_9] : memref<1x32x128xf32, #tpu.memory_space<vmem>>, vector<1x32x128xf32>
      %10 = vector.shape_cast %9 : vector<1x32x128xf32> to vector<32x128xf32>
      %c0_10 = arith.constant 0 : index
      %c0_11 = arith.constant 0 : index
      %11 = vector.load %arg4[%c0_10, %c0_11] : memref<1x128xf32, #tpu.memory_space<vmem>>, vector<1x128xf32>
      %12 = vector.shape_cast %11 : vector<1x128xf32> to vector<128xf32>
      %c0_12 = arith.constant 0 : index
      %c0_13 = arith.constant 0 : index
      %13 = vector.load %arg5[%c0_12, %c0_13] : memref<1x128xf32, #tpu.memory_space<vmem>>, vector<1x128xf32>
      %14 = vector.shape_cast %13 : vector<1x128xf32> to vector<128xf32>
      %cst_14 = arith.constant dense<0.000000e+00> : vector<32xf32>
      %15 = vector.multi_reduction <add>, %10, %cst_14 [1] : vector<32x128xf32> to vector<32xf32>
      %16 = vector.shape_cast %15 : vector<32xf32> to vector<32x1xf32>
      %cst_15 = arith.constant 1.280000e+02 : f32
      %17 = vector.broadcast %cst_15 : f32 to vector<32x1xf32>
      %18 = arith.divf %16, %17 : vector<32x1xf32>
      %19 = vector.broadcast %18 : vector<32x1xf32> to vector<32x128xf32>
      %20 = arith.subf %10, %19 : vector<32x128xf32>
      %21 = arith.mulf %20, %20 : vector<32x128xf32>
      %cst_16 = arith.constant dense<0.000000e+00> : vector<32xf32>
      %22 = vector.multi_reduction <add>, %21, %cst_16 [1] : vector<32x128xf32> to vector<32xf32>
      %23 = vector.shape_cast %22 : vector<32xf32> to vector<32x1xf32>
      %cst_17 = arith.constant 1.280000e+02 : f32
      %24 = vector.broadcast %cst_17 : f32 to vector<32x1xf32>
      %25 = arith.divf %23, %24 : vector<32x1xf32>
      %26 = vector.broadcast %18 : vector<32x1xf32> to vector<32x128xf32>
      %27 = arith.subf %10, %26 : vector<32x128xf32>
      %cst_18 = arith.constant 9.99999974E-6 : f32
      %28 = vector.broadcast %cst_18 : f32 to vector<32x1xf32>
      %29 = arith.addf %25, %28 : vector<32x1xf32>
      %30 = math.rsqrt %29 : vector<32x1xf32>
      %31 = vector.broadcast %30 : vector<32x1xf32> to vector<32x128xf32>
      %32 = arith.mulf %27, %31 : vector<32x128xf32>
      %33 = vector.shape_cast %12 : vector<128xf32> to vector<1x128xf32>
      %34 = vector.broadcast %33 : vector<1x128xf32> to vector<32x128xf32>
      %35 = arith.mulf %32, %34 : vector<32x128xf32>
      %36 = vector.shape_cast %14 : vector<128xf32> to vector<1x128xf32>
      %37 = vector.broadcast %36 : vector<1x128xf32> to vector<32x128xf32>
      %38 = arith.addf %35, %37 : vector<32x128xf32>
      %39 = arith.truncf %38 : vector<32x128xf32> to vector<32x128xbf16>
      %c0_19 = arith.constant 0 : index
      %c0_20 = arith.constant 0 : index
      %40 = vector.load %arg8[%c0_19, %c0_20] : memref<32x128xbf16, #tpu.memory_space<vmem>>, vector<32x128xbf16>
      tpu.vector_store %arg8[%c0_19, %c0_20], %39 {strides = array<i32>} : memref<32x128xbf16, #tpu.memory_space<vmem>>, vector<32x128xbf16>,
    } else {
    }
    %c0 = arith.constant 0 : index
    %c0_1 = arith.constant 0 : index
    %3 = vector.load %arg8[%c0, %c0_1] : memref<32x128xbf16, #tpu.memory_space<vmem>>, vector<32x128xbf16>
    %c0_2 = arith.constant 0 : index
    %c0_3 = arith.constant 0 : index
    %4 = vector.load %arg6[%c0_2, %c0_3] : memref<128x256xbf16, #tpu.memory_space<vmem>>, vector<128x256xbf16>
    %cst = arith.constant dense<0.000000e+00> : vector<32x256xf32>
    %5 = tpu.matmul %3, %4, %cst {dimension_numbers = #tpu.dot_dimension_numbers<[1], [0], [0], [1], [0, 0, 1, 1], [], []>} : vector<32x128xbf16>, vector<128x256xbf16>, vector<32x256xf32> -> vector<32x256xf32>
    %c0_4 = arith.constant 0 : index
    %c0_5 = arith.constant 0 : index
    %c0_6 = arith.constant 0 : index
    %6 = vector.load %arg7[%c0_4, %c0_5, %c0_6] : memref<1x32x256xf32, #tpu.memory_space<vmem>>, vector<1x32x256xf32>
    %7 = vector.shape_cast %6 : vector<1x32x256xf32> to vector<32x256xf32>
    %8 = vector.shape_cast %5 : vector<32x256xf32> to vector<1x32x256xf32>
    tpu.vector_store %arg7[%c0_4, %c0_5, %c0_6], %8 {strides = array<i32>} : memref<1x32x256xf32, #tpu.memory_space<vmem>>, vector<1x32x256xf32>,
    return
  }
  func.func @transform_0(%arg0: i32, %arg1: i32, %arg2: i32) -> (i32, i32, i32) {
    %c0_i32 = arith.constant 0 : i32
    %c0_i32_0 = arith.constant 0 : i32
    return %arg0, %arg1, %c0_i32 : i32, i32, i32
  }
  func.func @transform_1(%arg0: i32, %arg1: i32, %arg2: i32) -> (i32, i32) {
    %c0_i32 = arith.constant 0 : i32
    %c0_i32_0 = arith.constant 0 : i32
    %c0_i32_1 = arith.constant 0 : i32
    return %c0_i32, %c0_i32_0 : i32, i32
  }
  func.func @transform_2(%arg0: i32, %arg1: i32, %arg2: i32) -> (i32, i32) {
    %c0_i32 = arith.constant 0 : i32
    %c0_i32_0 = arith.constant 0 : i32
    %c0_i32_1 = arith.constant 0 : i32
    return %c0_i32, %c0_i32_0 : i32, i32
  }
  func.func @transform_3(%arg0: i32, %arg1: i32, %arg2: i32) -> (i32, i32) {
    %c0_i32 = arith.constant 0 : i32
    %c0_i32_0 = arith.constant 0 : i32
    return %c0_i32, %arg2 : i32, i32
  }
  func.func @transform_4(%arg0: i32, %arg1: i32, %arg2: i32) -> (i32, i32, i32) {
    %c0_i32 = arith.constant 0 : i32
    return %arg0, %arg1, %arg2 : i32, i32, i32
  }
}

</mosaic_0001>

<llo_original>
// kernel: gpt_forward.13
$region0: #{gpt_forward.13}
  #allocation0 [shape = 'u32[]', space=smem, size = 0x4, offset = 0x4, fixed_abs, tag = 'smem constant byte address 0x4 - core index']
  #allocation1 [shape = 'u32[144,128]{1,0:T(1,128)}', space=vmem, size = 0x12000, scoped, tag = 'internal scratch']
  #allocation2 [shape = 'bf16[32,128]{1,0:T(16,128)(2,1)}', space=vmem, size = 0x2000, scoped, tag = 'scratch operand']
  %s0 = inlined_call_operand.vmem [shape: f32[2,64,128], index: 0, kind: input, shape index: {}]
  %s1 = inlined_call_operand.vmem [shape: f32[1,128], index: 1, kind: input, shape index: {}]
  %s2 = inlined_call_operand.vmem [shape: f32[1,128], index: 2, kind: input, shape index: {}]
  %s3 = inlined_call_operand.vmem [shape: bf16[128,512], index: 3, kind: input, shape index: {}]
  %s4 = inlined_call_operand.hbm [shape: f32[2,64,512], index: 4, kind: output, shape index: {}]
  %s5 = sld [smem:[#allocation0]]
  $region91: #{gpt_forward.13} parent=0
    _
  %s7 = ssub.s32 1, %s5
  %s8 = scalar_select 0, %s7, %s5
  $region1: #{gpt_forward.13} parent=0
    #allocation3 [shape = 'u8[131072]{0}', space=vmem, size = 0x20000, scoped, tag = 'input window, operand 3']
    #allocation4 [shape = 'u8[65536]{0}', space=vmem, size = 0x10000, scoped, tag = 'output window, operand 0']
    #allocation5 [shape = 's32[2]{0}', space=sflag, size = 0x8, scoped, tag = 'scoped memory for gpt_forward.13']
    %9 = vsyncpa [#allocation5], 0
    %s10 = scalar_lea.sflag [#allocation5], 1
    %11 = vsyncpa %s10, 0
    loop: start=0, step=1, limit=10
    $region2: #{gpt_forward.13} parent=1 // loop_pre_header
      _
    $region3: #{gpt_forward.13} parent=1 // loop_header
      %s13 = sphi 0, %s17
      %p14 = scmp.ge.s32.totalorder %s13, 10
      %s20 = sphi 0, %s39
      %s21 = sphi 0, %s35
      %s22 = sphi 0, %s31
      %s23 = sphi 0, %s20
      %s24 = sphi 0, %s21
      %s25 = sphi 0, %s22
      %s26 = sphi 0, %s23
      %s27 = sphi 0, %s24
      %s28 = sphi 0, %s25
      %s44 = sphi 0, %s46
      %s47 = sphi 0, %s44
      %s48 = sphi 0, %s47
      %s64 = sphi 0, %s48
      %s68 = sphi 0, %s68
      %s70 = sphi 0, %s68
      %s71 = sphi 0, %s70
      %s85 = sphi 0, %s71
      %s89 = sphi 0, %s89
      %s91 = sphi 0, %s89
      %s92 = sphi 0, %s91
      %s106 = sphi 0, %s92
      %s112 = sphi 0, %s114
      %s115 = sphi 0, %s112
      %s116 = sphi 0, %s115
      %s132 = sphi 0, %s116
      %s142 = sphi 0, %s144
      %s145 = sphi 0, %s142
      %s146 = sphi 0, %s145
      %s162 = sphi 0, %s146
    $region4: #{gpt_forward.13} parent=1 // loop_header_branch
      %16 = sbr.rel (%p14) target = $region8
    $region5: #{gpt_forward.13} parent=1 // loop_body
      %s18 = ssub.s32 %s13, 1
      %s19 = ssub.s32 %s13, 2
      %s29 = sadd.s32 1, %s22
      %p30 = scmp.ge.s32.totalorder %s29, 2
      %s31 = scalar_select %p30, 0, %s29
      %s32 = sadd.s32 1, %s21
      %s33 = scalar_select %p30, %s32, %s21
      %p34 = scmp.ge.s32.totalorder %s33, 2
      %s35 = scalar_select %p34, 0, %s33
      %s36 = sadd.s32 1, %s20
      %s37 = scalar_select %p34, %s36, %s20
      %p38 = scmp.ge.s32.totalorder %s37, 2
      %s39 = scalar_select %p38, 0, %s37
      %s40 = ssub.s32 %s20, %s39
      %s41 = ssub.s32 %s21, %s35
      %s42 = sor.u32 %s40, %s41
      %p43 = scmp.eq.s32.totalorder %s42, 0
      %s45 = sadd.s32 %s44, 1
      %s46 = scalar_select %p43, %s44, %s45
      %p49 = pneg %p43
      %p50 = scmp.eq.s32.totalorder %s13, 7
      %p51 = por %p49, %p50
      %p52 = scmp.ne.s32.totalorder %s44, %s47
      %p53 = scmp.eq.s32.totalorder %s13, 0
      %p54 = por %p52, %p53
      %p55 = scmp.ne.s32.totalorder %s44, %s47
      %p56 = scmp.eq.s32.totalorder %s18, 7
      %p57 = por %p55, %p56
      %p58 = scmp.ne.s32.totalorder %s47, %s48
      %p59 = scmp.eq.s32.totalorder %s18, 0
      %p60 = por %p58, %p59
      %p61 = scmp.ne.s32.totalorder %s47, %s48
      %p62 = scmp.eq.s32.totalorder %s19, 7
      %p63 = por %p61, %p62
      %p65 = scmp.ne.s32.totalorder %s48, %s64
      %p66 = scmp.eq.s32.totalorder %s19, 0
      %p67 = por %p65, %p66
      %s69 = sadd.s32 %s68, 1
      %p72 = scmp.eq.s32.totalorder %s13, 7
      %p73 = scmp.ne.s32.totalorder %s68, %s70
      %p74 = scmp.eq.s32.totalorder %s13, 0
      %p75 = por %p73, %p74
      %p76 = scmp.ne.s32.totalorder %s68, %s70
      %p77 = scmp.eq.s32.totalorder %s18, 7
      %p78 = por %p76, %p77
      %p79 = scmp.ne.s32.totalorder %s70, %s71
      %p80 = scmp.eq.s32.totalorder %s18, 0
      %p81 = por %p79, %p80
      %p82 = scmp.ne.s32.totalorder %s70, %s71
      %p83 = scmp.eq.s32.totalorder %s19, 7
      %p84 = por %p82, %p83
      %p86 = scmp.ne.s32.totalorder %s71, %s85
      %p87 = scmp.eq.s32.totalorder %s19, 0
      %p88 = por %p86, %p87
      %s90 = sadd.s32 %s89, 1
      %p93 = scmp.eq.s32.totalorder %s13, 7
      %p94 = scmp.ne.s32.totalorder %s89, %s91
      %p95 = scmp.eq.s32.totalorder %s13, 0
      %p96 = por %p94, %p95
      %p97 = scmp.ne.s32.totalorder %s89, %s91
      %p98 = scmp.eq.s32.totalorder %s18, 7
      %p99 = por %p97, %p98
      %p100 = scmp.ne.s32.totalorder %s91, %s92
      %p101 = scmp.eq.s32.totalorder %s18, 0
      %p102 = por %p100, %p101
      %p103 = scmp.ne.s32.totalorder %s91, %s92
      %p104 = scmp.eq.s32.totalorder %s19, 7
      %p105 = por %p103, %p104
      %p107 = scmp.ne.s32.totalorder %s92, %s106
      %p108 = scmp.eq.s32.totalorder %s19, 0
      %p109 = por %p107, %p108
      %s110 = ssub.s32 %s22, %s31
      %p111 = scmp.eq.s32.totalorder %s110, 0
      %s113 = sadd.s32 %s112, 1
      %s114 = scalar_select %p111, %s112, %s113
      %p117 = pneg %p111
      %p118 = scmp.eq.s32.totalorder %s13, 7
      %p119 = por %p117, %p118
      %p120 = scmp.ne.s32.totalorder %s112, %s115
      %p121 = scmp.eq.s32.totalorder %s13, 0
      %p122 = por %p120, %p121
      %p123 = scmp.ne.s32.totalorder %s112, %s115
      %p124 = scmp.eq.s32.totalorder %s18, 7
      %p125 = por %p123, %p124
      %p126 = scmp.ne.s32.totalorder %s115, %s116
      %p127 = scmp.eq.s32.totalorder %s18, 0
      %p128 = por %p126, %p127
      %p129 = scmp.ne.s32.totalorder %s115, %s116
      %p130 = scmp.eq.s32.totalorder %s19, 7
      %p131 = por %p129, %p130
      %p133 = scmp.ne.s32.totalorder %s116, %s132
      %p134 = scmp.eq.s32.totalorder %s19, 0
      %p135 = por %p133, %p134
      %s136 = ssub.s32 %s20, %s39
      %s137 = ssub.s32 %s21, %s35
      %s138 = sor.u32 %s136, %s137
      %s139 = ssub.s32 %s22, %s31
      %s140 = sor.u32 %s138, %s139
      %p141 = scmp.eq.s32.totalorder %s140, 0
      %s143 = sadd.s32 %s142, 1
      %s144 = scalar_select %p141, %s142, %s143
      %p147 = pneg %p141
      %p148 = scmp.eq.s32.totalorder %s13, 7
      %p149 = por %p147, %p148
      %p150 = scmp.ne.s32.totalorder %s142, %s145
      %p151 = scmp.eq.s32.totalorder %s13, 0
      %p152 = por %p150, %p151
      %p153 = scmp.ne.s32.totalorder %s142, %s145
      %p154 = scmp.eq.s32.totalorder %s18, 7
      %p155 = por %p153, %p154
      %p156 = scmp.ne.s32.totalorder %s145, %s146
      %p157 = scmp.eq.s32.totalorder %s18, 0
      %p158 = por %p156, %p157
      %p159 = scmp.ne.s32.totalorder %s145, %s146
      %p160 = scmp.eq.s32.totalorder %s19, 7
      %p161 = por %p159, %p160
      %p163 = scmp.ne.s32.totalorder %s146, %s162
      %p164 = scmp.eq.s32.totalorder %s19, 0
      %p165 = por %p163, %p164
      %p166 = scmp.le.s32.totalorder 1, %s13
      %p167 = scmp.lt.s32.totalorder %s13, 9
      %p168 = pnand %p166, %p167
      %p169 = pneg %p168
      // Predicated region
      $region9: #{gpt_forward.13} parent=5 // pred_check
        _
      $region10: #{gpt_forward.13} parent=5 // pred_check_branch
        %171 = sbr.rel (%p168) target = $region12
      $region11: #{gpt_forward.13} parent=5 // pred_region
        %s172 = ssub.s32 %s13, 1
        // Predicated region
        $region13: #{gpt_forward.13} parent=11 // pred_check
          %p173 = pneg %p81
        $region14: #{gpt_forward.13} parent=11 // pred_check_branch
          %175 = sbr.rel (%p173) target = $region16
        $region15: #{gpt_forward.13} parent=11 // pred_region
          _
        $region16: #{gpt_forward.13} parent=11 // pred_fallthru
          _
        // Predicated region
        $region17: #{gpt_forward.13} parent=11 // pred_check
          %p176 = pneg %p102
        $region18: #{gpt_forward.13} parent=11 // pred_check_branch
          %178 = sbr.rel (%p176) target = $region20
        $region19: #{gpt_forward.13} parent=11 // pred_region
          _
        $region20: #{gpt_forward.13} parent=11 // pred_fallthru
          _
      $region12: #{gpt_forward.13} parent=5 // pred_fallthru
        _
      %p179 = scmp.lt.s32.totalorder %s13, 8
      // Predicated region
      $region21: #{gpt_forward.13} parent=5 // pred_check
        %p180 = pneg %p179
      $region22: #{gpt_forward.13} parent=5 // pred_check_branch
        %182 = sbr.rel (%p180) target = $region24
      $region23: #{gpt_forward.13} parent=5 // pred_region
        // Predicated region
        $region25: #{gpt_forward.13} parent=23 // pred_check
          %p183 = pneg %p54
        $region26: #{gpt_forward.13} parent=23 // pred_check_branch
          %185 = sbr.rel (%p183) target = $region28
        $region27: #{gpt_forward.13} parent=23 // pred_region
          %s186 = smul.u32 4, %s21
          %p187 = scmp.lt.s32.totalorder %s20, 1
          %s188 = scalar_select %p187, %s20, 1
          %p189 = scmp.lt.s32.totalorder %s186, 7
          %s190 = scalar_select %p189, %s186, 7
          %s191 = smul.addr %s188, 8
          %s192 = sadd.s32 %s190, %s191
          %s193 = smul.addr %s192, 8
          %s194 = scalar_lea.vmem %s0, %s193
          %s195 = smul.u32 4, %s21
        $region28: #{gpt_forward.13} parent=23 // pred_fallthru
          _
        // Predicated region
        $region29: #{gpt_forward.13} parent=23 // pred_check
          %p196 = pneg %p122
        $region30: #{gpt_forward.13} parent=23 // pred_check_branch
          %198 = sbr.rel (%p196) target = $region32
        $region31: #{gpt_forward.13} parent=23 // pred_region
          %s199 = sand.u32 %s112, 1
          %s200 = sand.u32 %s112, 1
          %s201 = smul.addr %s200, 128
          %s202 = scalar_lea.vmem [#allocation3], %s201
          %s203 = smul.u32 2, %s22
          %s204 = smul.addr %s203, 4
          %s205 = scalar_lea.vmem %s3, %s204
          // Predicated region
          $region33: #{gpt_forward.13} parent=31 // pred_check
            _
          $region34: #{gpt_forward.13} parent=31 // pred_check_branch
            %207 = sbr.rel (0) target = $region36
          $region35: #{gpt_forward.13} parent=31 // pred_region
            // Predicated region
            $region37: #{gpt_forward.13} parent=35 // pred_check
              _
            $region38: #{gpt_forward.13} parent=35 // pred_check_branch
              %209 = sbr.rel (0) target = $region40
            $region39: #{gpt_forward.13} parent=35 // pred_region
              // Predicated region
              $region52: #{gpt_forward.13} parent=39 // pred_check
                _
              $region53: #{gpt_forward.13} parent=39 // pred_check_branch
                %254 = sbr.rel (0) target = $region55
              $region54: #{gpt_forward.13} parent=39 // pred_region
                loop: start=0, step=1, limit=1
                $region56: #{gpt_forward.13} parent=54 // loop_pre_header
                  _
                $region57: #{gpt_forward.13} parent=54 // loop_header
                  %s256 = sphi 0, %s260
                  %p257 = scmp.ge.s32.totalorder %s256, 1
                  %s261 = sphi %s205, %s205
                  %s262 = sphi %s202, %s202
                $region58: #{gpt_forward.13} parent=54 // loop_header_branch
                  %259 = sbr.rel (%p257) target = $region62
                $region59: #{gpt_forward.13} parent=54 // loop_body
                  %v263 = vld [vmem:[%s261] sm:$0xff]
                  %264 = vst [vmem:[%s262] sm:$0xff] %v263
                  %v265 = vld [vmem:[%s261 + $0x10] sm:$0xff]
                  %266 = vst [vmem:[%s262 + $0x8] sm:$0xff] %v265
                  %v267 = vld [vmem:[%s261 + $0x20] sm:$0xff]
                  %268 = vst [vmem:[%s262 + $0x10] sm:$0xff] %v267
                  %v269 = vld [vmem:[%s261 + $0x30] sm:$0xff]
                  %270 = vst [vmem:[%s262 + $0x18] sm:$0xff] %v269
                  %v271 = vld [vmem:[%s261 + $0x40] sm:$0xff]
                  %272 = vst [vmem:[%s262 + $0x20] sm:$0xff] %v271
                  %v273 = vld [vmem:[%s261 + $0x50] sm:$0xff]
                  %274 = vst [vmem:[%s262 + $0x28] sm:$0xff] %v273
                  %v275 = vld [vmem:[%s261 + $0x60] sm:$0xff]
                  %276 = vst [vmem:[%s262 + $0x30] sm:$0xff] %v275
                  %v277 = vld [vmem:[%s261 + $0x70] sm:$0xff]
                  %278 = vst [vmem:[%s262 + $0x38] sm:$0xff] %v277
                  %v279 = vld [vmem:[%s261 + $0x80] sm:$0xff]
                  %280 = vst [vmem:[%s262 + $0x40] sm:$0xff] %v279
                  %v281 = vld [vmem:[%s261 + $0x90] sm:$0xff]
                  %282 = vst [vmem:[%s262 + $0x48] sm:$0xff] %v281
                  %v283 = vld [vmem:[%s261 + $0xa0] sm:$0xff]
                  %284 = vst [vmem:[%s262 + $0x50] sm:$0xff] %v283
                  %v285 = vld [vmem:[%s261 + $0xb0] sm:$0xff]
                  %286 = vst [vmem:[%s262 + $0x58] sm:$0xff] %v285
                  %v287 = vld [vmem:[%s261 + $0xc0] sm:$0xff]
                  %288 = vst [vmem:[%s262 + $0x60] sm:$0xff] %v287
                  %v289 = vld [vmem:[%s261 + $0xd0] sm:$0xff]
                  %290 = vst [vmem:[%s262 + $0x68] sm:$0xff] %v289
                  %v291 = vld [vmem:[%s261 + $0xe0] sm:$0xff]
                  %292 = vst [vmem:[%s262 + $0x70] sm:$0xff] %v291
                  %v293 = vld [vmem:[%s261 + $0xf0] sm:$0xff]
                  %294 = vst [vmem:[%s262 + $0x78] sm:$0xff] %v293
                $region60: #{gpt_forward.13} parent=54 // loop_footer
                  %s260 = sadd.s32 1, %s256
                $region61: #{gpt_forward.13} parent=54 // loop_footer_branch
                  %255 = sbr.rel target = $region57
                $region62: #{gpt_forward.13} parent=54 // loop_exit
                  _
              $region55: #{gpt_forward.13} parent=39 // pred_fallthru
                _
              // Predicated region
              $region63: #{gpt_forward.13} parent=39 // pred_check
                _
              $region64: #{gpt_forward.13} parent=39 // pred_check_branch
                %296 = sbr.rel target = $region66
              $region65: #{gpt_forward.13} parent=39 // pred_region
                _
              $region66: #{gpt_forward.13} parent=39 // pred_fallthru
                _
            $region40: #{gpt_forward.13} parent=35 // pred_fallthru
              _
            // Predicated region
            $region41: #{gpt_forward.13} parent=35 // pred_check
              _
            $region42: #{gpt_forward.13} parent=35 // pred_check_branch
              %211 = sbr.rel target = $region44
            $region43: #{gpt_forward.13} parent=35 // pred_region
              loop: start=0, step=1, limit=1
              $region45: #{gpt_forward.13} parent=43 // loop_pre_header
                _
              $region46: #{gpt_forward.13} parent=43 // loop_header
                %s214 = sphi 0, %s218
                %p215 = scmp.ge.s32.totalorder %s214, 1
                %s219 = sphi %s205, %s205
                %s220 = sphi %s202, %s202
              $region47: #{gpt_forward.13} parent=43 // loop_header_branch
                %217 = sbr.rel (%p215) target = $region51
              $region48: #{gpt_forward.13} parent=43 // loop_body
                %v221 = vld [vmem:[%s219] sm:$0xff]
                %222 = vst [vmem:[%s220] sm:$0xff] %v221
                %v223 = vld [vmem:[%s219 + $0x10] sm:$0xff]
                %224 = vst [vmem:[%s220 + $0x8] sm:$0xff] %v223
                %v225 = vld [vmem:[%s219 + $0x20] sm:$0xff]
                %226 = vst [vmem:[%s220 + $0x10] sm:$0xff] %v225
                %v227 = vld [vmem:[%s219 + $0x30] sm:$0xff]
                %228 = vst [vmem:[%s220 + $0x18] sm:$0xff] %v227
                %v229 = vld [vmem:[%s219 + $0x40] sm:$0xff]
                %230 = vst [vmem:[%s220 + $0x20] sm:$0xff] %v229
                %v231 = vld [vmem:[%s219 + $0x50] sm:$0xff]
                %232 = vst [vmem:[%s220 + $0x28] sm:$0xff] %v231
                %v233 = vld [vmem:[%s219 + $0x60] sm:$0xff]
                %234 = vst [vmem:[%s220 + $0x30] sm:$0xff] %v233
                %v235 = vld [vmem:[%s219 + $0x70] sm:$0xff]
                %236 = vst [vmem:[%s220 + $0x38] sm:$0xff] %v235
                %v237 = vld [vmem:[%s219 + $0x80] sm:$0xff]
                %238 = vst [vmem:[%s220 + $0x40] sm:$0xff] %v237
                %v239 = vld [vmem:[%s219 + $0x90] sm:$0xff]
                %240 = vst [vmem:[%s220 + $0x48] sm:$0xff] %v239
                %v241 = vld [vmem:[%s219 + $0xa0] sm:$0xff]
                %242 = vst [vmem:[%s220 + $0x50] sm:$0xff] %v241
                %v243 = vld [vmem:[%s219 + $0xb0] sm:$0xff]
                %244 = vst [vmem:[%s220 + $0x58] sm:$0xff] %v243
                %v245 = vld [vmem:[%s219 + $0xc0] sm:$0xff]
                %246 = vst [vmem:[%s220 + $0x60] sm:$0xff] %v245
                %v247 = vld [vmem:[%s219 + $0xd0] sm:$0xff]
                %248 = vst [vmem:[%s220 + $0x68] sm:$0xff] %v247
                %v249 = vld [vmem:[%s219 + $0xe0] sm:$0xff]
                %250 = vst [vmem:[%s220 + $0x70] sm:$0xff] %v249
                %v251 = vld [vmem:[%s219 + $0xf0] sm:$0xff]
                %252 = vst [vmem:[%s220 + $0x78] sm:$0xff] %v251
              $region49: #{gpt_forward.13} parent=43 // loop_footer
                %s218 = sadd.s32 1, %s214
              $region50: #{gpt_forward.13} parent=43 // loop_footer_branch
                %213 = sbr.rel target = $region46
              $region51: #{gpt_forward.13} parent=43 // loop_exit
                _
            $region44: #{gpt_forward.13} parent=35 // pred_fallthru
              _
          $region36: #{gpt_forward.13} parent=31 // pred_fallthru
            _
          %297 = vnop
        $region32: #{gpt_forward.13} parent=23 // pred_fallthru
          _
      $region24: #{gpt_forward.13} parent=5 // pred_fallthru
        _
      %p298 = scmp.le.s32.totalorder 1, %s13
      %p299 = scmp.lt.s32.totalorder %s13, 9
      %p300 = pnand %p298, %p299
      %p301 = pneg %p300
      // Predicated region
      $region67: #{gpt_forward.13} parent=5 // pred_check
        _
      $region68: #{gpt_forward.13} parent=5 // pred_check_branch
        %303 = sbr.rel (%p300) target = $region70
      $region69: #{gpt_forward.13} parent=5 // pred_region
        %s304 = ssub.s32 %s13, 1
        %s305 = sand.u32 %s115, 1
        %s306 = sand.u32 %s115, 1
        %s307 = smul.addr %s306, 128
        %s308 = scalar_lea.vmem [#allocation3], %s307
        // Predicated region
        $region71: #{gpt_forward.13} parent=69 // pred_check
          %p309 = pneg %p128
        $region72: #{gpt_forward.13} parent=69 // pred_check_branch
          %311 = sbr.rel (%p309) target = $region74
        $region73: #{gpt_forward.13} parent=69 // pred_region
          _
        $region74: #{gpt_forward.13} parent=69 // pred_fallthru
          _
        %s312 = smul.u32 4, %s24
        %p313 = scmp.lt.s32.totalorder %s23, 1
        %s314 = scalar_select %p313, %s23, 1
        %p315 = scmp.lt.s32.totalorder %s312, 7
        %s316 = scalar_select %p315, %s312, 7
        %s317 = smul.addr %s314, 8
        %s318 = sadd.s32 %s316, %s317
        %s319 = smul.addr %s318, 8
        %s320 = scalar_lea.vmem %s0, %s319
        %p321 = pneg %p60
        %p322 = pneg %p57
        %p323 = pneg %p81
        %p324 = pneg %p78
        %p325 = pneg %p102
        %p326 = pneg %p99
        %s327 = sand.u32 %s115, 1
        %s328 = sand.u32 %s115, 1
        %s329 = smul.addr %s328, 128
        %s330 = scalar_lea.vmem [#allocation3], %s329
        %p331 = pneg %p128
        %p332 = pneg %p125
        %p333 = pneg %p158
        %p334 = pneg %p155
        %s335 = sand.u32 %s145, 1
        %s336 = scalar_lea.sflag [#allocation5], %s335
        %s337 = sand.u32 %s145, 1
        %s338 = smul.addr %s337, 64
        %s339 = scalar_lea.vmem [#allocation4], %s338
        %s340 = smul.u32 4, %s24
        %p341 = scmp.lt.s32.totalorder %s23, 1
        %s342 = scalar_select %p341, %s23, 1
        %p343 = scmp.lt.s32.totalorder %s340, 7
        %s344 = scalar_select %p343, %s340, 7
        %s345 = smul.addr %s342, 8
        %s346 = sadd.s32 %s344, %s345
        %s347 = smul.addr %s346, 8
        %s348 = scalar_lea.vmem %s0, %s347
        %s349 = smul.u32 4, %s24
        %s350 = smul.u32 2, %s25
        %s351 = smul.u32 4, %s24
        %s352 = smul.u32 2, %s25
        %p354 = scmp.eq.s32.totalorder %s25, 0
        // Predicated region
        $region75: #{gpt_forward.13} parent=69 // pred_check
          %p355 = pneg %p354
        $region76: #{gpt_forward.13} parent=69 // pred_check_branch
          %357 = sbr.rel (%p355) target = $region78
        $region77: #{gpt_forward.13} parent=69 // pred_region
          %v358 = vld [vmem:[%s348] sm:$0xff]
          %v359 = vld [vmem:[%s348 + $0x8] sm:$0xff]
          %v360 = vld [vmem:[%s348 + $0x10] sm:$0xff]
          %v361 = vld [vmem:[%s348 + $0x18] sm:$0xff]
          %v362 = vld [vmem:[%s1] sm:$0x1]
          %v363 = vld [vmem:[%s2] sm:$0x1]
          %364 = vadd.xlane.f32.xlu0 %v358
          %v365 = vpop.xlane.xlu0 %364
          %366 = vadd.xlane.f32.xlu0 %v359
          %v367 = vpop.xlane.xlu0 %366
          %368 = vadd.xlane.f32.xlu0 %v360
          %v369 = vpop.xlane.xlu0 %368
          %370 = vadd.xlane.f32.xlu0 %v361
          %v371 = vpop.xlane.xlu0 %370
          %v372 = vrcp.pop 128.0
          %v373 = vmul.f32 %v365, %v372
          %v374 = vmul.f32 %v367, %v372
          %v375 = vmul.f32 %v369, %v372
          %v376 = vmul.f32 %v371, %v372
          %v377 = vsub.f32 %v358, %v373
          %v378 = vsub.f32 %v359, %v374
          %v379 = vsub.f32 %v360, %v375
          %v380 = vsub.f32 %v361, %v376
          %v381 = vmul.f32 %v377, %v377
          %v382 = vmul.f32 %v378, %v378
          %v383 = vmul.f32 %v379, %v379
          %v384 = vmul.f32 %v380, %v380
          %385 = vadd.xlane.f32.xlu0 %v381
          %v386 = vpop.xlane.xlu0 %385
          %387 = vadd.xlane.f32.xlu0 %v382
          %v388 = vpop.xlane.xlu0 %387
          %389 = vadd.xlane.f32.xlu0 %v383
          %v390 = vpop.xlane.xlu0 %389
          %391 = vadd.xlane.f32.xlu0 %v384
          %v392 = vpop.xlane.xlu0 %391
          %v393 = vmul.f32 %v386, %v372
          %v394 = vmul.f32 %v388, %v372
          %v395 = vmul.f32 %v390, %v372
          %v396 = vmul.f32 %v392, %v372
          %v397 = vadd.f32 %v393, 1e-05
          %v398 = vadd.f32 %v394, 1e-05
          %v399 = vadd.f32 %v395, 1e-05
          %v400 = vadd.f32 %v396, 1e-05
          %v401 = vrsqrt.pop %v397
          %v402 = vrsqrt.pop %v398
          %v403 = vrsqrt.pop %v399
          %v404 = vrsqrt.pop %v400
          %v405 = vmul.f32 %v377, %v401
          %v406 = vmul.f32 %v378, %v402
          %v407 = vmul.f32 %v379, %v403
          %v408 = vmul.f32 %v380, %v404
          %v410 = vlaneseq
          %v411 = vshrl.u32 %v410, 7
          %v412 = vsub.s32 0, %v411
          %v413 = vrot.slane %v362, %v412
          %v415 = vmul.f32 %v405, %v413
          %v416 = vmul.f32 %v406, %v413
          %v417 = vmul.f32 %v407, %v413
          %v418 = vmul.f32 %v408, %v413
          %v420 = vlaneseq
          %v421 = vshrl.u32 %v420, 7
          %v422 = vsub.s32 0, %v421
          %v423 = vrot.slane %v363, %v422
          %v425 = vadd.f32 %v415, %v423
          %v426 = vadd.f32 %v416, %v423
          %v427 = vadd.f32 %v417, %v423
          %v428 = vadd.f32 %v418, %v423
          %v429 = vpack.c.bf16 %v426, %v425
          %v430 = vpack.c.bf16 %v428, %v427
          %431 = vst [vmem:[#allocation2] sm:$0xff] %v429
          %432 = vst [vmem:[#allocation2 + $0x8] sm:$0xff] %v430
        $region78: #{gpt_forward.13} parent=69 // pred_fallthru
          _
        %v433 = vld [vmem:[#allocation2] sm:$0xff]
        %v434 = vld [vmem:[#allocation2 + $0x8] sm:$0xff]
        %v435 = vld [vmem:[%s308] sm:$0xff]
        %v436 = vld [vmem:[%s308 + $0x8] sm:$0xff]
        %v437 = vld [vmem:[%s308 + $0x10] sm:$0xff]
        %v438 = vld [vmem:[%s308 + $0x18] sm:$0xff]
        %v439 = vld [vmem:[%s308 + $0x20] sm:$0xff]
        %v440 = vld [vmem:[%s308 + $0x28] sm:$0xff]
        %v441 = vld [vmem:[%s308 + $0x30] sm:$0xff]
        %v442 = vld [vmem:[%s308 + $0x38] sm:$0xff]
        %v443 = vld [vmem:[%s308 + $0x40] sm:$0xff]
        %v444 = vld [vmem:[%s308 + $0x48] sm:$0xff]
        %v445 = vld [vmem:[%s308 + $0x50] sm:$0xff]
        %v446 = vld [vmem:[%s308 + $0x58] sm:$0xff]
        %v447 = vld [vmem:[%s308 + $0x60] sm:$0xff]
        %v448 = vld [vmem:[%s308 + $0x68] sm:$0xff]
        %v449 = vld [vmem:[%s308 + $0x70] sm:$0xff]
        %v450 = vld [vmem:[%s308 + $0x78] sm:$0xff]
        %v467 = vunpack.c.l.b16 %v435
        %v468 = vunpack.c.h.b16 %v435
        %v469 = vunpack.c.l.b16 %v436
        %v470 = vunpack.c.h.b16 %v436
        %v471 = vunpack.c.l.b16 %v437
        %v472 = vunpack.c.h.b16 %v437
        %v473 = vunpack.c.l.b16 %v438
        %v474 = vunpack.c.h.b16 %v438
        %v475 = vunpack.c.l.b16 %v439
        %v476 = vunpack.c.h.b16 %v439
        %v477 = vunpack.c.l.b16 %v440
        %v478 = vunpack.c.h.b16 %v440
        %v479 = vunpack.c.l.b16 %v441
        %v480 = vunpack.c.h.b16 %v441
        %v481 = vunpack.c.l.b16 %v442
        %v482 = vunpack.c.h.b16 %v442
        %v483 = vunpack.c.l.b16 %v443
        %v484 = vunpack.c.h.b16 %v443
        %v485 = vunpack.c.l.b16 %v444
        %v486 = vunpack.c.h.b16 %v444
        %v487 = vunpack.c.l.b16 %v445
        %v488 = vunpack.c.h.b16 %v445
        %v489 = vunpack.c.l.b16 %v446
        %v490 = vunpack.c.h.b16 %v446
        %v491 = vunpack.c.l.b16 %v447
        %v492 = vunpack.c.h.b16 %v447
        %v493 = vunpack.c.l.b16 %v448
        %v494 = vunpack.c.h.b16 %v448
        %v495 = vunpack.c.l.b16 %v449
        %v496 = vunpack.c.h.b16 %v449
        %v497 = vunpack.c.l.b16 %v450
        %v498 = vunpack.c.h.b16 %v450
        %v499 = vpack.c.b16 %v469, %v467
        %v500 = vpack.c.b16 %v470, %v468
        %v501 = vpack.c.b16 %v473, %v471
        %v502 = vpack.c.b16 %v474, %v472
        %v503 = vpack.c.b16 %v477, %v475
        %v504 = vpack.c.b16 %v478, %v476
        %v505 = vpack.c.b16 %v481, %v479
        %v506 = vpack.c.b16 %v482, %v480
        %v507 = vpack.c.b16 %v485, %v483
        %v508 = vpack.c.b16 %v486, %v484
        %v509 = vpack.c.b16 %v489, %v487
        %v510 = vpack.c.b16 %v490, %v488
        %v511 = vpack.c.b16 %v493, %v491
        %v512 = vpack.c.b16 %v494, %v492
        %v513 = vpack.c.b16 %v497, %v495
        %v514 = vpack.c.b16 %v498, %v496
        %531 = vmatprep.subr.bf16.mxu0 %v500
        %532 = vmatpush1.bf16.msra.mxu0 %v499
        %533 = vmatprep.subr.bf16.mxu0 %v502
        %534 = vmatpush1.bf16.msra.mxu0 %v501
        %535 = vmatprep.subr.bf16.mxu0 %v504
        %536 = vmatpush1.bf16.msra.mxu0 %v503
        %537 = vmatprep.subr.bf16.mxu0 %v506
        %538 = vmatpush1.bf16.msra.mxu0 %v505
        %539 = vmatprep.subr.bf16.mxu0 %v508
        %540 = vmatpush1.bf16.msra.mxu0 %v507
        %541 = vmatprep.subr.bf16.mxu0 %v510
        %542 = vmatpush1.bf16.msra.mxu0 %v509
        %543 = vmatprep.subr.bf16.mxu0 %v512
        %544 = vmatpush1.bf16.msra.mxu0 %v511
        %545 = vmatprep.subr.bf16.mxu0 %v514
        %546 = vmatpush1.bf16.msra.mxu0 %v513
        %547 = vmatprep.subr.bf16.mxu0 0
        %548 = vmatpush1.bf16.msra.mxu0 0
        %549 = vmatprep.subr.bf16.mxu0 0
        %550 = vmatpush1.bf16.msra.mxu0 0
        %551 = vmatprep.subr.bf16.mxu0 0
        %552 = vmatpush1.bf16.msra.mxu0 0
        %553 = vmatprep.subr.bf16.mxu0 0
        %554 = vmatpush1.bf16.msra.mxu0 0
        %555 = vmatprep.subr.bf16.mxu0 0
        %556 = vmatpush1.bf16.msra.mxu0 0
        %557 = vmatprep.subr.bf16.mxu0 0
        %558 = vmatpush1.bf16.msra.mxu0 0
        %559 = vmatprep.subr.bf16.mxu0 0
        %560 = vmatpush1.bf16.msra.mxu0 0
        %561 = vmatprep.subr.bf16.mxu0 0
        %562 = vmatpush1.bf16.msra.mxu0 0
        %563 = vmatprep.mubr.bf16.mxu0 0
        %564 = vmatmul.mubr.bf16.gmra.mrb[0].mxu0 %v433
        %v565 = vpop.f32.mrb[0].mxu0
        %v566 = vadd.f32 0.0, %v565
        %v567 = vpop.f32.mrb[0].mxu0
        %v568 = vadd.f32 0.0, %v567
        %v569 = vpop.f32.mrb[0].mxu0
        %v570 = vadd.f32 0.0, %v569
        %v571 = vpop.f32.mrb[0].mxu0
        %v572 = vadd.f32 0.0, %v571
        %573 = vmatprep.mubr.bf16.mxu0 0
        %574 = vmatmul.mubr.bf16.gmra.mrb[0].mxu0 %v434
        %v575 = vpop.f32.mrb[0].mxu0
        %v576 = vadd.f32 0.0, %v575
        %v577 = vpop.f32.mrb[0].mxu0
        %v578 = vadd.f32 0.0, %v577
        %v579 = vpop.f32.mrb[0].mxu0
        %v580 = vadd.f32 0.0, %v579
        %v581 = vpop.f32.mrb[0].mxu0
        %v582 = vadd.f32 0.0, %v581
        %583 = vdwg.mxu0
        %584 = vst [vmem:[%s339] sm:$0xff] %v566
        %585 = vst [vmem:[%s339 + $0x8] sm:$0xff] %v568
        %586 = vst [vmem:[%s339 + $0x10] sm:$0xff] %v570
        %587 = vst [vmem:[%s339 + $0x18] sm:$0xff] %v572
        %588 = vst [vmem:[%s339 + $0x20] sm:$0xff] %v576
        %589 = vst [vmem:[%s339 + $0x28] sm:$0xff] %v578
        %590 = vst [vmem:[%s339 + $0x30] sm:$0xff] %v580
        %591 = vst [vmem:[%s339 + $0x38] sm:$0xff] %v582
        %s592 = sand.u32 %s145, 1
        %s593 = scalar_lea.sflag [#allocation5], %s592
        %s594 = sand.u32 %s145, 1
        %s595 = smul.addr %s594, 64
        %s596 = scalar_lea.vmem [#allocation4], %s595
        // Predicated region
        $region79: #{gpt_forward.13} parent=69 // pred_check
          %p597 = pneg %p155
        $region80: #{gpt_forward.13} parent=69 // pred_check_branch
          %599 = sbr.rel (%p597) target = $region82
        $region81: #{gpt_forward.13} parent=69 // pred_region
          %s600 = smul.u32 4, %s24
          %s601 = smul.u32 2, %s25
          %s603 = ssub.s32 1024, 1024
          %604 = vsyncadd %s593, %s603
          %s605 = smul.addr %s600, 4
          %s606 = sadd.s32 %s601, %s605
          %s607 = smul.addr %s23, 32
          %s608 = sadd.s32 %s606, %s607
          %s609 = smul.addr %s608, 128
          %s610 = scalar_lea.hbm %s4, %s609
          %s611 = sshll.u32 %s596, 4
          %s612 = int_to_ptr.vmem [resolvable:$true] %s611
          %617 = dma.vmem_to_hbm [thread:$0]  %s612, 1024, %s610, %s593, 256, 512, 16
        $region82: #{gpt_forward.13} parent=69 // pred_fallthru
          _
      $region70: #{gpt_forward.13} parent=5 // pred_fallthru
        _
      %p618 = scmp.le.s32.totalorder 2, %s13
      // Predicated region
      $region83: #{gpt_forward.13} parent=5 // pred_check
        %p619 = pneg %p618
      $region84: #{gpt_forward.13} parent=5 // pred_check_branch
        %621 = sbr.rel (%p619) target = $region86
      $region85: #{gpt_forward.13} parent=5 // pred_region
        %s622 = ssub.s32 %s13, 2
        // Predicated region
        $region87: #{gpt_forward.13} parent=85 // pred_check
          %p623 = pneg %p161
        $region88: #{gpt_forward.13} parent=85 // pred_check_branch
          %625 = sbr.rel (%p623) target = $region90
        $region89: #{gpt_forward.13} parent=85 // pred_region
          %s626 = sand.u32 %s146, 1
          %s627 = scalar_lea.sflag [#allocation5], %s626
          %s628 = sand.u32 %s146, 1
          %s629 = smul.addr %s628, 64
          %s630 = scalar_lea.vmem [#allocation4], %s629
          %631 = dma.done %s627, 1024
        $region90: #{gpt_forward.13} parent=85 // pred_fallthru
          _
      $region86: #{gpt_forward.13} parent=5 // pred_fallthru
        _
    $region6: #{gpt_forward.13} parent=1 // loop_footer
      %s17 = sadd.s32 1, %s13
    $region7: #{gpt_forward.13} parent=1 // loop_footer_branch
      %12 = sbr.rel target = $region3
    $region8: #{gpt_forward.13} parent=1 // loop_exit
      _
    %632 = vsyncpa [#allocation5], 1
    %s633 = scalar_lea.sflag [#allocation5], 1
    %634 = vsyncpa %s633, 1

// kernel: gpt_forward.7
$region0: #{gpt_forward.7}
  #allocation0 [shape = 'u32[]', space=smem, size = 0x4, offset = 0x4, fixed_abs, tag = 'smem constant byte address 0x4 - core index']
  #allocation1 [shape = 'u32[144,128]{1,0:T(1,128)}', space=vmem, size = 0x12000, scoped, tag = 'internal scratch']
  %s0 = inlined_call_operand.vmem [shape: f32[2,64,128], index: 0, kind: input, shape index: {}]
  %s1 = inlined_call_operand.vmem [shape: f32[1,128], index: 1, kind: input, shape index: {}]
  %s2 = inlined_call_operand.vmem [shape: f32[1,128], index: 2, kind: input, shape index: {}]
  %s3 = inlined_call_operand.vmem [shape: bf16[128,384], index: 3, kind: input, shape index: {}]
  %s4 = inlined_call_operand.vmem [shape: f32[1,384], index: 4, kind: input, shape index: {}]
  %s5 = inlined_call_operand.vmem [shape: bf16[2,4,64,32], index: 5, kind: output, shape index: {0}]
  %s6 = inlined_call_operand.vmem [shape: bf16[2,4,64,32], index: 6, kind: output, shape index: {1}]
  %s7 = inlined_call_operand.vmem [shape: bf16[2,4,64,32], index: 7, kind: output, shape index: {2}]
  %8 = xla_tuple %s5, %s6, %s7
  %s9 = sld [smem:[#allocation0]]
  $region180: #{gpt_forward.7} parent=0
    _
  %s11 = ssub.s32 1, %s9
  %s12 = scalar_select 0, %s11, %s9
  $region1: #{gpt_forward.7} parent=0
    #allocation2 [shape = 'u8[65536]{0}', space=vmem, size = 0x10000, scoped, tag = 'output window, operand 0']
    #allocation3 [shape = 'u8[65536]{0}', space=vmem, size = 0x10000, scoped, tag = 'output window, operand 1']
    #allocation4 [shape = 'u8[65536]{0}', space=vmem, size = 0x10000, scoped, tag = 'output window, operand 2']
    loop: start=0, step=1, limit=6
    $region2: #{gpt_forward.7} parent=1 // loop_pre_header
      _
    $region3: #{gpt_forward.7} parent=1 // loop_header
      %s14 = sphi 0, %s18
      %p15 = scmp.ge.s32.totalorder %s14, 6
      %s21 = sphi 0, %s33
      %s22 = sphi 0, %s29
      %s23 = sphi 0, %s21
      %s24 = sphi 0, %s22
      %s25 = sphi 0, %s23
      %s26 = sphi 0, %s24
      %s38 = sphi 0, %s40
      %s41 = sphi 0, %s38
      %s42 = sphi 0, %s41
      %s58 = sphi 0, %s42
      %s62 = sphi 0, %s62
      %s64 = sphi 0, %s62
      %s65 = sphi 0, %s64
      %s79 = sphi 0, %s65
      %s83 = sphi 0, %s83
      %s85 = sphi 0, %s83
      %s86 = sphi 0, %s85
      %s100 = sphi 0, %s86
      %s104 = sphi 0, %s104
      %s106 = sphi 0, %s104
      %s107 = sphi 0, %s106
      %s121 = sphi 0, %s107
      %s125 = sphi 0, %s125
      %s127 = sphi 0, %s125
      %s128 = sphi 0, %s127
      %s142 = sphi 0, %s128
      %s150 = sphi 0, %s152
      %s153 = sphi 0, %s150
      %s154 = sphi 0, %s153
      %s170 = sphi 0, %s154
      %s178 = sphi 0, %s180
      %s181 = sphi 0, %s178
      %s182 = sphi 0, %s181
      %s198 = sphi 0, %s182
      %s206 = sphi 0, %s208
      %s209 = sphi 0, %s206
      %s210 = sphi 0, %s209
      %s226 = sphi 0, %s210
    $region4: #{gpt_forward.7} parent=1 // loop_header_branch
      %17 = sbr.rel (%p15) target = $region8
    $region5: #{gpt_forward.7} parent=1 // loop_body
      %s19 = ssub.s32 %s14, 1
      %s20 = ssub.s32 %s14, 2
      %s27 = sadd.s32 1, %s22
      %p28 = scmp.ge.s32.totalorder %s27, 2
      %s29 = scalar_select %p28, 0, %s27
      %s30 = sadd.s32 1, %s21
      %s31 = scalar_select %p28, %s30, %s21
      %p32 = scmp.ge.s32.totalorder %s31, 2
      %s33 = scalar_select %p32, 0, %s31
      %s34 = ssub.s32 %s21, %s33
      %s35 = ssub.s32 %s22, %s29
      %s36 = sor.u32 %s34, %s35
      %p37 = scmp.eq.s32.totalorder %s36, 0
      %s39 = sadd.s32 %s38, 1
      %s40 = scalar_select %p37, %s38, %s39
      %p43 = pneg %p37
      %p44 = scmp.eq.s32.totalorder %s14, 3
      %p45 = por %p43, %p44
      %p46 = scmp.ne.s32.totalorder %s38, %s41
      %p47 = scmp.eq.s32.totalorder %s14, 0
      %p48 = por %p46, %p47
      %p49 = scmp.ne.s32.totalorder %s38, %s41
      %p50 = scmp.eq.s32.totalorder %s19, 3
      %p51 = por %p49, %p50
      %p52 = scmp.ne.s32.totalorder %s41, %s42
      %p53 = scmp.eq.s32.totalorder %s19, 0
      %p54 = por %p52, %p53
      %p55 = scmp.ne.s32.totalorder %s41, %s42
      %p56 = scmp.eq.s32.totalorder %s20, 3
      %p57 = por %p55, %p56
      %p59 = scmp.ne.s32.totalorder %s42, %s58
      %p60 = scmp.eq.s32.totalorder %s20, 0
      %p61 = por %p59, %p60
      %s63 = sadd.s32 %s62, 1
      %p66 = scmp.eq.s32.totalorder %s14, 3
      %p67 = scmp.ne.s32.totalorder %s62, %s64
      %p68 = scmp.eq.s32.totalorder %s14, 0
      %p69 = por %p67, %p68
      %p70 = scmp.ne.s32.totalorder %s62, %s64
      %p71 = scmp.eq.s32.totalorder %s19, 3
      %p72 = por %p70, %p71
      %p73 = scmp.ne.s32.totalorder %s64, %s65
      %p74 = scmp.eq.s32.totalorder %s19, 0
      %p75 = por %p73, %p74
      %p76 = scmp.ne.s32.totalorder %s64, %s65
      %p77 = scmp.eq.s32.totalorder %s20, 3
      %p78 = por %p76, %p77
      %p80 = scmp.ne.s32.totalorder %s65, %s79
      %p81 = scmp.eq.s32.totalorder %s20, 0
      %p82 = por %p80, %p81
      %s84 = sadd.s32 %s83, 1
      %p87 = scmp.eq.s32.totalorder %s14, 3
      %p88 = scmp.ne.s32.totalorder %s83, %s85
      %p89 = scmp.eq.s32.totalorder %s14, 0
      %p90 = por %p88, %p89
      %p91 = scmp.ne.s32.totalorder %s83, %s85
      %p92 = scmp.eq.s32.totalorder %s19, 3
      %p93 = por %p91, %p92
      %p94 = scmp.ne.s32.totalorder %s85, %s86
      %p95 = scmp.eq.s32.totalorder %s19, 0
      %p96 = por %p94, %p95
      %p97 = scmp.ne.s32.totalorder %s85, %s86
      %p98 = scmp.eq.s32.totalorder %s20, 3
      %p99 = por %p97, %p98
      %p101 = scmp.ne.s32.totalorder %s86, %s100
      %p102 = scmp.eq.s32.totalorder %s20, 0
      %p103 = por %p101, %p102
      %s105 = sadd.s32 %s104, 1
      %p108 = scmp.eq.s32.totalorder %s14, 3
      %p109 = scmp.ne.s32.totalorder %s104, %s106
      %p110 = scmp.eq.s32.totalorder %s14, 0
      %p111 = por %p109, %p110
      %p112 = scmp.ne.s32.totalorder %s104, %s106
      %p113 = scmp.eq.s32.totalorder %s19, 3
      %p114 = por %p112, %p113
      %p115 = scmp.ne.s32.totalorder %s106, %s107
      %p116 = scmp.eq.s32.totalorder %s19, 0
      %p117 = por %p115, %p116
      %p118 = scmp.ne.s32.totalorder %s106, %s107
      %p119 = scmp.eq.s32.totalorder %s20, 3
      %p120 = por %p118, %p119
      %p122 = scmp.ne.s32.totalorder %s107, %s121
      %p123 = scmp.eq.s32.totalorder %s20, 0
      %p124 = por %p122, %p123
      %s126 = sadd.s32 %s125, 1
      %p129 = scmp.eq.s32.totalorder %s14, 3
      %p130 = scmp.ne.s32.totalorder %s125, %s127
      %p131 = scmp.eq.s32.totalorder %s14, 0
      %p132 = por %p130, %p131
      %p133 = scmp.ne.s32.totalorder %s125, %s127
      %p134 = scmp.eq.s32.totalorder %s19, 3
      %p135 = por %p133, %p134
      %p136 = scmp.ne.s32.totalorder %s127, %s128
      %p137 = scmp.eq.s32.totalorder %s19, 0
      %p138 = por %p136, %p137
      %p139 = scmp.ne.s32.totalorder %s127, %s128
      %p140 = scmp.eq.s32.totalorder %s20, 3
      %p141 = por %p139, %p140
      %p143 = scmp.ne.s32.totalorder %s128, %s142
      %p144 = scmp.eq.s32.totalorder %s20, 0
      %p145 = por %p143, %p144
      %s146 = ssub.s32 %s21, %s33
      %s147 = ssub.s32 %s22, %s29
      %s148 = sor.u32 %s146, %s147
      %p149 = scmp.eq.s32.totalorder %s148, 0
      %s151 = sadd.s32 %s150, 1
      %s152 = scalar_select %p149, %s150, %s151
      %p155 = pneg %p149
      %p156 = scmp.eq.s32.totalorder %s14, 3
      %p157 = por %p155, %p156
      %p158 = scmp.ne.s32.totalorder %s150, %s153
      %p159 = scmp.eq.s32.totalorder %s14, 0
      %p160 = por %p158, %p159
      %p161 = scmp.ne.s32.totalorder %s150, %s153
      %p162 = scmp.eq.s32.totalorder %s19, 3
      %p163 = por %p161, %p162
      %p164 = scmp.ne.s32.totalorder %s153, %s154
      %p165 = scmp.eq.s32.totalorder %s19, 0
      %p166 = por %p164, %p165
      %p167 = scmp.ne.s32.totalorder %s153, %s154
      %p168 = scmp.eq.s32.totalorder %s20, 3
      %p169 = por %p167, %p168
      %p171 = scmp.ne.s32.totalorder %s154, %s170
      %p172 = scmp.eq.s32.totalorder %s20, 0
      %p173 = por %p171, %p172
      %s174 = ssub.s32 %s21, %s33
      %s175 = ssub.s32 %s22, %s29
      %s176 = sor.u32 %s174, %s175
      %p177 = scmp.eq.s32.totalorder %s176, 0
      %s179 = sadd.s32 %s178, 1
      %s180 = scalar_select %p177, %s178, %s179
      %p183 = pneg %p177
      %p184 = scmp.eq.s32.totalorder %s14, 3
      %p185 = por %p183, %p184
      %p186 = scmp.ne.s32.totalorder %s178, %s181
      %p187 = scmp.eq.s32.totalorder %s14, 0
      %p188 = por %p186, %p187
      %p189 = scmp.ne.s32.totalorder %s178, %s181
      %p190 = scmp.eq.s32.totalorder %s19, 3
      %p191 = por %p189, %p190
      %p192 = scmp.ne.s32.totalorder %s181, %s182
      %p193 = scmp.eq.s32.totalorder %s19, 0
      %p194 = por %p192, %p193
      %p195 = scmp.ne.s32.totalorder %s181, %s182
      %p196 = scmp.eq.s32.totalorder %s20, 3
      %p197 = por %p195, %p196
      %p199 = scmp.ne.s32.totalorder %s182, %s198
      %p200 = scmp.eq.s32.totalorder %s20, 0
      %p201 = por %p199, %p200
      %s202 = ssub.s32 %s21, %s33
      %s203 = ssub.s32 %s22, %s29
      %s204 = sor.u32 %s202, %s203
      %p205 = scmp.eq.s32.totalorder %s204, 0
      %s207 = sadd.s32 %s206, 1
      %s208 = scalar_select %p205, %s206, %s207
      %p211 = pneg %p205
      %p212 = scmp.eq.s32.totalorder %s14, 3
      %p213 = por %p211, %p212
      %p214 = scmp.ne.s32.totalorder %s206, %s209
      %p215 = scmp.eq.s32.totalorder %s14, 0
      %p216 = por %p214, %p215
      %p217 = scmp.ne.s32.totalorder %s206, %s209
      %p218 = scmp.eq.s32.totalorder %s19, 3
      %p219 = por %p217, %p218
      %p220 = scmp.ne.s32.totalorder %s209, %s210
      %p221 = scmp.eq.s32.totalorder %s19, 0
      %p222 = por %p220, %p221
      %p223 = scmp.ne.s32.totalorder %s209, %s210
      %p224 = scmp.eq.s32.totalorder %s20, 3
      %p225 = por %p223, %p224
      %p227 = scmp.ne.s32.totalorder %s210, %s226
      %p228 = scmp.eq.s32.totalorder %s20, 0
      %p229 = por %p227, %p228
      %p230 = scmp.le.s32.totalorder 1, %s14
      %p231 = scmp.lt.s32.totalorder %s14, 5
      %p232 = pnand %p230, %p231
      %p233 = pneg %p232
      // Predicated region
      $region9: #{gpt_forward.7} parent=5 // pred_check
        _
      $region10: #{gpt_forward.7} parent=5 // pred_check_branch
        %235 = sbr.rel (%p232) target = $region12
      $region11: #{gpt_forward.7} parent=5 // pred_region
        %s236 = ssub.s32 %s14, 1
        // Predicated region
        $region13: #{gpt_forward.7} parent=11 // pred_check
          %p237 = pneg %p75
        $region14: #{gpt_forward.7} parent=11 // pred_check_branch
          %239 = sbr.rel (%p237) target = $region16
        $region15: #{gpt_forward.7} parent=11 // pred_region
          _
        $region16: #{gpt_forward.7} parent=11 // pred_fallthru
          _
        // Predicated region
        $region17: #{gpt_forward.7} parent=11 // pred_check
          %p240 = pneg %p96
        $region18: #{gpt_forward.7} parent=11 // pred_check_branch
          %242 = sbr.rel (%p240) target = $region20
        $region19: #{gpt_forward.7} parent=11 // pred_region
          _
        $region20: #{gpt_forward.7} parent=11 // pred_fallthru
          _
        // Predicated region
        $region21: #{gpt_forward.7} parent=11 // pred_check
          %p243 = pneg %p117
        $region22: #{gpt_forward.7} parent=11 // pred_check_branch
          %245 = sbr.rel (%p243) target = $region24
        $region23: #{gpt_forward.7} parent=11 // pred_region
          _
        $region24: #{gpt_forward.7} parent=11 // pred_fallthru
          _
        // Predicated region
        $region25: #{gpt_forward.7} parent=11 // pred_check
          %p246 = pneg %p138
        $region26: #{gpt_forward.7} parent=11 // pred_check_branch
          %248 = sbr.rel (%p246) target = $region28
        $region27: #{gpt_forward.7} parent=11 // pred_region
          _
        $region28: #{gpt_forward.7} parent=11 // pred_fallthru
          _
      $region12: #{gpt_forward.7} parent=5 // pred_fallthru
        _
      %p249 = scmp.lt.s32.totalorder %s14, 4
      // Predicated region
      $region29: #{gpt_forward.7} parent=5 // pred_check
        %p250 = pneg %p249
      $region30: #{gpt_forward.7} parent=5 // pred_check_branch
        %252 = sbr.rel (%p250) target = $region32
      $region31: #{gpt_forward.7} parent=5 // pred_region
        // Predicated region
        $region33: #{gpt_forward.7} parent=31 // pred_check
          %p253 = pneg %p48
        $region34: #{gpt_forward.7} parent=31 // pred_check_branch
          %255 = sbr.rel (%p253) target = $region36
        $region35: #{gpt_forward.7} parent=31 // pred_region
          %s256 = smul.u32 4, %s22
          %p257 = scmp.lt.s32.totalorder %s21, 1
          %s258 = scalar_select %p257, %s21, 1
          %p259 = scmp.lt.s32.totalorder %s256, 7
          %s260 = scalar_select %p259, %s256, 7
          %s261 = smul.addr %s258, 8
          %s262 = sadd.s32 %s260, %s261
          %s263 = smul.addr %s262, 8
          %s264 = scalar_lea.vmem %s0, %s263
          %s265 = smul.u32 4, %s22
        $region36: #{gpt_forward.7} parent=31 // pred_fallthru
          _
      $region32: #{gpt_forward.7} parent=5 // pred_fallthru
        _
      %p266 = scmp.le.s32.totalorder 1, %s14
      %p267 = scmp.lt.s32.totalorder %s14, 5
      %p268 = pnand %p266, %p267
      %p269 = pneg %p268
      // Predicated region
      $region37: #{gpt_forward.7} parent=5 // pred_check
        _
      $region38: #{gpt_forward.7} parent=5 // pred_check_branch
        %271 = sbr.rel (%p268) target = $region40
      $region39: #{gpt_forward.7} parent=5 // pred_region
        %s272 = ssub.s32 %s14, 1
        %s273 = smul.u32 4, %s24
        %p274 = scmp.lt.s32.totalorder %s23, 1
        %s275 = scalar_select %p274, %s23, 1
        %p276 = scmp.lt.s32.totalorder %s273, 7
        %s277 = scalar_select %p276, %s273, 7
        %s278 = smul.addr %s275, 8
        %s279 = sadd.s32 %s277, %s278
        %s280 = smul.addr %s279, 8
        %s281 = scalar_lea.vmem %s0, %s280
        %p282 = pneg %p54
        %p283 = pneg %p51
        %p284 = pneg %p75
        %p285 = pneg %p72
        %p286 = pneg %p96
        %p287 = pneg %p93
        %p288 = pneg %p117
        %p289 = pneg %p114
        %p290 = pneg %p138
        %p291 = pneg %p135
        %p292 = pneg %p166
        %p293 = pneg %p163
        %s294 = sand.u32 %s153, 1
        %s295 = sand.u32 %s153, 1
        %s296 = smul.addr %s295, 64
        %s297 = scalar_lea.vmem [#allocation2], %s296
        %p298 = pneg %p194
        %p299 = pneg %p191
        %s300 = sand.u32 %s181, 1
        %s301 = sand.u32 %s181, 1
        %s302 = smul.addr %s301, 64
        %s303 = scalar_lea.vmem [#allocation3], %s302
        %p304 = pneg %p222
        %p305 = pneg %p219
        %s306 = sand.u32 %s209, 1
        %s307 = sand.u32 %s209, 1
        %s308 = smul.addr %s307, 64
        %s309 = scalar_lea.vmem [#allocation4], %s308
        %s310 = smul.u32 4, %s24
        %p311 = scmp.lt.s32.totalorder %s23, 1
        %s312 = scalar_select %p311, %s23, 1
        %p313 = scmp.lt.s32.totalorder %s310, 7
        %s314 = scalar_select %p313, %s310, 7
        %s315 = smul.addr %s312, 8
        %s316 = sadd.s32 %s314, %s315
        %s317 = smul.addr %s316, 8
        %s318 = scalar_lea.vmem %s0, %s317
        %s319 = smul.u32 4, %s24
        %s320 = smul.u32 4, %s24
        %s321 = smul.u32 4, %s24
        %s322 = smul.u32 4, %s24
        %v324 = vld [vmem:[%s318] sm:$0xff]
        %v325 = vld [vmem:[%s318 + $0x8] sm:$0xff]
        %v326 = vld [vmem:[%s318 + $0x10] sm:$0xff]
        %v327 = vld [vmem:[%s318 + $0x18] sm:$0xff]
        %v328 = vld [vmem:[%s1] sm:$0x1]
        %v329 = vld [vmem:[%s2] sm:$0x1]
        %330 = vadd.xlane.f32.xlu0 %v324
        %v331 = vpop.xlane.xlu0 %330
        %332 = vadd.xlane.f32.xlu0 %v325
        %v333 = vpop.xlane.xlu0 %332
        %334 = vadd.xlane.f32.xlu0 %v326
        %v335 = vpop.xlane.xlu0 %334
        %336 = vadd.xlane.f32.xlu0 %v327
        %v337 = vpop.xlane.xlu0 %336
        %v338 = vrcp.pop 128.0
        %v339 = vmul.f32 %v331, %v338
        %v340 = vmul.f32 %v333, %v338
        %v341 = vmul.f32 %v335, %v338
        %v342 = vmul.f32 %v337, %v338
        %v343 = vsub.f32 %v324, %v339
        %v344 = vsub.f32 %v325, %v340
        %v345 = vsub.f32 %v326, %v341
        %v346 = vsub.f32 %v327, %v342
        %v347 = vmul.f32 %v343, %v343
        %v348 = vmul.f32 %v344, %v344
        %v349 = vmul.f32 %v345, %v345
        %v350 = vmul.f32 %v346, %v346
        %351 = vadd.xlane.f32.xlu0 %v347
        %v352 = vpop.xlane.xlu0 %351
        %353 = vadd.xlane.f32.xlu0 %v348
        %v354 = vpop.xlane.xlu0 %353
        %355 = vadd.xlane.f32.xlu0 %v349
        %v356 = vpop.xlane.xlu0 %355
        %357 = vadd.xlane.f32.xlu0 %v350
        %v358 = vpop.xlane.xlu0 %357
        %v359 = vmul.f32 %v352, %v338
        %v360 = vmul.f32 %v354, %v338
        %v361 = vmul.f32 %v356, %v338
        %v362 = vmul.f32 %v358, %v338
        %v363 = vadd.f32 %v359, 1e-05
        %v364 = vadd.f32 %v360, 1e-05
        %v365 = vadd.f32 %v361, 1e-05
        %v366 = vadd.f32 %v362, 1e-05
        %v367 = vrsqrt.pop %v363
        %v368 = vrsqrt.pop %v364
        %v369 = vrsqrt.pop %v365
        %v370 = vrsqrt.pop %v366
        %v371 = vmul.f32 %v343, %v367
        %v372 = vmul.f32 %v344, %v368
        %v373 = vmul.f32 %v345, %v369
        %v374 = vmul.f32 %v346, %v370
        %v376 = vlaneseq
        %v377 = vshrl.u32 %v376, 7
        %v378 = vsub.s32 0, %v377
        %v379 = vrot.slane %v328, %v378
        %v381 = vmul.f32 %v371, %v379
        %v382 = vmul.f32 %v372, %v379
        %v383 = vmul.f32 %v373, %v379
        %v384 = vmul.f32 %v374, %v379
        %v386 = vlaneseq
        %v387 = vshrl.u32 %v386, 7
        %v388 = vsub.s32 0, %v387
        %v389 = vrot.slane %v329, %v388
        %v391 = vadd.f32 %v381, %v389
        %v392 = vadd.f32 %v382, %v389
        %v393 = vadd.f32 %v383, %v389
        %v394 = vadd.f32 %v384, %v389
        %v395 = vpack.c.bf16 %v392, %v391
        %v396 = vpack.c.bf16 %v394, %v393
        %v397 = vld [vmem:[%s3] sm:$0xff]
        %v398 = vld [vmem:[%s3 + $0x8] sm:$0xf]
        %v399 = vld [vmem:[%s3 + $0xc] sm:$0xff]
        %v400 = vld [vmem:[%s3 + $0x14] sm:$0xf]
        %v401 = vld [vmem:[%s3 + $0x18] sm:$0xff]
        %v402 = vld [vmem:[%s3 + $0x20] sm:$0xf]
        %v403 = vld [vmem:[%s3 + $0x24] sm:$0xff]
        %v404 = vld [vmem:[%s3 + $0x2c] sm:$0xf]
        %v405 = vld [vmem:[%s3 + $0x30] sm:$0xff]
        %v406 = vld [vmem:[%s3 + $0x38] sm:$0xf]
        %v407 = vld [vmem:[%s3 + $0x3c] sm:$0xff]
        %v408 = vld [vmem:[%s3 + $0x44] sm:$0xf]
        %v409 = vld [vmem:[%s3 + $0x48] sm:$0xff]
        %v410 = vld [vmem:[%s3 + $0x50] sm:$0xf]
        %v411 = vld [vmem:[%s3 + $0x54] sm:$0xff]
        %v412 = vld [vmem:[%s3 + $0x5c] sm:$0xf]
        %v413 = vld [vmem:[%s3 + $0x60] sm:$0xff]
        %v414 = vld [vmem:[%s3 + $0x68] sm:$0xf]
        %v415 = vld [vmem:[%s3 + $0x6c] sm:$0xff]
        %v416 = vld [vmem:[%s3 + $0x74] sm:$0xf]
        %v417 = vld [vmem:[%s3 + $0x78] sm:$0xff]
        %v418 = vld [vmem:[%s3 + $0x80] sm:$0xf]
        %v419 = vld [vmem:[%s3 + $0x84] sm:$0xff]
        %v420 = vld [vmem:[%s3 + $0x8c] sm:$0xf]
        %v421 = vld [vmem:[%s3 + $0x90] sm:$0xff]
        %v422 = vld [vmem:[%s3 + $0x98] sm:$0xf]
        %v423 = vld [vmem:[%s3 + $0x9c] sm:$0xff]
        %v424 = vld [vmem:[%s3 + $0xa4] sm:$0xf]
        %v425 = vld [vmem:[%s3 + $0xa8] sm:$0xff]
        %v426 = vld [vmem:[%s3 + $0xb0] sm:$0xf]
        %v427 = vld [vmem:[%s3 + $0xb4] sm:$0xff]
        %v428 = vld [vmem:[%s3 + $0xbc] sm:$0xf]
        %v429 = vld [vmem:[%s4] sm:$0x7]
        %v431 = vlaneseq
        %v432 = vshrl.u32 %v431, 7
        %v433 = vsub.s32 0, %v432
        %v434 = vrot.slane %v429, %v433
        %v435 = vlaneseq
        %v436 = vshrl.u32 %v435, 7
        %v437 = vsub.s32 1, %v436
        %v438 = vrot.slane %v429, %v437
        %v439 = vlaneseq
        %v440 = vshrl.u32 %v439, 7
        %v441 = vsub.s32 2, %v440
        %v442 = vrot.slane %v429, %v441
        %v478 = vunpack.c.l.b16 %v397
        %v479 = vunpack.c.h.b16 %v397
        %v480 = vunpack.c.l.b16 %v398
        %v481 = vunpack.c.l.b16 %v399
        %v482 = vunpack.c.h.b16 %v399
        %v483 = vunpack.c.l.b16 %v400
        %v484 = vunpack.c.l.b16 %v401
        %v485 = vunpack.c.h.b16 %v401
        %v486 = vunpack.c.l.b16 %v402
        %v487 = vunpack.c.l.b16 %v403
        %v488 = vunpack.c.h.b16 %v403
        %v489 = vunpack.c.l.b16 %v404
        %v490 = vunpack.c.l.b16 %v405
        %v491 = vunpack.c.h.b16 %v405
        %v492 = vunpack.c.l.b16 %v406
        %v493 = vunpack.c.l.b16 %v407
        %v494 = vunpack.c.h.b16 %v407
        %v495 = vunpack.c.l.b16 %v408
        %v496 = vunpack.c.l.b16 %v409
        %v497 = vunpack.c.h.b16 %v409
        %v498 = vunpack.c.l.b16 %v410
        %v499 = vunpack.c.l.b16 %v411
        %v500 = vunpack.c.h.b16 %v411
        %v501 = vunpack.c.l.b16 %v412
        %v502 = vunpack.c.l.b16 %v413
        %v503 = vunpack.c.h.b16 %v413
        %v504 = vunpack.c.l.b16 %v414
        %v505 = vunpack.c.l.b16 %v415
        %v506 = vunpack.c.h.b16 %v415
        %v507 = vunpack.c.l.b16 %v416
        %v508 = vunpack.c.l.b16 %v417
        %v509 = vunpack.c.h.b16 %v417
        %v510 = vunpack.c.l.b16 %v418
        %v511 = vunpack.c.l.b16 %v419
        %v512 = vunpack.c.h.b16 %v419
        %v513 = vunpack.c.l.b16 %v420
        %v514 = vunpack.c.l.b16 %v421
        %v515 = vunpack.c.h.b16 %v421
        %v516 = vunpack.c.l.b16 %v422
        %v517 = vunpack.c.l.b16 %v423
        %v518 = vunpack.c.h.b16 %v423
        %v519 = vunpack.c.l.b16 %v424
        %v520 = vunpack.c.l.b16 %v425
        %v521 = vunpack.c.h.b16 %v425
        %v522 = vunpack.c.l.b16 %v426
        %v523 = vunpack.c.l.b16 %v427
        %v524 = vunpack.c.h.b16 %v427
        %v525 = vunpack.c.l.b16 %v428
        %v526 = vpack.c.b16 %v481, %v478
        %v527 = vpack.c.b16 %v482, %v479
        %v528 = vpack.c.b16 %v483, %v480
        %v529 = vpack.c.b16 %v487, %v484
        %v530 = vpack.c.b16 %v488, %v485
        %v531 = vpack.c.b16 %v489, %v486
        %v532 = vpack.c.b16 %v493, %v490
        %v533 = vpack.c.b16 %v494, %v491
        %v534 = vpack.c.b16 %v495, %v492
        %v535 = vpack.c.b16 %v499, %v496
        %v536 = vpack.c.b16 %v500, %v497
        %v537 = vpack.c.b16 %v501, %v498
        %v538 = vpack.c.b16 %v505, %v502
        %v539 = vpack.c.b16 %v506, %v503
        %v540 = vpack.c.b16 %v507, %v504
        %v541 = vpack.c.b16 %v511, %v508
        %v542 = vpack.c.b16 %v512, %v509
        %v543 = vpack.c.b16 %v513, %v510
        %v544 = vpack.c.b16 %v517, %v514
        %v545 = vpack.c.b16 %v518, %v515
        %v546 = vpack.c.b16 %v519, %v516
        %v547 = vpack.c.b16 %v523, %v520
        %v548 = vpack.c.b16 %v524, %v521
        %v549 = vpack.c.b16 %v525, %v522
        %574 = vmatprep.subr.bf16.mxu0 %v527
        %575 = vmatpush1.bf16.msra.mxu0 %v526
        %576 = vmatprep.subr.bf16.mxu0 %v530
        %577 = vmatpush1.bf16.msra.mxu0 %v529
        %578 = vmatprep.subr.bf16.mxu0 %v533
        %579 = vmatpush1.bf16.msra.mxu0 %v532
        %580 = vmatprep.subr.bf16.mxu0 %v536
        %581 = vmatpush1.bf16.msra.mxu0 %v535
        %582 = vmatprep.subr.bf16.mxu0 %v539
        %583 = vmatpush1.bf16.msra.mxu0 %v538
        %584 = vmatprep.subr.bf16.mxu0 %v542
        %585 = vmatpush1.bf16.msra.mxu0 %v541
        %586 = vmatprep.subr.bf16.mxu0 %v545
        %587 = vmatpush1.bf16.msra.mxu0 %v544
        %588 = vmatprep.subr.bf16.mxu0 %v548
        %589 = vmatpush1.bf16.msra.mxu0 %v547
        %590 = vmatprep.subr.bf16.mxu0 0
        %591 = vmatpush1.bf16.msra.mxu0 0
        %592 = vmatprep.subr.bf16.mxu0 0
        %593 = vmatpush1.bf16.msra.mxu0 0
        %594 = vmatprep.subr.bf16.mxu0 0
        %595 = vmatpush1.bf16.msra.mxu0 0
        %596 = vmatprep.subr.bf16.mxu0 0
        %597 = vmatpush1.bf16.msra.mxu0 0
        %598 = vmatprep.subr.bf16.mxu0 0
        %599 = vmatpush1.bf16.msra.mxu0 0
        %600 = vmatprep.subr.bf16.mxu0 0
        %601 = vmatpush1.bf16.msra.mxu0 0
        %602 = vmatprep.subr.bf16.mxu0 0
        %603 = vmatpush1.bf16.msra.mxu0 0
        %604 = vmatprep.subr.bf16.mxu0 0
        %605 = vmatpush1.bf16.msra.mxu0 0
        %606 = vmatprep.mubr.bf16.mxu0 0
        %607 = vmatmul.mubr.bf16.gmra.mrb[0].mxu0 %v395
        %v608 = vpop.f32.mrb[0].mxu0
        %v609 = vadd.f32 %v434, %v608
        %v610 = vpop.f32.mrb[0].mxu0
        %v611 = vadd.f32 %v438, %v610
        %v612 = vpop.f32.mrb[0].mxu0
        %v613 = vadd.f32 %v434, %v612
        %v614 = vpop.f32.mrb[0].mxu0
        %v615 = vadd.f32 %v438, %v614
        %616 = vmatprep.mubr.bf16.mxu0 0
        %617 = vmatmul.mubr.bf16.gmra.mrb[0].mxu0 %v396
        %v618 = vpop.f32.mrb[0].mxu0
        %v619 = vadd.f32 %v434, %v618
        %v620 = vpop.f32.mrb[0].mxu0
        %v621 = vadd.f32 %v438, %v620
        %v622 = vpop.f32.mrb[0].mxu0
        %v623 = vadd.f32 %v434, %v622
        %v624 = vpop.f32.mrb[0].mxu0
        %v625 = vadd.f32 %v438, %v624
        %626 = vdwg.mxu0
        %627 = vmatprep.subr.bf16.mxu0 0
        %628 = vmatpush1.bf16.msra.mxu0 %v528
        %629 = vmatprep.subr.bf16.mxu0 0
        %630 = vmatpush1.bf16.msra.mxu0 %v531
        %631 = vmatprep.subr.bf16.mxu0 0
        %632 = vmatpush1.bf16.msra.mxu0 %v534
        %633 = vmatprep.subr.bf16.mxu0 0
        %634 = vmatpush1.bf16.msra.mxu0 %v537
        %635 = vmatprep.subr.bf16.mxu0 0
        %636 = vmatpush1.bf16.msra.mxu0 %v540
        %637 = vmatprep.subr.bf16.mxu0 0
        %638 = vmatpush1.bf16.msra.mxu0 %v543
        %639 = vmatprep.subr.bf16.mxu0 0
        %640 = vmatpush1.bf16.msra.mxu0 %v546
        %641 = vmatprep.subr.bf16.mxu0 0
        %642 = vmatpush1.bf16.msra.mxu0 %v549
        %643 = vmatprep.subr.bf16.mxu0 0
        %644 = vmatpush1.bf16.msra.mxu0 0
        %645 = vmatprep.subr.bf16.mxu0 0
        %646 = vmatpush1.bf16.msra.mxu0 0
        %647 = vmatprep.subr.bf16.mxu0 0
        %648 = vmatpush1.bf16.msra.mxu0 0
        %649 = vmatprep.subr.bf16.mxu0 0
        %650 = vmatpush1.bf16.msra.mxu0 0
        %651 = vmatprep.subr.bf16.mxu0 0
        %652 = vmatpush1.bf16.msra.mxu0 0
        %653 = vmatprep.subr.bf16.mxu0 0
        %654 = vmatpush1.bf16.msra.mxu0 0
        %655 = vmatprep.subr.bf16.mxu0 0
        %656 = vmatpush1.bf16.msra.mxu0 0
        %657 = vmatprep.subr.bf16.mxu0 0
        %658 = vmatpush1.bf16.msra.mxu0 0
        %659 = vmatprep.mubr.bf16.mxu0 0
        %660 = vmatmul.mubr.bf16.gmra.mrb[0].mxu0 %v395
        %v661 = vpop.f32.mrb[0].mxu0
        %v662 = vadd.f32 %v442, %v661
        %v663 = vpop.f32.mrb[0].mxu0
        %v664 = vpop.f32.mrb[0].mxu0
        %v665 = vadd.f32 %v442, %v664
        %v666 = vpop.f32.mrb[0].mxu0
        %667 = vmatprep.mubr.bf16.mxu0 0
        %668 = vmatmul.mubr.bf16.gmra.mrb[0].mxu0 %v396
        %v669 = vpop.f32.mrb[0].mxu0
        %v670 = vadd.f32 %v442, %v669
        %v671 = vpop.f32.mrb[0].mxu0
        %v672 = vpop.f32.mrb[0].mxu0
        %v673 = vadd.f32 %v442, %v672
        %v674 = vpop.f32.mrb[0].mxu0
        %675 = vdwg.mxu0
        %v676 = vpack.c.bf16 %v613, %v609
        %v677 = vpack.c.bf16 %v615, %v611
        %v678 = vpack.c.bf16 %v665, %v662
        %v679 = vpack.c.bf16 %v623, %v619
        %v680 = vpack.c.bf16 %v625, %v621
        %v681 = vpack.c.bf16 %v673, %v670
        %v684 = vunpack.c.l.b16 %v676
        %v685 = vunpack.c.h.b16 %v676
        %v686 = vunpack.c.l.b16 %v679
        %v687 = vunpack.c.h.b16 %v679
        %v688 = vpack.c.b16 %v684, %v684
        %v689 = vpack.c.b16 %v685, %v685
        %v690 = vpack.c.b16 %v686, %v686
        %v691 = vpack.c.b16 %v687, %v687
        %vm696 = vcmask 257024
        %697 = vst.msk [vmem:[%s297] sm:$0xf] %vm696, %v688
        %698 = vst.msk [vmem:[%s297 + $0x4] sm:$0xf] %vm696, %v689
        %699 = vst.msk [vmem:[%s297 + $0x8] sm:$0xf] %vm696, %v690
        %700 = vst.msk [vmem:[%s297 + $0xc] sm:$0xf] %vm696, %v691
        %v703 = vunpack.c.l.b16 %v677
        %v704 = vunpack.c.h.b16 %v677
        %v705 = vunpack.c.l.b16 %v680
        %v706 = vunpack.c.h.b16 %v680
        %v707 = vpack.c.b16 %v703, %v703
        %v708 = vpack.c.b16 %v704, %v704
        %v709 = vpack.c.b16 %v705, %v705
        %v710 = vpack.c.b16 %v706, %v706
        %715 = vst.msk [vmem:[%s303] sm:$0xf] %vm696, %v707
        %716 = vst.msk [vmem:[%s303 + $0x4] sm:$0xf] %vm696, %v708
        %717 = vst.msk [vmem:[%s303 + $0x8] sm:$0xf] %vm696, %v709
        %718 = vst.msk [vmem:[%s303 + $0xc] sm:$0xf] %vm696, %v710
        %v721 = vunpack.c.l.b16 %v678
        %v722 = vunpack.c.h.b16 %v678
        %v723 = vunpack.c.l.b16 %v681
        %v724 = vunpack.c.h.b16 %v681
        %v725 = vpack.c.b16 %v721, %v721
        %v726 = vpack.c.b16 %v722, %v722
        %v727 = vpack.c.b16 %v723, %v723
        %v728 = vpack.c.b16 %v724, %v724
        %733 = vst.msk [vmem:[%s309] sm:$0xf] %vm696, %v725
        %734 = vst.msk [vmem:[%s309 + $0x4] sm:$0xf] %vm696, %v726
        %735 = vst.msk [vmem:[%s309 + $0x8] sm:$0xf] %vm696, %v727
        %736 = vst.msk [vmem:[%s309 + $0xc] sm:$0xf] %vm696, %v728
        %737 = vrot.lane.b32.xlu0 %v688, 96
        %v738 = vpop.permute.xlu0 %737
        %739 = vrot.lane.b32.xlu0 %v689, 96
        %v740 = vpop.permute.xlu0 %739
        %741 = vrot.lane.b32.xlu0 %v690, 96
        %v742 = vpop.permute.xlu0 %741
        %743 = vrot.lane.b32.xlu0 %v691, 96
        %v744 = vpop.permute.xlu0 %743
        %s749 = scalar_lea.vmem %s297, 16 [#allocation2]
        %750 = vst.msk [vmem:[%s749] sm:$0xf] %vm696, %v738
        %751 = vst.msk [vmem:[%s749 + $0x4] sm:$0xf] %vm696, %v740
        %752 = vst.msk [vmem:[%s749 + $0x8] sm:$0xf] %vm696, %v742
        %753 = vst.msk [vmem:[%s749 + $0xc] sm:$0xf] %vm696, %v744
        %754 = vrot.lane.b32.xlu0 %v707, 96
        %v755 = vpop.permute.xlu0 %754
        %756 = vrot.lane.b32.xlu0 %v708, 96
        %v757 = vpop.permute.xlu0 %756
        %758 = vrot.lane.b32.xlu0 %v709, 96
        %v759 = vpop.permute.xlu0 %758
        %760 = vrot.lane.b32.xlu0 %v710, 96
        %v761 = vpop.permute.xlu0 %760
        %s766 = scalar_lea.vmem %s303, 16 [#allocation3]
        %767 = vst.msk [vmem:[%s766] sm:$0xf] %vm696, %v755
        %768 = vst.msk [vmem:[%s766 + $0x4] sm:$0xf] %vm696, %v757
        %769 = vst.msk [vmem:[%s766 + $0x8] sm:$0xf] %vm696, %v759
        %770 = vst.msk [vmem:[%s766 + $0xc] sm:$0xf] %vm696, %v761
        %771 = vrot.lane.b32.xlu0 %v725, 96
        %v772 = vpop.permute.xlu0 %771
        %773 = vrot.lane.b32.xlu0 %v726, 96
        %v774 = vpop.permute.xlu0 %773
        %775 = vrot.lane.b32.xlu0 %v727, 96
        %v776 = vpop.permute.xlu0 %775
        %777 = vrot.lane.b32.xlu0 %v728, 96
        %v778 = vpop.permute.xlu0 %777
        %s783 = scalar_lea.vmem %s309, 16 [#allocation4]
        %784 = vst.msk [vmem:[%s783] sm:$0xf] %vm696, %v772
        %785 = vst.msk [vmem:[%s783 + $0x4] sm:$0xf] %vm696, %v774
        %786 = vst.msk [vmem:[%s783 + $0x8] sm:$0xf] %vm696, %v776
        %787 = vst.msk [vmem:[%s783 + $0xc] sm:$0xf] %vm696, %v778
        %788 = vrot.lane.b32.xlu0 %v688, 64
        %v789 = vpop.permute.xlu0 %788
        %790 = vrot.lane.b32.xlu0 %v689, 64
        %v791 = vpop.permute.xlu0 %790
        %792 = vrot.lane.b32.xlu0 %v690, 64
        %v793 = vpop.permute.xlu0 %792
        %794 = vrot.lane.b32.xlu0 %v691, 64
        %v795 = vpop.permute.xlu0 %794
        %s800 = scalar_lea.vmem %s297, 32 [#allocation2]
        %801 = vst.msk [vmem:[%s800] sm:$0xf] %vm696, %v789
        %802 = vst.msk [vmem:[%s800 + $0x4] sm:$0xf] %vm696, %v791
        %803 = vst.msk [vmem:[%s800 + $0x8] sm:$0xf] %vm696, %v793
        %804 = vst.msk [vmem:[%s800 + $0xc] sm:$0xf] %vm696, %v795
        %805 = vrot.lane.b32.xlu0 %v707, 64
        %v806 = vpop.permute.xlu0 %805
        %807 = vrot.lane.b32.xlu0 %v708, 64
        %v808 = vpop.permute.xlu0 %807
        %809 = vrot.lane.b32.xlu0 %v709, 64
        %v810 = vpop.permute.xlu0 %809
        %811 = vrot.lane.b32.xlu0 %v710, 64
        %v812 = vpop.permute.xlu0 %811
        %s817 = scalar_lea.vmem %s303, 32 [#allocation3]
        %818 = vst.msk [vmem:[%s817] sm:$0xf] %vm696, %v806
        %819 = vst.msk [vmem:[%s817 + $0x4] sm:$0xf] %vm696, %v808
        %820 = vst.msk [vmem:[%s817 + $0x8] sm:$0xf] %vm696, %v810
        %821 = vst.msk [vmem:[%s817 + $0xc] sm:$0xf] %vm696, %v812
        %822 = vrot.lane.b32.xlu0 %v725, 64
        %v823 = vpop.permute.xlu0 %822
        %824 = vrot.lane.b32.xlu0 %v726, 64
        %v825 = vpop.permute.xlu0 %824
        %826 = vrot.lane.b32.xlu0 %v727, 64
        %v827 = vpop.permute.xlu0 %826
        %828 = vrot.lane.b32.xlu0 %v728, 64
        %v829 = vpop.permute.xlu0 %828
        %s834 = scalar_lea.vmem %s309, 32 [#allocation4]
        %835 = vst.msk [vmem:[%s834] sm:$0xf] %vm696, %v823
        %836 = vst.msk [vmem:[%s834 + $0x4] sm:$0xf] %vm696, %v825
        %837 = vst.msk [vmem:[%s834 + $0x8] sm:$0xf] %vm696, %v827
        %838 = vst.msk [vmem:[%s834 + $0xc] sm:$0xf] %vm696, %v829
        %839 = vrot.lane.b32.xlu0 %v688, 32
        %v840 = vpop.permute.xlu0 %839
        %841 = vrot.lane.b32.xlu0 %v689, 32
        %v842 = vpop.permute.xlu0 %841
        %843 = vrot.lane.b32.xlu0 %v690, 32
        %v844 = vpop.permute.xlu0 %843
        %845 = vrot.lane.b32.xlu0 %v691, 32
        %v846 = vpop.permute.xlu0 %845
        %s851 = scalar_lea.vmem %s297, 48 [#allocation2]
        %852 = vst.msk [vmem:[%s851] sm:$0xf] %vm696, %v840
        %853 = vst.msk [vmem:[%s851 + $0x4] sm:$0xf] %vm696, %v842
        %854 = vst.msk [vmem:[%s851 + $0x8] sm:$0xf] %vm696, %v844
        %855 = vst.msk [vmem:[%s851 + $0xc] sm:$0xf] %vm696, %v846
        %856 = vrot.lane.b32.xlu0 %v707, 32
        %v857 = vpop.permute.xlu0 %856
        %858 = vrot.lane.b32.xlu0 %v708, 32
        %v859 = vpop.permute.xlu0 %858
        %860 = vrot.lane.b32.xlu0 %v709, 32
        %v861 = vpop.permute.xlu0 %860
        %862 = vrot.lane.b32.xlu0 %v710, 32
        %v863 = vpop.permute.xlu0 %862
        %s868 = scalar_lea.vmem %s303, 48 [#allocation3]
        %869 = vst.msk [vmem:[%s868] sm:$0xf] %vm696, %v857
        %870 = vst.msk [vmem:[%s868 + $0x4] sm:$0xf] %vm696, %v859
        %871 = vst.msk [vmem:[%s868 + $0x8] sm:$0xf] %vm696, %v861
        %872 = vst.msk [vmem:[%s868 + $0xc] sm:$0xf] %vm696, %v863
        %873 = vrot.lane.b32.xlu0 %v725, 32
        %v874 = vpop.permute.xlu0 %873
        %875 = vrot.lane.b32.xlu0 %v726, 32
        %v876 = vpop.permute.xlu0 %875
        %877 = vrot.lane.b32.xlu0 %v727, 32
        %v878 = vpop.permute.xlu0 %877
        %879 = vrot.lane.b32.xlu0 %v728, 32
        %v880 = vpop.permute.xlu0 %879
        %s885 = scalar_lea.vmem %s309, 48 [#allocation4]
        %886 = vst.msk [vmem:[%s885] sm:$0xf] %vm696, %v874
        %887 = vst.msk [vmem:[%s885 + $0x4] sm:$0xf] %vm696, %v876
        %888 = vst.msk [vmem:[%s885 + $0x8] sm:$0xf] %vm696, %v878
        %889 = vst.msk [vmem:[%s885 + $0xc] sm:$0xf] %vm696, %v880
        %s890 = sand.u32 %s153, 1
        %s891 = sand.u32 %s153, 1
        %s892 = smul.addr %s891, 64
        %s893 = scalar_lea.vmem [#allocation2], %s892
        %s894 = sand.u32 %s181, 1
        %s895 = sand.u32 %s181, 1
        %s896 = smul.addr %s895, 64
        %s897 = scalar_lea.vmem [#allocation3], %s896
        %s898 = sand.u32 %s209, 1
        %s899 = sand.u32 %s209, 1
        %s900 = smul.addr %s899, 64
        %s901 = scalar_lea.vmem [#allocation4], %s900
        // Predicated region
        $region41: #{gpt_forward.7} parent=39 // pred_check
          %p902 = pneg %p163
        $region42: #{gpt_forward.7} parent=39 // pred_check_branch
          %904 = sbr.rel (%p902) target = $region44
        $region43: #{gpt_forward.7} parent=39 // pred_region
          %s905 = smul.u32 4, %s24
          %s906 = smul.addr %s23, 32
          %s907 = sadd.s32 %s905, %s906
          %s908 = smul.addr %s907, 4
          %s909 = scalar_lea.vmem %s5, %s908
          // Predicated region
          $region45: #{gpt_forward.7} parent=43 // pred_check
            _
          $region46: #{gpt_forward.7} parent=43 // pred_check_branch
            %911 = sbr.rel (0) target = $region48
          $region47: #{gpt_forward.7} parent=43 // pred_region
            // Predicated region
            $region49: #{gpt_forward.7} parent=47 // pred_check
              _
            $region50: #{gpt_forward.7} parent=47 // pred_check_branch
              %913 = sbr.rel target = $region52
            $region51: #{gpt_forward.7} parent=47 // pred_region
              // Predicated region
              $region64: #{gpt_forward.7} parent=51 // pred_check
                _
              $region65: #{gpt_forward.7} parent=51 // pred_check_branch
                %958 = sbr.rel (0) target = $region67
              $region66: #{gpt_forward.7} parent=51 // pred_region
                loop: start=0, step=1, limit=1
                $region68: #{gpt_forward.7} parent=66 // loop_pre_header
                  _
                $region69: #{gpt_forward.7} parent=66 // loop_header
                  %s960 = sphi 0, %s964
                  %p961 = scmp.ge.s32.totalorder %s960, 1
                  %s965 = sphi %s893, %s893
                  %s966 = sphi %s909, %s909
                $region70: #{gpt_forward.7} parent=66 // loop_header_branch
                  %963 = sbr.rel (%p961) target = $region74
                $region71: #{gpt_forward.7} parent=66 // loop_body
                  _
                $region72: #{gpt_forward.7} parent=66 // loop_footer
                  %s964 = sadd.s32 1, %s960
                $region73: #{gpt_forward.7} parent=66 // loop_footer_branch
                  %959 = sbr.rel target = $region69
                $region74: #{gpt_forward.7} parent=66 // loop_exit
                  _
                loop: start=0, step=1, limit=1
                $region75: #{gpt_forward.7} parent=66 // loop_pre_header
                  _
                $region76: #{gpt_forward.7} parent=66 // loop_header
                  %s969 = sphi 0, %s973
                  %p970 = scmp.ge.s32.totalorder %s969, 1
                  %s974 = sphi %s893, %s893
                  %s975 = sphi %s909, %s909
                $region77: #{gpt_forward.7} parent=66 // loop_header_branch
                  %972 = sbr.rel (%p970) target = $region81
                $region78: #{gpt_forward.7} parent=66 // loop_body
                  %v976 = vld [vmem:[%s974] sm:$0xf]
                  %977 = vst [vmem:[%s975] sm:$0xf] %v976
                  %v978 = vld [vmem:[%s974 + $0x4] sm:$0xf]
                  %979 = vst [vmem:[%s975 + $0x4] sm:$0xf] %v978
                  %v980 = vld [vmem:[%s974 + $0x8] sm:$0xf]
                  %981 = vst [vmem:[%s975 + $0x8] sm:$0xf] %v980
                  %v982 = vld [vmem:[%s974 + $0xc] sm:$0xf]
                  %983 = vst [vmem:[%s975 + $0xc] sm:$0xf] %v982
                  %v984 = vld [vmem:[%s974 + $0x10] sm:$0xf]
                  %985 = vst [vmem:[%s975 + $0x20] sm:$0xf] %v984
                  %v986 = vld [vmem:[%s974 + $0x14] sm:$0xf]
                  %987 = vst [vmem:[%s975 + $0x24] sm:$0xf] %v986
                  %v988 = vld [vmem:[%s974 + $0x18] sm:$0xf]
                  %989 = vst [vmem:[%s975 + $0x28] sm:$0xf] %v988
                  %v990 = vld [vmem:[%s974 + $0x1c] sm:$0xf]
                  %991 = vst [vmem:[%s975 + $0x2c] sm:$0xf] %v990
                  %v992 = vld [vmem:[%s974 + $0x20] sm:$0xf]
                  %993 = vst [vmem:[%s975 + $0x40] sm:$0xf] %v992
                  %v994 = vld [vmem:[%s974 + $0x24] sm:$0xf]
                  %995 = vst [vmem:[%s975 + $0x44] sm:$0xf] %v994
                  %v996 = vld [vmem:[%s974 + $0x28] sm:$0xf]
                  %997 = vst [vmem:[%s975 + $0x48] sm:$0xf] %v996
                  %v998 = vld [vmem:[%s974 + $0x2c] sm:$0xf]
                  %999 = vst [vmem:[%s975 + $0x4c] sm:$0xf] %v998
                  %v1000 = vld [vmem:[%s974 + $0x30] sm:$0xf]
                  %1001 = vst [vmem:[%s975 + $0x60] sm:$0xf] %v1000
                  %v1002 = vld [vmem:[%s974 + $0x34] sm:$0xf]
                  %1003 = vst [vmem:[%s975 + $0x64] sm:$0xf] %v1002
                  %v1004 = vld [vmem:[%s974 + $0x38] sm:$0xf]
                  %1005 = vst [vmem:[%s975 + $0x68] sm:$0xf] %v1004
                  %v1006 = vld [vmem:[%s974 + $0x3c] sm:$0xf]
                  %1007 = vst [vmem:[%s975 + $0x6c] sm:$0xf] %v1006
                $region79: #{gpt_forward.7} parent=66 // loop_footer
                  %s973 = sadd.s32 1, %s969
                $region80: #{gpt_forward.7} parent=66 // loop_footer_branch
                  %968 = sbr.rel target = $region76
                $region81: #{gpt_forward.7} parent=66 // loop_exit
                  _
              $region67: #{gpt_forward.7} parent=51 // pred_fallthru
                _
            $region52: #{gpt_forward.7} parent=47 // pred_fallthru
              _
            // Predicated region
            $region53: #{gpt_forward.7} parent=47 // pred_check
              _
            $region54: #{gpt_forward.7} parent=47 // pred_check_branch
              %915 = sbr.rel (0) target = $region56
            $region55: #{gpt_forward.7} parent=47 // pred_region
              loop: start=0, step=1, limit=1
              $region57: #{gpt_forward.7} parent=55 // loop_pre_header
                _
              $region58: #{gpt_forward.7} parent=55 // loop_header
                %s918 = sphi 0, %s922
                %p919 = scmp.ge.s32.totalorder %s918, 1
                %s923 = sphi %s893, %s893
                %s924 = sphi %s909, %s909
              $region59: #{gpt_forward.7} parent=55 // loop_header_branch
                %921 = sbr.rel (%p919) target = $region63
              $region60: #{gpt_forward.7} parent=55 // loop_body
                %v925 = vld [vmem:[%s923] sm:$0xf]
                %926 = vst [vmem:[%s924] sm:$0xf] %v925
                %v927 = vld [vmem:[%s923 + $0x4] sm:$0xf]
                %928 = vst [vmem:[%s924 + $0x4] sm:$0xf] %v927
                %v929 = vld [vmem:[%s923 + $0x8] sm:$0xf]
                %930 = vst [vmem:[%s924 + $0x8] sm:$0xf] %v929
                %v931 = vld [vmem:[%s923 + $0xc] sm:$0xf]
                %932 = vst [vmem:[%s924 + $0xc] sm:$0xf] %v931
                %v933 = vld [vmem:[%s923 + $0x10] sm:$0xf]
                %934 = vst [vmem:[%s924 + $0x20] sm:$0xf] %v933
                %v935 = vld [vmem:[%s923 + $0x14] sm:$0xf]
                %936 = vst [vmem:[%s924 + $0x24] sm:$0xf] %v935
                %v937 = vld [vmem:[%s923 + $0x18] sm:$0xf]
                %938 = vst [vmem:[%s924 + $0x28] sm:$0xf] %v937
                %v939 = vld [vmem:[%s923 + $0x1c] sm:$0xf]
                %940 = vst [vmem:[%s924 + $0x2c] sm:$0xf] %v939
                %v941 = vld [vmem:[%s923 + $0x20] sm:$0xf]
                %942 = vst [vmem:[%s924 + $0x40] sm:$0xf] %v941
                %v943 = vld [vmem:[%s923 + $0x24] sm:$0xf]
                %944 = vst [vmem:[%s924 + $0x44] sm:$0xf] %v943
                %v945 = vld [vmem:[%s923 + $0x28] sm:$0xf]
                %946 = vst [vmem:[%s924 + $0x48] sm:$0xf] %v945
                %v947 = vld [vmem:[%s923 + $0x2c] sm:$0xf]
                %948 = vst [vmem:[%s924 + $0x4c] sm:$0xf] %v947
                %v949 = vld [vmem:[%s923 + $0x30] sm:$0xf]
                %950 = vst [vmem:[%s924 + $0x60] sm:$0xf] %v949
                %v951 = vld [vmem:[%s923 + $0x34] sm:$0xf]
                %952 = vst [vmem:[%s924 + $0x64] sm:$0xf] %v951
                %v953 = vld [vmem:[%s923 + $0x38] sm:$0xf]
                %954 = vst [vmem:[%s924 + $0x68] sm:$0xf] %v953
                %v955 = vld [vmem:[%s923 + $0x3c] sm:$0xf]
                %956 = vst [vmem:[%s924 + $0x6c] sm:$0xf] %v955
              $region61: #{gpt_forward.7} parent=55 // loop_footer
                %s922 = sadd.s32 1, %s918
              $region62: #{gpt_forward.7} parent=55 // loop_footer_branch
                %917 = sbr.rel target = $region58
              $region63: #{gpt_forward.7} parent=55 // loop_exit
                _
            $region56: #{gpt_forward.7} parent=47 // pred_fallthru
              _
          $region48: #{gpt_forward.7} parent=43 // pred_fallthru
            _
          %1008 = vnop
        $region44: #{gpt_forward.7} parent=39 // pred_fallthru
          _
        // Predicated region
        $region82: #{gpt_forward.7} parent=39 // pred_check
          %p1009 = pneg %p191
        $region83: #{gpt_forward.7} parent=39 // pred_check_branch
          %1011 = sbr.rel (%p1009) target = $region85
        $region84: #{gpt_forward.7} parent=39 // pred_region
          %s1012 = smul.u32 4, %s24
          %s1013 = smul.addr %s23, 32
          %s1014 = sadd.s32 %s1012, %s1013
          %s1015 = smul.addr %s1014, 4
          %s1016 = scalar_lea.vmem %s6, %s1015
          // Predicated region
          $region86: #{gpt_forward.7} parent=84 // pred_check
            _
          $region87: #{gpt_forward.7} parent=84 // pred_check_branch
            %1018 = sbr.rel (0) target = $region89
          $region88: #{gpt_forward.7} parent=84 // pred_region
            // Predicated region
            $region90: #{gpt_forward.7} parent=88 // pred_check
              _
            $region91: #{gpt_forward.7} parent=88 // pred_check_branch
              %1020 = sbr.rel target = $region93
            $region92: #{gpt_forward.7} parent=88 // pred_region
              // Predicated region
              $region105: #{gpt_forward.7} parent=92 // pred_check
                _
              $region106: #{gpt_forward.7} parent=92 // pred_check_branch
                %1065 = sbr.rel (0) target = $region108
              $region107: #{gpt_forward.7} parent=92 // pred_region
                loop: start=0, step=1, limit=1
                $region109: #{gpt_forward.7} parent=107 // loop_pre_header
                  _
                $region110: #{gpt_forward.7} parent=107 // loop_header
                  %s1067 = sphi 0, %s1071
                  %p1068 = scmp.ge.s32.totalorder %s1067, 1
                  %s1072 = sphi %s897, %s897
                  %s1073 = sphi %s1016, %s1016
                $region111: #{gpt_forward.7} parent=107 // loop_header_branch
                  %1070 = sbr.rel (%p1068) target = $region115
                $region112: #{gpt_forward.7} parent=107 // loop_body
                  _
                $region113: #{gpt_forward.7} parent=107 // loop_footer
                  %s1071 = sadd.s32 1, %s1067
                $region114: #{gpt_forward.7} parent=107 // loop_footer_branch
                  %1066 = sbr.rel target = $region110
                $region115: #{gpt_forward.7} parent=107 // loop_exit
                  _
                loop: start=0, step=1, limit=1
                $region116: #{gpt_forward.7} parent=107 // loop_pre_header
                  _
                $region117: #{gpt_forward.7} parent=107 // loop_header
                  %s1076 = sphi 0, %s1080
                  %p1077 = scmp.ge.s32.totalorder %s1076, 1
                  %s1081 = sphi %s897, %s897
                  %s1082 = sphi %s1016, %s1016
                $region118: #{gpt_forward.7} parent=107 // loop_header_branch
                  %1079 = sbr.rel (%p1077) target = $region122
                $region119: #{gpt_forward.7} parent=107 // loop_body
                  %v1083 = vld [vmem:[%s1081] sm:$0xf]
                  %1084 = vst [vmem:[%s1082] sm:$0xf] %v1083
                  %v1085 = vld [vmem:[%s1081 + $0x4] sm:$0xf]
                  %1086 = vst [vmem:[%s1082 + $0x4] sm:$0xf] %v1085
                  %v1087 = vld [vmem:[%s1081 + $0x8] sm:$0xf]
                  %1088 = vst [vmem:[%s1082 + $0x8] sm:$0xf] %v1087
                  %v1089 = vld [vmem:[%s1081 + $0xc] sm:$0xf]
                  %1090 = vst [vmem:[%s1082 + $0xc] sm:$0xf] %v1089
                  %v1091 = vld [vmem:[%s1081 + $0x10] sm:$0xf]
                  %1092 = vst [vmem:[%s1082 + $0x20] sm:$0xf] %v1091
                  %v1093 = vld [vmem:[%s1081 + $0x14] sm:$0xf]
                  %1094 = vst [vmem:[%s1082 + $0x24] sm:$0xf] %v1093
                  %v1095 = vld [vmem:[%s1081 + $0x18] sm:$0xf]
                  %1096 = vst [vmem:[%s1082 + $0x28] sm:$0xf] %v1095
                  %v1097 = vld [vmem:[%s1081 + $0x1c] sm:$0xf]
                  %1098 = vst [vmem:[%s1082 + $0x2c] sm:$0xf] %v1097
                  %v1099 = vld [vmem:[%s1081 + $0x20] sm:$0xf]
                  %1100 = vst [vmem:[%s1082 + $0x40] sm:$0xf] %v1099
                  %v1101 = vld [vmem:[%s1081 + $0x24] sm:$0xf]
                  %1102 = vst [vmem:[%s1082 + $0x44] sm:$0xf] %v1101
                  %v1103 = vld [vmem:[%s1081 + $0x28] sm:$0xf]
                  %1104 = vst [vmem:[%s1082 + $0x48] sm:$0xf] %v1103
                  %v1105 = vld [vmem:[%s1081 + $0x2c] sm:$0xf]
                  %1106 = vst [vmem:[%s1082 + $0x4c] sm:$0xf] %v1105
                  %v1107 = vld [vmem:[%s1081 + $0x30] sm:$0xf]
                  %1108 = vst [vmem:[%s1082 + $0x60] sm:$0xf] %v1107
                  %v1109 = vld [vmem:[%s1081 + $0x34] sm:$0xf]
                  %1110 = vst [vmem:[%s1082 + $0x64] sm:$0xf] %v1109
                  %v1111 = vld [vmem:[%s1081 + $0x38] sm:$0xf]
                  %1112 = vst [vmem:[%s1082 + $0x68] sm:$0xf] %v1111
                  %v1113 = vld [vmem:[%s1081 + $0x3c] sm:$0xf]
                  %1114 = vst [vmem:[%s1082 + $0x6c] sm:$0xf] %v1113
                $region120: #{gpt_forward.7} parent=107 // loop_footer
                  %s1080 = sadd.s32 1, %s1076
                $region121: #{gpt_forward.7} parent=107 // loop_footer_branch
                  %1075 = sbr.rel target = $region117
                $region122: #{gpt_forward.7} parent=107 // loop_exit
                  _
              $region108: #{gpt_forward.7} parent=92 // pred_fallthru
                _
            $region93: #{gpt_forward.7} parent=88 // pred_fallthru
              _
            // Predicated region
            $region94: #{gpt_forward.7} parent=88 // pred_check
              _
            $region95: #{gpt_forward.7} parent=88 // pred_check_branch
              %1022 = sbr.rel (0) target = $region97
            $region96: #{gpt_forward.7} parent=88 // pred_region
              loop: start=0, step=1, limit=1
              $region98: #{gpt_forward.7} parent=96 // loop_pre_header
                _
              $region99: #{gpt_forward.7} parent=96 // loop_header
                %s1025 = sphi 0, %s1029
                %p1026 = scmp.ge.s32.totalorder %s1025, 1
                %s1030 = sphi %s897, %s897
                %s1031 = sphi %s1016, %s1016
              $region100: #{gpt_forward.7} parent=96 // loop_header_branch
                %1028 = sbr.rel (%p1026) target = $region104
              $region101: #{gpt_forward.7} parent=96 // loop_body
                %v1032 = vld [vmem:[%s1030] sm:$0xf]
                %1033 = vst [vmem:[%s1031] sm:$0xf] %v1032
                %v1034 = vld [vmem:[%s1030 + $0x4] sm:$0xf]
                %1035 = vst [vmem:[%s1031 + $0x4] sm:$0xf] %v1034
                %v1036 = vld [vmem:[%s1030 + $0x8] sm:$0xf]
                %1037 = vst [vmem:[%s1031 + $0x8] sm:$0xf] %v1036
                %v1038 = vld [vmem:[%s1030 + $0xc] sm:$0xf]
                %1039 = vst [vmem:[%s1031 + $0xc] sm:$0xf] %v1038
                %v1040 = vld [vmem:[%s1030 + $0x10] sm:$0xf]
                %1041 = vst [vmem:[%s1031 + $0x20] sm:$0xf] %v1040
                %v1042 = vld [vmem:[%s1030 + $0x14] sm:$0xf]
                %1043 = vst [vmem:[%s1031 + $0x24] sm:$0xf] %v1042
                %v1044 = vld [vmem:[%s1030 + $0x18] sm:$0xf]
                %1045 = vst [vmem:[%s1031 + $0x28] sm:$0xf] %v1044
                %v1046 = vld [vmem:[%s1030 + $0x1c] sm:$0xf]
                %1047 = vst [vmem:[%s1031 + $0x2c] sm:$0xf] %v1046
                %v1048 = vld [vmem:[%s1030 + $0x20] sm:$0xf]
                %1049 = vst [vmem:[%s1031 + $0x40] sm:$0xf] %v1048
                %v1050 = vld [vmem:[%s1030 + $0x24] sm:$0xf]
                %1051 = vst [vmem:[%s1031 + $0x44] sm:$0xf] %v1050
                %v1052 = vld [vmem:[%s1030 + $0x28] sm:$0xf]
                %1053 = vst [vmem:[%s1031 + $0x48] sm:$0xf] %v1052
                %v1054 = vld [vmem:[%s1030 + $0x2c] sm:$0xf]
                %1055 = vst [vmem:[%s1031 + $0x4c] sm:$0xf] %v1054
                %v1056 = vld [vmem:[%s1030 + $0x30] sm:$0xf]
                %1057 = vst [vmem:[%s1031 + $0x60] sm:$0xf] %v1056
                %v1058 = vld [vmem:[%s1030 + $0x34] sm:$0xf]
                %1059 = vst [vmem:[%s1031 + $0x64] sm:$0xf] %v1058
                %v1060 = vld [vmem:[%s1030 + $0x38] sm:$0xf]
                %1061 = vst [vmem:[%s1031 + $0x68] sm:$0xf] %v1060
                %v1062 = vld [vmem:[%s1030 + $0x3c] sm:$0xf]
                %1063 = vst [vmem:[%s1031 + $0x6c] sm:$0xf] %v1062
              $region102: #{gpt_forward.7} parent=96 // loop_footer
                %s1029 = sadd.s32 1, %s1025
              $region103: #{gpt_forward.7} parent=96 // loop_footer_branch
                %1024 = sbr.rel target = $region99
              $region104: #{gpt_forward.7} parent=96 // loop_exit
                _
            $region97: #{gpt_forward.7} parent=88 // pred_fallthru
              _
          $region89: #{gpt_forward.7} parent=84 // pred_fallthru
            _
          %1115 = vnop
        $region85: #{gpt_forward.7} parent=39 // pred_fallthru
          _
        // Predicated region
        $region123: #{gpt_forward.7} parent=39 // pred_check
          %p1116 = pneg %p219
        $region124: #{gpt_forward.7} parent=39 // pred_check_branch
          %1118 = sbr.rel (%p1116) target = $region126
        $region125: #{gpt_forward.7} parent=39 // pred_region
          %s1119 = smul.u32 4, %s24
          %s1120 = smul.addr %s23, 32
          %s1121 = sadd.s32 %s1119, %s1120
          %s1122 = smul.addr %s1121, 4
          %s1123 = scalar_lea.vmem %s7, %s1122
          // Predicated region
          $region127: #{gpt_forward.7} parent=125 // pred_check
            _
          $region128: #{gpt_forward.7} parent=125 // pred_check_branch
            %1125 = sbr.rel (0) target = $region130
          $region129: #{gpt_forward.7} parent=125 // pred_region
            // Predicated region
            $region131: #{gpt_forward.7} parent=129 // pred_check
              _
            $region132: #{gpt_forward.7} parent=129 // pred_check_branch
              %1127 = sbr.rel target = $region134
            $region133: #{gpt_forward.7} parent=129 // pred_region
              // Predicated region
              $region146: #{gpt_forward.7} parent=133 // pred_check
                _
              $region147: #{gpt_forward.7} parent=133 // pred_check_branch
                %1172 = sbr.rel (0) target = $region149
              $region148: #{gpt_forward.7} parent=133 // pred_region
                loop: start=0, step=1, limit=1
                $region150: #{gpt_forward.7} parent=148 // loop_pre_header
                  _
                $region151: #{gpt_forward.7} parent=148 // loop_header
                  %s1174 = sphi 0, %s1178
                  %p1175 = scmp.ge.s32.totalorder %s1174, 1
                  %s1179 = sphi %s901, %s901
                  %s1180 = sphi %s1123, %s1123
                $region152: #{gpt_forward.7} parent=148 // loop_header_branch
                  %1177 = sbr.rel (%p1175) target = $region156
                $region153: #{gpt_forward.7} parent=148 // loop_body
                  _
                $region154: #{gpt_forward.7} parent=148 // loop_footer
                  %s1178 = sadd.s32 1, %s1174
                $region155: #{gpt_forward.7} parent=148 // loop_footer_branch
                  %1173 = sbr.rel target = $region151
                $region156: #{gpt_forward.7} parent=148 // loop_exit
                  _
                loop: start=0, step=1, limit=1
                $region157: #{gpt_forward.7} parent=148 // loop_pre_header
                  _
                $region158: #{gpt_forward.7} parent=148 // loop_header
                  %s1183 = sphi 0, %s1187
                  %p1184 = scmp.ge.s32.totalorder %s1183, 1
                  %s1188 = sphi %s901, %s901
                  %s1189 = sphi %s1123, %s1123
                $region159: #{gpt_forward.7} parent=148 // loop_header_branch
                  %1186 = sbr.rel (%p1184) target = $region163
                $region160: #{gpt_forward.7} parent=148 // loop_body
                  %v1190 = vld [vmem:[%s1188] sm:$0xf]
                  %1191 = vst [vmem:[%s1189] sm:$0xf] %v1190
                  %v1192 = vld [vmem:[%s1188 + $0x4] sm:$0xf]
                  %1193 = vst [vmem:[%s1189 + $0x4] sm:$0xf] %v1192
                  %v1194 = vld [vmem:[%s1188 + $0x8] sm:$0xf]
                  %1195 = vst [vmem:[%s1189 + $0x8] sm:$0xf] %v1194
                  %v1196 = vld [vmem:[%s1188 + $0xc] sm:$0xf]
                  %1197 = vst [vmem:[%s1189 + $0xc] sm:$0xf] %v1196
                  %v1198 = vld [vmem:[%s1188 + $0x10] sm:$0xf]
                  %1199 = vst [vmem:[%s1189 + $0x20] sm:$0xf] %v1198
                  %v1200 = vld [vmem:[%s1188 + $0x14] sm:$0xf]
                  %1201 = vst [vmem:[%s1189 + $0x24] sm:$0xf] %v1200
                  %v1202 = vld [vmem:[%s1188 + $0x18] sm:$0xf]
                  %1203 = vst [vmem:[%s1189 + $0x28] sm:$0xf] %v1202
                  %v1204 = vld [vmem:[%s1188 + $0x1c] sm:$0xf]
                  %1205 = vst [vmem:[%s1189 + $0x2c] sm:$0xf] %v1204
                  %v1206 = vld [vmem:[%s1188 + $0x20] sm:$0xf]
                  %1207 = vst [vmem:[%s1189 + $0x40] sm:$0xf] %v1206
                  %v1208 = vld [vmem:[%s1188 + $0x24] sm:$0xf]
                  %1209 = vst [vmem:[%s1189 + $0x44] sm:$0xf] %v1208
                  %v1210 = vld [vmem:[%s1188 + $0x28] sm:$0xf]
                  %1211 = vst [vmem:[%s1189 + $0x48] sm:$0xf] %v1210
                  %v1212 = vld [vmem:[%s1188 + $0x2c] sm:$0xf]
                  %1213 = vst [vmem:[%s1189 + $0x4c] sm:$0xf] %v1212
                  %v1214 = vld [vmem:[%s1188 + $0x30] sm:$0xf]
                  %1215 = vst [vmem:[%s1189 + $0x60] sm:$0xf] %v1214
                  %v1216 = vld [vmem:[%s1188 + $0x34] sm:$0xf]
                  %1217 = vst [vmem:[%s1189 + $0x64] sm:$0xf] %v1216
                  %v1218 = vld [vmem:[%s1188 + $0x38] sm:$0xf]
                  %1219 = vst [vmem:[%s1189 + $0x68] sm:$0xf] %v1218
                  %v1220 = vld [vmem:[%s1188 + $0x3c] sm:$0xf]
                  %1221 = vst [vmem:[%s1189 + $0x6c] sm:$0xf] %v1220
                $region161: #{gpt_forward.7} parent=148 // loop_footer
                  %s1187 = sadd.s32 1, %s1183
                $region162: #{gpt_forward.7} parent=148 // loop_footer_branch
                  %1182 = sbr.rel target = $region158
                $region163: #{gpt_forward.7} parent=148 // loop_exit
                  _
              $region149: #{gpt_forward.7} parent=133 // pred_fallthru
                _
            $region134: #{gpt_forward.7} parent=129 // pred_fallthru
              _
            // Predicated region
            $region135: #{gpt_forward.7} parent=129 // pred_check
              _
            $region136: #{gpt_forward.7} parent=129 // pred_check_branch
              %1129 = sbr.rel (0) target = $region138
            $region137: #{gpt_forward.7} parent=129 // pred_region
              loop: start=0, step=1, limit=1
              $region139: #{gpt_forward.7} parent=137 // loop_pre_header
                _
              $region140: #{gpt_forward.7} parent=137 // loop_header
                %s1132 = sphi 0, %s1136
                %p1133 = scmp.ge.s32.totalorder %s1132, 1
                %s1137 = sphi %s901, %s901
                %s1138 = sphi %s1123, %s1123
              $region141: #{gpt_forward.7} parent=137 // loop_header_branch
                %1135 = sbr.rel (%p1133) target = $region145
              $region142: #{gpt_forward.7} parent=137 // loop_body
                %v1139 = vld [vmem:[%s1137] sm:$0xf]
                %1140 = vst [vmem:[%s1138] sm:$0xf] %v1139
                %v1141 = vld [vmem:[%s1137 + $0x4] sm:$0xf]
                %1142 = vst [vmem:[%s1138 + $0x4] sm:$0xf] %v1141
                %v1143 = vld [vmem:[%s1137 + $0x8] sm:$0xf]
                %1144 = vst [vmem:[%s1138 + $0x8] sm:$0xf] %v1143
                %v1145 = vld [vmem:[%s1137 + $0xc] sm:$0xf]
                %1146 = vst [vmem:[%s1138 + $0xc] sm:$0xf] %v1145
                %v1147 = vld [vmem:[%s1137 + $0x10] sm:$0xf]
                %1148 = vst [vmem:[%s1138 + $0x20] sm:$0xf] %v1147
                %v1149 = vld [vmem:[%s1137 + $0x14] sm:$0xf]
                %1150 = vst [vmem:[%s1138 + $0x24] sm:$0xf] %v1149
                %v1151 = vld [vmem:[%s1137 + $0x18] sm:$0xf]
                %1152 = vst [vmem:[%s1138 + $0x28] sm:$0xf] %v1151
                %v1153 = vld [vmem:[%s1137 + $0x1c] sm:$0xf]
                %1154 = vst [vmem:[%s1138 + $0x2c] sm:$0xf] %v1153
                %v1155 = vld [vmem:[%s1137 + $0x20] sm:$0xf]
                %1156 = vst [vmem:[%s1138 + $0x40] sm:$0xf] %v1155
                %v1157 = vld [vmem:[%s1137 + $0x24] sm:$0xf]
                %1158 = vst [vmem:[%s1138 + $0x44] sm:$0xf] %v1157
                %v1159 = vld [vmem:[%s1137 + $0x28] sm:$0xf]
                %1160 = vst [vmem:[%s1138 + $0x48] sm:$0xf] %v1159
                %v1161 = vld [vmem:[%s1137 + $0x2c] sm:$0xf]
                %1162 = vst [vmem:[%s1138 + $0x4c] sm:$0xf] %v1161
                %v1163 = vld [vmem:[%s1137 + $0x30] sm:$0xf]
                %1164 = vst [vmem:[%s1138 + $0x60] sm:$0xf] %v1163
                %v1165 = vld [vmem:[%s1137 + $0x34] sm:$0xf]
                %1166 = vst [vmem:[%s1138 + $0x64] sm:$0xf] %v1165
                %v1167 = vld [vmem:[%s1137 + $0x38] sm:$0xf]
                %1168 = vst [vmem:[%s1138 + $0x68] sm:$0xf] %v1167
                %v1169 = vld [vmem:[%s1137 + $0x3c] sm:$0xf]
                %1170 = vst [vmem:[%s1138 + $0x6c] sm:$0xf] %v1169
              $region143: #{gpt_forward.7} parent=137 // loop_footer
                %s1136 = sadd.s32 1, %s1132
              $region144: #{gpt_forward.7} parent=137 // loop_footer_branch
                %1131 = sbr.rel target = $region140
              $region145: #{gpt_forward.7} parent=137 // loop_exit
                _
            $region138: #{gpt_forward.7} parent=129 // pred_fallthru
              _
          $region130: #{gpt_forward.7} parent=125 // pred_fallthru
            _
          %1222 = vnop
        $region126: #{gpt_forward.7} parent=39 // pred_fallthru
          _
      $region40: #{gpt_forward.7} parent=5 // pred_fallthru
        _
      %p1223 = scmp.le.s32.totalorder 2, %s14
      // Predicated region
      $region164: #{gpt_forward.7} parent=5 // pred_check
        %p1224 = pneg %p1223
      $region165: #{gpt_forward.7} parent=5 // pred_check_branch
        %1226 = sbr.rel (%p1224) target = $region167
      $region166: #{gpt_forward.7} parent=5 // pred_region
        %s1227 = ssub.s32 %s14, 2
        // Predicated region
        $region168: #{gpt_forward.7} parent=166 // pred_check
          %p1228 = pneg %p169
        $region169: #{gpt_forward.7} parent=166 // pred_check_branch
          %1230 = sbr.rel (%p1228) target = $region171
        $region170: #{gpt_forward.7} parent=166 // pred_region
          %s1231 = sand.u32 %s154, 1
          %s1232 = sand.u32 %s154, 1
          %s1233 = smul.addr %s1232, 64
          %s1234 = scalar_lea.vmem [#allocation2], %s1233
        $region171: #{gpt_forward.7} parent=166 // pred_fallthru
          _
        // Predicated region
        $region172: #{gpt_forward.7} parent=166 // pred_check
          %p1235 = pneg %p197
        $region173: #{gpt_forward.7} parent=166 // pred_check_branch
          %1237 = sbr.rel (%p1235) target = $region175
        $region174: #{gpt_forward.7} parent=166 // pred_region
          %s1238 = sand.u32 %s182, 1
          %s1239 = sand.u32 %s182, 1
          %s1240 = smul.addr %s1239, 64
          %s1241 = scalar_lea.vmem [#allocation3], %s1240
        $region175: #{gpt_forward.7} parent=166 // pred_fallthru
          _
        // Predicated region
        $region176: #{gpt_forward.7} parent=166 // pred_check
          %p1242 = pneg %p225
        $region177: #{gpt_forward.7} parent=166 // pred_check_branch
          %1244 = sbr.rel (%p1242) target = $region179
        $region178: #{gpt_forward.7} parent=166 // pred_region
          %s1245 = sand.u32 %s210, 1
          %s1246 = sand.u32 %s210, 1
          %s1247 = smul.addr %s1246, 64
          %s1248 = scalar_lea.vmem [#allocation4], %s1247
        $region179: #{gpt_forward.7} parent=166 // pred_fallthru
          _
      $region167: #{gpt_forward.7} parent=5 // pred_fallthru
        _
    $region6: #{gpt_forward.7} parent=1 // loop_footer
      %s18 = sadd.s32 1, %s14
    $region7: #{gpt_forward.7} parent=1 // loop_footer_branch
      %13 = sbr.rel target = $region3
    $region8: #{gpt_forward.7} parent=1 // loop_exit
      _

// kernel: gpt_forward.9
$region0: #{gpt_forward.9}
  #allocation0 [shape = 'u32[]', space=smem, size = 0x4, offset = 0x4, fixed_abs, tag = 'smem constant byte address 0x4 - core index']
  #allocation1 [shape = 'u32[144,128]{1,0:T(1,128)}', space=vmem, size = 0x12000, scoped, tag = 'internal scratch']
  #allocation2 [shape = 'f32[32,128]{1,0:T(8,128)}', space=vmem, size = 0x4000, scoped, tag = 'scratch operand']
  #allocation3 [shape = 'bf16[32,128]{1,0:T(16,128)(2,1)}', space=vmem, size = 0x2000, scoped, tag = 'scratch operand']
  #allocation4 [shape = 'f32[32,128]{1,0:T(8,128)}', space=vmem, size = 0x4000, scoped, tag = 'scratch operand']
  %s0 = inlined_call_operand.vmem [shape: f32[2,64,128], index: 0, kind: input, shape index: {}]
  %s1 = inlined_call_operand.vmem [shape: bf16[2,4,64,32], index: 1, kind: input, shape index: {}]
  %s2 = inlined_call_operand.vmem [shape: bf16[4,32,128], index: 2, kind: input, shape index: {}]
  %s3 = inlined_call_operand.vmem [shape: f32[1,128], index: 3, kind: input, shape index: {}]
  %s4 = inlined_call_operand.vmem [shape: f32[1,128], index: 4, kind: input, shape index: {}]
  %s5 = inlined_call_operand.vmem [shape: f32[1,128], index: 5, kind: input, shape index: {}]
  %s6 = inlined_call_operand.vmem [shape: bf16[128,512], index: 6, kind: input, shape index: {}]
  %s7 = inlined_call_operand.vmem [shape: f32[1,512], index: 7, kind: input, shape index: {}]
  %s8 = inlined_call_operand.vmem [shape: bf16[512,128], index: 8, kind: input, shape index: {}]
  %s9 = inlined_call_operand.vmem [shape: f32[1,128], index: 9, kind: input, shape index: {}]
  %s10 = inlined_call_operand.vmem [shape: f32[2,64,128], index: 10, kind: output, shape index: {}]
  %s11 = sld [smem:[#allocation0]]
  $region160: #{gpt_forward.9} parent=0
    _
  %s13 = ssub.s32 1, %s11
  %s14 = scalar_select 0, %s13, %s11
  $region1: #{gpt_forward.9} parent=0
    #allocation5 [shape = 'u8[65536]{0}', space=vmem, size = 0x10000, scoped, tag = 'input window, operand 1']
    #allocation6 [shape = 'u8[131072]{0}', space=vmem, size = 0x20000, scoped, tag = 'input window, operand 6']
    loop: start=0, step=1, limit=10
    $region2: #{gpt_forward.9} parent=1 // loop_pre_header
      _
    $region3: #{gpt_forward.9} parent=1 // loop_header
      %s16 = sphi 0, %s20
      %p17 = scmp.ge.s32.totalorder %s16, 10
      %s23 = sphi 0, %s42
      %s24 = sphi 0, %s38
      %s25 = sphi 0, %s34
      %s26 = sphi 0, %s23
      %s27 = sphi 0, %s24
      %s28 = sphi 0, %s25
      %s29 = sphi 0, %s26
      %s30 = sphi 0, %s27
      %s31 = sphi 0, %s28
      %s47 = sphi 0, %s49
      %s50 = sphi 0, %s47
      %s51 = sphi 0, %s50
      %s67 = sphi 0, %s51
      %s75 = sphi 0, %s77
      %s78 = sphi 0, %s75
      %s79 = sphi 0, %s78
      %s95 = sphi 0, %s79
      %s99 = sphi 0, %s99
      %s101 = sphi 0, %s99
      %s102 = sphi 0, %s101
      %s116 = sphi 0, %s102
      %s120 = sphi 0, %s120
      %s122 = sphi 0, %s120
      %s123 = sphi 0, %s122
      %s137 = sphi 0, %s123
      %s141 = sphi 0, %s141
      %s143 = sphi 0, %s141
      %s144 = sphi 0, %s143
      %s158 = sphi 0, %s144
      %s162 = sphi 0, %s162
      %s164 = sphi 0, %s162
      %s165 = sphi 0, %s164
      %s179 = sphi 0, %s165
      %s185 = sphi 0, %s187
      %s188 = sphi 0, %s185
      %s189 = sphi 0, %s188
      %s205 = sphi 0, %s189
      %s211 = sphi 0, %s213
      %s214 = sphi 0, %s211
      %s215 = sphi 0, %s214
      %s231 = sphi 0, %s215
      %s237 = sphi 0, %s239
      %s240 = sphi 0, %s237
      %s241 = sphi 0, %s240
      %s257 = sphi 0, %s241
      %s261 = sphi 0, %s261
      %s263 = sphi 0, %s261
      %s264 = sphi 0, %s263
      %s278 = sphi 0, %s264
      %s286 = sphi 0, %s288
      %s289 = sphi 0, %s286
      %s290 = sphi 0, %s289
      %s306 = sphi 0, %s290
    $region4: #{gpt_forward.9} parent=1 // loop_header_branch
      %19 = sbr.rel (%p17) target = $region8
    $region5: #{gpt_forward.9} parent=1 // loop_body
      %s21 = ssub.s32 %s16, 1
      %s22 = ssub.s32 %s16, 2
      %s32 = sadd.s32 1, %s25
      %p33 = scmp.ge.s32.totalorder %s32, 2
      %s34 = scalar_select %p33, 0, %s32
      %s35 = sadd.s32 1, %s24
      %s36 = scalar_select %p33, %s35, %s24
      %p37 = scmp.ge.s32.totalorder %s36, 2
      %s38 = scalar_select %p37, 0, %s36
      %s39 = sadd.s32 1, %s23
      %s40 = scalar_select %p37, %s39, %s23
      %p41 = scmp.ge.s32.totalorder %s40, 2
      %s42 = scalar_select %p41, 0, %s40
      %s43 = ssub.s32 %s23, %s42
      %s44 = ssub.s32 %s24, %s38
      %s45 = sor.u32 %s43, %s44
      %p46 = scmp.eq.s32.totalorder %s45, 0
      %s48 = sadd.s32 %s47, 1
      %s49 = scalar_select %p46, %s47, %s48
      %p52 = pneg %p46
      %p53 = scmp.eq.s32.totalorder %s16, 7
      %p54 = por %p52, %p53
      %p55 = scmp.ne.s32.totalorder %s47, %s50
      %p56 = scmp.eq.s32.totalorder %s16, 0
      %p57 = por %p55, %p56
      %p58 = scmp.ne.s32.totalorder %s47, %s50
      %p59 = scmp.eq.s32.totalorder %s21, 7
      %p60 = por %p58, %p59
      %p61 = scmp.ne.s32.totalorder %s50, %s51
      %p62 = scmp.eq.s32.totalorder %s21, 0
      %p63 = por %p61, %p62
      %p64 = scmp.ne.s32.totalorder %s50, %s51
      %p65 = scmp.eq.s32.totalorder %s22, 7
      %p66 = por %p64, %p65
      %p68 = scmp.ne.s32.totalorder %s51, %s67
      %p69 = scmp.eq.s32.totalorder %s22, 0
      %p70 = por %p68, %p69
      %s71 = ssub.s32 %s23, %s42
      %s72 = ssub.s32 %s24, %s38
      %s73 = sor.u32 %s71, %s72
      %p74 = scmp.eq.s32.totalorder %s73, 0
      %s76 = sadd.s32 %s75, 1
      %s77 = scalar_select %p74, %s75, %s76
      %p80 = pneg %p74
      %p81 = scmp.eq.s32.totalorder %s16, 7
      %p82 = por %p80, %p81
      %p83 = scmp.ne.s32.totalorder %s75, %s78
      %p84 = scmp.eq.s32.totalorder %s16, 0
      %p85 = por %p83, %p84
      %p86 = scmp.ne.s32.totalorder %s75, %s78
      %p87 = scmp.eq.s32.totalorder %s21, 7
      %p88 = por %p86, %p87
      %p89 = scmp.ne.s32.totalorder %s78, %s79
      %p90 = scmp.eq.s32.totalorder %s21, 0
      %p91 = por %p89, %p90
      %p92 = scmp.ne.s32.totalorder %s78, %s79
      %p93 = scmp.eq.s32.totalorder %s22, 7
      %p94 = por %p92, %p93
      %p96 = scmp.ne.s32.totalorder %s79, %s95
      %p97 = scmp.eq.s32.totalorder %s22, 0
      %p98 = por %p96, %p97
      %s100 = sadd.s32 %s99, 1
      %p103 = scmp.eq.s32.totalorder %s16, 7
      %p104 = scmp.ne.s32.totalorder %s99, %s101
      %p105 = scmp.eq.s32.totalorder %s16, 0
      %p106 = por %p104, %p105
      %p107 = scmp.ne.s32.totalorder %s99, %s101
      %p108 = scmp.eq.s32.totalorder %s21, 7
      %p109 = por %p107, %p108
      %p110 = scmp.ne.s32.totalorder %s101, %s102
      %p111 = scmp.eq.s32.totalorder %s21, 0
      %p112 = por %p110, %p111
      %p113 = scmp.ne.s32.totalorder %s101, %s102
      %p114 = scmp.eq.s32.totalorder %s22, 7
      %p115 = por %p113, %p114
      %p117 = scmp.ne.s32.totalorder %s102, %s116
      %p118 = scmp.eq.s32.totalorder %s22, 0
      %p119 = por %p117, %p118
      %s121 = sadd.s32 %s120, 1
      %p124 = scmp.eq.s32.totalorder %s16, 7
      %p125 = scmp.ne.s32.totalorder %s120, %s122
      %p126 = scmp.eq.s32.totalorder %s16, 0
      %p127 = por %p125, %p126
      %p128 = scmp.ne.s32.totalorder %s120, %s122
      %p129 = scmp.eq.s32.totalorder %s21, 7
      %p130 = por %p128, %p129
      %p131 = scmp.ne.s32.totalorder %s122, %s123
      %p132 = scmp.eq.s32.totalorder %s21, 0
      %p133 = por %p131, %p132
      %p134 = scmp.ne.s32.totalorder %s122, %s123
      %p135 = scmp.eq.s32.totalorder %s22, 7
      %p136 = por %p134, %p135
      %p138 = scmp.ne.s32.totalorder %s123, %s137
      %p139 = scmp.eq.s32.totalorder %s22, 0
      %p140 = por %p138, %p139
      %s142 = sadd.s32 %s141, 1
      %p145 = scmp.eq.s32.totalorder %s16, 7
      %p146 = scmp.ne.s32.totalorder %s141, %s143
      %p147 = scmp.eq.s32.totalorder %s16, 0
      %p148 = por %p146, %p147
      %p149 = scmp.ne.s32.totalorder %s141, %s143
      %p150 = scmp.eq.s32.totalorder %s21, 7
      %p151 = por %p149, %p150
      %p152 = scmp.ne.s32.totalorder %s143, %s144
      %p153 = scmp.eq.s32.totalorder %s21, 0
      %p154 = por %p152, %p153
      %p155 = scmp.ne.s32.totalorder %s143, %s144
      %p156 = scmp.eq.s32.totalorder %s22, 7
      %p157 = por %p155, %p156
      %p159 = scmp.ne.s32.totalorder %s144, %s158
      %p160 = scmp.eq.s32.totalorder %s22, 0
      %p161 = por %p159, %p160
      %s163 = sadd.s32 %s162, 1
      %p166 = scmp.eq.s32.totalorder %s16, 7
      %p167 = scmp.ne.s32.totalorder %s162, %s164
      %p168 = scmp.eq.s32.totalorder %s16, 0
      %p169 = por %p167, %p168
      %p170 = scmp.ne.s32.totalorder %s162, %s164
      %p171 = scmp.eq.s32.totalorder %s21, 7
      %p172 = por %p170, %p171
      %p173 = scmp.ne.s32.totalorder %s164, %s165
      %p174 = scmp.eq.s32.totalorder %s21, 0
      %p175 = por %p173, %p174
      %p176 = scmp.ne.s32.totalorder %s164, %s165
      %p177 = scmp.eq.s32.totalorder %s22, 7
      %p178 = por %p176, %p177
      %p180 = scmp.ne.s32.totalorder %s165, %s179
      %p181 = scmp.eq.s32.totalorder %s22, 0
      %p182 = por %p180, %p181
      %s183 = ssub.s32 %s25, %s34
      %p184 = scmp.eq.s32.totalorder %s183, 0
      %s186 = sadd.s32 %s185, 1
      %s187 = scalar_select %p184, %s185, %s186
      %p190 = pneg %p184
      %p191 = scmp.eq.s32.totalorder %s16, 7
      %p192 = por %p190, %p191
      %p193 = scmp.ne.s32.totalorder %s185, %s188
      %p194 = scmp.eq.s32.totalorder %s16, 0
      %p195 = por %p193, %p194
      %p196 = scmp.ne.s32.totalorder %s185, %s188
      %p197 = scmp.eq.s32.totalorder %s21, 7
      %p198 = por %p196, %p197
      %p199 = scmp.ne.s32.totalorder %s188, %s189
      %p200 = scmp.eq.s32.totalorder %s21, 0
      %p201 = por %p199, %p200
      %p202 = scmp.ne.s32.totalorder %s188, %s189
      %p203 = scmp.eq.s32.totalorder %s22, 7
      %p204 = por %p202, %p203
      %p206 = scmp.ne.s32.totalorder %s189, %s205
      %p207 = scmp.eq.s32.totalorder %s22, 0
      %p208 = por %p206, %p207
      %s209 = ssub.s32 %s25, %s34
      %p210 = scmp.eq.s32.totalorder %s209, 0
      %s212 = sadd.s32 %s211, 1
      %s213 = scalar_select %p210, %s211, %s212
      %p216 = pneg %p210
      %p217 = scmp.eq.s32.totalorder %s16, 7
      %p218 = por %p216, %p217
      %p219 = scmp.ne.s32.totalorder %s211, %s214
      %p220 = scmp.eq.s32.totalorder %s16, 0
      %p221 = por %p219, %p220
      %p222 = scmp.ne.s32.totalorder %s211, %s214
      %p223 = scmp.eq.s32.totalorder %s21, 7
      %p224 = por %p222, %p223
      %p225 = scmp.ne.s32.totalorder %s214, %s215
      %p226 = scmp.eq.s32.totalorder %s21, 0
      %p227 = por %p225, %p226
      %p228 = scmp.ne.s32.totalorder %s214, %s215
      %p229 = scmp.eq.s32.totalorder %s22, 7
      %p230 = por %p228, %p229
      %p232 = scmp.ne.s32.totalorder %s215, %s231
      %p233 = scmp.eq.s32.totalorder %s22, 0
      %p234 = por %p232, %p233
      %s235 = ssub.s32 %s25, %s34
      %p236 = scmp.eq.s32.totalorder %s235, 0
      %s238 = sadd.s32 %s237, 1
      %s239 = scalar_select %p236, %s237, %s238
      %p242 = pneg %p236
      %p243 = scmp.eq.s32.totalorder %s16, 7
      %p244 = por %p242, %p243
      %p245 = scmp.ne.s32.totalorder %s237, %s240
      %p246 = scmp.eq.s32.totalorder %s16, 0
      %p247 = por %p245, %p246
      %p248 = scmp.ne.s32.totalorder %s237, %s240
      %p249 = scmp.eq.s32.totalorder %s21, 7
      %p250 = por %p248, %p249
      %p251 = scmp.ne.s32.totalorder %s240, %s241
      %p252 = scmp.eq.s32.totalorder %s21, 0
      %p253 = por %p251, %p252
      %p254 = scmp.ne.s32.totalorder %s240, %s241
      %p255 = scmp.eq.s32.totalorder %s22, 7
      %p256 = por %p254, %p255
      %p258 = scmp.ne.s32.totalorder %s241, %s257
      %p259 = scmp.eq.s32.totalorder %s22, 0
      %p260 = por %p258, %p259
      %s262 = sadd.s32 %s261, 1
      %p265 = scmp.eq.s32.totalorder %s16, 7
      %p266 = scmp.ne.s32.totalorder %s261, %s263
      %p267 = scmp.eq.s32.totalorder %s16, 0
      %p268 = por %p266, %p267
      %p269 = scmp.ne.s32.totalorder %s261, %s263
      %p270 = scmp.eq.s32.totalorder %s21, 7
      %p271 = por %p269, %p270
      %p272 = scmp.ne.s32.totalorder %s263, %s264
      %p273 = scmp.eq.s32.totalorder %s21, 0
      %p274 = por %p272, %p273
      %p275 = scmp.ne.s32.totalorder %s263, %s264
      %p276 = scmp.eq.s32.totalorder %s22, 7
      %p277 = por %p275, %p276
      %p279 = scmp.ne.s32.totalorder %s264, %s278
      %p280 = scmp.eq.s32.totalorder %s22, 0
      %p281 = por %p279, %p280
      %s282 = ssub.s32 %s23, %s42
      %s283 = ssub.s32 %s24, %s38
      %s284 = sor.u32 %s282, %s283
      %p285 = scmp.eq.s32.totalorder %s284, 0
      %s287 = sadd.s32 %s286, 1
      %s288 = scalar_select %p285, %s286, %s287
      %p291 = pneg %p285
      %p292 = scmp.eq.s32.totalorder %s16, 7
      %p293 = por %p291, %p292
      %p294 = scmp.ne.s32.totalorder %s286, %s289
      %p295 = scmp.eq.s32.totalorder %s16, 0
      %p296 = por %p294, %p295
      %p297 = scmp.ne.s32.totalorder %s286, %s289
      %p298 = scmp.eq.s32.totalorder %s21, 7
      %p299 = por %p297, %p298
      %p300 = scmp.ne.s32.totalorder %s289, %s290
      %p301 = scmp.eq.s32.totalorder %s21, 0
      %p302 = por %p300, %p301
      %p303 = scmp.ne.s32.totalorder %s289, %s290
      %p304 = scmp.eq.s32.totalorder %s22, 7
      %p305 = por %p303, %p304
      %p307 = scmp.ne.s32.totalorder %s290, %s306
      %p308 = scmp.eq.s32.totalorder %s22, 0
      %p309 = por %p307, %p308
      %p310 = scmp.le.s32.totalorder 1, %s16
      %p311 = scmp.lt.s32.totalorder %s16, 9
      %p312 = pnand %p310, %p311
      %p313 = pneg %p312
      // Predicated region
      $region9: #{gpt_forward.9} parent=5 // pred_check
        _
      $region10: #{gpt_forward.9} parent=5 // pred_check_branch
        %315 = sbr.rel (%p312) target = $region12
      $region11: #{gpt_forward.9} parent=5 // pred_region
        %s316 = ssub.s32 %s16, 1
        // Predicated region
        $region13: #{gpt_forward.9} parent=11 // pred_check
          %p317 = pneg %p112
        $region14: #{gpt_forward.9} parent=11 // pred_check_branch
          %319 = sbr.rel (%p317) target = $region16
        $region15: #{gpt_forward.9} parent=11 // pred_region
          _
        $region16: #{gpt_forward.9} parent=11 // pred_fallthru
          _
        // Predicated region
        $region17: #{gpt_forward.9} parent=11 // pred_check
          %p320 = pneg %p133
        $region18: #{gpt_forward.9} parent=11 // pred_check_branch
          %322 = sbr.rel (%p320) target = $region20
        $region19: #{gpt_forward.9} parent=11 // pred_region
          _
        $region20: #{gpt_forward.9} parent=11 // pred_fallthru
          _
        // Predicated region
        $region21: #{gpt_forward.9} parent=11 // pred_check
          %p323 = pneg %p154
        $region22: #{gpt_forward.9} parent=11 // pred_check_branch
          %325 = sbr.rel (%p323) target = $region24
        $region23: #{gpt_forward.9} parent=11 // pred_region
          _
        $region24: #{gpt_forward.9} parent=11 // pred_fallthru
          _
        // Predicated region
        $region25: #{gpt_forward.9} parent=11 // pred_check
          %p326 = pneg %p175
        $region26: #{gpt_forward.9} parent=11 // pred_check_branch
          %328 = sbr.rel (%p326) target = $region28
        $region27: #{gpt_forward.9} parent=11 // pred_region
          _
        $region28: #{gpt_forward.9} parent=11 // pred_fallthru
          _
        // Predicated region
        $region29: #{gpt_forward.9} parent=11 // pred_check
          %p329 = pneg %p274
        $region30: #{gpt_forward.9} parent=11 // pred_check_branch
          %331 = sbr.rel (%p329) target = $region32
        $region31: #{gpt_forward.9} parent=11 // pred_region
          _
        $region32: #{gpt_forward.9} parent=11 // pred_fallthru
          _
      $region12: #{gpt_forward.9} parent=5 // pred_fallthru
        _
      %p332 = scmp.lt.s32.totalorder %s16, 8
      // Predicated region
      $region33: #{gpt_forward.9} parent=5 // pred_check
        %p333 = pneg %p332
      $region34: #{gpt_forward.9} parent=5 // pred_check_branch
        %335 = sbr.rel (%p333) target = $region36
      $region35: #{gpt_forward.9} parent=5 // pred_region
        // Predicated region
        $region37: #{gpt_forward.9} parent=35 // pred_check
          %p336 = pneg %p57
        $region38: #{gpt_forward.9} parent=35 // pred_check_branch
          %338 = sbr.rel (%p336) target = $region40
        $region39: #{gpt_forward.9} parent=35 // pred_region
          %s339 = smul.u32 4, %s24
          %p340 = scmp.lt.s32.totalorder %s23, 1
          %s341 = scalar_select %p340, %s23, 1
          %p342 = scmp.lt.s32.totalorder %s339, 7
          %s343 = scalar_select %p342, %s339, 7
          %s344 = smul.addr %s341, 8
          %s345 = sadd.s32 %s343, %s344
          %s346 = smul.addr %s345, 8
          %s347 = scalar_lea.vmem %s0, %s346
          %s348 = smul.u32 4, %s24
        $region40: #{gpt_forward.9} parent=35 // pred_fallthru
          _
        // Predicated region
        $region41: #{gpt_forward.9} parent=35 // pred_check
          %p349 = pneg %p85
        $region42: #{gpt_forward.9} parent=35 // pred_check_branch
          %351 = sbr.rel (%p349) target = $region44
        $region43: #{gpt_forward.9} parent=35 // pred_region
          %s352 = sand.u32 %s75, 1
          %s353 = sand.u32 %s75, 1
          %s354 = smul.addr %s353, 64
          %s355 = scalar_lea.vmem [#allocation5], %s354
          %s356 = smul.u32 4, %s24
          %s357 = smul.addr %s23, 32
          %s358 = sadd.s32 %s356, %s357
          %s359 = smul.addr %s358, 4
          %s360 = scalar_lea.vmem %s1, %s359
          // Predicated region
          $region45: #{gpt_forward.9} parent=43 // pred_check
            _
          $region46: #{gpt_forward.9} parent=43 // pred_check_branch
            %362 = sbr.rel (0) target = $region48
          $region47: #{gpt_forward.9} parent=43 // pred_region
            // Predicated region
            $region49: #{gpt_forward.9} parent=47 // pred_check
              _
            $region50: #{gpt_forward.9} parent=47 // pred_check_branch
              %364 = sbr.rel target = $region52
            $region51: #{gpt_forward.9} parent=47 // pred_region
              // Predicated region
              $region64: #{gpt_forward.9} parent=51 // pred_check
                _
              $region65: #{gpt_forward.9} parent=51 // pred_check_branch
                %409 = sbr.rel (0) target = $region67
              $region66: #{gpt_forward.9} parent=51 // pred_region
                loop: start=0, step=1, limit=1
                $region68: #{gpt_forward.9} parent=66 // loop_pre_header
                  _
                $region69: #{gpt_forward.9} parent=66 // loop_header
                  %s411 = sphi 0, %s415
                  %p412 = scmp.ge.s32.totalorder %s411, 1
                  %s416 = sphi %s360, %s360
                  %s417 = sphi %s355, %s355
                $region70: #{gpt_forward.9} parent=66 // loop_header_branch
                  %414 = sbr.rel (%p412) target = $region74
                $region71: #{gpt_forward.9} parent=66 // loop_body
                  _
                $region72: #{gpt_forward.9} parent=66 // loop_footer
                  %s415 = sadd.s32 1, %s411
                $region73: #{gpt_forward.9} parent=66 // loop_footer_branch
                  %410 = sbr.rel target = $region69
                $region74: #{gpt_forward.9} parent=66 // loop_exit
                  _
                loop: start=0, step=1, limit=1
                $region75: #{gpt_forward.9} parent=66 // loop_pre_header
                  _
                $region76: #{gpt_forward.9} parent=66 // loop_header
                  %s420 = sphi 0, %s424
                  %p421 = scmp.ge.s32.totalorder %s420, 1
                  %s425 = sphi %s360, %s360
                  %s426 = sphi %s355, %s355
                $region77: #{gpt_forward.9} parent=66 // loop_header_branch
                  %423 = sbr.rel (%p421) target = $region81
                $region78: #{gpt_forward.9} parent=66 // loop_body
                  %v427 = vld [vmem:[%s425] sm:$0xf]
                  %428 = vst [vmem:[%s426] sm:$0xf] %v427
                  %v429 = vld [vmem:[%s425 + $0x4] sm:$0xf]
                  %430 = vst [vmem:[%s426 + $0x4] sm:$0xf] %v429
                  %v431 = vld [vmem:[%s425 + $0x8] sm:$0xf]
                  %432 = vst [vmem:[%s426 + $0x8] sm:$0xf] %v431
                  %v433 = vld [vmem:[%s425 + $0xc] sm:$0xf]
                  %434 = vst [vmem:[%s426 + $0xc] sm:$0xf] %v433
                  %v435 = vld [vmem:[%s425 + $0x20] sm:$0xf]
                  %436 = vst [vmem:[%s426 + $0x10] sm:$0xf] %v435
                  %v437 = vld [vmem:[%s425 + $0x24] sm:$0xf]
                  %438 = vst [vmem:[%s426 + $0x14] sm:$0xf] %v437
                  %v439 = vld [vmem:[%s425 + $0x28] sm:$0xf]
                  %440 = vst [vmem:[%s426 + $0x18] sm:$0xf] %v439
                  %v441 = vld [vmem:[%s425 + $0x2c] sm:$0xf]
                  %442 = vst [vmem:[%s426 + $0x1c] sm:$0xf] %v441
                  %v443 = vld [vmem:[%s425 + $0x40] sm:$0xf]
                  %444 = vst [vmem:[%s426 + $0x20] sm:$0xf] %v443
                  %v445 = vld [vmem:[%s425 + $0x44] sm:$0xf]
                  %446 = vst [vmem:[%s426 + $0x24] sm:$0xf] %v445
                  %v447 = vld [vmem:[%s425 + $0x48] sm:$0xf]
                  %448 = vst [vmem:[%s426 + $0x28] sm:$0xf] %v447
                  %v449 = vld [vmem:[%s425 + $0x4c] sm:$0xf]
                  %450 = vst [vmem:[%s426 + $0x2c] sm:$0xf] %v449
                  %v451 = vld [vmem:[%s425 + $0x60] sm:$0xf]
                  %452 = vst [vmem:[%s426 + $0x30] sm:$0xf] %v451
                  %v453 = vld [vmem:[%s425 + $0x64] sm:$0xf]
                  %454 = vst [vmem:[%s426 + $0x34] sm:$0xf] %v453
                  %v455 = vld [vmem:[%s425 + $0x68] sm:$0xf]
                  %456 = vst [vmem:[%s426 + $0x38] sm:$0xf] %v455
                  %v457 = vld [vmem:[%s425 + $0x6c] sm:$0xf]
                  %458 = vst [vmem:[%s426 + $0x3c] sm:$0xf] %v457
                $region79: #{gpt_forward.9} parent=66 // loop_footer
                  %s424 = sadd.s32 1, %s420
                $region80: #{gpt_forward.9} parent=66 // loop_footer_branch
                  %419 = sbr.rel target = $region76
                $region81: #{gpt_forward.9} parent=66 // loop_exit
                  _
              $region67: #{gpt_forward.9} parent=51 // pred_fallthru
                _
            $region52: #{gpt_forward.9} parent=47 // pred_fallthru
              _
            // Predicated region
            $region53: #{gpt_forward.9} parent=47 // pred_check
              _
            $region54: #{gpt_forward.9} parent=47 // pred_check_branch
              %366 = sbr.rel (0) target = $region56
            $region55: #{gpt_forward.9} parent=47 // pred_region
              loop: start=0, step=1, limit=1
              $region57: #{gpt_forward.9} parent=55 // loop_pre_header
                _
              $region58: #{gpt_forward.9} parent=55 // loop_header
                %s369 = sphi 0, %s373
                %p370 = scmp.ge.s32.totalorder %s369, 1
                %s374 = sphi %s360, %s360
                %s375 = sphi %s355, %s355
              $region59: #{gpt_forward.9} parent=55 // loop_header_branch
                %372 = sbr.rel (%p370) target = $region63
              $region60: #{gpt_forward.9} parent=55 // loop_body
                %v376 = vld [vmem:[%s374] sm:$0xf]
                %377 = vst [vmem:[%s375] sm:$0xf] %v376
                %v378 = vld [vmem:[%s374 + $0x4] sm:$0xf]
                %379 = vst [vmem:[%s375 + $0x4] sm:$0xf] %v378
                %v380 = vld [vmem:[%s374 + $0x8] sm:$0xf]
                %381 = vst [vmem:[%s375 + $0x8] sm:$0xf] %v380
                %v382 = vld [vmem:[%s374 + $0xc] sm:$0xf]
                %383 = vst [vmem:[%s375 + $0xc] sm:$0xf] %v382
                %v384 = vld [vmem:[%s374 + $0x20] sm:$0xf]
                %385 = vst [vmem:[%s375 + $0x10] sm:$0xf] %v384
                %v386 = vld [vmem:[%s374 + $0x24] sm:$0xf]
                %387 = vst [vmem:[%s375 + $0x14] sm:$0xf] %v386
                %v388 = vld [vmem:[%s374 + $0x28] sm:$0xf]
                %389 = vst [vmem:[%s375 + $0x18] sm:$0xf] %v388
                %v390 = vld [vmem:[%s374 + $0x2c] sm:$0xf]
                %391 = vst [vmem:[%s375 + $0x1c] sm:$0xf] %v390
                %v392 = vld [vmem:[%s374 + $0x40] sm:$0xf]
                %393 = vst [vmem:[%s375 + $0x20] sm:$0xf] %v392
                %v394 = vld [vmem:[%s374 + $0x44] sm:$0xf]
                %395 = vst [vmem:[%s375 + $0x24] sm:$0xf] %v394
                %v396 = vld [vmem:[%s374 + $0x48] sm:$0xf]
                %397 = vst [vmem:[%s375 + $0x28] sm:$0xf] %v396
                %v398 = vld [vmem:[%s374 + $0x4c] sm:$0xf]
                %399 = vst [vmem:[%s375 + $0x2c] sm:$0xf] %v398
                %v400 = vld [vmem:[%s374 + $0x60] sm:$0xf]
                %401 = vst [vmem:[%s375 + $0x30] sm:$0xf] %v400
                %v402 = vld [vmem:[%s374 + $0x64] sm:$0xf]
                %403 = vst [vmem:[%s375 + $0x34] sm:$0xf] %v402
                %v404 = vld [vmem:[%s374 + $0x68] sm:$0xf]
                %405 = vst [vmem:[%s375 + $0x38] sm:$0xf] %v404
                %v406 = vld [vmem:[%s374 + $0x6c] sm:$0xf]
                %407 = vst [vmem:[%s375 + $0x3c] sm:$0xf] %v406
              $region61: #{gpt_forward.9} parent=55 // loop_footer
                %s373 = sadd.s32 1, %s369
              $region62: #{gpt_forward.9} parent=55 // loop_footer_branch
                %368 = sbr.rel target = $region58
              $region63: #{gpt_forward.9} parent=55 // loop_exit
                _
            $region56: #{gpt_forward.9} parent=47 // pred_fallthru
              _
          $region48: #{gpt_forward.9} parent=43 // pred_fallthru
            _
          %459 = vnop
        $region44: #{gpt_forward.9} parent=35 // pred_fallthru
          _
        // Predicated region
        $region82: #{gpt_forward.9} parent=35 // pred_check
          %p460 = pneg %p195
        $region83: #{gpt_forward.9} parent=35 // pred_check_branch
          %462 = sbr.rel (%p460) target = $region85
        $region84: #{gpt_forward.9} parent=35 // pred_region
          %s463 = sand.u32 %s185, 1
          %s464 = sand.u32 %s185, 1
          %s465 = smul.addr %s464, 128
          %s466 = scalar_lea.vmem [#allocation6], %s465
          %s467 = smul.u32 2, %s25
          %s468 = smul.addr %s467, 4
          %s469 = scalar_lea.vmem %s6, %s468
          // Predicated region
          $region86: #{gpt_forward.9} parent=84 // pred_check
            _
          $region87: #{gpt_forward.9} parent=84 // pred_check_branch
            %471 = sbr.rel (0) target = $region89
          $region88: #{gpt_forward.9} parent=84 // pred_region
            // Predicated region
            $region90: #{gpt_forward.9} parent=88 // pred_check
              _
            $region91: #{gpt_forward.9} parent=88 // pred_check_branch
              %473 = sbr.rel (0) target = $region93
            $region92: #{gpt_forward.9} parent=88 // pred_region
              // Predicated region
              $region105: #{gpt_forward.9} parent=92 // pred_check
                _
              $region106: #{gpt_forward.9} parent=92 // pred_check_branch
                %518 = sbr.rel (0) target = $region108
              $region107: #{gpt_forward.9} parent=92 // pred_region
                loop: start=0, step=1, limit=1
                $region109: #{gpt_forward.9} parent=107 // loop_pre_header
                  _
                $region110: #{gpt_forward.9} parent=107 // loop_header
                  %s520 = sphi 0, %s524
                  %p521 = scmp.ge.s32.totalorder %s520, 1
                  %s525 = sphi %s469, %s469
                  %s526 = sphi %s466, %s466
                $region111: #{gpt_forward.9} parent=107 // loop_header_branch
                  %523 = sbr.rel (%p521) target = $region115
                $region112: #{gpt_forward.9} parent=107 // loop_body
                  %v527 = vld [vmem:[%s525] sm:$0xff]
                  %528 = vst [vmem:[%s526] sm:$0xff] %v527
                  %v529 = vld [vmem:[%s525 + $0x10] sm:$0xff]
                  %530 = vst [vmem:[%s526 + $0x8] sm:$0xff] %v529
                  %v531 = vld [vmem:[%s525 + $0x20] sm:$0xff]
                  %532 = vst [vmem:[%s526 + $0x10] sm:$0xff] %v531
                  %v533 = vld [vmem:[%s525 + $0x30] sm:$0xff]
                  %534 = vst [vmem:[%s526 + $0x18] sm:$0xff] %v533
                  %v535 = vld [vmem:[%s525 + $0x40] sm:$0xff]
                  %536 = vst [vmem:[%s526 + $0x20] sm:$0xff] %v535
                  %v537 = vld [vmem:[%s525 + $0x50] sm:$0xff]
                  %538 = vst [vmem:[%s526 + $0x28] sm:$0xff] %v537
                  %v539 = vld [vmem:[%s525 + $0x60] sm:$0xff]
                  %540 = vst [vmem:[%s526 + $0x30] sm:$0xff] %v539
                  %v541 = vld [vmem:[%s525 + $0x70] sm:$0xff]
                  %542 = vst [vmem:[%s526 + $0x38] sm:$0xff] %v541
                  %v543 = vld [vmem:[%s525 + $0x80] sm:$0xff]
                  %544 = vst [vmem:[%s526 + $0x40] sm:$0xff] %v543
                  %v545 = vld [vmem:[%s525 + $0x90] sm:$0xff]
                  %546 = vst [vmem:[%s526 + $0x48] sm:$0xff] %v545
                  %v547 = vld [vmem:[%s525 + $0xa0] sm:$0xff]
                  %548 = vst [vmem:[%s526 + $0x50] sm:$0xff] %v547
                  %v549 = vld [vmem:[%s525 + $0xb0] sm:$0xff]
                  %550 = vst [vmem:[%s526 + $0x58] sm:$0xff] %v549
                  %v551 = vld [vmem:[%s525 + $0xc0] sm:$0xff]
                  %552 = vst [vmem:[%s526 + $0x60] sm:$0xff] %v551
                  %v553 = vld [vmem:[%s525 + $0xd0] sm:$0xff]
                  %554 = vst [vmem:[%s526 + $0x68] sm:$0xff] %v553
                  %v555 = vld [vmem:[%s525 + $0xe0] sm:$0xff]
                  %556 = vst [vmem:[%s526 + $0x70] sm:$0xff] %v555
                  %v557 = vld [vmem:[%s525 + $0xf0] sm:$0xff]
                  %558 = vst [vmem:[%s526 + $0x78] sm:$0xff] %v557
                $region113: #{gpt_forward.9} parent=107 // loop_footer
                  %s524 = sadd.s32 1, %s520
                $region114: #{gpt_forward.9} parent=107 // loop_footer_branch
                  %519 = sbr.rel target = $region110
                $region115: #{gpt_forward.9} parent=107 // loop_exit
                  _
              $region108: #{gpt_forward.9} parent=92 // pred_fallthru
                _
              // Predicated region
              $region116: #{gpt_forward.9} parent=92 // pred_check
                _
              $region117: #{gpt_forward.9} parent=92 // pred_check_branch
                %560 = sbr.rel target = $region119
              $region118: #{gpt_forward.9} parent=92 // pred_region
                _
              $region119: #{gpt_forward.9} parent=92 // pred_fallthru
                _
            $region93: #{gpt_forward.9} parent=88 // pred_fallthru
              _
            // Predicated region
            $region94: #{gpt_forward.9} parent=88 // pred_check
              _
            $region95: #{gpt_forward.9} parent=88 // pred_check_branch
              %475 = sbr.rel target = $region97
            $region96: #{gpt_forward.9} parent=88 // pred_region
              loop: start=0, step=1, limit=1
              $region98: #{gpt_forward.9} parent=96 // loop_pre_header
                _
              $region99: #{gpt_forward.9} parent=96 // loop_header
                %s478 = sphi 0, %s482
                %p479 = scmp.ge.s32.totalorder %s478, 1
                %s483 = sphi %s469, %s469
                %s484 = sphi %s466, %s466
              $region100: #{gpt_forward.9} parent=96 // loop_header_branch
                %481 = sbr.rel (%p479) target = $region104
              $region101: #{gpt_forward.9} parent=96 // loop_body
                %v485 = vld [vmem:[%s483] sm:$0xff]
                %486 = vst [vmem:[%s484] sm:$0xff] %v485
                %v487 = vld [vmem:[%s483 + $0x10] sm:$0xff]
                %488 = vst [vmem:[%s484 + $0x8] sm:$0xff] %v487
                %v489 = vld [vmem:[%s483 + $0x20] sm:$0xff]
                %490 = vst [vmem:[%s484 + $0x10] sm:$0xff] %v489
                %v491 = vld [vmem:[%s483 + $0x30] sm:$0xff]
                %492 = vst [vmem:[%s484 + $0x18] sm:$0xff] %v491
                %v493 = vld [vmem:[%s483 + $0x40] sm:$0xff]
                %494 = vst [vmem:[%s484 + $0x20] sm:$0xff] %v493
                %v495 = vld [vmem:[%s483 + $0x50] sm:$0xff]
                %496 = vst [vmem:[%s484 + $0x28] sm:$0xff] %v495
                %v497 = vld [vmem:[%s483 + $0x60] sm:$0xff]
                %498 = vst [vmem:[%s484 + $0x30] sm:$0xff] %v497
                %v499 = vld [vmem:[%s483 + $0x70] sm:$0xff]
                %500 = vst [vmem:[%s484 + $0x38] sm:$0xff] %v499
                %v501 = vld [vmem:[%s483 + $0x80] sm:$0xff]
                %502 = vst [vmem:[%s484 + $0x40] sm:$0xff] %v501
                %v503 = vld [vmem:[%s483 + $0x90] sm:$0xff]
                %504 = vst [vmem:[%s484 + $0x48] sm:$0xff] %v503
                %v505 = vld [vmem:[%s483 + $0xa0] sm:$0xff]
                %506 = vst [vmem:[%s484 + $0x50] sm:$0xff] %v505
                %v507 = vld [vmem:[%s483 + $0xb0] sm:$0xff]
                %508 = vst [vmem:[%s484 + $0x58] sm:$0xff] %v507
                %v509 = vld [vmem:[%s483 + $0xc0] sm:$0xff]
                %510 = vst [vmem:[%s484 + $0x60] sm:$0xff] %v509
                %v511 = vld [vmem:[%s483 + $0xd0] sm:$0xff]
                %512 = vst [vmem:[%s484 + $0x68] sm:$0xff] %v511
                %v513 = vld [vmem:[%s483 + $0xe0] sm:$0xff]
                %514 = vst [vmem:[%s484 + $0x70] sm:$0xff] %v513
                %v515 = vld [vmem:[%s483 + $0xf0] sm:$0xff]
                %516 = vst [vmem:[%s484 + $0x78] sm:$0xff] %v515
              $region102: #{gpt_forward.9} parent=96 // loop_footer
                %s482 = sadd.s32 1, %s478
              $region103: #{gpt_forward.9} parent=96 // loop_footer_branch
                %477 = sbr.rel target = $region99
              $region104: #{gpt_forward.9} parent=96 // loop_exit
                _
            $region97: #{gpt_forward.9} parent=88 // pred_fallthru
              _
          $region89: #{gpt_forward.9} parent=84 // pred_fallthru
            _
          %561 = vnop
        $region85: #{gpt_forward.9} parent=35 // pred_fallthru
          _
        // Predicated region
        $region120: #{gpt_forward.9} parent=35 // pred_check
          %p562 = pneg %p221
        $region121: #{gpt_forward.9} parent=35 // pred_check_branch
          %564 = sbr.rel (%p562) target = $region123
        $region122: #{gpt_forward.9} parent=35 // pred_region
          %s565 = smul.u32 2, %s25
          %p566 = scmp.lt.s32.totalorder %s565, 3
          %s567 = scalar_select %p566, %s565, 3
          %s568 = scalar_lea.vmem %s7, %s567
          %s569 = smul.u32 2, %s25
        $region123: #{gpt_forward.9} parent=35 // pred_fallthru
          _
        // Predicated region
        $region124: #{gpt_forward.9} parent=35 // pred_check
          %p570 = pneg %p247
        $region125: #{gpt_forward.9} parent=35 // pred_check_branch
          %572 = sbr.rel (%p570) target = $region127
        $region126: #{gpt_forward.9} parent=35 // pred_region
          %s573 = smul.u32 32, %s25
          %p574 = scmp.lt.s32.totalorder %s573, 63
          %s575 = scalar_select %p574, %s573, 63
          %s576 = smul.addr %s575, 4
          %s577 = scalar_lea.vmem %s8, %s576
          %s578 = smul.u32 32, %s25
        $region127: #{gpt_forward.9} parent=35 // pred_fallthru
          _
      $region36: #{gpt_forward.9} parent=5 // pred_fallthru
        _
      %p579 = scmp.le.s32.totalorder 1, %s16
      %p580 = scmp.lt.s32.totalorder %s16, 9
      %p581 = pnand %p579, %p580
      %p582 = pneg %p581
      // Predicated region
      $region128: #{gpt_forward.9} parent=5 // pred_check
        _
      $region129: #{gpt_forward.9} parent=5 // pred_check_branch
        %584 = sbr.rel (%p581) target = $region131
      $region130: #{gpt_forward.9} parent=5 // pred_region
        %s585 = ssub.s32 %s16, 1
        %s586 = sand.u32 %s78, 1
        %s587 = sand.u32 %s78, 1
        %s588 = smul.addr %s587, 64
        %s589 = scalar_lea.vmem [#allocation5], %s588
        // Predicated region
        $region132: #{gpt_forward.9} parent=130 // pred_check
          %p590 = pneg %p91
        $region133: #{gpt_forward.9} parent=130 // pred_check_branch
          %592 = sbr.rel (%p590) target = $region135
        $region134: #{gpt_forward.9} parent=130 // pred_region
          _
        $region135: #{gpt_forward.9} parent=130 // pred_fallthru
          _
        %s593 = sand.u32 %s188, 1
        %s594 = sand.u32 %s188, 1
        %s595 = smul.addr %s594, 128
        %s596 = scalar_lea.vmem [#allocation6], %s595
        // Predicated region
        $region136: #{gpt_forward.9} parent=130 // pred_check
          %p597 = pneg %p201
        $region137: #{gpt_forward.9} parent=130 // pred_check_branch
          %599 = sbr.rel (%p597) target = $region139
        $region138: #{gpt_forward.9} parent=130 // pred_region
          _
        $region139: #{gpt_forward.9} parent=130 // pred_fallthru
          _
        %s600 = smul.u32 4, %s27
        %p601 = scmp.lt.s32.totalorder %s26, 1
        %s602 = scalar_select %p601, %s26, 1
        %p603 = scmp.lt.s32.totalorder %s600, 7
        %s604 = scalar_select %p603, %s600, 7
        %s605 = smul.addr %s602, 8
        %s606 = sadd.s32 %s604, %s605
        %s607 = smul.addr %s606, 8
        %s608 = scalar_lea.vmem %s0, %s607
        %p609 = pneg %p63
        %p610 = pneg %p60
        %s611 = sand.u32 %s78, 1
        %s612 = sand.u32 %s78, 1
        %s613 = smul.addr %s612, 64
        %s614 = scalar_lea.vmem [#allocation5], %s613
        %p615 = pneg %p91
        %p616 = pneg %p88
        %p617 = pneg %p112
        %p618 = pneg %p109
        %p619 = pneg %p133
        %p620 = pneg %p130
        %p621 = pneg %p154
        %p622 = pneg %p151
        %p623 = pneg %p175
        %p624 = pneg %p172
        %s625 = sand.u32 %s188, 1
        %s626 = sand.u32 %s188, 1
        %s627 = smul.addr %s626, 128
        %s628 = scalar_lea.vmem [#allocation6], %s627
        %p629 = pneg %p201
        %p630 = pneg %p198
        %s631 = smul.u32 2, %s28
        %p632 = scmp.lt.s32.totalorder %s631, 3
        %s633 = scalar_select %p632, %s631, 3
        %s634 = scalar_lea.vmem %s7, %s633
        %p635 = pneg %p227
        %p636 = pneg %p224
        %s637 = smul.u32 32, %s28
        %p638 = scmp.lt.s32.totalorder %s637, 63
        %s639 = scalar_select %p638, %s637, 63
        %s640 = smul.addr %s639, 4
        %s641 = scalar_lea.vmem %s8, %s640
        %p642 = pneg %p253
        %p643 = pneg %p250
        %p644 = pneg %p274
        %p645 = pneg %p271
        %p646 = pneg %p302
        %p647 = pneg %p299
        %s648 = smul.u32 4, %s27
        %p649 = scmp.lt.s32.totalorder %s26, 1
        %s650 = scalar_select %p649, %s26, 1
        %p651 = scmp.lt.s32.totalorder %s648, 7
        %s652 = scalar_select %p651, %s648, 7
        %s653 = smul.addr %s650, 8
        %s654 = sadd.s32 %s652, %s653
        %s655 = smul.addr %s654, 8
        %s656 = scalar_lea.vmem %s10, %s655
        %s657 = smul.u32 4, %s27
        %p658 = scmp.lt.s32.totalorder %s26, 1
        %s659 = scalar_select %p658, %s26, 1
        %p660 = scmp.lt.s32.totalorder %s657, 7
        %s661 = scalar_select %p660, %s657, 7
        %s662 = smul.addr %s659, 8
        %s663 = sadd.s32 %s661, %s662
        %s664 = smul.addr %s663, 8
        %s665 = scalar_lea.vmem %s0, %s664
        %s666 = smul.u32 4, %s27
        %s667 = smul.u32 4, %s27
        %s668 = smul.u32 2, %s28
        %s669 = smul.u32 2, %s28
        %p670 = scmp.lt.s32.totalorder %s669, 3
        %s671 = scalar_select %p670, %s669, 3
        %s672 = scalar_lea.vmem %s7, %s671
        %s673 = smul.u32 2, %s28
        %s674 = smul.u32 32, %s28
        %p675 = scmp.lt.s32.totalorder %s674, 63
        %s676 = scalar_select %p675, %s674, 63
        %s677 = smul.addr %s676, 4
        %s678 = scalar_lea.vmem %s8, %s677
        %s679 = smul.u32 32, %s28
        %s680 = smul.u32 4, %s27
        %p681 = scmp.lt.s32.totalorder %s26, 1
        %s682 = scalar_select %p681, %s26, 1
        %p683 = scmp.lt.s32.totalorder %s680, 7
        %s684 = scalar_select %p683, %s680, 7
        %s685 = smul.addr %s682, 8
        %s686 = sadd.s32 %s684, %s685
        %s687 = smul.addr %s686, 8
        %s688 = scalar_lea.vmem %s10, %s687
        %s689 = smul.u32 4, %s27
        %p691 = scmp.eq.s32.totalorder %s28, 0
        // Predicated region
        $region140: #{gpt_forward.9} parent=130 // pred_check
          %p692 = pneg %p691
        $region141: #{gpt_forward.9} parent=130 // pred_check_branch
          %694 = sbr.rel (%p692) target = $region143
        $region142: #{gpt_forward.9} parent=130 // pred_region
          %v695 = vld [vmem:[%s589] sm:$0xf]
          %v696 = vld [vmem:[%s589 + $0x4] sm:$0xf]
          %v697 = vld [vmem:[%s589 + $0x8] sm:$0xf]
          %v698 = vld [vmem:[%s589 + $0xc] sm:$0xf]
          %v699 = vld [vmem:[%s2] sm:$0xf]
          %v700 = vld [vmem:[%s2 + $0x4] sm:$0xf]
          %v701 = vld [vmem:[%s2 + $0x8] sm:$0xf]
          %v702 = vld [vmem:[%s2 + $0xc] sm:$0xf]
          %s703 = scalar_lea.vmem %s589, 16 [#allocation5]
          %v704 = vld [vmem:[%s703] sm:$0xf]
          %v705 = vld [vmem:[%s703 + $0x4] sm:$0xf]
          %v706 = vld [vmem:[%s703 + $0x8] sm:$0xf]
          %v707 = vld [vmem:[%s703 + $0xc] sm:$0xf]
          %s708 = scalar_lea.vmem %s2, 16
          %v709 = vld [vmem:[%s708] sm:$0xf]
          %v710 = vld [vmem:[%s708 + $0x4] sm:$0xf]
          %v711 = vld [vmem:[%s708 + $0x8] sm:$0xf]
          %v712 = vld [vmem:[%s708 + $0xc] sm:$0xf]
          %v717 = vunpack.c.l.b16 %v704
          %v718 = vunpack.c.l.b16 %v705
          %v719 = vunpack.c.l.b16 %v706
          %v720 = vunpack.c.l.b16 %v707
          %v721 = vpack.c.b16 %v718, %v717
          %v722 = vpack.c.b16 %v720, %v719
          %v727 = vunpack.c.l.b16 %v709
          %v728 = vunpack.c.l.b16 %v710
          %v729 = vunpack.c.l.b16 %v711
          %v730 = vunpack.c.l.b16 %v712
          %v731 = vpack.c.b16 %v728, %v727
          %v732 = vpack.c.b16 %v730, %v729
          %vm735 = vcmask 261120
          %v737 = vsel %vm735, %v721, 0
          %v740 = vsel %vm735, %v722, 0
          %742 = vmatprep.subr.bf16.mxu0 0
          %743 = vmatpush1.bf16.msra.mxu0 %v731
          %744 = vmatprep.subr.bf16.mxu0 0
          %745 = vmatpush1.bf16.msra.mxu0 %v732
          %746 = vmatprep.subr.bf16.mxu0 0
          %747 = vmatpush1.bf16.msra.mxu0 0
          %748 = vmatprep.subr.bf16.mxu0 0
          %749 = vmatpush1.bf16.msra.mxu0 0
          %750 = vmatprep.subr.bf16.mxu0 0
          %751 = vmatpush1.bf16.msra.mxu0 0
          %752 = vmatprep.subr.bf16.mxu0 0
          %753 = vmatpush1.bf16.msra.mxu0 0
          %754 = vmatprep.subr.bf16.mxu0 0
          %755 = vmatpush1.bf16.msra.mxu0 0
          %756 = vmatprep.subr.bf16.mxu0 0
          %757 = vmatpush1.bf16.msra.mxu0 0
          %758 = vmatprep.subr.bf16.mxu0 0
          %759 = vmatpush1.bf16.msra.mxu0 0
          %760 = vmatprep.subr.bf16.mxu0 0
          %761 = vmatpush1.bf16.msra.mxu0 0
          %762 = vmatprep.subr.bf16.mxu0 0
          %763 = vmatpush1.bf16.msra.mxu0 0
          %764 = vmatprep.subr.bf16.mxu0 0
          %765 = vmatpush1.bf16.msra.mxu0 0
          %766 = vmatprep.subr.bf16.mxu0 0
          %767 = vmatpush1.bf16.msra.mxu0 0
          %768 = vmatprep.subr.bf16.mxu0 0
          %769 = vmatpush1.bf16.msra.mxu0 0
          %770 = vmatprep.subr.bf16.mxu0 0
          %771 = vmatpush1.bf16.msra.mxu0 0
          %772 = vmatprep.subr.bf16.mxu0 0
          %773 = vmatpush1.bf16.msra.mxu0 0
          %774 = vmatprep.mubr.bf16.mxu0 0
          %775 = vmatmul.mubr.bf16.gmra.mrb[0].mxu0 %v737
          %v776 = vpop.f32.mrb[0].mxu0
          %v777 = vadd.f32 0.0, %v776
          %v778 = vpop.f32.mrb[0].mxu0
          %v779 = vpop.f32.mrb[0].mxu0
          %v780 = vadd.f32 0.0, %v779
          %v781 = vpop.f32.mrb[0].mxu0
          %782 = vmatprep.mubr.bf16.mxu0 0
          %783 = vmatmul.mubr.bf16.gmra.mrb[0].mxu0 %v740
          %v784 = vpop.f32.mrb[0].mxu0
          %v785 = vadd.f32 0.0, %v784
          %v786 = vpop.f32.mrb[0].mxu0
          %v787 = vpop.f32.mrb[0].mxu0
          %v788 = vadd.f32 0.0, %v787
          %v789 = vpop.f32.mrb[0].mxu0
          %790 = vdwg.mxu0
          %v795 = vunpack.c.l.b16 %v695
          %v796 = vunpack.c.l.b16 %v696
          %v797 = vunpack.c.l.b16 %v697
          %v798 = vunpack.c.l.b16 %v698
          %v799 = vpack.c.b16 %v796, %v795
          %v800 = vpack.c.b16 %v798, %v797
          %v805 = vunpack.c.l.b16 %v699
          %v806 = vunpack.c.l.b16 %v700
          %v807 = vunpack.c.l.b16 %v701
          %v808 = vunpack.c.l.b16 %v702
          %v809 = vpack.c.b16 %v806, %v805
          %v810 = vpack.c.b16 %v808, %v807
          %v814 = vsel %vm735, %v799, 0
          %v817 = vsel %vm735, %v800, 0
          %819 = vmatprep.subr.bf16.mxu0 0
          %820 = vmatpush1.bf16.msra.mxu0 %v809
          %821 = vmatprep.subr.bf16.mxu0 0
          %822 = vmatpush1.bf16.msra.mxu0 %v810
          %823 = vmatprep.subr.bf16.mxu0 0
          %824 = vmatpush1.bf16.msra.mxu0 0
          %825 = vmatprep.subr.bf16.mxu0 0
          %826 = vmatpush1.bf16.msra.mxu0 0
          %827 = vmatprep.subr.bf16.mxu0 0
          %828 = vmatpush1.bf16.msra.mxu0 0
          %829 = vmatprep.subr.bf16.mxu0 0
          %830 = vmatpush1.bf16.msra.mxu0 0
          %831 = vmatprep.subr.bf16.mxu0 0
          %832 = vmatpush1.bf16.msra.mxu0 0
          %833 = vmatprep.subr.bf16.mxu0 0
          %834 = vmatpush1.bf16.msra.mxu0 0
          %835 = vmatprep.subr.bf16.mxu0 0
          %836 = vmatpush1.bf16.msra.mxu0 0
          %837 = vmatprep.subr.bf16.mxu0 0
          %838 = vmatpush1.bf16.msra.mxu0 0
          %839 = vmatprep.subr.bf16.mxu0 0
          %840 = vmatpush1.bf16.msra.mxu0 0
          %841 = vmatprep.subr.bf16.mxu0 0
          %842 = vmatpush1.bf16.msra.mxu0 0
          %843 = vmatprep.subr.bf16.mxu0 0
          %844 = vmatpush1.bf16.msra.mxu0 0
          %845 = vmatprep.subr.bf16.mxu0 0
          %846 = vmatpush1.bf16.msra.mxu0 0
          %847 = vmatprep.subr.bf16.mxu0 0
          %848 = vmatpush1.bf16.msra.mxu0 0
          %849 = vmatprep.subr.bf16.mxu0 0
          %850 = vmatpush1.bf16.msra.mxu0 0
          %851 = vmatprep.mubr.bf16.mxu0 0
          %852 = vmatmul.mubr.bf16.gmra.mrb[0].mxu0 %v814
          %v853 = vpop.f32.mrb[0].mxu0
          %v854 = vadd.f32 %v777, %v853
          %v855 = vpop.f32.mrb[0].mxu0
          %v856 = vpop.f32.mrb[0].mxu0
          %v857 = vadd.f32 %v780, %v856
          %v858 = vpop.f32.mrb[0].mxu0
          %859 = vmatprep.mubr.bf16.mxu0 0
          %860 = vmatmul.mubr.bf16.gmra.mrb[0].mxu0 %v817
          %v861 = vpop.f32.mrb[0].mxu0
          %v862 = vadd.f32 %v785, %v861
          %v863 = vpop.f32.mrb[0].mxu0
          %v864 = vpop.f32.mrb[0].mxu0
          %v865 = vadd.f32 %v788, %v864
          %v866 = vpop.f32.mrb[0].mxu0
          %867 = vdwg.mxu0
          %s868 = scalar_lea.vmem %s589, 32 [#allocation5]
          %v869 = vld [vmem:[%s868] sm:$0xf]
          %v870 = vld [vmem:[%s868 + $0x4] sm:$0xf]
          %v871 = vld [vmem:[%s868 + $0x8] sm:$0xf]
          %v872 = vld [vmem:[%s868 + $0xc] sm:$0xf]
          %s873 = scalar_lea.vmem %s2, 32
          %v874 = vld [vmem:[%s873] sm:$0xf]
          %v875 = vld [vmem:[%s873 + $0x4] sm:$0xf]
          %v876 = vld [vmem:[%s873 + $0x8] sm:$0xf]
          %v877 = vld [vmem:[%s873 + $0xc] sm:$0xf]
          %v882 = vunpack.c.l.b16 %v869
          %v883 = vunpack.c.l.b16 %v870
          %v884 = vunpack.c.l.b16 %v871
          %v885 = vunpack.c.l.b16 %v872
          %v886 = vpack.c.b16 %v883, %v882
          %v887 = vpack.c.b16 %v885, %v884
          %v892 = vunpack.c.l.b16 %v874
          %v893 = vunpack.c.l.b16 %v875
          %v894 = vunpack.c.l.b16 %v876
          %v895 = vunpack.c.l.b16 %v877
          %v896 = vpack.c.b16 %v893, %v892
          %v897 = vpack.c.b16 %v895, %v894
          %v901 = vsel %vm735, %v886, 0
          %v904 = vsel %vm735, %v887, 0
          %906 = vmatprep.subr.bf16.mxu0 0
          %907 = vmatpush1.bf16.msra.mxu0 %v896
          %908 = vmatprep.subr.bf16.mxu0 0
          %909 = vmatpush1.bf16.msra.mxu0 %v897
          %910 = vmatprep.subr.bf16.mxu0 0
          %911 = vmatpush1.bf16.msra.mxu0 0
          %912 = vmatprep.subr.bf16.mxu0 0
          %913 = vmatpush1.bf16.msra.mxu0 0
          %914 = vmatprep.subr.bf16.mxu0 0
          %915 = vmatpush1.bf16.msra.mxu0 0
          %916 = vmatprep.subr.bf16.mxu0 0
          %917 = vmatpush1.bf16.msra.mxu0 0
          %918 = vmatprep.subr.bf16.mxu0 0
          %919 = vmatpush1.bf16.msra.mxu0 0
          %920 = vmatprep.subr.bf16.mxu0 0
          %921 = vmatpush1.bf16.msra.mxu0 0
          %922 = vmatprep.subr.bf16.mxu0 0
          %923 = vmatpush1.bf16.msra.mxu0 0
          %924 = vmatprep.subr.bf16.mxu0 0
          %925 = vmatpush1.bf16.msra.mxu0 0
          %926 = vmatprep.subr.bf16.mxu0 0
          %927 = vmatpush1.bf16.msra.mxu0 0
          %928 = vmatprep.subr.bf16.mxu0 0
          %929 = vmatpush1.bf16.msra.mxu0 0
          %930 = vmatprep.subr.bf16.mxu0 0
          %931 = vmatpush1.bf16.msra.mxu0 0
          %932 = vmatprep.subr.bf16.mxu0 0
          %933 = vmatpush1.bf16.msra.mxu0 0
          %934 = vmatprep.subr.bf16.mxu0 0
          %935 = vmatpush1.bf16.msra.mxu0 0
          %936 = vmatprep.subr.bf16.mxu0 0
          %937 = vmatpush1.bf16.msra.mxu0 0
          %938 = vmatprep.mubr.bf16.mxu0 0
          %939 = vmatmul.mubr.bf16.gmra.mrb[0].mxu0 %v901
          %v940 = vpop.f32.mrb[0].mxu0
          %v941 = vadd.f32 0.0, %v940
          %v942 = vpop.f32.mrb[0].mxu0
          %v943 = vpop.f32.mrb[0].mxu0
          %v944 = vadd.f32 0.0, %v943
          %v945 = vpop.f32.mrb[0].mxu0
          %946 = vmatprep.mubr.bf16.mxu0 0
          %947 = vmatmul.mubr.bf16.gmra.mrb[0].mxu0 %v904
          %v948 = vpop.f32.mrb[0].mxu0
          %v949 = vadd.f32 0.0, %v948
          %v950 = vpop.f32.mrb[0].mxu0
          %v951 = vpop.f32.mrb[0].mxu0
          %v952 = vadd.f32 0.0, %v951
          %v953 = vpop.f32.mrb[0].mxu0
          %954 = vdwg.mxu0
          %v955 = vadd.f32 %v854, %v941
          %v956 = vadd.f32 %v857, %v944
          %v957 = vadd.f32 %v862, %v949
          %v958 = vadd.f32 %v865, %v952
          %s959 = scalar_lea.vmem %s589, 48 [#allocation5]
          %v960 = vld [vmem:[%s959] sm:$0xf]
          %v961 = vld [vmem:[%s959 + $0x4] sm:$0xf]
          %v962 = vld [vmem:[%s959 + $0x8] sm:$0xf]
          %v963 = vld [vmem:[%s959 + $0xc] sm:$0xf]
          %s964 = scalar_lea.vmem %s2, 48
          %v965 = vld [vmem:[%s964] sm:$0xf]
          %v966 = vld [vmem:[%s964 + $0x4] sm:$0xf]
          %v967 = vld [vmem:[%s964 + $0x8] sm:$0xf]
          %v968 = vld [vmem:[%s964 + $0xc] sm:$0xf]
          %v973 = vunpack.c.l.b16 %v960
          %v974 = vunpack.c.l.b16 %v961
          %v975 = vunpack.c.l.b16 %v962
          %v976 = vunpack.c.l.b16 %v963
          %v977 = vpack.c.b16 %v974, %v973
          %v978 = vpack.c.b16 %v976, %v975
          %v983 = vunpack.c.l.b16 %v965
          %v984 = vunpack.c.l.b16 %v966
          %v985 = vunpack.c.l.b16 %v967
          %v986 = vunpack.c.l.b16 %v968
          %v987 = vpack.c.b16 %v984, %v983
          %v988 = vpack.c.b16 %v986, %v985
          %v992 = vsel %vm735, %v977, 0
          %v995 = vsel %vm735, %v978, 0
          %997 = vmatprep.subr.bf16.mxu0 0
          %998 = vmatpush1.bf16.msra.mxu0 %v987
          %999 = vmatprep.subr.bf16.mxu0 0
          %1000 = vmatpush1.bf16.msra.mxu0 %v988
          %1001 = vmatprep.subr.bf16.mxu0 0
          %1002 = vmatpush1.bf16.msra.mxu0 0
          %1003 = vmatprep.subr.bf16.mxu0 0
          %1004 = vmatpush1.bf16.msra.mxu0 0
          %1005 = vmatprep.subr.bf16.mxu0 0
          %1006 = vmatpush1.bf16.msra.mxu0 0
          %1007 = vmatprep.subr.bf16.mxu0 0
          %1008 = vmatpush1.bf16.msra.mxu0 0
          %1009 = vmatprep.subr.bf16.mxu0 0
          %1010 = vmatpush1.bf16.msra.mxu0 0
          %1011 = vmatprep.subr.bf16.mxu0 0
          %1012 = vmatpush1.bf16.msra.mxu0 0
          %1013 = vmatprep.subr.bf16.mxu0 0
          %1014 = vmatpush1.bf16.msra.mxu0 0
          %1015 = vmatprep.subr.bf16.mxu0 0
          %1016 = vmatpush1.bf16.msra.mxu0 0
          %1017 = vmatprep.subr.bf16.mxu0 0
          %1018 = vmatpush1.bf16.msra.mxu0 0
          %1019 = vmatprep.subr.bf16.mxu0 0
          %1020 = vmatpush1.bf16.msra.mxu0 0
          %1021 = vmatprep.subr.bf16.mxu0 0
          %1022 = vmatpush1.bf16.msra.mxu0 0
          %1023 = vmatprep.subr.bf16.mxu0 0
          %1024 = vmatpush1.bf16.msra.mxu0 0
          %1025 = vmatprep.subr.bf16.mxu0 0
          %1026 = vmatpush1.bf16.msra.mxu0 0
          %1027 = vmatprep.subr.bf16.mxu0 0
          %1028 = vmatpush1.bf16.msra.mxu0 0
          %1029 = vmatprep.mubr.bf16.mxu0 0
          %1030 = vmatmul.mubr.bf16.gmra.mrb[0].mxu0 %v992
          %v1031 = vpop.f32.mrb[0].mxu0
          %v1032 = vadd.f32 0.0, %v1031
          %v1033 = vpop.f32.mrb[0].mxu0
          %v1034 = vpop.f32.mrb[0].mxu0
          %v1035 = vadd.f32 0.0, %v1034
          %v1036 = vpop.f32.mrb[0].mxu0
          %1037 = vmatprep.mubr.bf16.mxu0 0
          %1038 = vmatmul.mubr.bf16.gmra.mrb[0].mxu0 %v995
          %v1039 = vpop.f32.mrb[0].mxu0
          %v1040 = vadd.f32 0.0, %v1039
          %v1041 = vpop.f32.mrb[0].mxu0
          %v1042 = vpop.f32.mrb[0].mxu0
          %v1043 = vadd.f32 0.0, %v1042
          %v1044 = vpop.f32.mrb[0].mxu0
          %1045 = vdwg.mxu0
          %v1046 = vadd.f32 %v955, %v1032
          %v1047 = vadd.f32 %v956, %v1035
          %v1048 = vadd.f32 %v957, %v1040
          %v1049 = vadd.f32 %v958, %v1043
          %v1050 = vld [vmem:[%s665] sm:$0xff]
          %v1051 = vld [vmem:[%s665 + $0x8] sm:$0xff]
          %v1052 = vld [vmem:[%s665 + $0x10] sm:$0xff]
          %v1053 = vld [vmem:[%s665 + $0x18] sm:$0xff]
          %v1054 = vadd.f32 %v1050, %v1046
          %v1055 = vadd.f32 %v1051, %v1047
          %v1056 = vadd.f32 %v1052, %v1048
          %v1057 = vadd.f32 %v1053, %v1049
          %v1058 = vld [vmem:[%s3] sm:$0x1]
          %v1060 = vlaneseq
          %v1061 = vshrl.u32 %v1060, 7
          %v1062 = vsub.s32 0, %v1061
          %v1063 = vrot.slane %v1058, %v1062
          %v1065 = vadd.f32 %v1054, %v1063
          %v1066 = vadd.f32 %v1055, %v1063
          %v1067 = vadd.f32 %v1056, %v1063
          %v1068 = vadd.f32 %v1057, %v1063
          %1069 = vst [vmem:[#allocation2] sm:$0xff] %v1065
          %1070 = vst [vmem:[#allocation2 + $0x8] sm:$0xff] %v1066
          %1071 = vst [vmem:[#allocation2 + $0x10] sm:$0xff] %v1067
          %1072 = vst [vmem:[#allocation2 + $0x18] sm:$0xff] %v1068
          %v1073 = vld [vmem:[%s4] sm:$0x1]
          %v1074 = vld [vmem:[%s5] sm:$0x1]
          %1075 = vadd.xlane.f32.xlu0 %v1065
          %v1076 = vpop.xlane.xlu0 %1075
          %1077 = vadd.xlane.f32.xlu0 %v1066
          %v1078 = vpop.xlane.xlu0 %1077
          %1079 = vadd.xlane.f32.xlu0 %v1067
          %v1080 = vpop.xlane.xlu0 %1079
          %1081 = vadd.xlane.f32.xlu0 %v1068
          %v1082 = vpop.xlane.xlu0 %1081
          %v1083 = vrcp.pop 128.0
          %v1084 = vmul.f32 %v1076, %v1083
          %v1085 = vmul.f32 %v1078, %v1083
          %v1086 = vmul.f32 %v1080, %v1083
          %v1087 = vmul.f32 %v1082, %v1083
          %v1088 = vsub.f32 %v1065, %v1084
          %v1089 = vsub.f32 %v1066, %v1085
          %v1090 = vsub.f32 %v1067, %v1086
          %v1091 = vsub.f32 %v1068, %v1087
          %v1092 = vmul.f32 %v1088, %v1088
          %v1093 = vmul.f32 %v1089, %v1089
          %v1094 = vmul.f32 %v1090, %v1090
          %v1095 = vmul.f32 %v1091, %v1091
          %1096 = vadd.xlane.f32.xlu0 %v1092
          %v1097 = vpop.xlane.xlu0 %1096
          %1098 = vadd.xlane.f32.xlu0 %v1093
          %v1099 = vpop.xlane.xlu0 %1098
          %1100 = vadd.xlane.f32.xlu0 %v1094
          %v1101 = vpop.xlane.xlu0 %1100
          %1102 = vadd.xlane.f32.xlu0 %v1095
          %v1103 = vpop.xlane.xlu0 %1102
          %v1104 = vmul.f32 %v1097, %v1083
          %v1105 = vmul.f32 %v1099, %v1083
          %v1106 = vmul.f32 %v1101, %v1083
          %v1107 = vmul.f32 %v1103, %v1083
          %v1108 = vadd.f32 %v1104, 1e-05
          %v1109 = vadd.f32 %v1105, 1e-05
          %v1110 = vadd.f32 %v1106, 1e-05
          %v1111 = vadd.f32 %v1107, 1e-05
          %v1112 = vrsqrt.pop %v1108
          %v1113 = vrsqrt.pop %v1109
          %v1114 = vrsqrt.pop %v1110
          %v1115 = vrsqrt.pop %v1111
          %v1116 = vmul.f32 %v1088, %v1112
          %v1117 = vmul.f32 %v1089, %v1113
          %v1118 = vmul.f32 %v1090, %v1114
          %v1119 = vmul.f32 %v1091, %v1115
          %v1121 = vlaneseq
          %v1122 = vshrl.u32 %v1121, 7
          %v1123 = vsub.s32 0, %v1122
          %v1124 = vrot.slane %v1073, %v1123
          %v1126 = vmul.f32 %v1116, %v1124
          %v1127 = vmul.f32 %v1117, %v1124
          %v1128 = vmul.f32 %v1118, %v1124
          %v1129 = vmul.f32 %v1119, %v1124
          %v1131 = vlaneseq
          %v1132 = vshrl.u32 %v1131, 7
          %v1133 = vsub.s32 0, %v1132
          %v1134 = vrot.slane %v1074, %v1133
          %v1136 = vadd.f32 %v1126, %v1134
          %v1137 = vadd.f32 %v1127, %v1134
          %v1138 = vadd.f32 %v1128, %v1134
          %v1139 = vadd.f32 %v1129, %v1134
          %v1140 = vpack.c.bf16 %v1137, %v1136
          %v1141 = vpack.c.bf16 %v1139, %v1138
          %1142 = vst [vmem:[#allocation3] sm:$0xff] %v1140
          %1143 = vst [vmem:[#allocation3 + $0x8] sm:$0xff] %v1141
          %1144 = vst [vmem:[#allocation4] sm:$0xff] 0.0
          %1145 = vst [vmem:[#allocation4 + $0x8] sm:$0xff] 0.0
          %1146 = vst [vmem:[#allocation4 + $0x10] sm:$0xff] 0.0
          %1147 = vst [vmem:[#allocation4 + $0x18] sm:$0xff] 0.0
        $region143: #{gpt_forward.9} parent=130 // pred_fallthru
          _
        %v1148 = vld [vmem:[#allocation3] sm:$0xff]
        %v1149 = vld [vmem:[#allocation3 + $0x8] sm:$0xff]
        %v1150 = vld [vmem:[%s596] sm:$0xff]
        %v1151 = vld [vmem:[%s596 + $0x8] sm:$0xff]
        %v1152 = vld [vmem:[%s596 + $0x10] sm:$0xff]
        %v1153 = vld [vmem:[%s596 + $0x18] sm:$0xff]
        %v1154 = vld [vmem:[%s596 + $0x20] sm:$0xff]
        %v1155 = vld [vmem:[%s596 + $0x28] sm:$0xff]
        %v1156 = vld [vmem:[%s596 + $0x30] sm:$0xff]
        %v1157 = vld [vmem:[%s596 + $0x38] sm:$0xff]
        %v1158 = vld [vmem:[%s596 + $0x40] sm:$0xff]
        %v1159 = vld [vmem:[%s596 + $0x48] sm:$0xff]
        %v1160 = vld [vmem:[%s596 + $0x50] sm:$0xff]
        %v1161 = vld [vmem:[%s596 + $0x58] sm:$0xff]
        %v1162 = vld [vmem:[%s596 + $0x60] sm:$0xff]
        %v1163 = vld [vmem:[%s596 + $0x68] sm:$0xff]
        %v1164 = vld [vmem:[%s596 + $0x70] sm:$0xff]
        %v1165 = vld [vmem:[%s596 + $0x78] sm:$0xff]
        %v1166 = vld [vmem:[%s672] sm:$0x3]
        %v1168 = vlaneseq
        %v1169 = vshrl.u32 %v1168, 7
        %v1170 = vsub.s32 0, %v1169
        %v1171 = vrot.slane %v1166, %v1170
        %v1172 = vlaneseq
        %v1173 = vshrl.u32 %v1172, 7
        %v1174 = vsub.s32 1, %v1173
        %v1175 = vrot.slane %v1166, %v1174
        %v1194 = vunpack.c.l.b16 %v1150
        %v1195 = vunpack.c.h.b16 %v1150
        %v1196 = vunpack.c.l.b16 %v1151
        %v1197 = vunpack.c.h.b16 %v1151
        %v1198 = vunpack.c.l.b16 %v1152
        %v1199 = vunpack.c.h.b16 %v1152
        %v1200 = vunpack.c.l.b16 %v1153
        %v1201 = vunpack.c.h.b16 %v1153
        %v1202 = vunpack.c.l.b16 %v1154
        %v1203 = vunpack.c.h.b16 %v1154
        %v1204 = vunpack.c.l.b16 %v1155
        %v1205 = vunpack.c.h.b16 %v1155
        %v1206 = vunpack.c.l.b16 %v1156
        %v1207 = vunpack.c.h.b16 %v1156
        %v1208 = vunpack.c.l.b16 %v1157
        %v1209 = vunpack.c.h.b16 %v1157
        %v1210 = vunpack.c.l.b16 %v1158
        %v1211 = vunpack.c.h.b16 %v1158
        %v1212 = vunpack.c.l.b16 %v1159
        %v1213 = vunpack.c.h.b16 %v1159
        %v1214 = vunpack.c.l.b16 %v1160
        %v1215 = vunpack.c.h.b16 %v1160
        %v1216 = vunpack.c.l.b16 %v1161
        %v1217 = vunpack.c.h.b16 %v1161
        %v1218 = vunpack.c.l.b16 %v1162
        %v1219 = vunpack.c.h.b16 %v1162
        %v1220 = vunpack.c.l.b16 %v1163
        %v1221 = vunpack.c.h.b16 %v1163
        %v1222 = vunpack.c.l.b16 %v1164
        %v1223 = vunpack.c.h.b16 %v1164
        %v1224 = vunpack.c.l.b16 %v1165
        %v1225 = vunpack.c.h.b16 %v1165
        %v1226 = vpack.c.b16 %v1196, %v1194
        %v1227 = vpack.c.b16 %v1197, %v1195
        %v1228 = vpack.c.b16 %v1200, %v1198
        %v1229 = vpack.c.b16 %v1201, %v1199
        %v1230 = vpack.c.b16 %v1204, %v1202
        %v1231 = vpack.c.b16 %v1205, %v1203
        %v1232 = vpack.c.b16 %v1208, %v1206
        %v1233 = vpack.c.b16 %v1209, %v1207
        %v1234 = vpack.c.b16 %v1212, %v1210
        %v1235 = vpack.c.b16 %v1213, %v1211
        %v1236 = vpack.c.b16 %v1216, %v1214
        %v1237 = vpack.c.b16 %v1217, %v1215
        %v1238 = vpack.c.b16 %v1220, %v1218
        %v1239 = vpack.c.b16 %v1221, %v1219
        %v1240 = vpack.c.b16 %v1224, %v1222
        %v1241 = vpack.c.b16 %v1225, %v1223
        %1258 = vmatprep.subr.bf16.mxu0 %v1227
        %1259 = vmatpush1.bf16.msra.mxu0 %v1226
        %1260 = vmatprep.subr.bf16.mxu0 %v1229
        %1261 = vmatpush1.bf16.msra.mxu0 %v1228
        %1262 = vmatprep.subr.bf16.mxu0 %v1231
        %1263 = vmatpush1.bf16.msra.mxu0 %v1230
        %1264 = vmatprep.subr.bf16.mxu0 %v1233
        %1265 = vmatpush1.bf16.msra.mxu0 %v1232
        %1266 = vmatprep.subr.bf16.mxu0 %v1235
        %1267 = vmatpush1.bf16.msra.mxu0 %v1234
        %1268 = vmatprep.subr.bf16.mxu0 %v1237
        %1269 = vmatpush1.bf16.msra.mxu0 %v1236
        %1270 = vmatprep.subr.bf16.mxu0 %v1239
        %1271 = vmatpush1.bf16.msra.mxu0 %v1238
        %1272 = vmatprep.subr.bf16.mxu0 %v1241
        %1273 = vmatpush1.bf16.msra.mxu0 %v1240
        %1274 = vmatprep.subr.bf16.mxu0 0
        %1275 = vmatpush1.bf16.msra.mxu0 0
        %1276 = vmatprep.subr.bf16.mxu0 0
        %1277 = vmatpush1.bf16.msra.mxu0 0
        %1278 = vmatprep.subr.bf16.mxu0 0
        %1279 = vmatpush1.bf16.msra.mxu0 0
        %1280 = vmatprep.subr.bf16.mxu0 0
        %1281 = vmatpush1.bf16.msra.mxu0 0
        %1282 = vmatprep.subr.bf16.mxu0 0
        %1283 = vmatpush1.bf16.msra.mxu0 0
        %1284 = vmatprep.subr.bf16.mxu0 0
        %1285 = vmatpush1.bf16.msra.mxu0 0
        %1286 = vmatprep.subr.bf16.mxu0 0
        %1287 = vmatpush1.bf16.msra.mxu0 0
        %1288 = vmatprep.subr.bf16.mxu0 0
        %1289 = vmatpush1.bf16.msra.mxu0 0
        %1290 = vmatprep.mubr.bf16.mxu0 0
        %1291 = vmatmul.mubr.bf16.gmra.mrb[0].mxu0 %v1148
        %v1292 = vpop.f32.mrb[0].mxu0
        %v1293 = vadd.f32 %v1171, %v1292
        %v1294 = vpop.f32.mrb[0].mxu0
        %v1295 = vadd.f32 %v1175, %v1294
        %v1296 = vpop.f32.mrb[0].mxu0
        %v1297 = vadd.f32 %v1171, %v1296
        %v1298 = vpop.f32.mrb[0].mxu0
        %v1299 = vadd.f32 %v1175, %v1298
        %1300 = vmatprep.mubr.bf16.mxu0 0
        %1301 = vmatmul.mubr.bf16.gmra.mrb[0].mxu0 %v1149
        %v1302 = vpop.f32.mrb[0].mxu0
        %v1303 = vadd.f32 %v1171, %v1302
        %v1304 = vpop.f32.mrb[0].mxu0
        %v1305 = vadd.f32 %v1175, %v1304
        %v1306 = vpop.f32.mrb[0].mxu0
        %v1307 = vadd.f32 %v1171, %v1306
        %v1308 = vpop.f32.mrb[0].mxu0
        %v1309 = vadd.f32 %v1175, %v1308
        %1310 = vdwg.mxu0
        %v1311 = vmul.f32 %v1293, 0.5
        %v1312 = vmul.f32 %v1295, 0.5
        %v1313 = vmul.f32 %v1297, 0.5
        %v1314 = vmul.f32 %v1299, 0.5
        %v1315 = vmul.f32 %v1303, 0.5
        %v1316 = vmul.f32 %v1305, 0.5
        %v1317 = vmul.f32 %v1307, 0.5
        %v1318 = vmul.f32 %v1309, 0.5
        %v1319 = vmul.f32 %v1293, 0.044715
        %v1320 = vmul.f32 %v1295, 0.044715
        %v1321 = vmul.f32 %v1297, 0.044715
        %v1322 = vmul.f32 %v1299, 0.044715
        %v1323 = vmul.f32 %v1303, 0.044715
        %v1324 = vmul.f32 %v1305, 0.044715
        %v1325 = vmul.f32 %v1307, 0.044715
        %v1326 = vmul.f32 %v1309, 0.044715
        %v1327 = vmul.f32 %v1319, %v1293
        %v1328 = vmul.f32 %v1320, %v1295
        %v1329 = vmul.f32 %v1321, %v1297
        %v1330 = vmul.f32 %v1322, %v1299
        %v1331 = vmul.f32 %v1323, %v1303
        %v1332 = vmul.f32 %v1324, %v1305
        %v1333 = vmul.f32 %v1325, %v1307
        %v1334 = vmul.f32 %v1326, %v1309
        %v1335 = vmul.f32 %v1327, %v1293
        %v1336 = vmul.f32 %v1328, %v1295
        %v1337 = vmul.f32 %v1329, %v1297
        %v1338 = vmul.f32 %v1330, %v1299
        %v1339 = vmul.f32 %v1331, %v1303
        %v1340 = vmul.f32 %v1332, %v1305
        %v1341 = vmul.f32 %v1333, %v1307
        %v1342 = vmul.f32 %v1334, %v1309
        %v1343 = vadd.f32 %v1293, %v1335
        %v1344 = vadd.f32 %v1295, %v1336
        %v1345 = vadd.f32 %v1297, %v1337
        %v1346 = vadd.f32 %v1299, %v1338
        %v1347 = vadd.f32 %v1303, %v1339
        %v1348 = vadd.f32 %v1305, %v1340
        %v1349 = vadd.f32 %v1307, %v1341
        %v1350 = vadd.f32 %v1309, %v1342
        %v1351 = vmul.f32 %v1343, 0.7978846
        %v1352 = vmul.f32 %v1344, 0.7978846
        %v1353 = vmul.f32 %v1345, 0.7978846
        %v1354 = vmul.f32 %v1346, 0.7978846
        %v1355 = vmul.f32 %v1347, 0.7978846
        %v1356 = vmul.f32 %v1348, 0.7978846
        %v1357 = vmul.f32 %v1349, 0.7978846
        %v1358 = vmul.f32 %v1350, 0.7978846
        %v1359 = vtanh.pop %v1351
        %v1360 = vtanh.pop %v1352
        %v1361 = vtanh.pop %v1353
        %v1362 = vtanh.pop %v1354
        %v1363 = vtanh.pop %v1355
        %v1364 = vtanh.pop %v1356
        %v1365 = vtanh.pop %v1357
        %v1366 = vtanh.pop %v1358
        %v1367 = vadd.f32 %v1359, 1.0
        %v1368 = vadd.f32 %v1360, 1.0
        %v1369 = vadd.f32 %v1361, 1.0
        %v1370 = vadd.f32 %v1362, 1.0
        %v1371 = vadd.f32 %v1363, 1.0
        %v1372 = vadd.f32 %v1364, 1.0
        %v1373 = vadd.f32 %v1365, 1.0
        %v1374 = vadd.f32 %v1366, 1.0
        %v1375 = vmul.f32 %v1311, %v1367
        %v1376 = vmul.f32 %v1312, %v1368
        %v1377 = vmul.f32 %v1313, %v1369
        %v1378 = vmul.f32 %v1314, %v1370
        %v1379 = vmul.f32 %v1315, %v1371
        %v1380 = vmul.f32 %v1316, %v1372
        %v1381 = vmul.f32 %v1317, %v1373
        %v1382 = vmul.f32 %v1318, %v1374
        %v1383 = vpack.c.bf16 %v1377, %v1375
        %v1384 = vpack.c.bf16 %v1378, %v1376
        %v1385 = vpack.c.bf16 %v1381, %v1379
        %v1386 = vpack.c.bf16 %v1382, %v1380
        %v1387 = vld [vmem:[#allocation4] sm:$0xff]
        %v1388 = vld [vmem:[#allocation4 + $0x8] sm:$0xff]
        %v1389 = vld [vmem:[#allocation4 + $0x10] sm:$0xff]
        %v1390 = vld [vmem:[#allocation4 + $0x18] sm:$0xff]
        %v1391 = vld [vmem:[%s678] sm:$0xf]
        %v1392 = vld [vmem:[%s678 + $0x4] sm:$0xf]
        %v1393 = vld [vmem:[%s678 + $0x8] sm:$0xf]
        %v1394 = vld [vmem:[%s678 + $0xc] sm:$0xf]
        %v1395 = vld [vmem:[%s678 + $0x10] sm:$0xf]
        %v1396 = vld [vmem:[%s678 + $0x14] sm:$0xf]
        %v1397 = vld [vmem:[%s678 + $0x18] sm:$0xf]
        %v1398 = vld [vmem:[%s678 + $0x1c] sm:$0xf]
        %v1399 = vld [vmem:[%s678 + $0x20] sm:$0xf]
        %v1400 = vld [vmem:[%s678 + $0x24] sm:$0xf]
        %v1401 = vld [vmem:[%s678 + $0x28] sm:$0xf]
        %v1402 = vld [vmem:[%s678 + $0x2c] sm:$0xf]
        %v1403 = vld [vmem:[%s678 + $0x30] sm:$0xf]
        %v1404 = vld [vmem:[%s678 + $0x34] sm:$0xf]
        %v1405 = vld [vmem:[%s678 + $0x38] sm:$0xf]
        %v1406 = vld [vmem:[%s678 + $0x3c] sm:$0xf]
        %v1407 = vld [vmem:[%s678 + $0x40] sm:$0xf]
        %v1408 = vld [vmem:[%s678 + $0x44] sm:$0xf]
        %v1409 = vld [vmem:[%s678 + $0x48] sm:$0xf]
        %v1410 = vld [vmem:[%s678 + $0x4c] sm:$0xf]
        %v1411 = vld [vmem:[%s678 + $0x50] sm:$0xf]
        %v1412 = vld [vmem:[%s678 + $0x54] sm:$0xf]
        %v1413 = vld [vmem:[%s678 + $0x58] sm:$0xf]
        %v1414 = vld [vmem:[%s678 + $0x5c] sm:$0xf]
        %v1415 = vld [vmem:[%s678 + $0x60] sm:$0xf]
        %v1416 = vld [vmem:[%s678 + $0x64] sm:$0xf]
        %v1417 = vld [vmem:[%s678 + $0x68] sm:$0xf]
        %v1418 = vld [vmem:[%s678 + $0x6c] sm:$0xf]
        %v1419 = vld [vmem:[%s678 + $0x70] sm:$0xf]
        %v1420 = vld [vmem:[%s678 + $0x74] sm:$0xf]
        %v1421 = vld [vmem:[%s678 + $0x78] sm:$0xf]
        %v1422 = vld [vmem:[%s678 + $0x7c] sm:$0xf]
        %v1455 = vunpack.c.l.b16 %v1391
        %v1456 = vunpack.c.l.b16 %v1392
        %v1457 = vunpack.c.l.b16 %v1393
        %v1458 = vunpack.c.l.b16 %v1394
        %v1459 = vunpack.c.l.b16 %v1395
        %v1460 = vunpack.c.l.b16 %v1396
        %v1461 = vunpack.c.l.b16 %v1397
        %v1462 = vunpack.c.l.b16 %v1398
        %v1463 = vunpack.c.l.b16 %v1399
        %v1464 = vunpack.c.l.b16 %v1400
        %v1465 = vunpack.c.l.b16 %v1401
        %v1466 = vunpack.c.l.b16 %v1402
        %v1467 = vunpack.c.l.b16 %v1403
        %v1468 = vunpack.c.l.b16 %v1404
        %v1469 = vunpack.c.l.b16 %v1405
        %v1470 = vunpack.c.l.b16 %v1406
        %v1471 = vunpack.c.l.b16 %v1407
        %v1472 = vunpack.c.l.b16 %v1408
        %v1473 = vunpack.c.l.b16 %v1409
        %v1474 = vunpack.c.l.b16 %v1410
        %v1475 = vunpack.c.l.b16 %v1411
        %v1476 = vunpack.c.l.b16 %v1412
        %v1477 = vunpack.c.l.b16 %v1413
        %v1478 = vunpack.c.l.b16 %v1414
        %v1479 = vunpack.c.l.b16 %v1415
        %v1480 = vunpack.c.l.b16 %v1416
        %v1481 = vunpack.c.l.b16 %v1417
        %v1482 = vunpack.c.l.b16 %v1418
        %v1483 = vunpack.c.l.b16 %v1419
        %v1484 = vunpack.c.l.b16 %v1420
        %v1485 = vunpack.c.l.b16 %v1421
        %v1486 = vunpack.c.l.b16 %v1422
        %v1487 = vpack.c.b16 %v1456, %v1455
        %v1488 = vpack.c.b16 %v1458, %v1457
        %v1489 = vpack.c.b16 %v1460, %v1459
        %v1490 = vpack.c.b16 %v1462, %v1461
        %v1491 = vpack.c.b16 %v1464, %v1463
        %v1492 = vpack.c.b16 %v1466, %v1465
        %v1493 = vpack.c.b16 %v1468, %v1467
        %v1494 = vpack.c.b16 %v1470, %v1469
        %v1495 = vpack.c.b16 %v1472, %v1471
        %v1496 = vpack.c.b16 %v1474, %v1473
        %v1497 = vpack.c.b16 %v1476, %v1475
        %v1498 = vpack.c.b16 %v1478, %v1477
        %v1499 = vpack.c.b16 %v1480, %v1479
        %v1500 = vpack.c.b16 %v1482, %v1481
        %v1501 = vpack.c.b16 %v1484, %v1483
        %v1502 = vpack.c.b16 %v1486, %v1485
        %1519 = vmatprep.subr.bf16.mxu0 0
        %1520 = vmatpush1.bf16.msra.mxu0 %v1487
        %1521 = vmatprep.subr.bf16.mxu0 0
        %1522 = vmatpush1.bf16.msra.mxu0 %v1488
        %1523 = vmatprep.subr.bf16.mxu0 0
        %1524 = vmatpush1.bf16.msra.mxu0 %v1489
        %1525 = vmatprep.subr.bf16.mxu0 0
        %1526 = vmatpush1.bf16.msra.mxu0 %v1490
        %1527 = vmatprep.subr.bf16.mxu0 0
        %1528 = vmatpush1.bf16.msra.mxu0 %v1491
        %1529 = vmatprep.subr.bf16.mxu0 0
        %1530 = vmatpush1.bf16.msra.mxu0 %v1492
        %1531 = vmatprep.subr.bf16.mxu0 0
        %1532 = vmatpush1.bf16.msra.mxu0 %v1493
        %1533 = vmatprep.subr.bf16.mxu0 0
        %1534 = vmatpush1.bf16.msra.mxu0 %v1494
        %1535 = vmatprep.subr.bf16.mxu0 0
        %1536 = vmatpush1.bf16.msra.mxu0 %v1495
        %1537 = vmatprep.subr.bf16.mxu0 0
        %1538 = vmatpush1.bf16.msra.mxu0 %v1496
        %1539 = vmatprep.subr.bf16.mxu0 0
        %1540 = vmatpush1.bf16.msra.mxu0 %v1497
        %1541 = vmatprep.subr.bf16.mxu0 0
        %1542 = vmatpush1.bf16.msra.mxu0 %v1498
        %1543 = vmatprep.subr.bf16.mxu0 0
        %1544 = vmatpush1.bf16.msra.mxu0 %v1499
        %1545 = vmatprep.subr.bf16.mxu0 0
        %1546 = vmatpush1.bf16.msra.mxu0 %v1500
        %1547 = vmatprep.subr.bf16.mxu0 0
        %1548 = vmatpush1.bf16.msra.mxu0 %v1501
        %1549 = vmatprep.subr.bf16.mxu0 0
        %1550 = vmatpush1.bf16.msra.mxu0 %v1502
        %1551 = vmatprep.mubr.bf16.mxu0 %v1384
        %1552 = vmatmul.mubr.bf16.gmra.mrb[0].mxu0 %v1383
        %v1553 = vpop.f32.mrb[0].mxu0
        %v1554 = vadd.f32 0.0, %v1553
        %v1555 = vpop.f32.mrb[0].mxu0
        %v1556 = vpop.f32.mrb[0].mxu0
        %v1557 = vadd.f32 0.0, %v1556
        %v1558 = vpop.f32.mrb[0].mxu0
        %1559 = vmatprep.mubr.bf16.mxu0 %v1386
        %1560 = vmatmul.mubr.bf16.gmra.mrb[0].mxu0 %v1385
        %v1561 = vpop.f32.mrb[0].mxu0
        %v1562 = vadd.f32 0.0, %v1561
        %v1563 = vpop.f32.mrb[0].mxu0
        %v1564 = vpop.f32.mrb[0].mxu0
        %v1565 = vadd.f32 0.0, %v1564
        %v1566 = vpop.f32.mrb[0].mxu0
        %1567 = vdwg.mxu0
        %v1568 = vadd.f32 %v1387, %v1554
        %v1569 = vadd.f32 %v1388, %v1557
        %v1570 = vadd.f32 %v1389, %v1562
        %v1571 = vadd.f32 %v1390, %v1565
        %1572 = vst [vmem:[#allocation4] sm:$0xff] %v1568
        %1573 = vst [vmem:[#allocation4 + $0x8] sm:$0xff] %v1569
        %1574 = vst [vmem:[#allocation4 + $0x10] sm:$0xff] %v1570
        %1575 = vst [vmem:[#allocation4 + $0x18] sm:$0xff] %v1571
        %p1576 = scmp.eq.s32.totalorder %s28, 1
        // Predicated region
        $region144: #{gpt_forward.9} parent=130 // pred_check
          %p1577 = pneg %p1576
        $region145: #{gpt_forward.9} parent=130 // pred_check_branch
          %1579 = sbr.rel (%p1577) target = $region147
        $region146: #{gpt_forward.9} parent=130 // pred_region
          %v1580 = vld [vmem:[#allocation2] sm:$0xff]
          %v1581 = vld [vmem:[#allocation2 + $0x8] sm:$0xff]
          %v1582 = vld [vmem:[#allocation2 + $0x10] sm:$0xff]
          %v1583 = vld [vmem:[#allocation2 + $0x18] sm:$0xff]
          %v1584 = vld [vmem:[#allocation4] sm:$0xff]
          %v1585 = vld [vmem:[#allocation4 + $0x8] sm:$0xff]
          %v1586 = vld [vmem:[#allocation4 + $0x10] sm:$0xff]
          %v1587 = vld [vmem:[#allocation4 + $0x18] sm:$0xff]
          %v1588 = vadd.f32 %v1580, %v1584
          %v1589 = vadd.f32 %v1581, %v1585
          %v1590 = vadd.f32 %v1582, %v1586
          %v1591 = vadd.f32 %v1583, %v1587
          %v1592 = vld [vmem:[%s9] sm:$0x1]
          %v1594 = vlaneseq
          %v1595 = vshrl.u32 %v1594, 7
          %v1596 = vsub.s32 0, %v1595
          %v1597 = vrot.slane %v1592, %v1596
          %v1599 = vadd.f32 %v1588, %v1597
          %v1600 = vadd.f32 %v1589, %v1597
          %v1601 = vadd.f32 %v1590, %v1597
          %v1602 = vadd.f32 %v1591, %v1597
          %1603 = vst [vmem:[%s688] sm:$0xff] %v1599
          %1604 = vst [vmem:[%s688 + $0x8] sm:$0xff] %v1600
          %1605 = vst [vmem:[%s688 + $0x10] sm:$0xff] %v1601
          %1606 = vst [vmem:[%s688 + $0x18] sm:$0xff] %v1602
        $region147: #{gpt_forward.9} parent=130 // pred_fallthru
          _
        %s1607 = smul.u32 4, %s27
        %p1608 = scmp.lt.s32.totalorder %s26, 1
        %s1609 = scalar_select %p1608, %s26, 1
        %p1610 = scmp.lt.s32.totalorder %s1607, 7
        %s1611 = scalar_select %p1610, %s1607, 7
        %s1612 = smul.addr %s1609, 8
        %s1613 = sadd.s32 %s1611, %s1612
        %s1614 = smul.addr %s1613, 8
        %s1615 = scalar_lea.vmem %s10, %s1614
        // Predicated region
        $region148: #{gpt_forward.9} parent=130 // pred_check
          %p1616 = pneg %p299
        $region149: #{gpt_forward.9} parent=130 // pred_check_branch
          %1618 = sbr.rel (%p1616) target = $region151
        $region150: #{gpt_forward.9} parent=130 // pred_region
          %s1619 = smul.u32 4, %s27
        $region151: #{gpt_forward.9} parent=130 // pred_fallthru
          _
      $region131: #{gpt_forward.9} parent=5 // pred_fallthru
        _
      %p1620 = scmp.le.s32.totalorder 2, %s16
      // Predicated region
      $region152: #{gpt_forward.9} parent=5 // pred_check
        %p1621 = pneg %p1620
      $region153: #{gpt_forward.9} parent=5 // pred_check_branch
        %1623 = sbr.rel (%p1621) target = $region155
      $region154: #{gpt_forward.9} parent=5 // pred_region
        %s1624 = ssub.s32 %s16, 2
        // Predicated region
        $region156: #{gpt_forward.9} parent=154 // pred_check
          %p1625 = pneg %p305
        $region157: #{gpt_forward.9} parent=154 // pred_check_branch
          %1627 = sbr.rel (%p1625) target = $region159
        $region158: #{gpt_forward.9} parent=154 // pred_region
          %s1628 = smul.u32 4, %s30
          %p1629 = scmp.lt.s32.totalorder %s29, 1
          %s1630 = scalar_select %p1629, %s29, 1
          %p1631 = scmp.lt.s32.totalorder %s1628, 7
          %s1632 = scalar_select %p1631, %s1628, 7
          %s1633 = smul.addr %s1630, 8
          %s1634 = sadd.s32 %s1632, %s1633
          %s1635 = smul.addr %s1634, 8
          %s1636 = scalar_lea.vmem %s10, %s1635
        $region159: #{gpt_forward.9} parent=154 // pred_fallthru
          _
      $region155: #{gpt_forward.9} parent=5 // pred_fallthru
        _
    $region6: #{gpt_forward.9} parent=1 // loop_footer
      %s20 = sadd.s32 1, %s16
    $region7: #{gpt_forward.9} parent=1 // loop_footer_branch
      %15 = sbr.rel target = $region3
    $region8: #{gpt_forward.9} parent=1 // loop_exit
      _

// kernel: gpt_forward.8
$region0: #{gpt_forward.8}
  #allocation0 [shape = 'u32[]', space=smem, size = 0x4, offset = 0x4, fixed_abs, tag = 'smem constant byte address 0x4 - core index']
  #allocation1 [shape = 'u32[144,128]{1,0:T(1,128)}', space=vmem, size = 0x12000, scoped, tag = 'internal scratch']
  #allocation2 [shape = 'f32[4,32,1]{2,1,0:T(8,128)}', space=vmem, size = 0x10000, scoped, tag = 'scratch operand']
  #allocation3 [shape = 'f32[4,32,1]{2,1,0:T(8,128)}', space=vmem, size = 0x10000, scoped, tag = 'scratch operand']
  #allocation4 [shape = 'f32[4,32,32]{2,1,0:T(8,128)}', space=vmem, size = 0x10000, scoped, tag = 'scratch operand']
  %s0 = inlined_call_operand.vmem [shape: bf16[2,4,64,32], index: 0, kind: input, shape index: {}]
  %s1 = inlined_call_operand.vmem [shape: bf16[2,4,64,32], index: 1, kind: input, shape index: {}]
  %s2 = inlined_call_operand.vmem [shape: bf16[2,4,64,32], index: 2, kind: input, shape index: {}]
  %s3 = inlined_call_operand.vmem [shape: bf16[2,4,64,32], index: 3, kind: output, shape index: {}]
  %s4 = sld [smem:[#allocation0]]
  $region217: #{gpt_forward.8} parent=0
    _
  %s6 = ssub.s32 1, %s4
  %s7 = scalar_select 0, %s6, %s4
  $region1: #{gpt_forward.8} parent=0
    #allocation5 [shape = 'u8[65536]{0}', space=vmem, size = 0x10000, scoped, tag = 'input window, operand 0']
    #allocation6 [shape = 'u8[65536]{0}', space=vmem, size = 0x10000, scoped, tag = 'input window, operand 1']
    #allocation7 [shape = 'u8[65536]{0}', space=vmem, size = 0x10000, scoped, tag = 'input window, operand 2']
    #allocation8 [shape = 'u8[65536]{0}', space=vmem, size = 0x10000, scoped, tag = 'output window, operand 0']
    loop: start=0, step=1, limit=10
    $region2: #{gpt_forward.8} parent=1 // loop_pre_header
      _
    $region3: #{gpt_forward.8} parent=1 // loop_header
      %s9 = sphi 0, %s13
      %p10 = scmp.ge.s32.totalorder %s9, 10
      %s16 = sphi 0, %s35
      %s17 = sphi 0, %s31
      %s18 = sphi 0, %s27
      %s19 = sphi 0, %s16
      %s20 = sphi 0, %s17
      %s21 = sphi 0, %s18
      %s22 = sphi 0, %s19
      %s23 = sphi 0, %s20
      %s24 = sphi 0, %s21
      %s40 = sphi 0, %s42
      %s43 = sphi 0, %s40
      %s44 = sphi 0, %s43
      %s60 = sphi 0, %s44
      %s72 = sphi 0, %s74
      %s75 = sphi 0, %s72
      %s76 = sphi 0, %s75
      %s92 = sphi 0, %s76
      %s104 = sphi 0, %s106
      %s107 = sphi 0, %s104
      %s108 = sphi 0, %s107
      %s124 = sphi 0, %s108
      %s132 = sphi 0, %s134
      %s135 = sphi 0, %s132
      %s136 = sphi 0, %s135
      %s152 = sphi 0, %s136
    $region4: #{gpt_forward.8} parent=1 // loop_header_branch
      %12 = sbr.rel (%p10) target = $region8
    $region5: #{gpt_forward.8} parent=1 // loop_body
      %s14 = ssub.s32 %s9, 1
      %s15 = ssub.s32 %s9, 2
      %s25 = sadd.s32 1, %s18
      %p26 = scmp.ge.s32.totalorder %s25, 2
      %s27 = scalar_select %p26, 0, %s25
      %s28 = sadd.s32 1, %s17
      %s29 = scalar_select %p26, %s28, %s17
      %p30 = scmp.ge.s32.totalorder %s29, 2
      %s31 = scalar_select %p30, 0, %s29
      %s32 = sadd.s32 1, %s16
      %s33 = scalar_select %p30, %s32, %s16
      %p34 = scmp.ge.s32.totalorder %s33, 2
      %s35 = scalar_select %p34, 0, %s33
      %s36 = ssub.s32 %s16, %s35
      %s37 = ssub.s32 %s17, %s31
      %s38 = sor.u32 %s36, %s37
      %p39 = scmp.eq.s32.totalorder %s38, 0
      %s41 = sadd.s32 %s40, 1
      %s42 = scalar_select %p39, %s40, %s41
      %p45 = pneg %p39
      %p46 = scmp.eq.s32.totalorder %s9, 7
      %p47 = por %p45, %p46
      %p48 = scmp.ne.s32.totalorder %s40, %s43
      %p49 = scmp.eq.s32.totalorder %s9, 0
      %p50 = por %p48, %p49
      %p51 = scmp.ne.s32.totalorder %s40, %s43
      %p52 = scmp.eq.s32.totalorder %s14, 7
      %p53 = por %p51, %p52
      %p54 = scmp.ne.s32.totalorder %s43, %s44
      %p55 = scmp.eq.s32.totalorder %s14, 0
      %p56 = por %p54, %p55
      %p57 = scmp.ne.s32.totalorder %s43, %s44
      %p58 = scmp.eq.s32.totalorder %s15, 7
      %p59 = por %p57, %p58
      %p61 = scmp.ne.s32.totalorder %s44, %s60
      %p62 = scmp.eq.s32.totalorder %s15, 0
      %p63 = por %p61, %p62
      %p64 = scmp.lt.s32.totalorder %s18, %s17
      %s65 = scalar_select %p64, %s18, %s17
      %p66 = scmp.lt.s32.totalorder %s27, %s31
      %s67 = scalar_select %p66, %s27, %s31
      %s68 = ssub.s32 %s16, %s35
      %s69 = ssub.s32 %s65, %s67
      %s70 = sor.u32 %s68, %s69
      %p71 = scmp.eq.s32.totalorder %s70, 0
      %s73 = sadd.s32 %s72, 1
      %s74 = scalar_select %p71, %s72, %s73
      %p77 = pneg %p71
      %p78 = scmp.eq.s32.totalorder %s9, 7
      %p79 = por %p77, %p78
      %p80 = scmp.ne.s32.totalorder %s72, %s75
      %p81 = scmp.eq.s32.totalorder %s9, 0
      %p82 = por %p80, %p81
      %p83 = scmp.ne.s32.totalorder %s72, %s75
      %p84 = scmp.eq.s32.totalorder %s14, 7
      %p85 = por %p83, %p84
      %p86 = scmp.ne.s32.totalorder %s75, %s76
      %p87 = scmp.eq.s32.totalorder %s14, 0
      %p88 = por %p86, %p87
      %p89 = scmp.ne.s32.totalorder %s75, %s76
      %p90 = scmp.eq.s32.totalorder %s15, 7
      %p91 = por %p89, %p90
      %p93 = scmp.ne.s32.totalorder %s76, %s92
      %p94 = scmp.eq.s32.totalorder %s15, 0
      %p95 = por %p93, %p94
      %p96 = scmp.lt.s32.totalorder %s18, %s17
      %s97 = scalar_select %p96, %s18, %s17
      %p98 = scmp.lt.s32.totalorder %s27, %s31
      %s99 = scalar_select %p98, %s27, %s31
      %s100 = ssub.s32 %s16, %s35
      %s101 = ssub.s32 %s97, %s99
      %s102 = sor.u32 %s100, %s101
      %p103 = scmp.eq.s32.totalorder %s102, 0
      %s105 = sadd.s32 %s104, 1
      %s106 = scalar_select %p103, %s104, %s105
      %p109 = pneg %p103
      %p110 = scmp.eq.s32.totalorder %s9, 7
      %p111 = por %p109, %p110
      %p112 = scmp.ne.s32.totalorder %s104, %s107
      %p113 = scmp.eq.s32.totalorder %s9, 0
      %p114 = por %p112, %p113
      %p115 = scmp.ne.s32.totalorder %s104, %s107
      %p116 = scmp.eq.s32.totalorder %s14, 7
      %p117 = por %p115, %p116
      %p118 = scmp.ne.s32.totalorder %s107, %s108
      %p119 = scmp.eq.s32.totalorder %s14, 0
      %p120 = por %p118, %p119
      %p121 = scmp.ne.s32.totalorder %s107, %s108
      %p122 = scmp.eq.s32.totalorder %s15, 7
      %p123 = por %p121, %p122
      %p125 = scmp.ne.s32.totalorder %s108, %s124
      %p126 = scmp.eq.s32.totalorder %s15, 0
      %p127 = por %p125, %p126
      %s128 = ssub.s32 %s16, %s35
      %s129 = ssub.s32 %s17, %s31
      %s130 = sor.u32 %s128, %s129
      %p131 = scmp.eq.s32.totalorder %s130, 0
      %s133 = sadd.s32 %s132, 1
      %s134 = scalar_select %p131, %s132, %s133
      %p137 = pneg %p131
      %p138 = scmp.eq.s32.totalorder %s9, 7
      %p139 = por %p137, %p138
      %p140 = scmp.ne.s32.totalorder %s132, %s135
      %p141 = scmp.eq.s32.totalorder %s9, 0
      %p142 = por %p140, %p141
      %p143 = scmp.ne.s32.totalorder %s132, %s135
      %p144 = scmp.eq.s32.totalorder %s14, 7
      %p145 = por %p143, %p144
      %p146 = scmp.ne.s32.totalorder %s135, %s136
      %p147 = scmp.eq.s32.totalorder %s14, 0
      %p148 = por %p146, %p147
      %p149 = scmp.ne.s32.totalorder %s135, %s136
      %p150 = scmp.eq.s32.totalorder %s15, 7
      %p151 = por %p149, %p150
      %p153 = scmp.ne.s32.totalorder %s136, %s152
      %p154 = scmp.eq.s32.totalorder %s15, 0
      %p155 = por %p153, %p154
      %p156 = scmp.le.s32.totalorder 1, %s9
      %p157 = scmp.lt.s32.totalorder %s9, 9
      %p158 = pnand %p156, %p157
      %p159 = pneg %p158
      // Predicated region
      $region9: #{gpt_forward.8} parent=5 // pred_check
        _
      $region10: #{gpt_forward.8} parent=5 // pred_check_branch
        %161 = sbr.rel (%p158) target = $region12
      $region11: #{gpt_forward.8} parent=5 // pred_region
        %s162 = ssub.s32 %s9, 1
      $region12: #{gpt_forward.8} parent=5 // pred_fallthru
        _
      %p163 = scmp.lt.s32.totalorder %s9, 8
      // Predicated region
      $region13: #{gpt_forward.8} parent=5 // pred_check
        %p164 = pneg %p163
      $region14: #{gpt_forward.8} parent=5 // pred_check_branch
        %166 = sbr.rel (%p164) target = $region16
      $region15: #{gpt_forward.8} parent=5 // pred_region
        // Predicated region
        $region17: #{gpt_forward.8} parent=15 // pred_check
          %p167 = pneg %p50
        $region18: #{gpt_forward.8} parent=15 // pred_check_branch
          %169 = sbr.rel (%p167) target = $region20
        $region19: #{gpt_forward.8} parent=15 // pred_region
          %s170 = sand.u32 %s40, 1
          %s171 = sand.u32 %s40, 1
          %s172 = smul.addr %s171, 64
          %s173 = scalar_lea.vmem [#allocation5], %s172
          %s174 = smul.u32 4, %s17
          %s175 = smul.addr %s16, 32
          %s176 = sadd.s32 %s174, %s175
          %s177 = smul.addr %s176, 4
          %s178 = scalar_lea.vmem %s0, %s177
          // Predicated region
          $region21: #{gpt_forward.8} parent=19 // pred_check
            _
          $region22: #{gpt_forward.8} parent=19 // pred_check_branch
            %180 = sbr.rel (0) target = $region24
          $region23: #{gpt_forward.8} parent=19 // pred_region
            // Predicated region
            $region25: #{gpt_forward.8} parent=23 // pred_check
              _
            $region26: #{gpt_forward.8} parent=23 // pred_check_branch
              %182 = sbr.rel target = $region28
            $region27: #{gpt_forward.8} parent=23 // pred_region
              // Predicated region
              $region40: #{gpt_forward.8} parent=27 // pred_check
                _
              $region41: #{gpt_forward.8} parent=27 // pred_check_branch
                %227 = sbr.rel (0) target = $region43
              $region42: #{gpt_forward.8} parent=27 // pred_region
                loop: start=0, step=1, limit=1
                $region44: #{gpt_forward.8} parent=42 // loop_pre_header
                  _
                $region45: #{gpt_forward.8} parent=42 // loop_header
                  %s229 = sphi 0, %s233
                  %p230 = scmp.ge.s32.totalorder %s229, 1
                  %s234 = sphi %s178, %s178
                  %s235 = sphi %s173, %s173
                $region46: #{gpt_forward.8} parent=42 // loop_header_branch
                  %232 = sbr.rel (%p230) target = $region50
                $region47: #{gpt_forward.8} parent=42 // loop_body
                  _
                $region48: #{gpt_forward.8} parent=42 // loop_footer
                  %s233 = sadd.s32 1, %s229
                $region49: #{gpt_forward.8} parent=42 // loop_footer_branch
                  %228 = sbr.rel target = $region45
                $region50: #{gpt_forward.8} parent=42 // loop_exit
                  _
                loop: start=0, step=1, limit=1
                $region51: #{gpt_forward.8} parent=42 // loop_pre_header
                  _
                $region52: #{gpt_forward.8} parent=42 // loop_header
                  %s238 = sphi 0, %s242
                  %p239 = scmp.ge.s32.totalorder %s238, 1
                  %s243 = sphi %s178, %s178
                  %s244 = sphi %s173, %s173
                $region53: #{gpt_forward.8} parent=42 // loop_header_branch
                  %241 = sbr.rel (%p239) target = $region57
                $region54: #{gpt_forward.8} parent=42 // loop_body
                  %v245 = vld [vmem:[%s243] sm:$0xf]
                  %246 = vst [vmem:[%s244] sm:$0xf] %v245
                  %v247 = vld [vmem:[%s243 + $0x4] sm:$0xf]
                  %248 = vst [vmem:[%s244 + $0x4] sm:$0xf] %v247
                  %v249 = vld [vmem:[%s243 + $0x8] sm:$0xf]
                  %250 = vst [vmem:[%s244 + $0x8] sm:$0xf] %v249
                  %v251 = vld [vmem:[%s243 + $0xc] sm:$0xf]
                  %252 = vst [vmem:[%s244 + $0xc] sm:$0xf] %v251
                  %v253 = vld [vmem:[%s243 + $0x20] sm:$0xf]
                  %254 = vst [vmem:[%s244 + $0x10] sm:$0xf] %v253
                  %v255 = vld [vmem:[%s243 + $0x24] sm:$0xf]
                  %256 = vst [vmem:[%s244 + $0x14] sm:$0xf] %v255
                  %v257 = vld [vmem:[%s243 + $0x28] sm:$0xf]
                  %258 = vst [vmem:[%s244 + $0x18] sm:$0xf] %v257
                  %v259 = vld [vmem:[%s243 + $0x2c] sm:$0xf]
                  %260 = vst [vmem:[%s244 + $0x1c] sm:$0xf] %v259
                  %v261 = vld [vmem:[%s243 + $0x40] sm:$0xf]
                  %262 = vst [vmem:[%s244 + $0x20] sm:$0xf] %v261
                  %v263 = vld [vmem:[%s243 + $0x44] sm:$0xf]
                  %264 = vst [vmem:[%s244 + $0x24] sm:$0xf] %v263
                  %v265 = vld [vmem:[%s243 + $0x48] sm:$0xf]
                  %266 = vst [vmem:[%s244 + $0x28] sm:$0xf] %v265
                  %v267 = vld [vmem:[%s243 + $0x4c] sm:$0xf]
                  %268 = vst [vmem:[%s244 + $0x2c] sm:$0xf] %v267
                  %v269 = vld [vmem:[%s243 + $0x60] sm:$0xf]
                  %270 = vst [vmem:[%s244 + $0x30] sm:$0xf] %v269
                  %v271 = vld [vmem:[%s243 + $0x64] sm:$0xf]
                  %272 = vst [vmem:[%s244 + $0x34] sm:$0xf] %v271
                  %v273 = vld [vmem:[%s243 + $0x68] sm:$0xf]
                  %274 = vst [vmem:[%s244 + $0x38] sm:$0xf] %v273
                  %v275 = vld [vmem:[%s243 + $0x6c] sm:$0xf]
                  %276 = vst [vmem:[%s244 + $0x3c] sm:$0xf] %v275
                $region55: #{gpt_forward.8} parent=42 // loop_footer
                  %s242 = sadd.s32 1, %s238
                $region56: #{gpt_forward.8} parent=42 // loop_footer_branch
                  %237 = sbr.rel target = $region52
                $region57: #{gpt_forward.8} parent=42 // loop_exit
                  _
              $region43: #{gpt_forward.8} parent=27 // pred_fallthru
                _
            $region28: #{gpt_forward.8} parent=23 // pred_fallthru
              _
            // Predicated region
            $region29: #{gpt_forward.8} parent=23 // pred_check
              _
            $region30: #{gpt_forward.8} parent=23 // pred_check_branch
              %184 = sbr.rel (0) target = $region32
            $region31: #{gpt_forward.8} parent=23 // pred_region
              loop: start=0, step=1, limit=1
              $region33: #{gpt_forward.8} parent=31 // loop_pre_header
                _
              $region34: #{gpt_forward.8} parent=31 // loop_header
                %s187 = sphi 0, %s191
                %p188 = scmp.ge.s32.totalorder %s187, 1
                %s192 = sphi %s178, %s178
                %s193 = sphi %s173, %s173
              $region35: #{gpt_forward.8} parent=31 // loop_header_branch
                %190 = sbr.rel (%p188) target = $region39
              $region36: #{gpt_forward.8} parent=31 // loop_body
                %v194 = vld [vmem:[%s192] sm:$0xf]
                %195 = vst [vmem:[%s193] sm:$0xf] %v194
                %v196 = vld [vmem:[%s192 + $0x4] sm:$0xf]
                %197 = vst [vmem:[%s193 + $0x4] sm:$0xf] %v196
                %v198 = vld [vmem:[%s192 + $0x8] sm:$0xf]
                %199 = vst [vmem:[%s193 + $0x8] sm:$0xf] %v198
                %v200 = vld [vmem:[%s192 + $0xc] sm:$0xf]
                %201 = vst [vmem:[%s193 + $0xc] sm:$0xf] %v200
                %v202 = vld [vmem:[%s192 + $0x20] sm:$0xf]
                %203 = vst [vmem:[%s193 + $0x10] sm:$0xf] %v202
                %v204 = vld [vmem:[%s192 + $0x24] sm:$0xf]
                %205 = vst [vmem:[%s193 + $0x14] sm:$0xf] %v204
                %v206 = vld [vmem:[%s192 + $0x28] sm:$0xf]
                %207 = vst [vmem:[%s193 + $0x18] sm:$0xf] %v206
                %v208 = vld [vmem:[%s192 + $0x2c] sm:$0xf]
                %209 = vst [vmem:[%s193 + $0x1c] sm:$0xf] %v208
                %v210 = vld [vmem:[%s192 + $0x40] sm:$0xf]
                %211 = vst [vmem:[%s193 + $0x20] sm:$0xf] %v210
                %v212 = vld [vmem:[%s192 + $0x44] sm:$0xf]
                %213 = vst [vmem:[%s193 + $0x24] sm:$0xf] %v212
                %v214 = vld [vmem:[%s192 + $0x48] sm:$0xf]
                %215 = vst [vmem:[%s193 + $0x28] sm:$0xf] %v214
                %v216 = vld [vmem:[%s192 + $0x4c] sm:$0xf]
                %217 = vst [vmem:[%s193 + $0x2c] sm:$0xf] %v216
                %v218 = vld [vmem:[%s192 + $0x60] sm:$0xf]
                %219 = vst [vmem:[%s193 + $0x30] sm:$0xf] %v218
                %v220 = vld [vmem:[%s192 + $0x64] sm:$0xf]
                %221 = vst [vmem:[%s193 + $0x34] sm:$0xf] %v220
                %v222 = vld [vmem:[%s192 + $0x68] sm:$0xf]
                %223 = vst [vmem:[%s193 + $0x38] sm:$0xf] %v222
                %v224 = vld [vmem:[%s192 + $0x6c] sm:$0xf]
                %225 = vst [vmem:[%s193 + $0x3c] sm:$0xf] %v224
              $region37: #{gpt_forward.8} parent=31 // loop_footer
                %s191 = sadd.s32 1, %s187
              $region38: #{gpt_forward.8} parent=31 // loop_footer_branch
                %186 = sbr.rel target = $region34
              $region39: #{gpt_forward.8} parent=31 // loop_exit
                _
            $region32: #{gpt_forward.8} parent=23 // pred_fallthru
              _
          $region24: #{gpt_forward.8} parent=19 // pred_fallthru
            _
          %277 = vnop
        $region20: #{gpt_forward.8} parent=15 // pred_fallthru
          _
        // Predicated region
        $region58: #{gpt_forward.8} parent=15 // pred_check
          %p278 = pneg %p82
        $region59: #{gpt_forward.8} parent=15 // pred_check_branch
          %280 = sbr.rel (%p278) target = $region61
        $region60: #{gpt_forward.8} parent=15 // pred_region
          %s281 = sand.u32 %s72, 1
          %s282 = sand.u32 %s72, 1
          %s283 = smul.addr %s282, 64
          %s284 = scalar_lea.vmem [#allocation6], %s283
          %p285 = scmp.lt.s32.totalorder %s18, %s17
          %s286 = scalar_select %p285, %s18, %s17
          %s287 = smul.u32 4, %s286
          %s288 = smul.addr %s16, 32
          %s289 = sadd.s32 %s287, %s288
          %s290 = smul.addr %s289, 4
          %s291 = scalar_lea.vmem %s1, %s290
          // Predicated region
          $region62: #{gpt_forward.8} parent=60 // pred_check
            _
          $region63: #{gpt_forward.8} parent=60 // pred_check_branch
            %293 = sbr.rel (0) target = $region65
          $region64: #{gpt_forward.8} parent=60 // pred_region
            // Predicated region
            $region66: #{gpt_forward.8} parent=64 // pred_check
              _
            $region67: #{gpt_forward.8} parent=64 // pred_check_branch
              %295 = sbr.rel target = $region69
            $region68: #{gpt_forward.8} parent=64 // pred_region
              // Predicated region
              $region81: #{gpt_forward.8} parent=68 // pred_check
                _
              $region82: #{gpt_forward.8} parent=68 // pred_check_branch
                %340 = sbr.rel (0) target = $region84
              $region83: #{gpt_forward.8} parent=68 // pred_region
                loop: start=0, step=1, limit=1
                $region85: #{gpt_forward.8} parent=83 // loop_pre_header
                  _
                $region86: #{gpt_forward.8} parent=83 // loop_header
                  %s342 = sphi 0, %s346
                  %p343 = scmp.ge.s32.totalorder %s342, 1
                  %s347 = sphi %s291, %s291
                  %s348 = sphi %s284, %s284
                $region87: #{gpt_forward.8} parent=83 // loop_header_branch
                  %345 = sbr.rel (%p343) target = $region91
                $region88: #{gpt_forward.8} parent=83 // loop_body
                  _
                $region89: #{gpt_forward.8} parent=83 // loop_footer
                  %s346 = sadd.s32 1, %s342
                $region90: #{gpt_forward.8} parent=83 // loop_footer_branch
                  %341 = sbr.rel target = $region86
                $region91: #{gpt_forward.8} parent=83 // loop_exit
                  _
                loop: start=0, step=1, limit=1
                $region92: #{gpt_forward.8} parent=83 // loop_pre_header
                  _
                $region93: #{gpt_forward.8} parent=83 // loop_header
                  %s351 = sphi 0, %s355
                  %p352 = scmp.ge.s32.totalorder %s351, 1
                  %s356 = sphi %s291, %s291
                  %s357 = sphi %s284, %s284
                $region94: #{gpt_forward.8} parent=83 // loop_header_branch
                  %354 = sbr.rel (%p352) target = $region98
                $region95: #{gpt_forward.8} parent=83 // loop_body
                  %v358 = vld [vmem:[%s356] sm:$0xf]
                  %359 = vst [vmem:[%s357] sm:$0xf] %v358
                  %v360 = vld [vmem:[%s356 + $0x4] sm:$0xf]
                  %361 = vst [vmem:[%s357 + $0x4] sm:$0xf] %v360
                  %v362 = vld [vmem:[%s356 + $0x8] sm:$0xf]
                  %363 = vst [vmem:[%s357 + $0x8] sm:$0xf] %v362
                  %v364 = vld [vmem:[%s356 + $0xc] sm:$0xf]
                  %365 = vst [vmem:[%s357 + $0xc] sm:$0xf] %v364
                  %v366 = vld [vmem:[%s356 + $0x20] sm:$0xf]
                  %367 = vst [vmem:[%s357 + $0x10] sm:$0xf] %v366
                  %v368 = vld [vmem:[%s356 + $0x24] sm:$0xf]
                  %369 = vst [vmem:[%s357 + $0x14] sm:$0xf] %v368
                  %v370 = vld [vmem:[%s356 + $0x28] sm:$0xf]
                  %371 = vst [vmem:[%s357 + $0x18] sm:$0xf] %v370
                  %v372 = vld [vmem:[%s356 + $0x2c] sm:$0xf]
                  %373 = vst [vmem:[%s357 + $0x1c] sm:$0xf] %v372
                  %v374 = vld [vmem:[%s356 + $0x40] sm:$0xf]
                  %375 = vst [vmem:[%s357 + $0x20] sm:$0xf] %v374
                  %v376 = vld [vmem:[%s356 + $0x44] sm:$0xf]
                  %377 = vst [vmem:[%s357 + $0x24] sm:$0xf] %v376
                  %v378 = vld [vmem:[%s356 + $0x48] sm:$0xf]
                  %379 = vst [vmem:[%s357 + $0x28] sm:$0xf] %v378
                  %v380 = vld [vmem:[%s356 + $0x4c] sm:$0xf]
                  %381 = vst [vmem:[%s357 + $0x2c] sm:$0xf] %v380
                  %v382 = vld [vmem:[%s356 + $0x60] sm:$0xf]
                  %383 = vst [vmem:[%s357 + $0x30] sm:$0xf] %v382
                  %v384 = vld [vmem:[%s356 + $0x64] sm:$0xf]
                  %385 = vst [vmem:[%s357 + $0x34] sm:$0xf] %v384
                  %v386 = vld [vmem:[%s356 + $0x68] sm:$0xf]
                  %387 = vst [vmem:[%s357 + $0x38] sm:$0xf] %v386
                  %v388 = vld [vmem:[%s356 + $0x6c] sm:$0xf]
                  %389 = vst [vmem:[%s357 + $0x3c] sm:$0xf] %v388
                $region96: #{gpt_forward.8} parent=83 // loop_footer
                  %s355 = sadd.s32 1, %s351
                $region97: #{gpt_forward.8} parent=83 // loop_footer_branch
                  %350 = sbr.rel target = $region93
                $region98: #{gpt_forward.8} parent=83 // loop_exit
                  _
              $region84: #{gpt_forward.8} parent=68 // pred_fallthru
                _
            $region69: #{gpt_forward.8} parent=64 // pred_fallthru
              _
            // Predicated region
            $region70: #{gpt_forward.8} parent=64 // pred_check
              _
            $region71: #{gpt_forward.8} parent=64 // pred_check_branch
              %297 = sbr.rel (0) target = $region73
            $region72: #{gpt_forward.8} parent=64 // pred_region
              loop: start=0, step=1, limit=1
              $region74: #{gpt_forward.8} parent=72 // loop_pre_header
                _
              $region75: #{gpt_forward.8} parent=72 // loop_header
                %s300 = sphi 0, %s304
                %p301 = scmp.ge.s32.totalorder %s300, 1
                %s305 = sphi %s291, %s291
                %s306 = sphi %s284, %s284
              $region76: #{gpt_forward.8} parent=72 // loop_header_branch
                %303 = sbr.rel (%p301) target = $region80
              $region77: #{gpt_forward.8} parent=72 // loop_body
                %v307 = vld [vmem:[%s305] sm:$0xf]
                %308 = vst [vmem:[%s306] sm:$0xf] %v307
                %v309 = vld [vmem:[%s305 + $0x4] sm:$0xf]
                %310 = vst [vmem:[%s306 + $0x4] sm:$0xf] %v309
                %v311 = vld [vmem:[%s305 + $0x8] sm:$0xf]
                %312 = vst [vmem:[%s306 + $0x8] sm:$0xf] %v311
                %v313 = vld [vmem:[%s305 + $0xc] sm:$0xf]
                %314 = vst [vmem:[%s306 + $0xc] sm:$0xf] %v313
                %v315 = vld [vmem:[%s305 + $0x20] sm:$0xf]
                %316 = vst [vmem:[%s306 + $0x10] sm:$0xf] %v315
                %v317 = vld [vmem:[%s305 + $0x24] sm:$0xf]
                %318 = vst [vmem:[%s306 + $0x14] sm:$0xf] %v317
                %v319 = vld [vmem:[%s305 + $0x28] sm:$0xf]
                %320 = vst [vmem:[%s306 + $0x18] sm:$0xf] %v319
                %v321 = vld [vmem:[%s305 + $0x2c] sm:$0xf]
                %322 = vst [vmem:[%s306 + $0x1c] sm:$0xf] %v321
                %v323 = vld [vmem:[%s305 + $0x40] sm:$0xf]
                %324 = vst [vmem:[%s306 + $0x20] sm:$0xf] %v323
                %v325 = vld [vmem:[%s305 + $0x44] sm:$0xf]
                %326 = vst [vmem:[%s306 + $0x24] sm:$0xf] %v325
                %v327 = vld [vmem:[%s305 + $0x48] sm:$0xf]
                %328 = vst [vmem:[%s306 + $0x28] sm:$0xf] %v327
                %v329 = vld [vmem:[%s305 + $0x4c] sm:$0xf]
                %330 = vst [vmem:[%s306 + $0x2c] sm:$0xf] %v329
                %v331 = vld [vmem:[%s305 + $0x60] sm:$0xf]
                %332 = vst [vmem:[%s306 + $0x30] sm:$0xf] %v331
                %v333 = vld [vmem:[%s305 + $0x64] sm:$0xf]
                %334 = vst [vmem:[%s306 + $0x34] sm:$0xf] %v333
                %v335 = vld [vmem:[%s305 + $0x68] sm:$0xf]
                %336 = vst [vmem:[%s306 + $0x38] sm:$0xf] %v335
                %v337 = vld [vmem:[%s305 + $0x6c] sm:$0xf]
                %338 = vst [vmem:[%s306 + $0x3c] sm:$0xf] %v337
              $region78: #{gpt_forward.8} parent=72 // loop_footer
                %s304 = sadd.s32 1, %s300
              $region79: #{gpt_forward.8} parent=72 // loop_footer_branch
                %299 = sbr.rel target = $region75
              $region80: #{gpt_forward.8} parent=72 // loop_exit
                _
            $region73: #{gpt_forward.8} parent=64 // pred_fallthru
              _
          $region65: #{gpt_forward.8} parent=60 // pred_fallthru
            _
          %390 = vnop
        $region61: #{gpt_forward.8} parent=15 // pred_fallthru
          _
        // Predicated region
        $region99: #{gpt_forward.8} parent=15 // pred_check
          %p391 = pneg %p114
        $region100: #{gpt_forward.8} parent=15 // pred_check_branch
          %393 = sbr.rel (%p391) target = $region102
        $region101: #{gpt_forward.8} parent=15 // pred_region
          %s394 = sand.u32 %s104, 1
          %s395 = sand.u32 %s104, 1
          %s396 = smul.addr %s395, 64
          %s397 = scalar_lea.vmem [#allocation7], %s396
          %p398 = scmp.lt.s32.totalorder %s18, %s17
          %s399 = scalar_select %p398, %s18, %s17
          %s400 = smul.u32 4, %s399
          %s401 = smul.addr %s16, 32
          %s402 = sadd.s32 %s400, %s401
          %s403 = smul.addr %s402, 4
          %s404 = scalar_lea.vmem %s2, %s403
          // Predicated region
          $region103: #{gpt_forward.8} parent=101 // pred_check
            _
          $region104: #{gpt_forward.8} parent=101 // pred_check_branch
            %406 = sbr.rel (0) target = $region106
          $region105: #{gpt_forward.8} parent=101 // pred_region
            // Predicated region
            $region107: #{gpt_forward.8} parent=105 // pred_check
              _
            $region108: #{gpt_forward.8} parent=105 // pred_check_branch
              %408 = sbr.rel target = $region110
            $region109: #{gpt_forward.8} parent=105 // pred_region
              // Predicated region
              $region122: #{gpt_forward.8} parent=109 // pred_check
                _
              $region123: #{gpt_forward.8} parent=109 // pred_check_branch
                %453 = sbr.rel (0) target = $region125
              $region124: #{gpt_forward.8} parent=109 // pred_region
                loop: start=0, step=1, limit=1
                $region126: #{gpt_forward.8} parent=124 // loop_pre_header
                  _
                $region127: #{gpt_forward.8} parent=124 // loop_header
                  %s455 = sphi 0, %s459
                  %p456 = scmp.ge.s32.totalorder %s455, 1
                  %s460 = sphi %s404, %s404
                  %s461 = sphi %s397, %s397
                $region128: #{gpt_forward.8} parent=124 // loop_header_branch
                  %458 = sbr.rel (%p456) target = $region132
                $region129: #{gpt_forward.8} parent=124 // loop_body
                  _
                $region130: #{gpt_forward.8} parent=124 // loop_footer
                  %s459 = sadd.s32 1, %s455
                $region131: #{gpt_forward.8} parent=124 // loop_footer_branch
                  %454 = sbr.rel target = $region127
                $region132: #{gpt_forward.8} parent=124 // loop_exit
                  _
                loop: start=0, step=1, limit=1
                $region133: #{gpt_forward.8} parent=124 // loop_pre_header
                  _
                $region134: #{gpt_forward.8} parent=124 // loop_header
                  %s464 = sphi 0, %s468
                  %p465 = scmp.ge.s32.totalorder %s464, 1
                  %s469 = sphi %s404, %s404
                  %s470 = sphi %s397, %s397
                $region135: #{gpt_forward.8} parent=124 // loop_header_branch
                  %467 = sbr.rel (%p465) target = $region139
                $region136: #{gpt_forward.8} parent=124 // loop_body
                  %v471 = vld [vmem:[%s469] sm:$0xf]
                  %472 = vst [vmem:[%s470] sm:$0xf] %v471
                  %v473 = vld [vmem:[%s469 + $0x4] sm:$0xf]
                  %474 = vst [vmem:[%s470 + $0x4] sm:$0xf] %v473
                  %v475 = vld [vmem:[%s469 + $0x8] sm:$0xf]
                  %476 = vst [vmem:[%s470 + $0x8] sm:$0xf] %v475
                  %v477 = vld [vmem:[%s469 + $0xc] sm:$0xf]
                  %478 = vst [vmem:[%s470 + $0xc] sm:$0xf] %v477
                  %v479 = vld [vmem:[%s469 + $0x20] sm:$0xf]
                  %480 = vst [vmem:[%s470 + $0x10] sm:$0xf] %v479
                  %v481 = vld [vmem:[%s469 + $0x24] sm:$0xf]
                  %482 = vst [vmem:[%s470 + $0x14] sm:$0xf] %v481
                  %v483 = vld [vmem:[%s469 + $0x28] sm:$0xf]
                  %484 = vst [vmem:[%s470 + $0x18] sm:$0xf] %v483
                  %v485 = vld [vmem:[%s469 + $0x2c] sm:$0xf]
                  %486 = vst [vmem:[%s470 + $0x1c] sm:$0xf] %v485
                  %v487 = vld [vmem:[%s469 + $0x40] sm:$0xf]
                  %488 = vst [vmem:[%s470 + $0x20] sm:$0xf] %v487
                  %v489 = vld [vmem:[%s469 + $0x44] sm:$0xf]
                  %490 = vst [vmem:[%s470 + $0x24] sm:$0xf] %v489
                  %v491 = vld [vmem:[%s469 + $0x48] sm:$0xf]
                  %492 = vst [vmem:[%s470 + $0x28] sm:$0xf] %v491
                  %v493 = vld [vmem:[%s469 + $0x4c] sm:$0xf]
                  %494 = vst [vmem:[%s470 + $0x2c] sm:$0xf] %v493
                  %v495 = vld [vmem:[%s469 + $0x60] sm:$0xf]
                  %496 = vst [vmem:[%s470 + $0x30] sm:$0xf] %v495
                  %v497 = vld [vmem:[%s469 + $0x64] sm:$0xf]
                  %498 = vst [vmem:[%s470 + $0x34] sm:$0xf] %v497
                  %v499 = vld [vmem:[%s469 + $0x68] sm:$0xf]
                  %500 = vst [vmem:[%s470 + $0x38] sm:$0xf] %v499
                  %v501 = vld [vmem:[%s469 + $0x6c] sm:$0xf]
                  %502 = vst [vmem:[%s470 + $0x3c] sm:$0xf] %v501
                $region137: #{gpt_forward.8} parent=124 // loop_footer
                  %s468 = sadd.s32 1, %s464
                $region138: #{gpt_forward.8} parent=124 // loop_footer_branch
                  %463 = sbr.rel target = $region134
                $region139: #{gpt_forward.8} parent=124 // loop_exit
                  _
              $region125: #{gpt_forward.8} parent=109 // pred_fallthru
                _
            $region110: #{gpt_forward.8} parent=105 // pred_fallthru
              _
            // Predicated region
            $region111: #{gpt_forward.8} parent=105 // pred_check
              _
            $region112: #{gpt_forward.8} parent=105 // pred_check_branch
              %410 = sbr.rel (0) target = $region114
            $region113: #{gpt_forward.8} parent=105 // pred_region
              loop: start=0, step=1, limit=1
              $region115: #{gpt_forward.8} parent=113 // loop_pre_header
                _
              $region116: #{gpt_forward.8} parent=113 // loop_header
                %s413 = sphi 0, %s417
                %p414 = scmp.ge.s32.totalorder %s413, 1
                %s418 = sphi %s404, %s404
                %s419 = sphi %s397, %s397
              $region117: #{gpt_forward.8} parent=113 // loop_header_branch
                %416 = sbr.rel (%p414) target = $region121
              $region118: #{gpt_forward.8} parent=113 // loop_body
                %v420 = vld [vmem:[%s418] sm:$0xf]
                %421 = vst [vmem:[%s419] sm:$0xf] %v420
                %v422 = vld [vmem:[%s418 + $0x4] sm:$0xf]
                %423 = vst [vmem:[%s419 + $0x4] sm:$0xf] %v422
                %v424 = vld [vmem:[%s418 + $0x8] sm:$0xf]
                %425 = vst [vmem:[%s419 + $0x8] sm:$0xf] %v424
                %v426 = vld [vmem:[%s418 + $0xc] sm:$0xf]
                %427 = vst [vmem:[%s419 + $0xc] sm:$0xf] %v426
                %v428 = vld [vmem:[%s418 + $0x20] sm:$0xf]
                %429 = vst [vmem:[%s419 + $0x10] sm:$0xf] %v428
                %v430 = vld [vmem:[%s418 + $0x24] sm:$0xf]
                %431 = vst [vmem:[%s419 + $0x14] sm:$0xf] %v430
                %v432 = vld [vmem:[%s418 + $0x28] sm:$0xf]
                %433 = vst [vmem:[%s419 + $0x18] sm:$0xf] %v432
                %v434 = vld [vmem:[%s418 + $0x2c] sm:$0xf]
                %435 = vst [vmem:[%s419 + $0x1c] sm:$0xf] %v434
                %v436 = vld [vmem:[%s418 + $0x40] sm:$0xf]
                %437 = vst [vmem:[%s419 + $0x20] sm:$0xf] %v436
                %v438 = vld [vmem:[%s418 + $0x44] sm:$0xf]
                %439 = vst [vmem:[%s419 + $0x24] sm:$0xf] %v438
                %v440 = vld [vmem:[%s418 + $0x48] sm:$0xf]
                %441 = vst [vmem:[%s419 + $0x28] sm:$0xf] %v440
                %v442 = vld [vmem:[%s418 + $0x4c] sm:$0xf]
                %443 = vst [vmem:[%s419 + $0x2c] sm:$0xf] %v442
                %v444 = vld [vmem:[%s418 + $0x60] sm:$0xf]
                %445 = vst [vmem:[%s419 + $0x30] sm:$0xf] %v444
                %v446 = vld [vmem:[%s418 + $0x64] sm:$0xf]
                %447 = vst [vmem:[%s419 + $0x34] sm:$0xf] %v446
                %v448 = vld [vmem:[%s418 + $0x68] sm:$0xf]
                %449 = vst [vmem:[%s419 + $0x38] sm:$0xf] %v448
                %v450 = vld [vmem:[%s418 + $0x6c] sm:$0xf]
                %451 = vst [vmem:[%s419 + $0x3c] sm:$0xf] %v450
              $region119: #{gpt_forward.8} parent=113 // loop_footer
                %s417 = sadd.s32 1, %s413
              $region120: #{gpt_forward.8} parent=113 // loop_footer_branch
                %412 = sbr.rel target = $region116
              $region121: #{gpt_forward.8} parent=113 // loop_exit
                _
            $region114: #{gpt_forward.8} parent=105 // pred_fallthru
              _
          $region106: #{gpt_forward.8} parent=101 // pred_fallthru
            _
          %503 = vnop
        $region102: #{gpt_forward.8} parent=15 // pred_fallthru
          _
      $region16: #{gpt_forward.8} parent=5 // pred_fallthru
        _
      %p504 = scmp.le.s32.totalorder 1, %s9
      %p505 = scmp.lt.s32.totalorder %s9, 9
      %p506 = pnand %p504, %p505
      %p507 = pneg %p506
      // Predicated region
      $region140: #{gpt_forward.8} parent=5 // pred_check
        _
      $region141: #{gpt_forward.8} parent=5 // pred_check_branch
        %509 = sbr.rel (%p506) target = $region143
      $region142: #{gpt_forward.8} parent=5 // pred_region
        %s510 = ssub.s32 %s9, 1
        %s511 = sand.u32 %s43, 1
        %s512 = sand.u32 %s43, 1
        %s513 = smul.addr %s512, 64
        %s514 = scalar_lea.vmem [#allocation5], %s513
        // Predicated region
        $region144: #{gpt_forward.8} parent=142 // pred_check
          %p515 = pneg %p56
        $region145: #{gpt_forward.8} parent=142 // pred_check_branch
          %517 = sbr.rel (%p515) target = $region147
        $region146: #{gpt_forward.8} parent=142 // pred_region
          _
        $region147: #{gpt_forward.8} parent=142 // pred_fallthru
          _
        %s518 = sand.u32 %s75, 1
        %s519 = sand.u32 %s75, 1
        %s520 = smul.addr %s519, 64
        %s521 = scalar_lea.vmem [#allocation6], %s520
        // Predicated region
        $region148: #{gpt_forward.8} parent=142 // pred_check
          %p522 = pneg %p88
        $region149: #{gpt_forward.8} parent=142 // pred_check_branch
          %524 = sbr.rel (%p522) target = $region151
        $region150: #{gpt_forward.8} parent=142 // pred_region
          _
        $region151: #{gpt_forward.8} parent=142 // pred_fallthru
          _
        %s525 = sand.u32 %s107, 1
        %s526 = sand.u32 %s107, 1
        %s527 = smul.addr %s526, 64
        %s528 = scalar_lea.vmem [#allocation7], %s527
        // Predicated region
        $region152: #{gpt_forward.8} parent=142 // pred_check
          %p529 = pneg %p120
        $region153: #{gpt_forward.8} parent=142 // pred_check_branch
          %531 = sbr.rel (%p529) target = $region155
        $region154: #{gpt_forward.8} parent=142 // pred_region
          _
        $region155: #{gpt_forward.8} parent=142 // pred_fallthru
          _
        %s532 = sand.u32 %s43, 1
        %s533 = sand.u32 %s43, 1
        %s534 = smul.addr %s533, 64
        %s535 = scalar_lea.vmem [#allocation5], %s534
        %p536 = pneg %p56
        %p537 = pneg %p53
        %s538 = sand.u32 %s75, 1
        %s539 = sand.u32 %s75, 1
        %s540 = smul.addr %s539, 64
        %s541 = scalar_lea.vmem [#allocation6], %s540
        %p542 = pneg %p88
        %p543 = pneg %p85
        %s544 = sand.u32 %s107, 1
        %s545 = sand.u32 %s107, 1
        %s546 = smul.addr %s545, 64
        %s547 = scalar_lea.vmem [#allocation7], %s546
        %p548 = pneg %p120
        %p549 = pneg %p117
        %p550 = pneg %p148
        %p551 = pneg %p145
        %s552 = sand.u32 %s135, 1
        %s553 = sand.u32 %s135, 1
        %s554 = smul.addr %s553, 64
        %s555 = scalar_lea.vmem [#allocation8], %s554
        %s556 = smul.u32 4, %s20
        %p557 = scmp.lt.s32.totalorder %s21, %s20
        %s558 = scalar_select %p557, %s21, %s20
        %s559 = smul.u32 4, %s558
        %p560 = scmp.lt.s32.totalorder %s21, %s20
        %s561 = scalar_select %p560, %s21, %s20
        %s562 = smul.u32 4, %s561
        %s563 = smul.u32 4, %s20
        %p565 = scmp.eq.s32.totalorder %s21, 0
        // Predicated region
        $region156: #{gpt_forward.8} parent=142 // pred_check
          %p566 = pneg %p565
        $region157: #{gpt_forward.8} parent=142 // pred_check_branch
          %568 = sbr.rel (%p566) target = $region159
        $region158: #{gpt_forward.8} parent=142 // pred_region
          %vm569 = vcmask 7168
          %570 = vst.msk [vmem:[#allocation2] sm:$0xff] %vm569, -1e+30
          %571 = vst.msk [vmem:[#allocation2 + $0x8] sm:$0xff] %vm569, -1e+30
          %572 = vst.msk [vmem:[#allocation2 + $0x10] sm:$0xff] %vm569, -1e+30
          %573 = vst.msk [vmem:[#allocation2 + $0x18] sm:$0xff] %vm569, -1e+30
          %574 = vst.msk [vmem:[#allocation2 + $0x20] sm:$0xff] %vm569, -1e+30
          %575 = vst.msk [vmem:[#allocation2 + $0x28] sm:$0xff] %vm569, -1e+30
          %576 = vst.msk [vmem:[#allocation2 + $0x30] sm:$0xff] %vm569, -1e+30
          %577 = vst.msk [vmem:[#allocation2 + $0x38] sm:$0xff] %vm569, -1e+30
          %578 = vst.msk [vmem:[#allocation2 + $0x40] sm:$0xff] %vm569, -1e+30
          %579 = vst.msk [vmem:[#allocation2 + $0x48] sm:$0xff] %vm569, -1e+30
          %580 = vst.msk [vmem:[#allocation2 + $0x50] sm:$0xff] %vm569, -1e+30
          %581 = vst.msk [vmem:[#allocation2 + $0x58] sm:$0xff] %vm569, -1e+30
          %582 = vst.msk [vmem:[#allocation2 + $0x60] sm:$0xff] %vm569, -1e+30
          %583 = vst.msk [vmem:[#allocation2 + $0x68] sm:$0xff] %vm569, -1e+30
          %584 = vst.msk [vmem:[#allocation2 + $0x70] sm:$0xff] %vm569, -1e+30
          %585 = vst.msk [vmem:[#allocation2 + $0x78] sm:$0xff] %vm569, -1e+30
          %586 = vst.msk [vmem:[#allocation3] sm:$0xff] %vm569, 0.0
          %587 = vst.msk [vmem:[#allocation3 + $0x8] sm:$0xff] %vm569, 0.0
          %588 = vst.msk [vmem:[#allocation3 + $0x10] sm:$0xff] %vm569, 0.0
          %589 = vst.msk [vmem:[#allocation3 + $0x18] sm:$0xff] %vm569, 0.0
          %590 = vst.msk [vmem:[#allocation3 + $0x20] sm:$0xff] %vm569, 0.0
          %591 = vst.msk [vmem:[#allocation3 + $0x28] sm:$0xff] %vm569, 0.0
          %592 = vst.msk [vmem:[#allocation3 + $0x30] sm:$0xff] %vm569, 0.0
          %593 = vst.msk [vmem:[#allocation3 + $0x38] sm:$0xff] %vm569, 0.0
          %594 = vst.msk [vmem:[#allocation3 + $0x40] sm:$0xff] %vm569, 0.0
          %595 = vst.msk [vmem:[#allocation3 + $0x48] sm:$0xff] %vm569, 0.0
          %596 = vst.msk [vmem:[#allocation3 + $0x50] sm:$0xff] %vm569, 0.0
          %597 = vst.msk [vmem:[#allocation3 + $0x58] sm:$0xff] %vm569, 0.0
          %598 = vst.msk [vmem:[#allocation3 + $0x60] sm:$0xff] %vm569, 0.0
          %599 = vst.msk [vmem:[#allocation3 + $0x68] sm:$0xff] %vm569, 0.0
          %600 = vst.msk [vmem:[#allocation3 + $0x70] sm:$0xff] %vm569, 0.0
          %601 = vst.msk [vmem:[#allocation3 + $0x78] sm:$0xff] %vm569, 0.0
          %vm602 = vcmask 261120
          %603 = vst.msk [vmem:[#allocation4] sm:$0xff] %vm602, 0.0
          %604 = vst.msk [vmem:[#allocation4 + $0x8] sm:$0xff] %vm602, 0.0
          %605 = vst.msk [vmem:[#allocation4 + $0x10] sm:$0xff] %vm602, 0.0
          %606 = vst.msk [vmem:[#allocation4 + $0x18] sm:$0xff] %vm602, 0.0
          %607 = vst.msk [vmem:[#allocation4 + $0x20] sm:$0xff] %vm602, 0.0
          %608 = vst.msk [vmem:[#allocation4 + $0x28] sm:$0xff] %vm602, 0.0
          %609 = vst.msk [vmem:[#allocation4 + $0x30] sm:$0xff] %vm602, 0.0
          %610 = vst.msk [vmem:[#allocation4 + $0x38] sm:$0xff] %vm602, 0.0
          %611 = vst.msk [vmem:[#allocation4 + $0x40] sm:$0xff] %vm602, 0.0
          %612 = vst.msk [vmem:[#allocation4 + $0x48] sm:$0xff] %vm602, 0.0
          %613 = vst.msk [vmem:[#allocation4 + $0x50] sm:$0xff] %vm602, 0.0
          %614 = vst.msk [vmem:[#allocation4 + $0x58] sm:$0xff] %vm602, 0.0
          %615 = vst.msk [vmem:[#allocation4 + $0x60] sm:$0xff] %vm602, 0.0
          %616 = vst.msk [vmem:[#allocation4 + $0x68] sm:$0xff] %vm602, 0.0
          %617 = vst.msk [vmem:[#allocation4 + $0x70] sm:$0xff] %vm602, 0.0
          %618 = vst.msk [vmem:[#allocation4 + $0x78] sm:$0xff] %vm602, 0.0
        $region159: #{gpt_forward.8} parent=142 // pred_fallthru
          _
        %p619 = scmp.lt.s32.totalorder %s21, %s20
        // Predicated region
        $region160: #{gpt_forward.8} parent=142 // pred_check
          %p620 = pneg %p619
        $region161: #{gpt_forward.8} parent=142 // pred_check_branch
          %622 = sbr.rel (%p620) target = $region163
        $region162: #{gpt_forward.8} parent=142 // pred_region
          %v623 = vld [vmem:[%s514] sm:$0xf]
          %v624 = vld [vmem:[%s514 + $0x4] sm:$0xf]
          %v625 = vld [vmem:[%s514 + $0x8] sm:$0xf]
          %v626 = vld [vmem:[%s514 + $0xc] sm:$0xf]
          %v627 = vld [vmem:[%s514 + $0x10] sm:$0xf]
          %v628 = vld [vmem:[%s514 + $0x14] sm:$0xf]
          %v629 = vld [vmem:[%s514 + $0x18] sm:$0xf]
          %v630 = vld [vmem:[%s514 + $0x1c] sm:$0xf]
          %v631 = vld [vmem:[%s514 + $0x20] sm:$0xf]
          %v632 = vld [vmem:[%s514 + $0x24] sm:$0xf]
          %v633 = vld [vmem:[%s514 + $0x28] sm:$0xf]
          %v634 = vld [vmem:[%s514 + $0x2c] sm:$0xf]
          %v635 = vld [vmem:[%s514 + $0x30] sm:$0xf]
          %v636 = vld [vmem:[%s514 + $0x34] sm:$0xf]
          %v637 = vld [vmem:[%s514 + $0x38] sm:$0xf]
          %v638 = vld [vmem:[%s514 + $0x3c] sm:$0xf]
          %v639 = vld [vmem:[%s521] sm:$0xf]
          %v640 = vld [vmem:[%s521 + $0x4] sm:$0xf]
          %v641 = vld [vmem:[%s521 + $0x8] sm:$0xf]
          %v642 = vld [vmem:[%s521 + $0xc] sm:$0xf]
          %v643 = vld [vmem:[%s521 + $0x10] sm:$0xf]
          %v644 = vld [vmem:[%s521 + $0x14] sm:$0xf]
          %v645 = vld [vmem:[%s521 + $0x18] sm:$0xf]
          %v646 = vld [vmem:[%s521 + $0x1c] sm:$0xf]
          %v647 = vld [vmem:[%s521 + $0x20] sm:$0xf]
          %v648 = vld [vmem:[%s521 + $0x24] sm:$0xf]
          %v649 = vld [vmem:[%s521 + $0x28] sm:$0xf]
          %v650 = vld [vmem:[%s521 + $0x2c] sm:$0xf]
          %v651 = vld [vmem:[%s521 + $0x30] sm:$0xf]
          %v652 = vld [vmem:[%s521 + $0x34] sm:$0xf]
          %v653 = vld [vmem:[%s521 + $0x38] sm:$0xf]
          %v654 = vld [vmem:[%s521 + $0x3c] sm:$0xf]
          %v655 = vld [vmem:[%s528] sm:$0xf]
          %v656 = vld [vmem:[%s528 + $0x4] sm:$0xf]
          %v657 = vld [vmem:[%s528 + $0x8] sm:$0xf]
          %v658 = vld [vmem:[%s528 + $0xc] sm:$0xf]
          %v659 = vld [vmem:[%s528 + $0x10] sm:$0xf]
          %v660 = vld [vmem:[%s528 + $0x14] sm:$0xf]
          %v661 = vld [vmem:[%s528 + $0x18] sm:$0xf]
          %v662 = vld [vmem:[%s528 + $0x1c] sm:$0xf]
          %v663 = vld [vmem:[%s528 + $0x20] sm:$0xf]
          %v664 = vld [vmem:[%s528 + $0x24] sm:$0xf]
          %v665 = vld [vmem:[%s528 + $0x28] sm:$0xf]
          %v666 = vld [vmem:[%s528 + $0x2c] sm:$0xf]
          %v667 = vld [vmem:[%s528 + $0x30] sm:$0xf]
          %v668 = vld [vmem:[%s528 + $0x34] sm:$0xf]
          %v669 = vld [vmem:[%s528 + $0x38] sm:$0xf]
          %v670 = vld [vmem:[%s528 + $0x3c] sm:$0xf]
          %v675 = vunpack.c.l.b16 %v623
          %v676 = vunpack.c.l.b16 %v624
          %v677 = vunpack.c.l.b16 %v625
          %v678 = vunpack.c.l.b16 %v626
          %v679 = vpack.c.b16 %v676, %v675
          %v680 = vpack.c.b16 %v678, %v677
          %v685 = vunpack.c.l.b16 %v639
          %v686 = vunpack.c.l.b16 %v640
          %v687 = vunpack.c.l.b16 %v641
          %v688 = vunpack.c.l.b16 %v642
          %v689 = vpack.c.b16 %v686, %v685
          %v690 = vpack.c.b16 %v688, %v687
          %vm691 = vcmask 261120
          %v693 = vsel %vm691, %v679, 0
          %v696 = vsel %vm691, %v680, 0
          %v699 = vsel %vm691, %v689, 0
          %v702 = vsel %vm691, %v690, 0
          %704 = vmatprep.subr.bf16.mxu0 0
          %705 = vmatpush1.bf16.xpose.msra.mxu0 %v699
          %706 = vmatprep.subr.bf16.mxu0 0
          %707 = vmatpush1.bf16.xpose.msra.mxu0 %v702
          %708 = vmatprep.subr.bf16.mxu0 0
          %709 = vmatpush1.bf16.xpose.msra.mxu0 0
          %710 = vmatprep.subr.bf16.mxu0 0
          %711 = vmatpush1.bf16.xpose.msra.mxu0 0
          %712 = vmatprep.subr.bf16.mxu0 0
          %713 = vmatpush1.bf16.xpose.msra.mxu0 0
          %714 = vmatprep.subr.bf16.mxu0 0
          %715 = vmatpush1.bf16.xpose.msra.mxu0 0
          %716 = vmatprep.subr.bf16.mxu0 0
          %717 = vmatpush1.bf16.xpose.msra.mxu0 0
          %718 = vmatprep.subr.bf16.mxu0 0
          %719 = vmatpush1.bf16.xpose.msra.mxu0 0
          %720 = vmatprep.subr.bf16.mxu0 0
          %721 = vmatpush1.bf16.xpose.msra.mxu0 0
          %722 = vmatprep.subr.bf16.mxu0 0
          %723 = vmatpush1.bf16.xpose.msra.mxu0 0
          %724 = vmatprep.subr.bf16.mxu0 0
          %725 = vmatpush1.bf16.xpose.msra.mxu0 0
          %726 = vmatprep.subr.bf16.mxu0 0
          %727 = vmatpush1.bf16.xpose.msra.mxu0 0
          %728 = vmatprep.subr.bf16.mxu0 0
          %729 = vmatpush1.bf16.xpose.msra.mxu0 0
          %730 = vmatprep.subr.bf16.mxu0 0
          %731 = vmatpush1.bf16.xpose.msra.mxu0 0
          %732 = vmatprep.subr.bf16.mxu0 0
          %733 = vmatpush1.bf16.xpose.msra.mxu0 0
          %734 = vmatprep.subr.bf16.mxu0 0
          %735 = vmatpush1.bf16.xpose.msra.mxu0 0
          %736 = vmatprep.mubr.bf16.mxu0 0
          %737 = vmatmul.mubr.bf16.gmra.mrb[0].mxu0 %v693
          %v738 = vpop.f32.mrb[0].mxu0
          %v739 = vadd.f32 0.0, %v738
          %v740 = vpop.f32.mrb[0].mxu0
          %v741 = vpop.f32.mrb[0].mxu0
          %v742 = vadd.f32 0.0, %v741
          %v743 = vpop.f32.mrb[0].mxu0
          %744 = vmatprep.mubr.bf16.mxu0 0
          %745 = vmatmul.mubr.bf16.gmra.mrb[0].mxu0 %v696
          %v746 = vpop.f32.mrb[0].mxu0
          %v747 = vadd.f32 0.0, %v746
          %v748 = vpop.f32.mrb[0].mxu0
          %v749 = vpop.f32.mrb[0].mxu0
          %v750 = vadd.f32 0.0, %v749
          %v751 = vpop.f32.mrb[0].mxu0
          %752 = vdwg.mxu0
          %v757 = vunpack.c.l.b16 %v627
          %v758 = vunpack.c.l.b16 %v628
          %v759 = vunpack.c.l.b16 %v629
          %v760 = vunpack.c.l.b16 %v630
          %v761 = vpack.c.b16 %v758, %v757
          %v762 = vpack.c.b16 %v760, %v759
          %v767 = vunpack.c.l.b16 %v643
          %v768 = vunpack.c.l.b16 %v644
          %v769 = vunpack.c.l.b16 %v645
          %v770 = vunpack.c.l.b16 %v646
          %v771 = vpack.c.b16 %v768, %v767
          %v772 = vpack.c.b16 %v770, %v769
          %v774 = vsel %vm691, %v761, 0
          %v777 = vsel %vm691, %v762, 0
          %v780 = vsel %vm691, %v771, 0
          %v783 = vsel %vm691, %v772, 0
          %785 = vmatprep.subr.bf16.mxu0 0
          %786 = vmatpush1.bf16.xpose.msra.mxu0 %v780
          %787 = vmatprep.subr.bf16.mxu0 0
          %788 = vmatpush1.bf16.xpose.msra.mxu0 %v783
          %789 = vmatprep.subr.bf16.mxu0 0
          %790 = vmatpush1.bf16.xpose.msra.mxu0 0
          %791 = vmatprep.subr.bf16.mxu0 0
          %792 = vmatpush1.bf16.xpose.msra.mxu0 0
          %793 = vmatprep.subr.bf16.mxu0 0
          %794 = vmatpush1.bf16.xpose.msra.mxu0 0
          %795 = vmatprep.subr.bf16.mxu0 0
          %796 = vmatpush1.bf16.xpose.msra.mxu0 0
          %797 = vmatprep.subr.bf16.mxu0 0
          %798 = vmatpush1.bf16.xpose.msra.mxu0 0
          %799 = vmatprep.subr.bf16.mxu0 0
          %800 = vmatpush1.bf16.xpose.msra.mxu0 0
          %801 = vmatprep.subr.bf16.mxu0 0
          %802 = vmatpush1.bf16.xpose.msra.mxu0 0
          %803 = vmatprep.subr.bf16.mxu0 0
          %804 = vmatpush1.bf16.xpose.msra.mxu0 0
          %805 = vmatprep.subr.bf16.mxu0 0
          %806 = vmatpush1.bf16.xpose.msra.mxu0 0
          %807 = vmatprep.subr.bf16.mxu0 0
          %808 = vmatpush1.bf16.xpose.msra.mxu0 0
          %809 = vmatprep.subr.bf16.mxu0 0
          %810 = vmatpush1.bf16.xpose.msra.mxu0 0
          %811 = vmatprep.subr.bf16.mxu0 0
          %812 = vmatpush1.bf16.xpose.msra.mxu0 0
          %813 = vmatprep.subr.bf16.mxu0 0
          %814 = vmatpush1.bf16.xpose.msra.mxu0 0
          %815 = vmatprep.subr.bf16.mxu0 0
          %816 = vmatpush1.bf16.xpose.msra.mxu0 0
          %817 = vmatprep.mubr.bf16.mxu0 0
          %818 = vmatmul.mubr.bf16.gmra.mrb[0].mxu0 %v774
          %v819 = vpop.f32.mrb[0].mxu0
          %v820 = vadd.f32 0.0, %v819
          %v821 = vpop.f32.mrb[0].mxu0
          %v822 = vpop.f32.mrb[0].mxu0
          %v823 = vadd.f32 0.0, %v822
          %v824 = vpop.f32.mrb[0].mxu0
          %825 = vmatprep.mubr.bf16.mxu0 0
          %826 = vmatmul.mubr.bf16.gmra.mrb[0].mxu0 %v777
          %v827 = vpop.f32.mrb[0].mxu0
          %v828 = vadd.f32 0.0, %v827
          %v829 = vpop.f32.mrb[0].mxu0
          %v830 = vpop.f32.mrb[0].mxu0
          %v831 = vadd.f32 0.0, %v830
          %v832 = vpop.f32.mrb[0].mxu0
          %833 = vdwg.mxu0
          %v838 = vunpack.c.l.b16 %v631
          %v839 = vunpack.c.l.b16 %v632
          %v840 = vunpack.c.l.b16 %v633
          %v841 = vunpack.c.l.b16 %v634
          %v842 = vpack.c.b16 %v839, %v838
          %v843 = vpack.c.b16 %v841, %v840
          %v848 = vunpack.c.l.b16 %v647
          %v849 = vunpack.c.l.b16 %v648
          %v850 = vunpack.c.l.b16 %v649
          %v851 = vunpack.c.l.b16 %v650
          %v852 = vpack.c.b16 %v849, %v848
          %v853 = vpack.c.b16 %v851, %v850
          %v855 = vsel %vm691, %v842, 0
          %v858 = vsel %vm691, %v843, 0
          %v861 = vsel %vm691, %v852, 0
          %v864 = vsel %vm691, %v853, 0
          %866 = vmatprep.subr.bf16.mxu0 0
          %867 = vmatpush1.bf16.xpose.msra.mxu0 %v861
          %868 = vmatprep.subr.bf16.mxu0 0
          %869 = vmatpush1.bf16.xpose.msra.mxu0 %v864
          %870 = vmatprep.subr.bf16.mxu0 0
          %871 = vmatpush1.bf16.xpose.msra.mxu0 0
          %872 = vmatprep.subr.bf16.mxu0 0
          %873 = vmatpush1.bf16.xpose.msra.mxu0 0
          %874 = vmatprep.subr.bf16.mxu0 0
          %875 = vmatpush1.bf16.xpose.msra.mxu0 0
          %876 = vmatprep.subr.bf16.mxu0 0
          %877 = vmatpush1.bf16.xpose.msra.mxu0 0
          %878 = vmatprep.subr.bf16.mxu0 0
          %879 = vmatpush1.bf16.xpose.msra.mxu0 0
          %880 = vmatprep.subr.bf16.mxu0 0
          %881 = vmatpush1.bf16.xpose.msra.mxu0 0
          %882 = vmatprep.subr.bf16.mxu0 0
          %883 = vmatpush1.bf16.xpose.msra.mxu0 0
          %884 = vmatprep.subr.bf16.mxu0 0
          %885 = vmatpush1.bf16.xpose.msra.mxu0 0
          %886 = vmatprep.subr.bf16.mxu0 0
          %887 = vmatpush1.bf16.xpose.msra.mxu0 0
          %888 = vmatprep.subr.bf16.mxu0 0
          %889 = vmatpush1.bf16.xpose.msra.mxu0 0
          %890 = vmatprep.subr.bf16.mxu0 0
          %891 = vmatpush1.bf16.xpose.msra.mxu0 0
          %892 = vmatprep.subr.bf16.mxu0 0
          %893 = vmatpush1.bf16.xpose.msra.mxu0 0
          %894 = vmatprep.subr.bf16.mxu0 0
          %895 = vmatpush1.bf16.xpose.msra.mxu0 0
          %896 = vmatprep.subr.bf16.mxu0 0
          %897 = vmatpush1.bf16.xpose.msra.mxu0 0
          %898 = vmatprep.mubr.bf16.mxu0 0
          %899 = vmatmul.mubr.bf16.gmra.mrb[0].mxu0 %v855
          %v900 = vpop.f32.mrb[0].mxu0
          %v901 = vadd.f32 0.0, %v900
          %v902 = vpop.f32.mrb[0].mxu0
          %v903 = vpop.f32.mrb[0].mxu0
          %v904 = vadd.f32 0.0, %v903
          %v905 = vpop.f32.mrb[0].mxu0
          %906 = vmatprep.mubr.bf16.mxu0 0
          %907 = vmatmul.mubr.bf16.gmra.mrb[0].mxu0 %v858
          %v908 = vpop.f32.mrb[0].mxu0
          %v909 = vadd.f32 0.0, %v908
          %v910 = vpop.f32.mrb[0].mxu0
          %v911 = vpop.f32.mrb[0].mxu0
          %v912 = vadd.f32 0.0, %v911
          %v913 = vpop.f32.mrb[0].mxu0
          %914 = vdwg.mxu0
          %v919 = vunpack.c.l.b16 %v635
          %v920 = vunpack.c.l.b16 %v636
          %v921 = vunpack.c.l.b16 %v637
          %v922 = vunpack.c.l.b16 %v638
          %v923 = vpack.c.b16 %v920, %v919
          %v924 = vpack.c.b16 %v922, %v921
          %v929 = vunpack.c.l.b16 %v651
          %v930 = vunpack.c.l.b16 %v652
          %v931 = vunpack.c.l.b16 %v653
          %v932 = vunpack.c.l.b16 %v654
          %v933 = vpack.c.b16 %v930, %v929
          %v934 = vpack.c.b16 %v932, %v931
          %v936 = vsel %vm691, %v923, 0
          %v939 = vsel %vm691, %v924, 0
          %v942 = vsel %vm691, %v933, 0
          %v945 = vsel %vm691, %v934, 0
          %947 = vmatprep.subr.bf16.mxu0 0
          %948 = vmatpush1.bf16.xpose.msra.mxu0 %v942
          %949 = vmatprep.subr.bf16.mxu0 0
          %950 = vmatpush1.bf16.xpose.msra.mxu0 %v945
          %951 = vmatprep.subr.bf16.mxu0 0
          %952 = vmatpush1.bf16.xpose.msra.mxu0 0
          %953 = vmatprep.subr.bf16.mxu0 0
          %954 = vmatpush1.bf16.xpose.msra.mxu0 0
          %955 = vmatprep.subr.bf16.mxu0 0
          %956 = vmatpush1.bf16.xpose.msra.mxu0 0
          %957 = vmatprep.subr.bf16.mxu0 0
          %958 = vmatpush1.bf16.xpose.msra.mxu0 0
          %959 = vmatprep.subr.bf16.mxu0 0
          %960 = vmatpush1.bf16.xpose.msra.mxu0 0
          %961 = vmatprep.subr.bf16.mxu0 0
          %962 = vmatpush1.bf16.xpose.msra.mxu0 0
          %963 = vmatprep.subr.bf16.mxu0 0
          %964 = vmatpush1.bf16.xpose.msra.mxu0 0
          %965 = vmatprep.subr.bf16.mxu0 0
          %966 = vmatpush1.bf16.xpose.msra.mxu0 0
          %967 = vmatprep.subr.bf16.mxu0 0
          %968 = vmatpush1.bf16.xpose.msra.mxu0 0
          %969 = vmatprep.subr.bf16.mxu0 0
          %970 = vmatpush1.bf16.xpose.msra.mxu0 0
          %971 = vmatprep.subr.bf16.mxu0 0
          %972 = vmatpush1.bf16.xpose.msra.mxu0 0
          %973 = vmatprep.subr.bf16.mxu0 0
          %974 = vmatpush1.bf16.xpose.msra.mxu0 0
          %975 = vmatprep.subr.bf16.mxu0 0
          %976 = vmatpush1.bf16.xpose.msra.mxu0 0
          %977 = vmatprep.subr.bf16.mxu0 0
          %978 = vmatpush1.bf16.xpose.msra.mxu0 0
          %979 = vmatprep.mubr.bf16.mxu0 0
          %980 = vmatmul.mubr.bf16.gmra.mrb[0].mxu0 %v936
          %v981 = vpop.f32.mrb[0].mxu0
          %v982 = vadd.f32 0.0, %v981
          %v983 = vpop.f32.mrb[0].mxu0
          %v984 = vpop.f32.mrb[0].mxu0
          %v985 = vadd.f32 0.0, %v984
          %v986 = vpop.f32.mrb[0].mxu0
          %987 = vmatprep.mubr.bf16.mxu0 0
          %988 = vmatmul.mubr.bf16.gmra.mrb[0].mxu0 %v939
          %v989 = vpop.f32.mrb[0].mxu0
          %v990 = vadd.f32 0.0, %v989
          %v991 = vpop.f32.mrb[0].mxu0
          %v992 = vpop.f32.mrb[0].mxu0
          %v993 = vadd.f32 0.0, %v992
          %v994 = vpop.f32.mrb[0].mxu0
          %995 = vdwg.mxu0
          %v996 = vmul.f32 %v739, 0.17677669
          %v997 = vmul.f32 %v742, 0.17677669
          %v998 = vmul.f32 %v747, 0.17677669
          %v999 = vmul.f32 %v750, 0.17677669
          %v1000 = vmul.f32 %v820, 0.17677669
          %v1001 = vmul.f32 %v823, 0.17677669
          %v1002 = vmul.f32 %v828, 0.17677669
          %v1003 = vmul.f32 %v831, 0.17677669
          %v1004 = vmul.f32 %v901, 0.17677669
          %v1005 = vmul.f32 %v904, 0.17677669
          %v1006 = vmul.f32 %v909, 0.17677669
          %v1007 = vmul.f32 %v912, 0.17677669
          %v1008 = vmul.f32 %v982, 0.17677669
          %v1009 = vmul.f32 %v985, 0.17677669
          %v1010 = vmul.f32 %v990, 0.17677669
          %v1011 = vmul.f32 %v993, 0.17677669
          %v1012 = vld [vmem:[#allocation2] sm:$0xff]
          %v1013 = vld [vmem:[#allocation2 + $0x8] sm:$0xff]
          %v1014 = vld [vmem:[#allocation2 + $0x10] sm:$0xff]
          %v1015 = vld [vmem:[#allocation2 + $0x18] sm:$0xff]
          %v1016 = vld [vmem:[#allocation2 + $0x20] sm:$0xff]
          %v1017 = vld [vmem:[#allocation2 + $0x28] sm:$0xff]
          %v1018 = vld [vmem:[#allocation2 + $0x30] sm:$0xff]
          %v1019 = vld [vmem:[#allocation2 + $0x38] sm:$0xff]
          %v1020 = vld [vmem:[#allocation2 + $0x40] sm:$0xff]
          %v1021 = vld [vmem:[#allocation2 + $0x48] sm:$0xff]
          %v1022 = vld [vmem:[#allocation2 + $0x50] sm:$0xff]
          %v1023 = vld [vmem:[#allocation2 + $0x58] sm:$0xff]
          %v1024 = vld [vmem:[#allocation2 + $0x60] sm:$0xff]
          %v1025 = vld [vmem:[#allocation2 + $0x68] sm:$0xff]
          %v1026 = vld [vmem:[#allocation2 + $0x70] sm:$0xff]
          %v1027 = vld [vmem:[#allocation2 + $0x78] sm:$0xff]
          %v1028 = vsel %vm691, %v996, -inf
          %1029 = vmax.xlane.f32.xlu0 %v1028
          %v1030 = vpop.xlane.xlu0 %1029
          %v1031 = vsel %vm691, %v997, -inf
          %1032 = vmax.xlane.f32.xlu0 %v1031
          %v1033 = vpop.xlane.xlu0 %1032
          %v1034 = vsel %vm691, %v998, -inf
          %1035 = vmax.xlane.f32.xlu0 %v1034
          %v1036 = vpop.xlane.xlu0 %1035
          %v1037 = vsel %vm691, %v999, -inf
          %1038 = vmax.xlane.f32.xlu0 %v1037
          %v1039 = vpop.xlane.xlu0 %1038
          %v1040 = vsel %vm691, %v1000, -inf
          %1041 = vmax.xlane.f32.xlu0 %v1040
          %v1042 = vpop.xlane.xlu0 %1041
          %v1043 = vsel %vm691, %v1001, -inf
          %1044 = vmax.xlane.f32.xlu0 %v1043
          %v1045 = vpop.xlane.xlu0 %1044
          %v1046 = vsel %vm691, %v1002, -inf
          %1047 = vmax.xlane.f32.xlu0 %v1046
          %v1048 = vpop.xlane.xlu0 %1047
          %v1049 = vsel %vm691, %v1003, -inf
          %1050 = vmax.xlane.f32.xlu0 %v1049
          %v1051 = vpop.xlane.xlu0 %1050
          %v1052 = vsel %vm691, %v1004, -inf
          %1053 = vmax.xlane.f32.xlu0 %v1052
          %v1054 = vpop.xlane.xlu0 %1053
          %v1055 = vsel %vm691, %v1005, -inf
          %1056 = vmax.xlane.f32.xlu0 %v1055
          %v1057 = vpop.xlane.xlu0 %1056
          %v1058 = vsel %vm691, %v1006, -inf
          %1059 = vmax.xlane.f32.xlu0 %v1058
          %v1060 = vpop.xlane.xlu0 %1059
          %v1061 = vsel %vm691, %v1007, -inf
          %1062 = vmax.xlane.f32.xlu0 %v1061
          %v1063 = vpop.xlane.xlu0 %1062
          %v1064 = vsel %vm691, %v1008, -inf
          %1065 = vmax.xlane.f32.xlu0 %v1064
          %v1066 = vpop.xlane.xlu0 %1065
          %v1067 = vsel %vm691, %v1009, -inf
          %1068 = vmax.xlane.f32.xlu0 %v1067
          %v1069 = vpop.xlane.xlu0 %1068
          %v1070 = vsel %vm691, %v1010, -inf
          %1071 = vmax.xlane.f32.xlu0 %v1070
          %v1072 = vpop.xlane.xlu0 %1071
          %v1073 = vsel %vm691, %v1011, -inf
          %1074 = vmax.xlane.f32.xlu0 %v1073
          %v1075 = vpop.xlane.xlu0 %1074
          %v1076 = vmax.f32 %v1012, %v1030
          %v1077 = vmax.f32 %v1013, %v1033
          %v1078 = vmax.f32 %v1014, %v1036
          %v1079 = vmax.f32 %v1015, %v1039
          %v1080 = vmax.f32 %v1016, %v1042
          %v1081 = vmax.f32 %v1017, %v1045
          %v1082 = vmax.f32 %v1018, %v1048
          %v1083 = vmax.f32 %v1019, %v1051
          %v1084 = vmax.f32 %v1020, %v1054
          %v1085 = vmax.f32 %v1021, %v1057
          %v1086 = vmax.f32 %v1022, %v1060
          %v1087 = vmax.f32 %v1023, %v1063
          %v1088 = vmax.f32 %v1024, %v1066
          %v1089 = vmax.f32 %v1025, %v1069
          %v1090 = vmax.f32 %v1026, %v1072
          %v1091 = vmax.f32 %v1027, %v1075
          %v1092 = vsub.f32 %v1012, %v1076
          %v1093 = vsub.f32 %v1013, %v1077
          %v1094 = vsub.f32 %v1014, %v1078
          %v1095 = vsub.f32 %v1015, %v1079
          %v1096 = vsub.f32 %v1016, %v1080
          %v1097 = vsub.f32 %v1017, %v1081
          %v1098 = vsub.f32 %v1018, %v1082
          %v1099 = vsub.f32 %v1019, %v1083
          %v1100 = vsub.f32 %v1020, %v1084
          %v1101 = vsub.f32 %v1021, %v1085
          %v1102 = vsub.f32 %v1022, %v1086
          %v1103 = vsub.f32 %v1023, %v1087
          %v1104 = vsub.f32 %v1024, %v1088
          %v1105 = vsub.f32 %v1025, %v1089
          %v1106 = vsub.f32 %v1026, %v1090
          %v1107 = vsub.f32 %v1027, %v1091
          %v1108 = vmul.f32 %v1092, 1.442695
          %v1109 = vpow.pop %v1108
          %v1110 = vmul.f32 %v1093, 1.442695
          %v1111 = vpow.pop %v1110
          %v1112 = vmul.f32 %v1094, 1.442695
          %v1113 = vpow.pop %v1112
          %v1114 = vmul.f32 %v1095, 1.442695
          %v1115 = vpow.pop %v1114
          %v1116 = vmul.f32 %v1096, 1.442695
          %v1117 = vpow.pop %v1116
          %v1118 = vmul.f32 %v1097, 1.442695
          %v1119 = vpow.pop %v1118
          %v1120 = vmul.f32 %v1098, 1.442695
          %v1121 = vpow.pop %v1120
          %v1122 = vmul.f32 %v1099, 1.442695
          %v1123 = vpow.pop %v1122
          %v1124 = vmul.f32 %v1100, 1.442695
          %v1125 = vpow.pop %v1124
          %v1126 = vmul.f32 %v1101, 1.442695
          %v1127 = vpow.pop %v1126
          %v1128 = vmul.f32 %v1102, 1.442695
          %v1129 = vpow.pop %v1128
          %v1130 = vmul.f32 %v1103, 1.442695
          %v1131 = vpow.pop %v1130
          %v1132 = vmul.f32 %v1104, 1.442695
          %v1133 = vpow.pop %v1132
          %v1134 = vmul.f32 %v1105, 1.442695
          %v1135 = vpow.pop %v1134
          %v1136 = vmul.f32 %v1106, 1.442695
          %v1137 = vpow.pop %v1136
          %v1138 = vmul.f32 %v1107, 1.442695
          %v1139 = vpow.pop %v1138
          %1141 = vset.pattern.permute.xlu0 0
          %1142 = vperm.xlu0 %1141, %v1076
          %v1143 = vpop.permute.xlu0 %1142
          %1146 = vset.pattern.permute.xlu0 0
          %1147 = vperm.xlu0 %1146, %v1077
          %v1148 = vpop.permute.xlu0 %1147
          %1151 = vset.pattern.permute.xlu0 0
          %1152 = vperm.xlu0 %1151, %v1078
          %v1153 = vpop.permute.xlu0 %1152
          %1156 = vset.pattern.permute.xlu0 0
          %1157 = vperm.xlu0 %1156, %v1079
          %v1158 = vpop.permute.xlu0 %1157
          %1161 = vset.pattern.permute.xlu0 0
          %1162 = vperm.xlu0 %1161, %v1080
          %v1163 = vpop.permute.xlu0 %1162
          %1166 = vset.pattern.permute.xlu0 0
          %1167 = vperm.xlu0 %1166, %v1081
          %v1168 = vpop.permute.xlu0 %1167
          %1171 = vset.pattern.permute.xlu0 0
          %1172 = vperm.xlu0 %1171, %v1082
          %v1173 = vpop.permute.xlu0 %1172
          %1176 = vset.pattern.permute.xlu0 0
          %1177 = vperm.xlu0 %1176, %v1083
          %v1178 = vpop.permute.xlu0 %1177
          %1181 = vset.pattern.permute.xlu0 0
          %1182 = vperm.xlu0 %1181, %v1084
          %v1183 = vpop.permute.xlu0 %1182
          %1186 = vset.pattern.permute.xlu0 0
          %1187 = vperm.xlu0 %1186, %v1085
          %v1188 = vpop.permute.xlu0 %1187
          %1191 = vset.pattern.permute.xlu0 0
          %1192 = vperm.xlu0 %1191, %v1086
          %v1193 = vpop.permute.xlu0 %1192
          %1196 = vset.pattern.permute.xlu0 0
          %1197 = vperm.xlu0 %1196, %v1087
          %v1198 = vpop.permute.xlu0 %1197
          %1201 = vset.pattern.permute.xlu0 0
          %1202 = vperm.xlu0 %1201, %v1088
          %v1203 = vpop.permute.xlu0 %1202
          %1206 = vset.pattern.permute.xlu0 0
          %1207 = vperm.xlu0 %1206, %v1089
          %v1208 = vpop.permute.xlu0 %1207
          %1211 = vset.pattern.permute.xlu0 0
          %1212 = vperm.xlu0 %1211, %v1090
          %v1213 = vpop.permute.xlu0 %1212
          %1216 = vset.pattern.permute.xlu0 0
          %1217 = vperm.xlu0 %1216, %v1091
          %v1218 = vpop.permute.xlu0 %1217
          %v1220 = vsub.f32 %v996, %v1143
          %v1221 = vsub.f32 %v997, %v1148
          %v1222 = vsub.f32 %v998, %v1153
          %v1223 = vsub.f32 %v999, %v1158
          %v1224 = vsub.f32 %v1000, %v1163
          %v1225 = vsub.f32 %v1001, %v1168
          %v1226 = vsub.f32 %v1002, %v1173
          %v1227 = vsub.f32 %v1003, %v1178
          %v1228 = vsub.f32 %v1004, %v1183
          %v1229 = vsub.f32 %v1005, %v1188
          %v1230 = vsub.f32 %v1006, %v1193
          %v1231 = vsub.f32 %v1007, %v1198
          %v1232 = vsub.f32 %v1008, %v1203
          %v1233 = vsub.f32 %v1009, %v1208
          %v1234 = vsub.f32 %v1010, %v1213
          %v1235 = vsub.f32 %v1011, %v1218
          %v1236 = vmul.f32 %v1220, 1.442695
          %v1237 = vpow.pop %v1236
          %v1238 = vmul.f32 %v1221, 1.442695
          %v1239 = vpow.pop %v1238
          %v1240 = vmul.f32 %v1222, 1.442695
          %v1241 = vpow.pop %v1240
          %v1242 = vmul.f32 %v1223, 1.442695
          %v1243 = vpow.pop %v1242
          %v1244 = vmul.f32 %v1224, 1.442695
          %v1245 = vpow.pop %v1244
          %v1246 = vmul.f32 %v1225, 1.442695
          %v1247 = vpow.pop %v1246
          %v1248 = vmul.f32 %v1226, 1.442695
          %v1249 = vpow.pop %v1248
          %v1250 = vmul.f32 %v1227, 1.442695
          %v1251 = vpow.pop %v1250
          %v1252 = vmul.f32 %v1228, 1.442695
          %v1253 = vpow.pop %v1252
          %v1254 = vmul.f32 %v1229, 1.442695
          %v1255 = vpow.pop %v1254
          %v1256 = vmul.f32 %v1230, 1.442695
          %v1257 = vpow.pop %v1256
          %v1258 = vmul.f32 %v1231, 1.442695
          %v1259 = vpow.pop %v1258
          %v1260 = vmul.f32 %v1232, 1.442695
          %v1261 = vpow.pop %v1260
          %v1262 = vmul.f32 %v1233, 1.442695
          %v1263 = vpow.pop %v1262
          %v1264 = vmul.f32 %v1234, 1.442695
          %v1265 = vpow.pop %v1264
          %v1266 = vmul.f32 %v1235, 1.442695
          %v1267 = vpow.pop %v1266
          %v1268 = vld [vmem:[#allocation3] sm:$0xff]
          %v1269 = vld [vmem:[#allocation3 + $0x8] sm:$0xff]
          %v1270 = vld [vmem:[#allocation3 + $0x10] sm:$0xff]
          %v1271 = vld [vmem:[#allocation3 + $0x18] sm:$0xff]
          %v1272 = vld [vmem:[#allocation3 + $0x20] sm:$0xff]
          %v1273 = vld [vmem:[#allocation3 + $0x28] sm:$0xff]
          %v1274 = vld [vmem:[#allocation3 + $0x30] sm:$0xff]
          %v1275 = vld [vmem:[#allocation3 + $0x38] sm:$0xff]
          %v1276 = vld [vmem:[#allocation3 + $0x40] sm:$0xff]
          %v1277 = vld [vmem:[#allocation3 + $0x48] sm:$0xff]
          %v1278 = vld [vmem:[#allocation3 + $0x50] sm:$0xff]
          %v1279 = vld [vmem:[#allocation3 + $0x58] sm:$0xff]
          %v1280 = vld [vmem:[#allocation3 + $0x60] sm:$0xff]
          %v1281 = vld [vmem:[#allocation3 + $0x68] sm:$0xff]
          %v1282 = vld [vmem:[#allocation3 + $0x70] sm:$0xff]
          %v1283 = vld [vmem:[#allocation3 + $0x78] sm:$0xff]
          %v1284 = vmul.f32 %v1109, %v1268
          %v1285 = vmul.f32 %v1111, %v1269
          %v1286 = vmul.f32 %v1113, %v1270
          %v1287 = vmul.f32 %v1115, %v1271
          %v1288 = vmul.f32 %v1117, %v1272
          %v1289 = vmul.f32 %v1119, %v1273
          %v1290 = vmul.f32 %v1121, %v1274
          %v1291 = vmul.f32 %v1123, %v1275
          %v1292 = vmul.f32 %v1125, %v1276
          %v1293 = vmul.f32 %v1127, %v1277
          %v1294 = vmul.f32 %v1129, %v1278
          %v1295 = vmul.f32 %v1131, %v1279
          %v1296 = vmul.f32 %v1133, %v1280
          %v1297 = vmul.f32 %v1135, %v1281
          %v1298 = vmul.f32 %v1137, %v1282
          %v1299 = vmul.f32 %v1139, %v1283
          %v1300 = vsel %vm691, %v1237, 0.0
          %1301 = vadd.xlane.f32.xlu0 %v1300
          %v1302 = vpop.xlane.xlu0 %1301
          %v1303 = vsel %vm691, %v1239, 0.0
          %1304 = vadd.xlane.f32.xlu0 %v1303
          %v1305 = vpop.xlane.xlu0 %1304
          %v1306 = vsel %vm691, %v1241, 0.0
          %1307 = vadd.xlane.f32.xlu0 %v1306
          %v1308 = vpop.xlane.xlu0 %1307
          %v1309 = vsel %vm691, %v1243, 0.0
          %1310 = vadd.xlane.f32.xlu0 %v1309
          %v1311 = vpop.xlane.xlu0 %1310
          %v1312 = vsel %vm691, %v1245, 0.0
          %1313 = vadd.xlane.f32.xlu0 %v1312
          %v1314 = vpop.xlane.xlu0 %1313
          %v1315 = vsel %vm691, %v1247, 0.0
          %1316 = vadd.xlane.f32.xlu0 %v1315
          %v1317 = vpop.xlane.xlu0 %1316
          %v1318 = vsel %vm691, %v1249, 0.0
          %1319 = vadd.xlane.f32.xlu0 %v1318
          %v1320 = vpop.xlane.xlu0 %1319
          %v1321 = vsel %vm691, %v1251, 0.0
          %1322 = vadd.xlane.f32.xlu0 %v1321
          %v1323 = vpop.xlane.xlu0 %1322
          %v1324 = vsel %vm691, %v1253, 0.0
          %1325 = vadd.xlane.f32.xlu0 %v1324
          %v1326 = vpop.xlane.xlu0 %1325
          %v1327 = vsel %vm691, %v1255, 0.0
          %1328 = vadd.xlane.f32.xlu0 %v1327
          %v1329 = vpop.xlane.xlu0 %1328
          %v1330 = vsel %vm691, %v1257, 0.0
          %1331 = vadd.xlane.f32.xlu0 %v1330
          %v1332 = vpop.xlane.xlu0 %1331
          %v1333 = vsel %vm691, %v1259, 0.0
          %1334 = vadd.xlane.f32.xlu0 %v1333
          %v1335 = vpop.xlane.xlu0 %1334
          %v1336 = vsel %vm691, %v1261, 0.0
          %1337 = vadd.xlane.f32.xlu0 %v1336
          %v1338 = vpop.xlane.xlu0 %1337
          %v1339 = vsel %vm691, %v1263, 0.0
          %1340 = vadd.xlane.f32.xlu0 %v1339
          %v1341 = vpop.xlane.xlu0 %1340
          %v1342 = vsel %vm691, %v1265, 0.0
          %1343 = vadd.xlane.f32.xlu0 %v1342
          %v1344 = vpop.xlane.xlu0 %1343
          %v1345 = vsel %vm691, %v1267, 0.0
          %1346 = vadd.xlane.f32.xlu0 %v1345
          %v1347 = vpop.xlane.xlu0 %1346
          %v1348 = vadd.f32 %v1284, %v1302
          %v1349 = vadd.f32 %v1285, %v1305
          %v1350 = vadd.f32 %v1286, %v1308
          %v1351 = vadd.f32 %v1287, %v1311
          %v1352 = vadd.f32 %v1288, %v1314
          %v1353 = vadd.f32 %v1289, %v1317
          %v1354 = vadd.f32 %v1290, %v1320
          %v1355 = vadd.f32 %v1291, %v1323
          %v1356 = vadd.f32 %v1292, %v1326
          %v1357 = vadd.f32 %v1293, %v1329
          %v1358 = vadd.f32 %v1294, %v1332
          %v1359 = vadd.f32 %v1295, %v1335
          %v1360 = vadd.f32 %v1296, %v1338
          %v1361 = vadd.f32 %v1297, %v1341
          %v1362 = vadd.f32 %v1298, %v1344
          %v1363 = vadd.f32 %v1299, %v1347
          %vm1364 = vcmask 7168
          %1365 = vst.msk [vmem:[#allocation3] sm:$0xff] %vm1364, %v1348
          %1366 = vst.msk [vmem:[#allocation3 + $0x8] sm:$0xff] %vm1364, %v1349
          %1367 = vst.msk [vmem:[#allocation3 + $0x10] sm:$0xff] %vm1364, %v1350
          %1368 = vst.msk [vmem:[#allocation3 + $0x18] sm:$0xff] %vm1364, %v1351
          %1369 = vst.msk [vmem:[#allocation3 + $0x20] sm:$0xff] %vm1364, %v1352
          %1370 = vst.msk [vmem:[#allocation3 + $0x28] sm:$0xff] %vm1364, %v1353
          %1371 = vst.msk [vmem:[#allocation3 + $0x30] sm:$0xff] %vm1364, %v1354
          %1372 = vst.msk [vmem:[#allocation3 + $0x38] sm:$0xff] %vm1364, %v1355
          %1373 = vst.msk [vmem:[#allocation3 + $0x40] sm:$0xff] %vm1364, %v1356
          %1374 = vst.msk [vmem:[#allocation3 + $0x48] sm:$0xff] %vm1364, %v1357
          %1375 = vst.msk [vmem:[#allocation3 + $0x50] sm:$0xff] %vm1364, %v1358
          %1376 = vst.msk [vmem:[#allocation3 + $0x58] sm:$0xff] %vm1364, %v1359
          %1377 = vst.msk [vmem:[#allocation3 + $0x60] sm:$0xff] %vm1364, %v1360
          %1378 = vst.msk [vmem:[#allocation3 + $0x68] sm:$0xff] %vm1364, %v1361
          %1379 = vst.msk [vmem:[#allocation3 + $0x70] sm:$0xff] %vm1364, %v1362
          %1380 = vst.msk [vmem:[#allocation3 + $0x78] sm:$0xff] %vm1364, %v1363
          %v1381 = vpack.c.bf16 %v1239, %v1237
          %v1382 = vpack.c.bf16 %v1243, %v1241
          %v1383 = vpack.c.bf16 %v1247, %v1245
          %v1384 = vpack.c.bf16 %v1251, %v1249
          %v1385 = vpack.c.bf16 %v1255, %v1253
          %v1386 = vpack.c.bf16 %v1259, %v1257
          %v1387 = vpack.c.bf16 %v1263, %v1261
          %v1388 = vpack.c.bf16 %v1267, %v1265
          %v1393 = vunpack.c.l.b16 %v655
          %v1394 = vunpack.c.l.b16 %v656
          %v1395 = vunpack.c.l.b16 %v657
          %v1396 = vunpack.c.l.b16 %v658
          %v1397 = vpack.c.b16 %v1394, %v1393
          %v1398 = vpack.c.b16 %v1396, %v1395
          %v1402 = vsel %vm691, %v1381, 0
          %v1405 = vsel %vm691, %v1382, 0
          %1407 = vmatprep.subr.bf16.mxu0 0
          %1408 = vmatpush1.bf16.msra.mxu0 %v1397
          %1409 = vmatprep.subr.bf16.mxu0 0
          %1410 = vmatpush1.bf16.msra.mxu0 %v1398
          %1411 = vmatprep.subr.bf16.mxu0 0
          %1412 = vmatpush1.bf16.msra.mxu0 0
          %1413 = vmatprep.subr.bf16.mxu0 0
          %1414 = vmatpush1.bf16.msra.mxu0 0
          %1415 = vmatprep.subr.bf16.mxu0 0
          %1416 = vmatpush1.bf16.msra.mxu0 0
          %1417 = vmatprep.subr.bf16.mxu0 0
          %1418 = vmatpush1.bf16.msra.mxu0 0
          %1419 = vmatprep.subr.bf16.mxu0 0
          %1420 = vmatpush1.bf16.msra.mxu0 0
          %1421 = vmatprep.subr.bf16.mxu0 0
          %1422 = vmatpush1.bf16.msra.mxu0 0
          %1423 = vmatprep.subr.bf16.mxu0 0
          %1424 = vmatpush1.bf16.msra.mxu0 0
          %1425 = vmatprep.subr.bf16.mxu0 0
          %1426 = vmatpush1.bf16.msra.mxu0 0
          %1427 = vmatprep.subr.bf16.mxu0 0
          %1428 = vmatpush1.bf16.msra.mxu0 0
          %1429 = vmatprep.subr.bf16.mxu0 0
          %1430 = vmatpush1.bf16.msra.mxu0 0
          %1431 = vmatprep.subr.bf16.mxu0 0
          %1432 = vmatpush1.bf16.msra.mxu0 0
          %1433 = vmatprep.subr.bf16.mxu0 0
          %1434 = vmatpush1.bf16.msra.mxu0 0
          %1435 = vmatprep.subr.bf16.mxu0 0
          %1436 = vmatpush1.bf16.msra.mxu0 0
          %1437 = vmatprep.subr.bf16.mxu0 0
          %1438 = vmatpush1.bf16.msra.mxu0 0
          %1439 = vmatprep.mubr.bf16.mxu0 0
          %1440 = vmatmul.mubr.bf16.gmra.mrb[0].mxu0 %v1402
          %v1441 = vpop.f32.mrb[0].mxu0
          %v1442 = vadd.f32 0.0, %v1441
          %v1443 = vpop.f32.mrb[0].mxu0
          %v1444 = vpop.f32.mrb[0].mxu0
          %v1445 = vadd.f32 0.0, %v1444
          %v1446 = vpop.f32.mrb[0].mxu0
          %1447 = vmatprep.mubr.bf16.mxu0 0
          %1448 = vmatmul.mubr.bf16.gmra.mrb[0].mxu0 %v1405
          %v1449 = vpop.f32.mrb[0].mxu0
          %v1450 = vadd.f32 0.0, %v1449
          %v1451 = vpop.f32.mrb[0].mxu0
          %v1452 = vpop.f32.mrb[0].mxu0
          %v1453 = vadd.f32 0.0, %v1452
          %v1454 = vpop.f32.mrb[0].mxu0
          %1455 = vdwg.mxu0
          %v1460 = vunpack.c.l.b16 %v659
          %v1461 = vunpack.c.l.b16 %v660
          %v1462 = vunpack.c.l.b16 %v661
          %v1463 = vunpack.c.l.b16 %v662
          %v1464 = vpack.c.b16 %v1461, %v1460
          %v1465 = vpack.c.b16 %v1463, %v1462
          %v1469 = vsel %vm691, %v1383, 0
          %v1472 = vsel %vm691, %v1384, 0
          %1474 = vmatprep.subr.bf16.mxu0 0
          %1475 = vmatpush1.bf16.msra.mxu0 %v1464
          %1476 = vmatprep.subr.bf16.mxu0 0
          %1477 = vmatpush1.bf16.msra.mxu0 %v1465
          %1478 = vmatprep.subr.bf16.mxu0 0
          %1479 = vmatpush1.bf16.msra.mxu0 0
          %1480 = vmatprep.subr.bf16.mxu0 0
          %1481 = vmatpush1.bf16.msra.mxu0 0
          %1482 = vmatprep.subr.bf16.mxu0 0
          %1483 = vmatpush1.bf16.msra.mxu0 0
          %1484 = vmatprep.subr.bf16.mxu0 0
          %1485 = vmatpush1.bf16.msra.mxu0 0
          %1486 = vmatprep.subr.bf16.mxu0 0
          %1487 = vmatpush1.bf16.msra.mxu0 0
          %1488 = vmatprep.subr.bf16.mxu0 0
          %1489 = vmatpush1.bf16.msra.mxu0 0
          %1490 = vmatprep.subr.bf16.mxu0 0
          %1491 = vmatpush1.bf16.msra.mxu0 0
          %1492 = vmatprep.subr.bf16.mxu0 0
          %1493 = vmatpush1.bf16.msra.mxu0 0
          %1494 = vmatprep.subr.bf16.mxu0 0
          %1495 = vmatpush1.bf16.msra.mxu0 0
          %1496 = vmatprep.subr.bf16.mxu0 0
          %1497 = vmatpush1.bf16.msra.mxu0 0
          %1498 = vmatprep.subr.bf16.mxu0 0
          %1499 = vmatpush1.bf16.msra.mxu0 0
          %1500 = vmatprep.subr.bf16.mxu0 0
          %1501 = vmatpush1.bf16.msra.mxu0 0
          %1502 = vmatprep.subr.bf16.mxu0 0
          %1503 = vmatpush1.bf16.msra.mxu0 0
          %1504 = vmatprep.subr.bf16.mxu0 0
          %1505 = vmatpush1.bf16.msra.mxu0 0
          %1506 = vmatprep.mubr.bf16.mxu0 0
          %1507 = vmatmul.mubr.bf16.gmra.mrb[0].mxu0 %v1469
          %v1508 = vpop.f32.mrb[0].mxu0
          %v1509 = vadd.f32 0.0, %v1508
          %v1510 = vpop.f32.mrb[0].mxu0
          %v1511 = vpop.f32.mrb[0].mxu0
          %v1512 = vadd.f32 0.0, %v1511
          %v1513 = vpop.f32.mrb[0].mxu0
          %1514 = vmatprep.mubr.bf16.mxu0 0
          %1515 = vmatmul.mubr.bf16.gmra.mrb[0].mxu0 %v1472
          %v1516 = vpop.f32.mrb[0].mxu0
          %v1517 = vadd.f32 0.0, %v1516
          %v1518 = vpop.f32.mrb[0].mxu0
          %v1519 = vpop.f32.mrb[0].mxu0
          %v1520 = vadd.f32 0.0, %v1519
          %v1521 = vpop.f32.mrb[0].mxu0
          %1522 = vdwg.mxu0
          %v1527 = vunpack.c.l.b16 %v663
          %v1528 = vunpack.c.l.b16 %v664
          %v1529 = vunpack.c.l.b16 %v665
          %v1530 = vunpack.c.l.b16 %v666
          %v1531 = vpack.c.b16 %v1528, %v1527
          %v1532 = vpack.c.b16 %v1530, %v1529
          %v1536 = vsel %vm691, %v1385, 0
          %v1539 = vsel %vm691, %v1386, 0
          %1541 = vmatprep.subr.bf16.mxu0 0
          %1542 = vmatpush1.bf16.msra.mxu0 %v1531
          %1543 = vmatprep.subr.bf16.mxu0 0
          %1544 = vmatpush1.bf16.msra.mxu0 %v1532
          %1545 = vmatprep.subr.bf16.mxu0 0
          %1546 = vmatpush1.bf16.msra.mxu0 0
          %1547 = vmatprep.subr.bf16.mxu0 0
          %1548 = vmatpush1.bf16.msra.mxu0 0
          %1549 = vmatprep.subr.bf16.mxu0 0
          %1550 = vmatpush1.bf16.msra.mxu0 0
          %1551 = vmatprep.subr.bf16.mxu0 0
          %1552 = vmatpush1.bf16.msra.mxu0 0
          %1553 = vmatprep.subr.bf16.mxu0 0
          %1554 = vmatpush1.bf16.msra.mxu0 0
          %1555 = vmatprep.subr.bf16.mxu0 0
          %1556 = vmatpush1.bf16.msra.mxu0 0
          %1557 = vmatprep.subr.bf16.mxu0 0
          %1558 = vmatpush1.bf16.msra.mxu0 0
          %1559 = vmatprep.subr.bf16.mxu0 0
          %1560 = vmatpush1.bf16.msra.mxu0 0
          %1561 = vmatprep.subr.bf16.mxu0 0
          %1562 = vmatpush1.bf16.msra.mxu0 0
          %1563 = vmatprep.subr.bf16.mxu0 0
          %1564 = vmatpush1.bf16.msra.mxu0 0
          %1565 = vmatprep.subr.bf16.mxu0 0
          %1566 = vmatpush1.bf16.msra.mxu0 0
          %1567 = vmatprep.subr.bf16.mxu0 0
          %1568 = vmatpush1.bf16.msra.mxu0 0
          %1569 = vmatprep.subr.bf16.mxu0 0
          %1570 = vmatpush1.bf16.msra.mxu0 0
          %1571 = vmatprep.subr.bf16.mxu0 0
          %1572 = vmatpush1.bf16.msra.mxu0 0
          %1573 = vmatprep.mubr.bf16.mxu0 0
          %1574 = vmatmul.mubr.bf16.gmra.mrb[0].mxu0 %v1536
          %v1575 = vpop.f32.mrb[0].mxu0
          %v1576 = vadd.f32 0.0, %v1575
          %v1577 = vpop.f32.mrb[0].mxu0
          %v1578 = vpop.f32.mrb[0].mxu0
          %v1579 = vadd.f32 0.0, %v1578
          %v1580 = vpop.f32.mrb[0].mxu0
          %1581 = vmatprep.mubr.bf16.mxu0 0
          %1582 = vmatmul.mubr.bf16.gmra.mrb[0].mxu0 %v1539
          %v1583 = vpop.f32.mrb[0].mxu0
          %v1584 = vadd.f32 0.0, %v1583
          %v1585 = vpop.f32.mrb[0].mxu0
          %v1586 = vpop.f32.mrb[0].mxu0
          %v1587 = vadd.f32 0.0, %v1586
          %v1588 = vpop.f32.mrb[0].mxu0
          %1589 = vdwg.mxu0
          %v1594 = vunpack.c.l.b16 %v667
          %v1595 = vunpack.c.l.b16 %v668
          %v1596 = vunpack.c.l.b16 %v669
          %v1597 = vunpack.c.l.b16 %v670
          %v1598 = vpack.c.b16 %v1595, %v1594
          %v1599 = vpack.c.b16 %v1597, %v1596
          %v1603 = vsel %vm691, %v1387, 0
          %v1606 = vsel %vm691, %v1388, 0
          %1608 = vmatprep.subr.bf16.mxu0 0
          %1609 = vmatpush1.bf16.msra.mxu0 %v1598
          %1610 = vmatprep.subr.bf16.mxu0 0
          %1611 = vmatpush1.bf16.msra.mxu0 %v1599
          %1612 = vmatprep.subr.bf16.mxu0 0
          %1613 = vmatpush1.bf16.msra.mxu0 0
          %1614 = vmatprep.subr.bf16.mxu0 0
          %1615 = vmatpush1.bf16.msra.mxu0 0
          %1616 = vmatprep.subr.bf16.mxu0 0
          %1617 = vmatpush1.bf16.msra.mxu0 0
          %1618 = vmatprep.subr.bf16.mxu0 0
          %1619 = vmatpush1.bf16.msra.mxu0 0
          %1620 = vmatprep.subr.bf16.mxu0 0
          %1621 = vmatpush1.bf16.msra.mxu0 0
          %1622 = vmatprep.subr.bf16.mxu0 0
          %1623 = vmatpush1.bf16.msra.mxu0 0
          %1624 = vmatprep.subr.bf16.mxu0 0
          %1625 = vmatpush1.bf16.msra.mxu0 0
          %1626 = vmatprep.subr.bf16.mxu0 0
          %1627 = vmatpush1.bf16.msra.mxu0 0
          %1628 = vmatprep.subr.bf16.mxu0 0
          %1629 = vmatpush1.bf16.msra.mxu0 0
          %1630 = vmatprep.subr.bf16.mxu0 0
          %1631 = vmatpush1.bf16.msra.mxu0 0
          %1632 = vmatprep.subr.bf16.mxu0 0
          %1633 = vmatpush1.bf16.msra.mxu0 0
          %1634 = vmatprep.subr.bf16.mxu0 0
          %1635 = vmatpush1.bf16.msra.mxu0 0
          %1636 = vmatprep.subr.bf16.mxu0 0
          %1637 = vmatpush1.bf16.msra.mxu0 0
          %1638 = vmatprep.subr.bf16.mxu0 0
          %1639 = vmatpush1.bf16.msra.mxu0 0
          %1640 = vmatprep.mubr.bf16.mxu0 0
          %1641 = vmatmul.mubr.bf16.gmra.mrb[0].mxu0 %v1603
          %v1642 = vpop.f32.mrb[0].mxu0
          %v1643 = vadd.f32 0.0, %v1642
          %v1644 = vpop.f32.mrb[0].mxu0
          %v1645 = vpop.f32.mrb[0].mxu0
          %v1646 = vadd.f32 0.0, %v1645
          %v1647 = vpop.f32.mrb[0].mxu0
          %1648 = vmatprep.mubr.bf16.mxu0 0
          %1649 = vmatmul.mubr.bf16.gmra.mrb[0].mxu0 %v1606
          %v1650 = vpop.f32.mrb[0].mxu0
          %v1651 = vadd.f32 0.0, %v1650
          %v1652 = vpop.f32.mrb[0].mxu0
          %v1653 = vpop.f32.mrb[0].mxu0
          %v1654 = vadd.f32 0.0, %v1653
          %v1655 = vpop.f32.mrb[0].mxu0
          %1656 = vdwg.mxu0
          %v1657 = vld [vmem:[#allocation4] sm:$0xff]
          %v1658 = vld [vmem:[#allocation4 + $0x8] sm:$0xff]
          %v1659 = vld [vmem:[#allocation4 + $0x10] sm:$0xff]
          %v1660 = vld [vmem:[#allocation4 + $0x18] sm:$0xff]
          %v1661 = vld [vmem:[#allocation4 + $0x20] sm:$0xff]
          %v1662 = vld [vmem:[#allocation4 + $0x28] sm:$0xff]
          %v1663 = vld [vmem:[#allocation4 + $0x30] sm:$0xff]
          %v1664 = vld [vmem:[#allocation4 + $0x38] sm:$0xff]
          %v1665 = vld [vmem:[#allocation4 + $0x40] sm:$0xff]
          %v1666 = vld [vmem:[#allocation4 + $0x48] sm:$0xff]
          %v1667 = vld [vmem:[#allocation4 + $0x50] sm:$0xff]
          %v1668 = vld [vmem:[#allocation4 + $0x58] sm:$0xff]
          %v1669 = vld [vmem:[#allocation4 + $0x60] sm:$0xff]
          %v1670 = vld [vmem:[#allocation4 + $0x68] sm:$0xff]
          %v1671 = vld [vmem:[#allocation4 + $0x70] sm:$0xff]
          %v1672 = vld [vmem:[#allocation4 + $0x78] sm:$0xff]
          %1674 = vset.pattern.permute.xlu0 0
          %1675 = vperm.xlu0 %1674, %v1109
          %v1676 = vpop.permute.xlu0 %1675
          %1679 = vset.pattern.permute.xlu0 0
          %1680 = vperm.xlu0 %1679, %v1111
          %v1681 = vpop.permute.xlu0 %1680
          %1684 = vset.pattern.permute.xlu0 0
          %1685 = vperm.xlu0 %1684, %v1113
          %v1686 = vpop.permute.xlu0 %1685
          %1689 = vset.pattern.permute.xlu0 0
          %1690 = vperm.xlu0 %1689, %v1115
          %v1691 = vpop.permute.xlu0 %1690
          %1694 = vset.pattern.permute.xlu0 0
          %1695 = vperm.xlu0 %1694, %v1117
          %v1696 = vpop.permute.xlu0 %1695
          %1699 = vset.pattern.permute.xlu0 0
          %1700 = vperm.xlu0 %1699, %v1119
          %v1701 = vpop.permute.xlu0 %1700
          %1704 = vset.pattern.permute.xlu0 0
          %1705 = vperm.xlu0 %1704, %v1121
          %v1706 = vpop.permute.xlu0 %1705
          %1709 = vset.pattern.permute.xlu0 0
          %1710 = vperm.xlu0 %1709, %v1123
          %v1711 = vpop.permute.xlu0 %1710
          %1714 = vset.pattern.permute.xlu0 0
          %1715 = vperm.xlu0 %1714, %v1125
          %v1716 = vpop.permute.xlu0 %1715
          %1719 = vset.pattern.permute.xlu0 0
          %1720 = vperm.xlu0 %1719, %v1127
          %v1721 = vpop.permute.xlu0 %1720
          %1724 = vset.pattern.permute.xlu0 0
          %1725 = vperm.xlu0 %1724, %v1129
          %v1726 = vpop.permute.xlu0 %1725
          %1729 = vset.pattern.permute.xlu0 0
          %1730 = vperm.xlu0 %1729, %v1131
          %v1731 = vpop.permute.xlu0 %1730
          %1734 = vset.pattern.permute.xlu0 0
          %1735 = vperm.xlu0 %1734, %v1133
          %v1736 = vpop.permute.xlu0 %1735
          %1739 = vset.pattern.permute.xlu0 0
          %1740 = vperm.xlu0 %1739, %v1135
          %v1741 = vpop.permute.xlu0 %1740
          %1744 = vset.pattern.permute.xlu0 0
          %1745 = vperm.xlu0 %1744, %v1137
          %v1746 = vpop.permute.xlu0 %1745
          %1749 = vset.pattern.permute.xlu0 0
          %1750 = vperm.xlu0 %1749, %v1139
          %v1751 = vpop.permute.xlu0 %1750
          %v1753 = vmul.f32 %v1676, %v1657
          %v1754 = vmul.f32 %v1681, %v1658
          %v1755 = vmul.f32 %v1686, %v1659
          %v1756 = vmul.f32 %v1691, %v1660
          %v1757 = vmul.f32 %v1696, %v1661
          %v1758 = vmul.f32 %v1701, %v1662
          %v1759 = vmul.f32 %v1706, %v1663
          %v1760 = vmul.f32 %v1711, %v1664
          %v1761 = vmul.f32 %v1716, %v1665
          %v1762 = vmul.f32 %v1721, %v1666
          %v1763 = vmul.f32 %v1726, %v1667
          %v1764 = vmul.f32 %v1731, %v1668
          %v1765 = vmul.f32 %v1736, %v1669
          %v1766 = vmul.f32 %v1741, %v1670
          %v1767 = vmul.f32 %v1746, %v1671
          %v1768 = vmul.f32 %v1751, %v1672
          %v1769 = vadd.f32 %v1753, %v1442
          %v1770 = vadd.f32 %v1754, %v1445
          %v1771 = vadd.f32 %v1755, %v1450
          %v1772 = vadd.f32 %v1756, %v1453
          %v1773 = vadd.f32 %v1757, %v1509
          %v1774 = vadd.f32 %v1758, %v1512
          %v1775 = vadd.f32 %v1759, %v1517
          %v1776 = vadd.f32 %v1760, %v1520
          %v1777 = vadd.f32 %v1761, %v1576
          %v1778 = vadd.f32 %v1762, %v1579
          %v1779 = vadd.f32 %v1763, %v1584
          %v1780 = vadd.f32 %v1764, %v1587
          %v1781 = vadd.f32 %v1765, %v1643
          %v1782 = vadd.f32 %v1766, %v1646
          %v1783 = vadd.f32 %v1767, %v1651
          %v1784 = vadd.f32 %v1768, %v1654
          %1785 = vst.msk [vmem:[#allocation4] sm:$0xff] %vm691, %v1769
          %1786 = vst.msk [vmem:[#allocation4 + $0x8] sm:$0xff] %vm691, %v1770
          %1787 = vst.msk [vmem:[#allocation4 + $0x10] sm:$0xff] %vm691, %v1771
          %1788 = vst.msk [vmem:[#allocation4 + $0x18] sm:$0xff] %vm691, %v1772
          %1789 = vst.msk [vmem:[#allocation4 + $0x20] sm:$0xff] %vm691, %v1773
          %1790 = vst.msk [vmem:[#allocation4 + $0x28] sm:$0xff] %vm691, %v1774
          %1791 = vst.msk [vmem:[#allocation4 + $0x30] sm:$0xff] %vm691, %v1775
          %1792 = vst.msk [vmem:[#allocation4 + $0x38] sm:$0xff] %vm691, %v1776
          %1793 = vst.msk [vmem:[#allocation4 + $0x40] sm:$0xff] %vm691, %v1777
          %1794 = vst.msk [vmem:[#allocation4 + $0x48] sm:$0xff] %vm691, %v1778
          %1795 = vst.msk [vmem:[#allocation4 + $0x50] sm:$0xff] %vm691, %v1779
          %1796 = vst.msk [vmem:[#allocation4 + $0x58] sm:$0xff] %vm691, %v1780
          %1797 = vst.msk [vmem:[#allocation4 + $0x60] sm:$0xff] %vm691, %v1781
          %1798 = vst.msk [vmem:[#allocation4 + $0x68] sm:$0xff] %vm691, %v1782
          %1799 = vst.msk [vmem:[#allocation4 + $0x70] sm:$0xff] %vm691, %v1783
          %1800 = vst.msk [vmem:[#allocation4 + $0x78] sm:$0xff] %vm691, %v1784
          %1801 = vst.msk [vmem:[#allocation2] sm:$0xff] %vm1364, %v1076
          %1802 = vst.msk [vmem:[#allocation2 + $0x8] sm:$0xff] %vm1364, %v1077
          %1803 = vst.msk [vmem:[#allocation2 + $0x10] sm:$0xff] %vm1364, %v1078
          %1804 = vst.msk [vmem:[#allocation2 + $0x18] sm:$0xff] %vm1364, %v1079
          %1805 = vst.msk [vmem:[#allocation2 + $0x20] sm:$0xff] %vm1364, %v1080
          %1806 = vst.msk [vmem:[#allocation2 + $0x28] sm:$0xff] %vm1364, %v1081
          %1807 = vst.msk [vmem:[#allocation2 + $0x30] sm:$0xff] %vm1364, %v1082
          %1808 = vst.msk [vmem:[#allocation2 + $0x38] sm:$0xff] %vm1364, %v1083
          %1809 = vst.msk [vmem:[#allocation2 + $0x40] sm:$0xff] %vm1364, %v1084
          %1810 = vst.msk [vmem:[#allocation2 + $0x48] sm:$0xff] %vm1364, %v1085
          %1811 = vst.msk [vmem:[#allocation2 + $0x50] sm:$0xff] %vm1364, %v1086
          %1812 = vst.msk [vmem:[#allocation2 + $0x58] sm:$0xff] %vm1364, %v1087
          %1813 = vst.msk [vmem:[#allocation2 + $0x60] sm:$0xff] %vm1364, %v1088
          %1814 = vst.msk [vmem:[#allocation2 + $0x68] sm:$0xff] %vm1364, %v1089
          %1815 = vst.msk [vmem:[#allocation2 + $0x70] sm:$0xff] %vm1364, %v1090
          %1816 = vst.msk [vmem:[#allocation2 + $0x78] sm:$0xff] %vm1364, %v1091
        $region163: #{gpt_forward.8} parent=142 // pred_fallthru
          _
        %p1817 = scmp.eq.s32.totalorder %s21, %s20
        // Predicated region
        $region164: #{gpt_forward.8} parent=142 // pred_check
          %p1818 = pneg %p1817
        $region165: #{gpt_forward.8} parent=142 // pred_check_branch
          %1820 = sbr.rel (%p1818) target = $region167
        $region166: #{gpt_forward.8} parent=142 // pred_region
          %v1821 = vld [vmem:[%s514] sm:$0xf]
          %v1822 = vld [vmem:[%s514 + $0x4] sm:$0xf]
          %v1823 = vld [vmem:[%s514 + $0x8] sm:$0xf]
          %v1824 = vld [vmem:[%s514 + $0xc] sm:$0xf]
          %v1825 = vld [vmem:[%s514 + $0x10] sm:$0xf]
          %v1826 = vld [vmem:[%s514 + $0x14] sm:$0xf]
          %v1827 = vld [vmem:[%s514 + $0x18] sm:$0xf]
          %v1828 = vld [vmem:[%s514 + $0x1c] sm:$0xf]
          %v1829 = vld [vmem:[%s514 + $0x20] sm:$0xf]
          %v1830 = vld [vmem:[%s514 + $0x24] sm:$0xf]
          %v1831 = vld [vmem:[%s514 + $0x28] sm:$0xf]
          %v1832 = vld [vmem:[%s514 + $0x2c] sm:$0xf]
          %v1833 = vld [vmem:[%s514 + $0x30] sm:$0xf]
          %v1834 = vld [vmem:[%s514 + $0x34] sm:$0xf]
          %v1835 = vld [vmem:[%s514 + $0x38] sm:$0xf]
          %v1836 = vld [vmem:[%s514 + $0x3c] sm:$0xf]
          %v1837 = vld [vmem:[%s521] sm:$0xf]
          %v1838 = vld [vmem:[%s521 + $0x4] sm:$0xf]
          %v1839 = vld [vmem:[%s521 + $0x8] sm:$0xf]
          %v1840 = vld [vmem:[%s521 + $0xc] sm:$0xf]
          %v1841 = vld [vmem:[%s521 + $0x10] sm:$0xf]
          %v1842 = vld [vmem:[%s521 + $0x14] sm:$0xf]
          %v1843 = vld [vmem:[%s521 + $0x18] sm:$0xf]
          %v1844 = vld [vmem:[%s521 + $0x1c] sm:$0xf]
          %v1845 = vld [vmem:[%s521 + $0x20] sm:$0xf]
          %v1846 = vld [vmem:[%s521 + $0x24] sm:$0xf]
          %v1847 = vld [vmem:[%s521 + $0x28] sm:$0xf]
          %v1848 = vld [vmem:[%s521 + $0x2c] sm:$0xf]
          %v1849 = vld [vmem:[%s521 + $0x30] sm:$0xf]
          %v1850 = vld [vmem:[%s521 + $0x34] sm:$0xf]
          %v1851 = vld [vmem:[%s521 + $0x38] sm:$0xf]
          %v1852 = vld [vmem:[%s521 + $0x3c] sm:$0xf]
          %v1853 = vld [vmem:[%s528] sm:$0xf]
          %v1854 = vld [vmem:[%s528 + $0x4] sm:$0xf]
          %v1855 = vld [vmem:[%s528 + $0x8] sm:$0xf]
          %v1856 = vld [vmem:[%s528 + $0xc] sm:$0xf]
          %v1857 = vld [vmem:[%s528 + $0x10] sm:$0xf]
          %v1858 = vld [vmem:[%s528 + $0x14] sm:$0xf]
          %v1859 = vld [vmem:[%s528 + $0x18] sm:$0xf]
          %v1860 = vld [vmem:[%s528 + $0x1c] sm:$0xf]
          %v1861 = vld [vmem:[%s528 + $0x20] sm:$0xf]
          %v1862 = vld [vmem:[%s528 + $0x24] sm:$0xf]
          %v1863 = vld [vmem:[%s528 + $0x28] sm:$0xf]
          %v1864 = vld [vmem:[%s528 + $0x2c] sm:$0xf]
          %v1865 = vld [vmem:[%s528 + $0x30] sm:$0xf]
          %v1866 = vld [vmem:[%s528 + $0x34] sm:$0xf]
          %v1867 = vld [vmem:[%s528 + $0x38] sm:$0xf]
          %v1868 = vld [vmem:[%s528 + $0x3c] sm:$0xf]
          %v1873 = vunpack.c.l.b16 %v1821
          %v1874 = vunpack.c.l.b16 %v1822
          %v1875 = vunpack.c.l.b16 %v1823
          %v1876 = vunpack.c.l.b16 %v1824
          %v1877 = vpack.c.b16 %v1874, %v1873
          %v1878 = vpack.c.b16 %v1876, %v1875
          %v1883 = vunpack.c.l.b16 %v1837
          %v1884 = vunpack.c.l.b16 %v1838
          %v1885 = vunpack.c.l.b16 %v1839
          %v1886 = vunpack.c.l.b16 %v1840
          %v1887 = vpack.c.b16 %v1884, %v1883
          %v1888 = vpack.c.b16 %v1886, %v1885
          %vm1889 = vcmask 261120
          %v1891 = vsel %vm1889, %v1877, 0
          %v1894 = vsel %vm1889, %v1878, 0
          %v1897 = vsel %vm1889, %v1887, 0
          %v1900 = vsel %vm1889, %v1888, 0
          %1902 = vmatprep.subr.bf16.mxu0 0
          %1903 = vmatpush1.bf16.xpose.msra.mxu0 %v1897
          %1904 = vmatprep.subr.bf16.mxu0 0
          %1905 = vmatpush1.bf16.xpose.msra.mxu0 %v1900
          %1906 = vmatprep.subr.bf16.mxu0 0
          %1907 = vmatpush1.bf16.xpose.msra.mxu0 0
          %1908 = vmatprep.subr.bf16.mxu0 0
          %1909 = vmatpush1.bf16.xpose.msra.mxu0 0
          %1910 = vmatprep.subr.bf16.mxu0 0
          %1911 = vmatpush1.bf16.xpose.msra.mxu0 0
          %1912 = vmatprep.subr.bf16.mxu0 0
          %1913 = vmatpush1.bf16.xpose.msra.mxu0 0
          %1914 = vmatprep.subr.bf16.mxu0 0
          %1915 = vmatpush1.bf16.xpose.msra.mxu0 0
          %1916 = vmatprep.subr.bf16.mxu0 0
          %1917 = vmatpush1.bf16.xpose.msra.mxu0 0
          %1918 = vmatprep.subr.bf16.mxu0 0
          %1919 = vmatpush1.bf16.xpose.msra.mxu0 0
          %1920 = vmatprep.subr.bf16.mxu0 0
          %1921 = vmatpush1.bf16.xpose.msra.mxu0 0
          %1922 = vmatprep.subr.bf16.mxu0 0
          %1923 = vmatpush1.bf16.xpose.msra.mxu0 0
          %1924 = vmatprep.subr.bf16.mxu0 0
          %1925 = vmatpush1.bf16.xpose.msra.mxu0 0
          %1926 = vmatprep.subr.bf16.mxu0 0
          %1927 = vmatpush1.bf16.xpose.msra.mxu0 0
          %1928 = vmatprep.subr.bf16.mxu0 0
          %1929 = vmatpush1.bf16.xpose.msra.mxu0 0
          %1930 = vmatprep.subr.bf16.mxu0 0
          %1931 = vmatpush1.bf16.xpose.msra.mxu0 0
          %1932 = vmatprep.subr.bf16.mxu0 0
          %1933 = vmatpush1.bf16.xpose.msra.mxu0 0
          %1934 = vmatprep.mubr.bf16.mxu0 0
          %1935 = vmatmul.mubr.bf16.gmra.mrb[0].mxu0 %v1891
          %v1936 = vpop.f32.mrb[0].mxu0
          %v1937 = vadd.f32 0.0, %v1936
          %v1938 = vpop.f32.mrb[0].mxu0
          %v1939 = vpop.f32.mrb[0].mxu0
          %v1940 = vadd.f32 0.0, %v1939
          %v1941 = vpop.f32.mrb[0].mxu0
          %1942 = vmatprep.mubr.bf16.mxu0 0
          %1943 = vmatmul.mubr.bf16.gmra.mrb[0].mxu0 %v1894
          %v1944 = vpop.f32.mrb[0].mxu0
          %v1945 = vadd.f32 0.0, %v1944
          %v1946 = vpop.f32.mrb[0].mxu0
          %v1947 = vpop.f32.mrb[0].mxu0
          %v1948 = vadd.f32 0.0, %v1947
          %v1949 = vpop.f32.mrb[0].mxu0
          %1950 = vdwg.mxu0
          %v1955 = vunpack.c.l.b16 %v1825
          %v1956 = vunpack.c.l.b16 %v1826
          %v1957 = vunpack.c.l.b16 %v1827
          %v1958 = vunpack.c.l.b16 %v1828
          %v1959 = vpack.c.b16 %v1956, %v1955
          %v1960 = vpack.c.b16 %v1958, %v1957
          %v1965 = vunpack.c.l.b16 %v1841
          %v1966 = vunpack.c.l.b16 %v1842
          %v1967 = vunpack.c.l.b16 %v1843
          %v1968 = vunpack.c.l.b16 %v1844
          %v1969 = vpack.c.b16 %v1966, %v1965
          %v1970 = vpack.c.b16 %v1968, %v1967
          %v1972 = vsel %vm1889, %v1959, 0
          %v1975 = vsel %vm1889, %v1960, 0
          %v1978 = vsel %vm1889, %v1969, 0
          %v1981 = vsel %vm1889, %v1970, 0
          %1983 = vmatprep.subr.bf16.mxu0 0
          %1984 = vmatpush1.bf16.xpose.msra.mxu0 %v1978
          %1985 = vmatprep.subr.bf16.mxu0 0
          %1986 = vmatpush1.bf16.xpose.msra.mxu0 %v1981
          %1987 = vmatprep.subr.bf16.mxu0 0
          %1988 = vmatpush1.bf16.xpose.msra.mxu0 0
          %1989 = vmatprep.subr.bf16.mxu0 0
          %1990 = vmatpush1.bf16.xpose.msra.mxu0 0
          %1991 = vmatprep.subr.bf16.mxu0 0
          %1992 = vmatpush1.bf16.xpose.msra.mxu0 0
          %1993 = vmatprep.subr.bf16.mxu0 0
          %1994 = vmatpush1.bf16.xpose.msra.mxu0 0
          %1995 = vmatprep.subr.bf16.mxu0 0
          %1996 = vmatpush1.bf16.xpose.msra.mxu0 0
          %1997 = vmatprep.subr.bf16.mxu0 0
          %1998 = vmatpush1.bf16.xpose.msra.mxu0 0
          %1999 = vmatprep.subr.bf16.mxu0 0
          %2000 = vmatpush1.bf16.xpose.msra.mxu0 0
          %2001 = vmatprep.subr.bf16.mxu0 0
          %2002 = vmatpush1.bf16.xpose.msra.mxu0 0
          %2003 = vmatprep.subr.bf16.mxu0 0
          %2004 = vmatpush1.bf16.xpose.msra.mxu0 0
          %2005 = vmatprep.subr.bf16.mxu0 0
          %2006 = vmatpush1.bf16.xpose.msra.mxu0 0
          %2007 = vmatprep.subr.bf16.mxu0 0
          %2008 = vmatpush1.bf16.xpose.msra.mxu0 0
          %2009 = vmatprep.subr.bf16.mxu0 0
          %2010 = vmatpush1.bf16.xpose.msra.mxu0 0
          %2011 = vmatprep.subr.bf16.mxu0 0
          %2012 = vmatpush1.bf16.xpose.msra.mxu0 0
          %2013 = vmatprep.subr.bf16.mxu0 0
          %2014 = vmatpush1.bf16.xpose.msra.mxu0 0
          %2015 = vmatprep.mubr.bf16.mxu0 0
          %2016 = vmatmul.mubr.bf16.gmra.mrb[0].mxu0 %v1972
          %v2017 = vpop.f32.mrb[0].mxu0
          %v2018 = vadd.f32 0.0, %v2017
          %v2019 = vpop.f32.mrb[0].mxu0
          %v2020 = vpop.f32.mrb[0].mxu0
          %v2021 = vadd.f32 0.0, %v2020
          %v2022 = vpop.f32.mrb[0].mxu0
          %2023 = vmatprep.mubr.bf16.mxu0 0
          %2024 = vmatmul.mubr.bf16.gmra.mrb[0].mxu0 %v1975
          %v2025 = vpop.f32.mrb[0].mxu0
          %v2026 = vadd.f32 0.0, %v2025
          %v2027 = vpop.f32.mrb[0].mxu0
          %v2028 = vpop.f32.mrb[0].mxu0
          %v2029 = vadd.f32 0.0, %v2028
          %v2030 = vpop.f32.mrb[0].mxu0
          %2031 = vdwg.mxu0
          %v2036 = vunpack.c.l.b16 %v1829
          %v2037 = vunpack.c.l.b16 %v1830
          %v2038 = vunpack.c.l.b16 %v1831
          %v2039 = vunpack.c.l.b16 %v1832
          %v2040 = vpack.c.b16 %v2037, %v2036
          %v2041 = vpack.c.b16 %v2039, %v2038
          %v2046 = vunpack.c.l.b16 %v1845
          %v2047 = vunpack.c.l.b16 %v1846
          %v2048 = vunpack.c.l.b16 %v1847
          %v2049 = vunpack.c.l.b16 %v1848
          %v2050 = vpack.c.b16 %v2047, %v2046
          %v2051 = vpack.c.b16 %v2049, %v2048
          %v2053 = vsel %vm1889, %v2040, 0
          %v2056 = vsel %vm1889, %v2041, 0
          %v2059 = vsel %vm1889, %v2050, 0
          %v2062 = vsel %vm1889, %v2051, 0
          %2064 = vmatprep.subr.bf16.mxu0 0
          %2065 = vmatpush1.bf16.xpose.msra.mxu0 %v2059
          %2066 = vmatprep.subr.bf16.mxu0 0
          %2067 = vmatpush1.bf16.xpose.msra.mxu0 %v2062
          %2068 = vmatprep.subr.bf16.mxu0 0
          %2069 = vmatpush1.bf16.xpose.msra.mxu0 0
          %2070 = vmatprep.subr.bf16.mxu0 0
          %2071 = vmatpush1.bf16.xpose.msra.mxu0 0
          %2072 = vmatprep.subr.bf16.mxu0 0
          %2073 = vmatpush1.bf16.xpose.msra.mxu0 0
          %2074 = vmatprep.subr.bf16.mxu0 0
          %2075 = vmatpush1.bf16.xpose.msra.mxu0 0
          %2076 = vmatprep.subr.bf16.mxu0 0
          %2077 = vmatpush1.bf16.xpose.msra.mxu0 0
          %2078 = vmatprep.subr.bf16.mxu0 0
          %2079 = vmatpush1.bf16.xpose.msra.mxu0 0
          %2080 = vmatprep.subr.bf16.mxu0 0
          %2081 = vmatpush1.bf16.xpose.msra.mxu0 0
          %2082 = vmatprep.subr.bf16.mxu0 0
          %2083 = vmatpush1.bf16.xpose.msra.mxu0 0
          %2084 = vmatprep.subr.bf16.mxu0 0
          %2085 = vmatpush1.bf16.xpose.msra.mxu0 0
          %2086 = vmatprep.subr.bf16.mxu0 0
          %2087 = vmatpush1.bf16.xpose.msra.mxu0 0
          %2088 = vmatprep.subr.bf16.mxu0 0
          %2089 = vmatpush1.bf16.xpose.msra.mxu0 0
          %2090 = vmatprep.subr.bf16.mxu0 0
          %2091 = vmatpush1.bf16.xpose.msra.mxu0 0
          %2092 = vmatprep.subr.bf16.mxu0 0
          %2093 = vmatpush1.bf16.xpose.msra.mxu0 0
          %2094 = vmatprep.subr.bf16.mxu0 0
          %2095 = vmatpush1.bf16.xpose.msra.mxu0 0
          %2096 = vmatprep.mubr.bf16.mxu0 0
          %2097 = vmatmul.mubr.bf16.gmra.mrb[0].mxu0 %v2053
          %v2098 = vpop.f32.mrb[0].mxu0
          %v2099 = vadd.f32 0.0, %v2098
          %v2100 = vpop.f32.mrb[0].mxu0
          %v2101 = vpop.f32.mrb[0].mxu0
          %v2102 = vadd.f32 0.0, %v2101
          %v2103 = vpop.f32.mrb[0].mxu0
          %2104 = vmatprep.mubr.bf16.mxu0 0
          %2105 = vmatmul.mubr.bf16.gmra.mrb[0].mxu0 %v2056
          %v2106 = vpop.f32.mrb[0].mxu0
          %v2107 = vadd.f32 0.0, %v2106
          %v2108 = vpop.f32.mrb[0].mxu0
          %v2109 = vpop.f32.mrb[0].mxu0
          %v2110 = vadd.f32 0.0, %v2109
          %v2111 = vpop.f32.mrb[0].mxu0
          %2112 = vdwg.mxu0
          %v2117 = vunpack.c.l.b16 %v1833
          %v2118 = vunpack.c.l.b16 %v1834
          %v2119 = vunpack.c.l.b16 %v1835
          %v2120 = vunpack.c.l.b16 %v1836
          %v2121 = vpack.c.b16 %v2118, %v2117
          %v2122 = vpack.c.b16 %v2120, %v2119
          %v2127 = vunpack.c.l.b16 %v1849
          %v2128 = vunpack.c.l.b16 %v1850
          %v2129 = vunpack.c.l.b16 %v1851
          %v2130 = vunpack.c.l.b16 %v1852
          %v2131 = vpack.c.b16 %v2128, %v2127
          %v2132 = vpack.c.b16 %v2130, %v2129
          %v2134 = vsel %vm1889, %v2121, 0
          %v2137 = vsel %vm1889, %v2122, 0
          %v2140 = vsel %vm1889, %v2131, 0
          %v2143 = vsel %vm1889, %v2132, 0
          %2145 = vmatprep.subr.bf16.mxu0 0
          %2146 = vmatpush1.bf16.xpose.msra.mxu0 %v2140
          %2147 = vmatprep.subr.bf16.mxu0 0
          %2148 = vmatpush1.bf16.xpose.msra.mxu0 %v2143
          %2149 = vmatprep.subr.bf16.mxu0 0
          %2150 = vmatpush1.bf16.xpose.msra.mxu0 0
          %2151 = vmatprep.subr.bf16.mxu0 0
          %2152 = vmatpush1.bf16.xpose.msra.mxu0 0
          %2153 = vmatprep.subr.bf16.mxu0 0
          %2154 = vmatpush1.bf16.xpose.msra.mxu0 0
          %2155 = vmatprep.subr.bf16.mxu0 0
          %2156 = vmatpush1.bf16.xpose.msra.mxu0 0
          %2157 = vmatprep.subr.bf16.mxu0 0
          %2158 = vmatpush1.bf16.xpose.msra.mxu0 0
          %2159 = vmatprep.subr.bf16.mxu0 0
          %2160 = vmatpush1.bf16.xpose.msra.mxu0 0
          %2161 = vmatprep.subr.bf16.mxu0 0
          %2162 = vmatpush1.bf16.xpose.msra.mxu0 0
          %2163 = vmatprep.subr.bf16.mxu0 0
          %2164 = vmatpush1.bf16.xpose.msra.mxu0 0
          %2165 = vmatprep.subr.bf16.mxu0 0
          %2166 = vmatpush1.bf16.xpose.msra.mxu0 0
          %2167 = vmatprep.subr.bf16.mxu0 0
          %2168 = vmatpush1.bf16.xpose.msra.mxu0 0
          %2169 = vmatprep.subr.bf16.mxu0 0
          %2170 = vmatpush1.bf16.xpose.msra.mxu0 0
          %2171 = vmatprep.subr.bf16.mxu0 0
          %2172 = vmatpush1.bf16.xpose.msra.mxu0 0
          %2173 = vmatprep.subr.bf16.mxu0 0
          %2174 = vmatpush1.bf16.xpose.msra.mxu0 0
          %2175 = vmatprep.subr.bf16.mxu0 0
          %2176 = vmatpush1.bf16.xpose.msra.mxu0 0
          %2177 = vmatprep.mubr.bf16.mxu0 0
          %2178 = vmatmul.mubr.bf16.gmra.mrb[0].mxu0 %v2134
          %v2179 = vpop.f32.mrb[0].mxu0
          %v2180 = vadd.f32 0.0, %v2179
          %v2181 = vpop.f32.mrb[0].mxu0
          %v2182 = vpop.f32.mrb[0].mxu0
          %v2183 = vadd.f32 0.0, %v2182
          %v2184 = vpop.f32.mrb[0].mxu0
          %2185 = vmatprep.mubr.bf16.mxu0 0
          %2186 = vmatmul.mubr.bf16.gmra.mrb[0].mxu0 %v2137
          %v2187 = vpop.f32.mrb[0].mxu0
          %v2188 = vadd.f32 0.0, %v2187
          %v2189 = vpop.f32.mrb[0].mxu0
          %v2190 = vpop.f32.mrb[0].mxu0
          %v2191 = vadd.f32 0.0, %v2190
          %v2192 = vpop.f32.mrb[0].mxu0
          %2193 = vdwg.mxu0
          %v2194 = vmul.f32 %v1937, 0.17677669
          %v2195 = vmul.f32 %v1940, 0.17677669
          %v2196 = vmul.f32 %v1945, 0.17677669
          %v2197 = vmul.f32 %v1948, 0.17677669
          %v2198 = vmul.f32 %v2018, 0.17677669
          %v2199 = vmul.f32 %v2021, 0.17677669
          %v2200 = vmul.f32 %v2026, 0.17677669
          %v2201 = vmul.f32 %v2029, 0.17677669
          %v2202 = vmul.f32 %v2099, 0.17677669
          %v2203 = vmul.f32 %v2102, 0.17677669
          %v2204 = vmul.f32 %v2107, 0.17677669
          %v2205 = vmul.f32 %v2110, 0.17677669
          %v2206 = vmul.f32 %v2180, 0.17677669
          %v2207 = vmul.f32 %v2183, 0.17677669
          %v2208 = vmul.f32 %v2188, 0.17677669
          %v2209 = vmul.f32 %v2191, 0.17677669
          %v2210 = vlaneseq
          %v2211 = vshrl.u32 %v2210, 7
          %v2212 = vadd.s32 %v2211, 8
          %v2213 = vadd.s32 %v2211, 16
          %v2214 = vadd.s32 %v2211, 24
          %v2215 = vlaneseq
          %v2216 = vand.u32 %v2215, 127
          %vm2217 = vcmp.le.s32.totalorder %v2216, %v2211
          %vm2218 = vcmp.le.s32.totalorder %v2216, %v2212
          %vm2219 = vcmp.le.s32.totalorder %v2216, %v2213
          %vm2220 = vcmp.le.s32.totalorder %v2216, %v2214
          %v2221 = vsel %vm2217, 1, 0
          %v2222 = vsel %vm2218, 1, 0
          %v2223 = vsel %vm2219, 1, 0
          %v2224 = vsel %vm2220, 1, 0
          %vm2225 = vcmp.eq.s32.totalorder %v2221, 1
          %vm2226 = vcmp.eq.s32.totalorder %v2222, 1
          %vm2227 = vcmp.eq.s32.totalorder %v2223, 1
          %vm2228 = vcmp.eq.s32.totalorder %v2224, 1
          %v2229 = vsel %vm2225, %v2194, -1e+30
          %v2230 = vsel %vm2226, %v2195, -1e+30
          %v2231 = vsel %vm2227, %v2196, -1e+30
          %v2232 = vsel %vm2228, %v2197, -1e+30
          %v2233 = vsel %vm2225, %v2198, -1e+30
          %v2234 = vsel %vm2226, %v2199, -1e+30
          %v2235 = vsel %vm2227, %v2200, -1e+30
          %v2236 = vsel %vm2228, %v2201, -1e+30
          %v2237 = vsel %vm2225, %v2202, -1e+30
          %v2238 = vsel %vm2226, %v2203, -1e+30
          %v2239 = vsel %vm2227, %v2204, -1e+30
          %v2240 = vsel %vm2228, %v2205, -1e+30
          %v2241 = vsel %vm2225, %v2206, -1e+30
          %v2242 = vsel %vm2226, %v2207, -1e+30
          %v2243 = vsel %vm2227, %v2208, -1e+30
          %v2244 = vsel %vm2228, %v2209, -1e+30
          %v2245 = vld [vmem:[#allocation2] sm:$0xff]
          %v2246 = vld [vmem:[#allocation2 + $0x8] sm:$0xff]
          %v2247 = vld [vmem:[#allocation2 + $0x10] sm:$0xff]
          %v2248 = vld [vmem:[#allocation2 + $0x18] sm:$0xff]
          %v2249 = vld [vmem:[#allocation2 + $0x20] sm:$0xff]
          %v2250 = vld [vmem:[#allocation2 + $0x28] sm:$0xff]
          %v2251 = vld [vmem:[#allocation2 + $0x30] sm:$0xff]
          %v2252 = vld [vmem:[#allocation2 + $0x38] sm:$0xff]
          %v2253 = vld [vmem:[#allocation2 + $0x40] sm:$0xff]
          %v2254 = vld [vmem:[#allocation2 + $0x48] sm:$0xff]
          %v2255 = vld [vmem:[#allocation2 + $0x50] sm:$0xff]
          %v2256 = vld [vmem:[#allocation2 + $0x58] sm:$0xff]
          %v2257 = vld [vmem:[#allocation2 + $0x60] sm:$0xff]
          %v2258 = vld [vmem:[#allocation2 + $0x68] sm:$0xff]
          %v2259 = vld [vmem:[#allocation2 + $0x70] sm:$0xff]
          %v2260 = vld [vmem:[#allocation2 + $0x78] sm:$0xff]
          %v2261 = vsel %vm1889, %v2229, -inf
          %2262 = vmax.xlane.f32.xlu0 %v2261
          %v2263 = vpop.xlane.xlu0 %2262
          %v2264 = vsel %vm1889, %v2230, -inf
          %2265 = vmax.xlane.f32.xlu0 %v2264
          %v2266 = vpop.xlane.xlu0 %2265
          %v2267 = vsel %vm1889, %v2231, -inf
          %2268 = vmax.xlane.f32.xlu0 %v2267
          %v2269 = vpop.xlane.xlu0 %2268
          %v2270 = vsel %vm1889, %v2232, -inf
          %2271 = vmax.xlane.f32.xlu0 %v2270
          %v2272 = vpop.xlane.xlu0 %2271
          %v2273 = vsel %vm1889, %v2233, -inf
          %2274 = vmax.xlane.f32.xlu0 %v2273
          %v2275 = vpop.xlane.xlu0 %2274
          %v2276 = vsel %vm1889, %v2234, -inf
          %2277 = vmax.xlane.f32.xlu0 %v2276
          %v2278 = vpop.xlane.xlu0 %2277
          %v2279 = vsel %vm1889, %v2235, -inf
          %2280 = vmax.xlane.f32.xlu0 %v2279
          %v2281 = vpop.xlane.xlu0 %2280
          %v2282 = vsel %vm1889, %v2236, -inf
          %2283 = vmax.xlane.f32.xlu0 %v2282
          %v2284 = vpop.xlane.xlu0 %2283
          %v2285 = vsel %vm1889, %v2237, -inf
          %2286 = vmax.xlane.f32.xlu0 %v2285
          %v2287 = vpop.xlane.xlu0 %2286
          %v2288 = vsel %vm1889, %v2238, -inf
          %2289 = vmax.xlane.f32.xlu0 %v2288
          %v2290 = vpop.xlane.xlu0 %2289
          %v2291 = vsel %vm1889, %v2239, -inf
          %2292 = vmax.xlane.f32.xlu0 %v2291
          %v2293 = vpop.xlane.xlu0 %2292
          %v2294 = vsel %vm1889, %v2240, -inf
          %2295 = vmax.xlane.f32.xlu0 %v2294
          %v2296 = vpop.xlane.xlu0 %2295
          %v2297 = vsel %vm1889, %v2241, -inf
          %2298 = vmax.xlane.f32.xlu0 %v2297
          %v2299 = vpop.xlane.xlu0 %2298
          %v2300 = vsel %vm1889, %v2242, -inf
          %2301 = vmax.xlane.f32.xlu0 %v2300
          %v2302 = vpop.xlane.xlu0 %2301
          %v2303 = vsel %vm1889, %v2243, -inf
          %2304 = vmax.xlane.f32.xlu0 %v2303
          %v2305 = vpop.xlane.xlu0 %2304
          %v2306 = vsel %vm1889, %v2244, -inf
          %2307 = vmax.xlane.f32.xlu0 %v2306
          %v2308 = vpop.xlane.xlu0 %2307
          %v2309 = vmax.f32 %v2245, %v2263
          %v2310 = vmax.f32 %v2246, %v2266
          %v2311 = vmax.f32 %v2247, %v2269
          %v2312 = vmax.f32 %v2248, %v2272
          %v2313 = vmax.f32 %v2249, %v2275
          %v2314 = vmax.f32 %v2250, %v2278
          %v2315 = vmax.f32 %v2251, %v2281
          %v2316 = vmax.f32 %v2252, %v2284
          %v2317 = vmax.f32 %v2253, %v2287
          %v2318 = vmax.f32 %v2254, %v2290
          %v2319 = vmax.f32 %v2255, %v2293
          %v2320 = vmax.f32 %v2256, %v2296
          %v2321 = vmax.f32 %v2257, %v2299
          %v2322 = vmax.f32 %v2258, %v2302
          %v2323 = vmax.f32 %v2259, %v2305
          %v2324 = vmax.f32 %v2260, %v2308
          %v2325 = vsub.f32 %v2245, %v2309
          %v2326 = vsub.f32 %v2246, %v2310
          %v2327 = vsub.f32 %v2247, %v2311
          %v2328 = vsub.f32 %v2248, %v2312
          %v2329 = vsub.f32 %v2249, %v2313
          %v2330 = vsub.f32 %v2250, %v2314
          %v2331 = vsub.f32 %v2251, %v2315
          %v2332 = vsub.f32 %v2252, %v2316
          %v2333 = vsub.f32 %v2253, %v2317
          %v2334 = vsub.f32 %v2254, %v2318
          %v2335 = vsub.f32 %v2255, %v2319
          %v2336 = vsub.f32 %v2256, %v2320
          %v2337 = vsub.f32 %v2257, %v2321
          %v2338 = vsub.f32 %v2258, %v2322
          %v2339 = vsub.f32 %v2259, %v2323
          %v2340 = vsub.f32 %v2260, %v2324
          %v2341 = vmul.f32 %v2325, 1.442695
          %v2342 = vpow.pop %v2341
          %v2343 = vmul.f32 %v2326, 1.442695
          %v2344 = vpow.pop %v2343
          %v2345 = vmul.f32 %v2327, 1.442695
          %v2346 = vpow.pop %v2345
          %v2347 = vmul.f32 %v2328, 1.442695
          %v2348 = vpow.pop %v2347
          %v2349 = vmul.f32 %v2329, 1.442695
          %v2350 = vpow.pop %v2349
          %v2351 = vmul.f32 %v2330, 1.442695
          %v2352 = vpow.pop %v2351
          %v2353 = vmul.f32 %v2331, 1.442695
          %v2354 = vpow.pop %v2353
          %v2355 = vmul.f32 %v2332, 1.442695
          %v2356 = vpow.pop %v2355
          %v2357 = vmul.f32 %v2333, 1.442695
          %v2358 = vpow.pop %v2357
          %v2359 = vmul.f32 %v2334, 1.442695
          %v2360 = vpow.pop %v2359
          %v2361 = vmul.f32 %v2335, 1.442695
          %v2362 = vpow.pop %v2361
          %v2363 = vmul.f32 %v2336, 1.442695
          %v2364 = vpow.pop %v2363
          %v2365 = vmul.f32 %v2337, 1.442695
          %v2366 = vpow.pop %v2365
          %v2367 = vmul.f32 %v2338, 1.442695
          %v2368 = vpow.pop %v2367
          %v2369 = vmul.f32 %v2339, 1.442695
          %v2370 = vpow.pop %v2369
          %v2371 = vmul.f32 %v2340, 1.442695
          %v2372 = vpow.pop %v2371
          %2374 = vset.pattern.permute.xlu0 0
          %2375 = vperm.xlu0 %2374, %v2309
          %v2376 = vpop.permute.xlu0 %2375
          %2379 = vset.pattern.permute.xlu0 0
          %2380 = vperm.xlu0 %2379, %v2310
          %v2381 = vpop.permute.xlu0 %2380
          %2384 = vset.pattern.permute.xlu0 0
          %2385 = vperm.xlu0 %2384, %v2311
          %v2386 = vpop.permute.xlu0 %2385
          %2389 = vset.pattern.permute.xlu0 0
          %2390 = vperm.xlu0 %2389, %v2312
          %v2391 = vpop.permute.xlu0 %2390
          %2394 = vset.pattern.permute.xlu0 0
          %2395 = vperm.xlu0 %2394, %v2313
          %v2396 = vpop.permute.xlu0 %2395
          %2399 = vset.pattern.permute.xlu0 0
          %2400 = vperm.xlu0 %2399, %v2314
          %v2401 = vpop.permute.xlu0 %2400
          %2404 = vset.pattern.permute.xlu0 0
          %2405 = vperm.xlu0 %2404, %v2315
          %v2406 = vpop.permute.xlu0 %2405
          %2409 = vset.pattern.permute.xlu0 0
          %2410 = vperm.xlu0 %2409, %v2316
          %v2411 = vpop.permute.xlu0 %2410
          %2414 = vset.pattern.permute.xlu0 0
          %2415 = vperm.xlu0 %2414, %v2317
          %v2416 = vpop.permute.xlu0 %2415
          %2419 = vset.pattern.permute.xlu0 0
          %2420 = vperm.xlu0 %2419, %v2318
          %v2421 = vpop.permute.xlu0 %2420
          %2424 = vset.pattern.permute.xlu0 0
          %2425 = vperm.xlu0 %2424, %v2319
          %v2426 = vpop.permute.xlu0 %2425
          %2429 = vset.pattern.permute.xlu0 0
          %2430 = vperm.xlu0 %2429, %v2320
          %v2431 = vpop.permute.xlu0 %2430
          %2434 = vset.pattern.permute.xlu0 0
          %2435 = vperm.xlu0 %2434, %v2321
          %v2436 = vpop.permute.xlu0 %2435
          %2439 = vset.pattern.permute.xlu0 0
          %2440 = vperm.xlu0 %2439, %v2322
          %v2441 = vpop.permute.xlu0 %2440
          %2444 = vset.pattern.permute.xlu0 0
          %2445 = vperm.xlu0 %2444, %v2323
          %v2446 = vpop.permute.xlu0 %2445
          %2449 = vset.pattern.permute.xlu0 0
          %2450 = vperm.xlu0 %2449, %v2324
          %v2451 = vpop.permute.xlu0 %2450
          %v2453 = vsub.f32 %v2229, %v2376
          %v2454 = vsub.f32 %v2230, %v2381
          %v2455 = vsub.f32 %v2231, %v2386
          %v2456 = vsub.f32 %v2232, %v2391
          %v2457 = vsub.f32 %v2233, %v2396
          %v2458 = vsub.f32 %v2234, %v2401
          %v2459 = vsub.f32 %v2235, %v2406
          %v2460 = vsub.f32 %v2236, %v2411
          %v2461 = vsub.f32 %v2237, %v2416
          %v2462 = vsub.f32 %v2238, %v2421
          %v2463 = vsub.f32 %v2239, %v2426
          %v2464 = vsub.f32 %v2240, %v2431
          %v2465 = vsub.f32 %v2241, %v2436
          %v2466 = vsub.f32 %v2242, %v2441
          %v2467 = vsub.f32 %v2243, %v2446
          %v2468 = vsub.f32 %v2244, %v2451
          %v2469 = vmul.f32 %v2453, 1.442695
          %v2470 = vpow.pop %v2469
          %v2471 = vmul.f32 %v2454, 1.442695
          %v2472 = vpow.pop %v2471
          %v2473 = vmul.f32 %v2455, 1.442695
          %v2474 = vpow.pop %v2473
          %v2475 = vmul.f32 %v2456, 1.442695
          %v2476 = vpow.pop %v2475
          %v2477 = vmul.f32 %v2457, 1.442695
          %v2478 = vpow.pop %v2477
          %v2479 = vmul.f32 %v2458, 1.442695
          %v2480 = vpow.pop %v2479
          %v2481 = vmul.f32 %v2459, 1.442695
          %v2482 = vpow.pop %v2481
          %v2483 = vmul.f32 %v2460, 1.442695
          %v2484 = vpow.pop %v2483
          %v2485 = vmul.f32 %v2461, 1.442695
          %v2486 = vpow.pop %v2485
          %v2487 = vmul.f32 %v2462, 1.442695
          %v2488 = vpow.pop %v2487
          %v2489 = vmul.f32 %v2463, 1.442695
          %v2490 = vpow.pop %v2489
          %v2491 = vmul.f32 %v2464, 1.442695
          %v2492 = vpow.pop %v2491
          %v2493 = vmul.f32 %v2465, 1.442695
          %v2494 = vpow.pop %v2493
          %v2495 = vmul.f32 %v2466, 1.442695
          %v2496 = vpow.pop %v2495
          %v2497 = vmul.f32 %v2467, 1.442695
          %v2498 = vpow.pop %v2497
          %v2499 = vmul.f32 %v2468, 1.442695
          %v2500 = vpow.pop %v2499
          %v2501 = vld [vmem:[#allocation3] sm:$0xff]
          %v2502 = vld [vmem:[#allocation3 + $0x8] sm:$0xff]
          %v2503 = vld [vmem:[#allocation3 + $0x10] sm:$0xff]
          %v2504 = vld [vmem:[#allocation3 + $0x18] sm:$0xff]
          %v2505 = vld [vmem:[#allocation3 + $0x20] sm:$0xff]
          %v2506 = vld [vmem:[#allocation3 + $0x28] sm:$0xff]
          %v2507 = vld [vmem:[#allocation3 + $0x30] sm:$0xff]
          %v2508 = vld [vmem:[#allocation3 + $0x38] sm:$0xff]
          %v2509 = vld [vmem:[#allocation3 + $0x40] sm:$0xff]
          %v2510 = vld [vmem:[#allocation3 + $0x48] sm:$0xff]
          %v2511 = vld [vmem:[#allocation3 + $0x50] sm:$0xff]
          %v2512 = vld [vmem:[#allocation3 + $0x58] sm:$0xff]
          %v2513 = vld [vmem:[#allocation3 + $0x60] sm:$0xff]
          %v2514 = vld [vmem:[#allocation3 + $0x68] sm:$0xff]
          %v2515 = vld [vmem:[#allocation3 + $0x70] sm:$0xff]
          %v2516 = vld [vmem:[#allocation3 + $0x78] sm:$0xff]
          %v2517 = vmul.f32 %v2342, %v2501
          %v2518 = vmul.f32 %v2344, %v2502
          %v2519 = vmul.f32 %v2346, %v2503
          %v2520 = vmul.f32 %v2348, %v2504
          %v2521 = vmul.f32 %v2350, %v2505
          %v2522 = vmul.f32 %v2352, %v2506
          %v2523 = vmul.f32 %v2354, %v2507
          %v2524 = vmul.f32 %v2356, %v2508
          %v2525 = vmul.f32 %v2358, %v2509
          %v2526 = vmul.f32 %v2360, %v2510
          %v2527 = vmul.f32 %v2362, %v2511
          %v2528 = vmul.f32 %v2364, %v2512
          %v2529 = vmul.f32 %v2366, %v2513
          %v2530 = vmul.f32 %v2368, %v2514
          %v2531 = vmul.f32 %v2370, %v2515
          %v2532 = vmul.f32 %v2372, %v2516
          %v2533 = vsel %vm1889, %v2470, 0.0
          %2534 = vadd.xlane.f32.xlu0 %v2533
          %v2535 = vpop.xlane.xlu0 %2534
          %v2536 = vsel %vm1889, %v2472, 0.0
          %2537 = vadd.xlane.f32.xlu0 %v2536
          %v2538 = vpop.xlane.xlu0 %2537
          %v2539 = vsel %vm1889, %v2474, 0.0
          %2540 = vadd.xlane.f32.xlu0 %v2539
          %v2541 = vpop.xlane.xlu0 %2540
          %v2542 = vsel %vm1889, %v2476, 0.0
          %2543 = vadd.xlane.f32.xlu0 %v2542
          %v2544 = vpop.xlane.xlu0 %2543
          %v2545 = vsel %vm1889, %v2478, 0.0
          %2546 = vadd.xlane.f32.xlu0 %v2545
          %v2547 = vpop.xlane.xlu0 %2546
          %v2548 = vsel %vm1889, %v2480, 0.0
          %2549 = vadd.xlane.f32.xlu0 %v2548
          %v2550 = vpop.xlane.xlu0 %2549
          %v2551 = vsel %vm1889, %v2482, 0.0
          %2552 = vadd.xlane.f32.xlu0 %v2551
          %v2553 = vpop.xlane.xlu0 %2552
          %v2554 = vsel %vm1889, %v2484, 0.0
          %2555 = vadd.xlane.f32.xlu0 %v2554
          %v2556 = vpop.xlane.xlu0 %2555
          %v2557 = vsel %vm1889, %v2486, 0.0
          %2558 = vadd.xlane.f32.xlu0 %v2557
          %v2559 = vpop.xlane.xlu0 %2558
          %v2560 = vsel %vm1889, %v2488, 0.0
          %2561 = vadd.xlane.f32.xlu0 %v2560
          %v2562 = vpop.xlane.xlu0 %2561
          %v2563 = vsel %vm1889, %v2490, 0.0
          %2564 = vadd.xlane.f32.xlu0 %v2563
          %v2565 = vpop.xlane.xlu0 %2564
          %v2566 = vsel %vm1889, %v2492, 0.0
          %2567 = vadd.xlane.f32.xlu0 %v2566
          %v2568 = vpop.xlane.xlu0 %2567
          %v2569 = vsel %vm1889, %v2494, 0.0
          %2570 = vadd.xlane.f32.xlu0 %v2569
          %v2571 = vpop.xlane.xlu0 %2570
          %v2572 = vsel %vm1889, %v2496, 0.0
          %2573 = vadd.xlane.f32.xlu0 %v2572
          %v2574 = vpop.xlane.xlu0 %2573
          %v2575 = vsel %vm1889, %v2498, 0.0
          %2576 = vadd.xlane.f32.xlu0 %v2575
          %v2577 = vpop.xlane.xlu0 %2576
          %v2578 = vsel %vm1889, %v2500, 0.0
          %2579 = vadd.xlane.f32.xlu0 %v2578
          %v2580 = vpop.xlane.xlu0 %2579
          %v2581 = vadd.f32 %v2517, %v2535
          %v2582 = vadd.f32 %v2518, %v2538
          %v2583 = vadd.f32 %v2519, %v2541
          %v2584 = vadd.f32 %v2520, %v2544
          %v2585 = vadd.f32 %v2521, %v2547
          %v2586 = vadd.f32 %v2522, %v2550
          %v2587 = vadd.f32 %v2523, %v2553
          %v2588 = vadd.f32 %v2524, %v2556
          %v2589 = vadd.f32 %v2525, %v2559
          %v2590 = vadd.f32 %v2526, %v2562
          %v2591 = vadd.f32 %v2527, %v2565
          %v2592 = vadd.f32 %v2528, %v2568
          %v2593 = vadd.f32 %v2529, %v2571
          %v2594 = vadd.f32 %v2530, %v2574
          %v2595 = vadd.f32 %v2531, %v2577
          %v2596 = vadd.f32 %v2532, %v2580
          %vm2597 = vcmask 7168
          %2598 = vst.msk [vmem:[#allocation3] sm:$0xff] %vm2597, %v2581
          %2599 = vst.msk [vmem:[#allocation3 + $0x8] sm:$0xff] %vm2597, %v2582
          %2600 = vst.msk [vmem:[#allocation3 + $0x10] sm:$0xff] %vm2597, %v2583
          %2601 = vst.msk [vmem:[#allocation3 + $0x18] sm:$0xff] %vm2597, %v2584
          %2602 = vst.msk [vmem:[#allocation3 + $0x20] sm:$0xff] %vm2597, %v2585
          %2603 = vst.msk [vmem:[#allocation3 + $0x28] sm:$0xff] %vm2597, %v2586
          %2604 = vst.msk [vmem:[#allocation3 + $0x30] sm:$0xff] %vm2597, %v2587
          %2605 = vst.msk [vmem:[#allocation3 + $0x38] sm:$0xff] %vm2597, %v2588
          %2606 = vst.msk [vmem:[#allocation3 + $0x40] sm:$0xff] %vm2597, %v2589
          %2607 = vst.msk [vmem:[#allocation3 + $0x48] sm:$0xff] %vm2597, %v2590
          %2608 = vst.msk [vmem:[#allocation3 + $0x50] sm:$0xff] %vm2597, %v2591
          %2609 = vst.msk [vmem:[#allocation3 + $0x58] sm:$0xff] %vm2597, %v2592
          %2610 = vst.msk [vmem:[#allocation3 + $0x60] sm:$0xff] %vm2597, %v2593
          %2611 = vst.msk [vmem:[#allocation3 + $0x68] sm:$0xff] %vm2597, %v2594
          %2612 = vst.msk [vmem:[#allocation3 + $0x70] sm:$0xff] %vm2597, %v2595
          %2613 = vst.msk [vmem:[#allocation3 + $0x78] sm:$0xff] %vm2597, %v2596
          %v2614 = vpack.c.bf16 %v2472, %v2470
          %v2615 = vpack.c.bf16 %v2476, %v2474
          %v2616 = vpack.c.bf16 %v2480, %v2478
          %v2617 = vpack.c.bf16 %v2484, %v2482
          %v2618 = vpack.c.bf16 %v2488, %v2486
          %v2619 = vpack.c.bf16 %v2492, %v2490
          %v2620 = vpack.c.bf16 %v2496, %v2494
          %v2621 = vpack.c.bf16 %v2500, %v2498
          %v2626 = vunpack.c.l.b16 %v1853
          %v2627 = vunpack.c.l.b16 %v1854
          %v2628 = vunpack.c.l.b16 %v1855
          %v2629 = vunpack.c.l.b16 %v1856
          %v2630 = vpack.c.b16 %v2627, %v2626
          %v2631 = vpack.c.b16 %v2629, %v2628
          %v2635 = vsel %vm1889, %v2614, 0
          %v2638 = vsel %vm1889, %v2615, 0
          %2640 = vmatprep.subr.bf16.mxu0 0
          %2641 = vmatpush1.bf16.msra.mxu0 %v2630
          %2642 = vmatprep.subr.bf16.mxu0 0
          %2643 = vmatpush1.bf16.msra.mxu0 %v2631
          %2644 = vmatprep.subr.bf16.mxu0 0
          %2645 = vmatpush1.bf16.msra.mxu0 0
          %2646 = vmatprep.subr.bf16.mxu0 0
          %2647 = vmatpush1.bf16.msra.mxu0 0
          %2648 = vmatprep.subr.bf16.mxu0 0
          %2649 = vmatpush1.bf16.msra.mxu0 0
          %2650 = vmatprep.subr.bf16.mxu0 0
          %2651 = vmatpush1.bf16.msra.mxu0 0
          %2652 = vmatprep.subr.bf16.mxu0 0
          %2653 = vmatpush1.bf16.msra.mxu0 0
          %2654 = vmatprep.subr.bf16.mxu0 0
          %2655 = vmatpush1.bf16.msra.mxu0 0
          %2656 = vmatprep.subr.bf16.mxu0 0
          %2657 = vmatpush1.bf16.msra.mxu0 0
          %2658 = vmatprep.subr.bf16.mxu0 0
          %2659 = vmatpush1.bf16.msra.mxu0 0
          %2660 = vmatprep.subr.bf16.mxu0 0
          %2661 = vmatpush1.bf16.msra.mxu0 0
          %2662 = vmatprep.subr.bf16.mxu0 0
          %2663 = vmatpush1.bf16.msra.mxu0 0
          %2664 = vmatprep.subr.bf16.mxu0 0
          %2665 = vmatpush1.bf16.msra.mxu0 0
          %2666 = vmatprep.subr.bf16.mxu0 0
          %2667 = vmatpush1.bf16.msra.mxu0 0
          %2668 = vmatprep.subr.bf16.mxu0 0
          %2669 = vmatpush1.bf16.msra.mxu0 0
          %2670 = vmatprep.subr.bf16.mxu0 0
          %2671 = vmatpush1.bf16.msra.mxu0 0
          %2672 = vmatprep.mubr.bf16.mxu0 0
          %2673 = vmatmul.mubr.bf16.gmra.mrb[0].mxu0 %v2635
          %v2674 = vpop.f32.mrb[0].mxu0
          %v2675 = vadd.f32 0.0, %v2674
          %v2676 = vpop.f32.mrb[0].mxu0
          %v2677 = vpop.f32.mrb[0].mxu0
          %v2678 = vadd.f32 0.0, %v2677
          %v2679 = vpop.f32.mrb[0].mxu0
          %2680 = vmatprep.mubr.bf16.mxu0 0
          %2681 = vmatmul.mubr.bf16.gmra.mrb[0].mxu0 %v2638
          %v2682 = vpop.f32.mrb[0].mxu0
          %v2683 = vadd.f32 0.0, %v2682
          %v2684 = vpop.f32.mrb[0].mxu0
          %v2685 = vpop.f32.mrb[0].mxu0
          %v2686 = vadd.f32 0.0, %v2685
          %v2687 = vpop.f32.mrb[0].mxu0
          %2688 = vdwg.mxu0
          %v2693 = vunpack.c.l.b16 %v1857
          %v2694 = vunpack.c.l.b16 %v1858
          %v2695 = vunpack.c.l.b16 %v1859
          %v2696 = vunpack.c.l.b16 %v1860
          %v2697 = vpack.c.b16 %v2694, %v2693
          %v2698 = vpack.c.b16 %v2696, %v2695
          %v2702 = vsel %vm1889, %v2616, 0
          %v2705 = vsel %vm1889, %v2617, 0
          %2707 = vmatprep.subr.bf16.mxu0 0
          %2708 = vmatpush1.bf16.msra.mxu0 %v2697
          %2709 = vmatprep.subr.bf16.mxu0 0
          %2710 = vmatpush1.bf16.msra.mxu0 %v2698
          %2711 = vmatprep.subr.bf16.mxu0 0
          %2712 = vmatpush1.bf16.msra.mxu0 0
          %2713 = vmatprep.subr.bf16.mxu0 0
          %2714 = vmatpush1.bf16.msra.mxu0 0
          %2715 = vmatprep.subr.bf16.mxu0 0
          %2716 = vmatpush1.bf16.msra.mxu0 0
          %2717 = vmatprep.subr.bf16.mxu0 0
          %2718 = vmatpush1.bf16.msra.mxu0 0
          %2719 = vmatprep.subr.bf16.mxu0 0
          %2720 = vmatpush1.bf16.msra.mxu0 0
          %2721 = vmatprep.subr.bf16.mxu0 0
          %2722 = vmatpush1.bf16.msra.mxu0 0
          %2723 = vmatprep.subr.bf16.mxu0 0
          %2724 = vmatpush1.bf16.msra.mxu0 0
          %2725 = vmatprep.subr.bf16.mxu0 0
          %2726 = vmatpush1.bf16.msra.mxu0 0
          %2727 = vmatprep.subr.bf16.mxu0 0
          %2728 = vmatpush1.bf16.msra.mxu0 0
          %2729 = vmatprep.subr.bf16.mxu0 0
          %2730 = vmatpush1.bf16.msra.mxu0 0
          %2731 = vmatprep.subr.bf16.mxu0 0
          %2732 = vmatpush1.bf16.msra.mxu0 0
          %2733 = vmatprep.subr.bf16.mxu0 0
          %2734 = vmatpush1.bf16.msra.mxu0 0
          %2735 = vmatprep.subr.bf16.mxu0 0
          %2736 = vmatpush1.bf16.msra.mxu0 0
          %2737 = vmatprep.subr.bf16.mxu0 0
          %2738 = vmatpush1.bf16.msra.mxu0 0
          %2739 = vmatprep.mubr.bf16.mxu0 0
          %2740 = vmatmul.mubr.bf16.gmra.mrb[0].mxu0 %v2702
          %v2741 = vpop.f32.mrb[0].mxu0
          %v2742 = vadd.f32 0.0, %v2741
          %v2743 = vpop.f32.mrb[0].mxu0
          %v2744 = vpop.f32.mrb[0].mxu0
          %v2745 = vadd.f32 0.0, %v2744
          %v2746 = vpop.f32.mrb[0].mxu0
          %2747 = vmatprep.mubr.bf16.mxu0 0
          %2748 = vmatmul.mubr.bf16.gmra.mrb[0].mxu0 %v2705
          %v2749 = vpop.f32.mrb[0].mxu0
          %v2750 = vadd.f32 0.0, %v2749
          %v2751 = vpop.f32.mrb[0].mxu0
          %v2752 = vpop.f32.mrb[0].mxu0
          %v2753 = vadd.f32 0.0, %v2752
          %v2754 = vpop.f32.mrb[0].mxu0
          %2755 = vdwg.mxu0
          %v2760 = vunpack.c.l.b16 %v1861
          %v2761 = vunpack.c.l.b16 %v1862
          %v2762 = vunpack.c.l.b16 %v1863
          %v2763 = vunpack.c.l.b16 %v1864
          %v2764 = vpack.c.b16 %v2761, %v2760
          %v2765 = vpack.c.b16 %v2763, %v2762
          %v2769 = vsel %vm1889, %v2618, 0
          %v2772 = vsel %vm1889, %v2619, 0
          %2774 = vmatprep.subr.bf16.mxu0 0
          %2775 = vmatpush1.bf16.msra.mxu0 %v2764
          %2776 = vmatprep.subr.bf16.mxu0 0
          %2777 = vmatpush1.bf16.msra.mxu0 %v2765
          %2778 = vmatprep.subr.bf16.mxu0 0
          %2779 = vmatpush1.bf16.msra.mxu0 0
          %2780 = vmatprep.subr.bf16.mxu0 0
          %2781 = vmatpush1.bf16.msra.mxu0 0
          %2782 = vmatprep.subr.bf16.mxu0 0
          %2783 = vmatpush1.bf16.msra.mxu0 0
          %2784 = vmatprep.subr.bf16.mxu0 0
          %2785 = vmatpush1.bf16.msra.mxu0 0
          %2786 = vmatprep.subr.bf16.mxu0 0
          %2787 = vmatpush1.bf16.msra.mxu0 0
          %2788 = vmatprep.subr.bf16.mxu0 0
          %2789 = vmatpush1.bf16.msra.mxu0 0
          %2790 = vmatprep.subr.bf16.mxu0 0
          %2791 = vmatpush1.bf16.msra.mxu0 0
          %2792 = vmatprep.subr.bf16.mxu0 0
          %2793 = vmatpush1.bf16.msra.mxu0 0
          %2794 = vmatprep.subr.bf16.mxu0 0
          %2795 = vmatpush1.bf16.msra.mxu0 0
          %2796 = vmatprep.subr.bf16.mxu0 0
          %2797 = vmatpush1.bf16.msra.mxu0 0
          %2798 = vmatprep.subr.bf16.mxu0 0
          %2799 = vmatpush1.bf16.msra.mxu0 0
          %2800 = vmatprep.subr.bf16.mxu0 0
          %2801 = vmatpush1.bf16.msra.mxu0 0
          %2802 = vmatprep.subr.bf16.mxu0 0
          %2803 = vmatpush1.bf16.msra.mxu0 0
          %2804 = vmatprep.subr.bf16.mxu0 0
          %2805 = vmatpush1.bf16.msra.mxu0 0
          %2806 = vmatprep.mubr.bf16.mxu0 0
          %2807 = vmatmul.mubr.bf16.gmra.mrb[0].mxu0 %v2769
          %v2808 = vpop.f32.mrb[0].mxu0
          %v2809 = vadd.f32 0.0, %v2808
          %v2810 = vpop.f32.mrb[0].mxu0
          %v2811 = vpop.f32.mrb[0].mxu0
          %v2812 = vadd.f32 0.0, %v2811
          %v2813 = vpop.f32.mrb[0].mxu0
          %2814 = vmatprep.mubr.bf16.mxu0 0
          %2815 = vmatmul.mubr.bf16.gmra.mrb[0].mxu0 %v2772
          %v2816 = vpop.f32.mrb[0].mxu0
          %v2817 = vadd.f32 0.0, %v2816
          %v2818 = vpop.f32.mrb[0].mxu0
          %v2819 = vpop.f32.mrb[0].mxu0
          %v2820 = vadd.f32 0.0, %v2819
          %v2821 = vpop.f32.mrb[0].mxu0
          %2822 = vdwg.mxu0
          %v2827 = vunpack.c.l.b16 %v1865
          %v2828 = vunpack.c.l.b16 %v1866
          %v2829 = vunpack.c.l.b16 %v1867
          %v2830 = vunpack.c.l.b16 %v1868
          %v2831 = vpack.c.b16 %v2828, %v2827
          %v2832 = vpack.c.b16 %v2830, %v2829
          %v2836 = vsel %vm1889, %v2620, 0
          %v2839 = vsel %vm1889, %v2621, 0
          %2841 = vmatprep.subr.bf16.mxu0 0
          %2842 = vmatpush1.bf16.msra.mxu0 %v2831
          %2843 = vmatprep.subr.bf16.mxu0 0
          %2844 = vmatpush1.bf16.msra.mxu0 %v2832
          %2845 = vmatprep.subr.bf16.mxu0 0
          %2846 = vmatpush1.bf16.msra.mxu0 0
          %2847 = vmatprep.subr.bf16.mxu0 0
          %2848 = vmatpush1.bf16.msra.mxu0 0
          %2849 = vmatprep.subr.bf16.mxu0 0
          %2850 = vmatpush1.bf16.msra.mxu0 0
          %2851 = vmatprep.subr.bf16.mxu0 0
          %2852 = vmatpush1.bf16.msra.mxu0 0
          %2853 = vmatprep.subr.bf16.mxu0 0
          %2854 = vmatpush1.bf16.msra.mxu0 0
          %2855 = vmatprep.subr.bf16.mxu0 0
          %2856 = vmatpush1.bf16.msra.mxu0 0
          %2857 = vmatprep.subr.bf16.mxu0 0
          %2858 = vmatpush1.bf16.msra.mxu0 0
          %2859 = vmatprep.subr.bf16.mxu0 0
          %2860 = vmatpush1.bf16.msra.mxu0 0
          %2861 = vmatprep.subr.bf16.mxu0 0
          %2862 = vmatpush1.bf16.msra.mxu0 0
          %2863 = vmatprep.subr.bf16.mxu0 0
          %2864 = vmatpush1.bf16.msra.mxu0 0
          %2865 = vmatprep.subr.bf16.mxu0 0
          %2866 = vmatpush1.bf16.msra.mxu0 0
          %2867 = vmatprep.subr.bf16.mxu0 0
          %2868 = vmatpush1.bf16.msra.mxu0 0
          %2869 = vmatprep.subr.bf16.mxu0 0
          %2870 = vmatpush1.bf16.msra.mxu0 0
          %2871 = vmatprep.subr.bf16.mxu0 0
          %2872 = vmatpush1.bf16.msra.mxu0 0
          %2873 = vmatprep.mubr.bf16.mxu0 0
          %2874 = vmatmul.mubr.bf16.gmra.mrb[0].mxu0 %v2836
          %v2875 = vpop.f32.mrb[0].mxu0
          %v2876 = vadd.f32 0.0, %v2875
          %v2877 = vpop.f32.mrb[0].mxu0
          %v2878 = vpop.f32.mrb[0].mxu0
          %v2879 = vadd.f32 0.0, %v2878
          %v2880 = vpop.f32.mrb[0].mxu0
          %2881 = vmatprep.mubr.bf16.mxu0 0
          %2882 = vmatmul.mubr.bf16.gmra.mrb[0].mxu0 %v2839
          %v2883 = vpop.f32.mrb[0].mxu0
          %v2884 = vadd.f32 0.0, %v2883
          %v2885 = vpop.f32.mrb[0].mxu0
          %v2886 = vpop.f32.mrb[0].mxu0
          %v2887 = vadd.f32 0.0, %v2886
          %v2888 = vpop.f32.mrb[0].mxu0
          %2889 = vdwg.mxu0
          %v2890 = vld [vmem:[#allocation4] sm:$0xff]
          %v2891 = vld [vmem:[#allocation4 + $0x8] sm:$0xff]
          %v2892 = vld [vmem:[#allocation4 + $0x10] sm:$0xff]
          %v2893 = vld [vmem:[#allocation4 + $0x18] sm:$0xff]
          %v2894 = vld [vmem:[#allocation4 + $0x20] sm:$0xff]
          %v2895 = vld [vmem:[#allocation4 + $0x28] sm:$0xff]
          %v2896 = vld [vmem:[#allocation4 + $0x30] sm:$0xff]
          %v2897 = vld [vmem:[#allocation4 + $0x38] sm:$0xff]
          %v2898 = vld [vmem:[#allocation4 + $0x40] sm:$0xff]
          %v2899 = vld [vmem:[#allocation4 + $0x48] sm:$0xff]
          %v2900 = vld [vmem:[#allocation4 + $0x50] sm:$0xff]
          %v2901 = vld [vmem:[#allocation4 + $0x58] sm:$0xff]
          %v2902 = vld [vmem:[#allocation4 + $0x60] sm:$0xff]
          %v2903 = vld [vmem:[#allocation4 + $0x68] sm:$0xff]
          %v2904 = vld [vmem:[#allocation4 + $0x70] sm:$0xff]
          %v2905 = vld [vmem:[#allocation4 + $0x78] sm:$0xff]
          %2907 = vset.pattern.permute.xlu0 0
          %2908 = vperm.xlu0 %2907, %v2342
          %v2909 = vpop.permute.xlu0 %2908
          %2912 = vset.pattern.permute.xlu0 0
          %2913 = vperm.xlu0 %2912, %v2344
          %v2914 = vpop.permute.xlu0 %2913
          %2917 = vset.pattern.permute.xlu0 0
          %2918 = vperm.xlu0 %2917, %v2346
          %v2919 = vpop.permute.xlu0 %2918
          %2922 = vset.pattern.permute.xlu0 0
          %2923 = vperm.xlu0 %2922, %v2348
          %v2924 = vpop.permute.xlu0 %2923
          %2927 = vset.pattern.permute.xlu0 0
          %2928 = vperm.xlu0 %2927, %v2350
          %v2929 = vpop.permute.xlu0 %2928
          %2932 = vset.pattern.permute.xlu0 0
          %2933 = vperm.xlu0 %2932, %v2352
          %v2934 = vpop.permute.xlu0 %2933
          %2937 = vset.pattern.permute.xlu0 0
          %2938 = vperm.xlu0 %2937, %v2354
          %v2939 = vpop.permute.xlu0 %2938
          %2942 = vset.pattern.permute.xlu0 0
          %2943 = vperm.xlu0 %2942, %v2356
          %v2944 = vpop.permute.xlu0 %2943
          %2947 = vset.pattern.permute.xlu0 0
          %2948 = vperm.xlu0 %2947, %v2358
          %v2949 = vpop.permute.xlu0 %2948
          %2952 = vset.pattern.permute.xlu0 0
          %2953 = vperm.xlu0 %2952, %v2360
          %v2954 = vpop.permute.xlu0 %2953
          %2957 = vset.pattern.permute.xlu0 0
          %2958 = vperm.xlu0 %2957, %v2362
          %v2959 = vpop.permute.xlu0 %2958
          %2962 = vset.pattern.permute.xlu0 0
          %2963 = vperm.xlu0 %2962, %v2364
          %v2964 = vpop.permute.xlu0 %2963
          %2967 = vset.pattern.permute.xlu0 0
          %2968 = vperm.xlu0 %2967, %v2366
          %v2969 = vpop.permute.xlu0 %2968
          %2972 = vset.pattern.permute.xlu0 0
          %2973 = vperm.xlu0 %2972, %v2368
          %v2974 = vpop.permute.xlu0 %2973
          %2977 = vset.pattern.permute.xlu0 0
          %2978 = vperm.xlu0 %2977, %v2370
          %v2979 = vpop.permute.xlu0 %2978
          %2982 = vset.pattern.permute.xlu0 0
          %2983 = vperm.xlu0 %2982, %v2372
          %v2984 = vpop.permute.xlu0 %2983
          %v2986 = vmul.f32 %v2909, %v2890
          %v2987 = vmul.f32 %v2914, %v2891
          %v2988 = vmul.f32 %v2919, %v2892
          %v2989 = vmul.f32 %v2924, %v2893
          %v2990 = vmul.f32 %v2929, %v2894
          %v2991 = vmul.f32 %v2934, %v2895
          %v2992 = vmul.f32 %v2939, %v2896
          %v2993 = vmul.f32 %v2944, %v2897
          %v2994 = vmul.f32 %v2949, %v2898
          %v2995 = vmul.f32 %v2954, %v2899
          %v2996 = vmul.f32 %v2959, %v2900
          %v2997 = vmul.f32 %v2964, %v2901
          %v2998 = vmul.f32 %v2969, %v2902
          %v2999 = vmul.f32 %v2974, %v2903
          %v3000 = vmul.f32 %v2979, %v2904
          %v3001 = vmul.f32 %v2984, %v2905
          %v3002 = vadd.f32 %v2986, %v2675
          %v3003 = vadd.f32 %v2987, %v2678
          %v3004 = vadd.f32 %v2988, %v2683
          %v3005 = vadd.f32 %v2989, %v2686
          %v3006 = vadd.f32 %v2990, %v2742
          %v3007 = vadd.f32 %v2991, %v2745
          %v3008 = vadd.f32 %v2992, %v2750
          %v3009 = vadd.f32 %v2993, %v2753
          %v3010 = vadd.f32 %v2994, %v2809
          %v3011 = vadd.f32 %v2995, %v2812
          %v3012 = vadd.f32 %v2996, %v2817
          %v3013 = vadd.f32 %v2997, %v2820
          %v3014 = vadd.f32 %v2998, %v2876
          %v3015 = vadd.f32 %v2999, %v2879
          %v3016 = vadd.f32 %v3000, %v2884
          %v3017 = vadd.f32 %v3001, %v2887
          %3018 = vst.msk [vmem:[#allocation4] sm:$0xff] %vm1889, %v3002
          %3019 = vst.msk [vmem:[#allocation4 + $0x8] sm:$0xff] %vm1889, %v3003
          %3020 = vst.msk [vmem:[#allocation4 + $0x10] sm:$0xff] %vm1889, %v3004
          %3021 = vst.msk [vmem:[#allocation4 + $0x18] sm:$0xff] %vm1889, %v3005
          %3022 = vst.msk [vmem:[#allocation4 + $0x20] sm:$0xff] %vm1889, %v3006
          %3023 = vst.msk [vmem:[#allocation4 + $0x28] sm:$0xff] %vm1889, %v3007
          %3024 = vst.msk [vmem:[#allocation4 + $0x30] sm:$0xff] %vm1889, %v3008
          %3025 = vst.msk [vmem:[#allocation4 + $0x38] sm:$0xff] %vm1889, %v3009
          %3026 = vst.msk [vmem:[#allocation4 + $0x40] sm:$0xff] %vm1889, %v3010
          %3027 = vst.msk [vmem:[#allocation4 + $0x48] sm:$0xff] %vm1889, %v3011
          %3028 = vst.msk [vmem:[#allocation4 + $0x50] sm:$0xff] %vm1889, %v3012
          %3029 = vst.msk [vmem:[#allocation4 + $0x58] sm:$0xff] %vm1889, %v3013
          %3030 = vst.msk [vmem:[#allocation4 + $0x60] sm:$0xff] %vm1889, %v3014
          %3031 = vst.msk [vmem:[#allocation4 + $0x68] sm:$0xff] %vm1889, %v3015
          %3032 = vst.msk [vmem:[#allocation4 + $0x70] sm:$0xff] %vm1889, %v3016
          %3033 = vst.msk [vmem:[#allocation4 + $0x78] sm:$0xff] %vm1889, %v3017
          %3034 = vst.msk [vmem:[#allocation2] sm:$0xff] %vm2597, %v2309
          %3035 = vst.msk [vmem:[#allocation2 + $0x8] sm:$0xff] %vm2597, %v2310
          %3036 = vst.msk [vmem:[#allocation2 + $0x10] sm:$0xff] %vm2597, %v2311
          %3037 = vst.msk [vmem:[#allocation2 + $0x18] sm:$0xff] %vm2597, %v2312
          %3038 = vst.msk [vmem:[#allocation2 + $0x20] sm:$0xff] %vm2597, %v2313
          %3039 = vst.msk [vmem:[#allocation2 + $0x28] sm:$0xff] %vm2597, %v2314
          %3040 = vst.msk [vmem:[#allocation2 + $0x30] sm:$0xff] %vm2597, %v2315
          %3041 = vst.msk [vmem:[#allocation2 + $0x38] sm:$0xff] %vm2597, %v2316
          %3042 = vst.msk [vmem:[#allocation2 + $0x40] sm:$0xff] %vm2597, %v2317
          %3043 = vst.msk [vmem:[#allocation2 + $0x48] sm:$0xff] %vm2597, %v2318
          %3044 = vst.msk [vmem:[#allocation2 + $0x50] sm:$0xff] %vm2597, %v2319
          %3045 = vst.msk [vmem:[#allocation2 + $0x58] sm:$0xff] %vm2597, %v2320
          %3046 = vst.msk [vmem:[#allocation2 + $0x60] sm:$0xff] %vm2597, %v2321
          %3047 = vst.msk [vmem:[#allocation2 + $0x68] sm:$0xff] %vm2597, %v2322
          %3048 = vst.msk [vmem:[#allocation2 + $0x70] sm:$0xff] %vm2597, %v2323
          %3049 = vst.msk [vmem:[#allocation2 + $0x78] sm:$0xff] %vm2597, %v2324
          %v3050 = vld [vmem:[#allocation4] sm:$0xff]
          %v3051 = vld [vmem:[#allocation4 + $0x8] sm:$0xff]
          %v3052 = vld [vmem:[#allocation4 + $0x10] sm:$0xff]
          %v3053 = vld [vmem:[#allocation4 + $0x18] sm:$0xff]
          %v3054 = vld [vmem:[#allocation4 + $0x20] sm:$0xff]
          %v3055 = vld [vmem:[#allocation4 + $0x28] sm:$0xff]
          %v3056 = vld [vmem:[#allocation4 + $0x30] sm:$0xff]
          %v3057 = vld [vmem:[#allocation4 + $0x38] sm:$0xff]
          %v3058 = vld [vmem:[#allocation4 + $0x40] sm:$0xff]
          %v3059 = vld [vmem:[#allocation4 + $0x48] sm:$0xff]
          %v3060 = vld [vmem:[#allocation4 + $0x50] sm:$0xff]
          %v3061 = vld [vmem:[#allocation4 + $0x58] sm:$0xff]
          %v3062 = vld [vmem:[#allocation4 + $0x60] sm:$0xff]
          %v3063 = vld [vmem:[#allocation4 + $0x68] sm:$0xff]
          %v3064 = vld [vmem:[#allocation4 + $0x70] sm:$0xff]
          %v3065 = vld [vmem:[#allocation4 + $0x78] sm:$0xff]
          %v3066 = vld [vmem:[#allocation3] sm:$0xff]
          %v3067 = vld [vmem:[#allocation3 + $0x8] sm:$0xff]
          %v3068 = vld [vmem:[#allocation3 + $0x10] sm:$0xff]
          %v3069 = vld [vmem:[#allocation3 + $0x18] sm:$0xff]
          %v3070 = vld [vmem:[#allocation3 + $0x20] sm:$0xff]
          %v3071 = vld [vmem:[#allocation3 + $0x28] sm:$0xff]
          %v3072 = vld [vmem:[#allocation3 + $0x30] sm:$0xff]
          %v3073 = vld [vmem:[#allocation3 + $0x38] sm:$0xff]
          %v3074 = vld [vmem:[#allocation3 + $0x40] sm:$0xff]
          %v3075 = vld [vmem:[#allocation3 + $0x48] sm:$0xff]
          %v3076 = vld [vmem:[#allocation3 + $0x50] sm:$0xff]
          %v3077 = vld [vmem:[#allocation3 + $0x58] sm:$0xff]
          %v3078 = vld [vmem:[#allocation3 + $0x60] sm:$0xff]
          %v3079 = vld [vmem:[#allocation3 + $0x68] sm:$0xff]
          %v3080 = vld [vmem:[#allocation3 + $0x70] sm:$0xff]
          %v3081 = vld [vmem:[#allocation3 + $0x78] sm:$0xff]
          %v3082 = vrcp.pop %v3066
          %v3083 = vrcp.pop %v3067
          %v3084 = vrcp.pop %v3068
          %v3085 = vrcp.pop %v3069
          %v3086 = vrcp.pop %v3070
          %v3087 = vrcp.pop %v3071
          %v3088 = vrcp.pop %v3072
          %v3089 = vrcp.pop %v3073
          %v3090 = vrcp.pop %v3074
          %v3091 = vrcp.pop %v3075
          %v3092 = vrcp.pop %v3076
          %v3093 = vrcp.pop %v3077
          %v3094 = vrcp.pop %v3078
          %v3095 = vrcp.pop %v3079
          %v3096 = vrcp.pop %v3080
          %v3097 = vrcp.pop %v3081
          %3099 = vset.pattern.permute.xlu0 0
          %3100 = vperm.xlu0 %3099, %v3082
          %v3101 = vpop.permute.xlu0 %3100
          %3104 = vset.pattern.permute.xlu0 0
          %3105 = vperm.xlu0 %3104, %v3083
          %v3106 = vpop.permute.xlu0 %3105
          %3109 = vset.pattern.permute.xlu0 0
          %3110 = vperm.xlu0 %3109, %v3084
          %v3111 = vpop.permute.xlu0 %3110
          %3114 = vset.pattern.permute.xlu0 0
          %3115 = vperm.xlu0 %3114, %v3085
          %v3116 = vpop.permute.xlu0 %3115
          %3119 = vset.pattern.permute.xlu0 0
          %3120 = vperm.xlu0 %3119, %v3086
          %v3121 = vpop.permute.xlu0 %3120
          %3124 = vset.pattern.permute.xlu0 0
          %3125 = vperm.xlu0 %3124, %v3087
          %v3126 = vpop.permute.xlu0 %3125
          %3129 = vset.pattern.permute.xlu0 0
          %3130 = vperm.xlu0 %3129, %v3088
          %v3131 = vpop.permute.xlu0 %3130
          %3134 = vset.pattern.permute.xlu0 0
          %3135 = vperm.xlu0 %3134, %v3089
          %v3136 = vpop.permute.xlu0 %3135
          %3139 = vset.pattern.permute.xlu0 0
          %3140 = vperm.xlu0 %3139, %v3090
          %v3141 = vpop.permute.xlu0 %3140
          %3144 = vset.pattern.permute.xlu0 0
          %3145 = vperm.xlu0 %3144, %v3091
          %v3146 = vpop.permute.xlu0 %3145
          %3149 = vset.pattern.permute.xlu0 0
          %3150 = vperm.xlu0 %3149, %v3092
          %v3151 = vpop.permute.xlu0 %3150
          %3154 = vset.pattern.permute.xlu0 0
          %3155 = vperm.xlu0 %3154, %v3093
          %v3156 = vpop.permute.xlu0 %3155
          %3159 = vset.pattern.permute.xlu0 0
          %3160 = vperm.xlu0 %3159, %v3094
          %v3161 = vpop.permute.xlu0 %3160
          %3164 = vset.pattern.permute.xlu0 0
          %3165 = vperm.xlu0 %3164, %v3095
          %v3166 = vpop.permute.xlu0 %3165
          %3169 = vset.pattern.permute.xlu0 0
          %3170 = vperm.xlu0 %3169, %v3096
          %v3171 = vpop.permute.xlu0 %3170
          %3174 = vset.pattern.permute.xlu0 0
          %3175 = vperm.xlu0 %3174, %v3097
          %v3176 = vpop.permute.xlu0 %3175
          %v3178 = vmul.f32 %v3050, %v3101
          %v3179 = vmul.f32 %v3051, %v3106
          %v3180 = vmul.f32 %v3052, %v3111
          %v3181 = vmul.f32 %v3053, %v3116
          %v3182 = vmul.f32 %v3054, %v3121
          %v3183 = vmul.f32 %v3055, %v3126
          %v3184 = vmul.f32 %v3056, %v3131
          %v3185 = vmul.f32 %v3057, %v3136
          %v3186 = vmul.f32 %v3058, %v3141
          %v3187 = vmul.f32 %v3059, %v3146
          %v3188 = vmul.f32 %v3060, %v3151
          %v3189 = vmul.f32 %v3061, %v3156
          %v3190 = vmul.f32 %v3062, %v3161
          %v3191 = vmul.f32 %v3063, %v3166
          %v3192 = vmul.f32 %v3064, %v3171
          %v3193 = vmul.f32 %v3065, %v3176
          %v3194 = vpack.c.bf16 %v3179, %v3178
          %v3195 = vpack.c.bf16 %v3181, %v3180
          %v3196 = vpack.c.bf16 %v3183, %v3182
          %v3197 = vpack.c.bf16 %v3185, %v3184
          %v3198 = vpack.c.bf16 %v3187, %v3186
          %v3199 = vpack.c.bf16 %v3189, %v3188
          %v3200 = vpack.c.bf16 %v3191, %v3190
          %v3201 = vpack.c.bf16 %v3193, %v3192
          %v3210 = vunpack.c.l.b16 %v3194
          %v3211 = vunpack.c.h.b16 %v3194
          %v3212 = vunpack.c.l.b16 %v3195
          %v3213 = vunpack.c.h.b16 %v3195
          %v3214 = vunpack.c.l.b16 %v3196
          %v3215 = vunpack.c.h.b16 %v3196
          %v3216 = vunpack.c.l.b16 %v3197
          %v3217 = vunpack.c.h.b16 %v3197
          %v3218 = vunpack.c.l.b16 %v3198
          %v3219 = vunpack.c.h.b16 %v3198
          %v3220 = vunpack.c.l.b16 %v3199
          %v3221 = vunpack.c.h.b16 %v3199
          %v3222 = vunpack.c.l.b16 %v3200
          %v3223 = vunpack.c.h.b16 %v3200
          %v3224 = vunpack.c.l.b16 %v3201
          %v3225 = vunpack.c.h.b16 %v3201
          %v3226 = vpack.c.b16 %v3210, %v3210
          %v3227 = vpack.c.b16 %v3211, %v3211
          %v3228 = vpack.c.b16 %v3212, %v3212
          %v3229 = vpack.c.b16 %v3213, %v3213
          %v3230 = vpack.c.b16 %v3214, %v3214
          %v3231 = vpack.c.b16 %v3215, %v3215
          %v3232 = vpack.c.b16 %v3216, %v3216
          %v3233 = vpack.c.b16 %v3217, %v3217
          %v3234 = vpack.c.b16 %v3218, %v3218
          %v3235 = vpack.c.b16 %v3219, %v3219
          %v3236 = vpack.c.b16 %v3220, %v3220
          %v3237 = vpack.c.b16 %v3221, %v3221
          %v3238 = vpack.c.b16 %v3222, %v3222
          %v3239 = vpack.c.b16 %v3223, %v3223
          %v3240 = vpack.c.b16 %v3224, %v3224
          %v3241 = vpack.c.b16 %v3225, %v3225
          %vm3258 = vcmask 257024
          %3259 = vst.msk [vmem:[%s555] sm:$0xf] %vm3258, %v3226
          %3260 = vst.msk [vmem:[%s555 + $0x4] sm:$0xf] %vm3258, %v3227
          %3261 = vst.msk [vmem:[%s555 + $0x8] sm:$0xf] %vm3258, %v3228
          %3262 = vst.msk [vmem:[%s555 + $0xc] sm:$0xf] %vm3258, %v3229
          %3263 = vst.msk [vmem:[%s555 + $0x10] sm:$0xf] %vm3258, %v3230
          %3264 = vst.msk [vmem:[%s555 + $0x14] sm:$0xf] %vm3258, %v3231
          %3265 = vst.msk [vmem:[%s555 + $0x18] sm:$0xf] %vm3258, %v3232
          %3266 = vst.msk [vmem:[%s555 + $0x1c] sm:$0xf] %vm3258, %v3233
          %3267 = vst.msk [vmem:[%s555 + $0x20] sm:$0xf] %vm3258, %v3234
          %3268 = vst.msk [vmem:[%s555 + $0x24] sm:$0xf] %vm3258, %v3235
          %3269 = vst.msk [vmem:[%s555 + $0x28] sm:$0xf] %vm3258, %v3236
          %3270 = vst.msk [vmem:[%s555 + $0x2c] sm:$0xf] %vm3258, %v3237
          %3271 = vst.msk [vmem:[%s555 + $0x30] sm:$0xf] %vm3258, %v3238
          %3272 = vst.msk [vmem:[%s555 + $0x34] sm:$0xf] %vm3258, %v3239
          %3273 = vst.msk [vmem:[%s555 + $0x38] sm:$0xf] %vm3258, %v3240
          %3274 = vst.msk [vmem:[%s555 + $0x3c] sm:$0xf] %vm3258, %v3241
        $region167: #{gpt_forward.8} parent=142 // pred_fallthru
          _
        %s3275 = sand.u32 %s135, 1
        %s3276 = sand.u32 %s135, 1
        %s3277 = smul.addr %s3276, 64
        %s3278 = scalar_lea.vmem [#allocation8], %s3277
        // Predicated region
        $region168: #{gpt_forward.8} parent=142 // pred_check
          %p3279 = pneg %p145
        $region169: #{gpt_forward.8} parent=142 // pred_check_branch
          %3281 = sbr.rel (%p3279) target = $region171
        $region170: #{gpt_forward.8} parent=142 // pred_region
          %s3282 = smul.u32 4, %s20
          %s3283 = smul.addr %s19, 32
          %s3284 = sadd.s32 %s3282, %s3283
          %s3285 = smul.addr %s3284, 4
          %s3286 = scalar_lea.vmem %s3, %s3285
          // Predicated region
          $region172: #{gpt_forward.8} parent=170 // pred_check
            _
          $region173: #{gpt_forward.8} parent=170 // pred_check_branch
            %3288 = sbr.rel (0) target = $region175
          $region174: #{gpt_forward.8} parent=170 // pred_region
            // Predicated region
            $region176: #{gpt_forward.8} parent=174 // pred_check
              _
            $region177: #{gpt_forward.8} parent=174 // pred_check_branch
              %3290 = sbr.rel target = $region179
            $region178: #{gpt_forward.8} parent=174 // pred_region
              // Predicated region
              $region191: #{gpt_forward.8} parent=178 // pred_check
                _
              $region192: #{gpt_forward.8} parent=178 // pred_check_branch
                %3335 = sbr.rel (0) target = $region194
              $region193: #{gpt_forward.8} parent=178 // pred_region
                loop: start=0, step=1, limit=1
                $region195: #{gpt_forward.8} parent=193 // loop_pre_header
                  _
                $region196: #{gpt_forward.8} parent=193 // loop_header
                  %s3337 = sphi 0, %s3341
                  %p3338 = scmp.ge.s32.totalorder %s3337, 1
                  %s3342 = sphi %s3278, %s3278
                  %s3343 = sphi %s3286, %s3286
                $region197: #{gpt_forward.8} parent=193 // loop_header_branch
                  %3340 = sbr.rel (%p3338) target = $region201
                $region198: #{gpt_forward.8} parent=193 // loop_body
                  _
                $region199: #{gpt_forward.8} parent=193 // loop_footer
                  %s3341 = sadd.s32 1, %s3337
                $region200: #{gpt_forward.8} parent=193 // loop_footer_branch
                  %3336 = sbr.rel target = $region196
                $region201: #{gpt_forward.8} parent=193 // loop_exit
                  _
                loop: start=0, step=1, limit=1
                $region202: #{gpt_forward.8} parent=193 // loop_pre_header
                  _
                $region203: #{gpt_forward.8} parent=193 // loop_header
                  %s3346 = sphi 0, %s3350
                  %p3347 = scmp.ge.s32.totalorder %s3346, 1
                  %s3351 = sphi %s3278, %s3278
                  %s3352 = sphi %s3286, %s3286
                $region204: #{gpt_forward.8} parent=193 // loop_header_branch
                  %3349 = sbr.rel (%p3347) target = $region208
                $region205: #{gpt_forward.8} parent=193 // loop_body
                  %v3353 = vld [vmem:[%s3351] sm:$0xf]
                  %3354 = vst [vmem:[%s3352] sm:$0xf] %v3353
                  %v3355 = vld [vmem:[%s3351 + $0x4] sm:$0xf]
                  %3356 = vst [vmem:[%s3352 + $0x4] sm:$0xf] %v3355
                  %v3357 = vld [vmem:[%s3351 + $0x8] sm:$0xf]
                  %3358 = vst [vmem:[%s3352 + $0x8] sm:$0xf] %v3357
                  %v3359 = vld [vmem:[%s3351 + $0xc] sm:$0xf]
                  %3360 = vst [vmem:[%s3352 + $0xc] sm:$0xf] %v3359
                  %v3361 = vld [vmem:[%s3351 + $0x10] sm:$0xf]
                  %3362 = vst [vmem:[%s3352 + $0x20] sm:$0xf] %v3361
                  %v3363 = vld [vmem:[%s3351 + $0x14] sm:$0xf]
                  %3364 = vst [vmem:[%s3352 + $0x24] sm:$0xf] %v3363
                  %v3365 = vld [vmem:[%s3351 + $0x18] sm:$0xf]
                  %3366 = vst [vmem:[%s3352 + $0x28] sm:$0xf] %v3365
                  %v3367 = vld [vmem:[%s3351 + $0x1c] sm:$0xf]
                  %3368 = vst [vmem:[%s3352 + $0x2c] sm:$0xf] %v3367
                  %v3369 = vld [vmem:[%s3351 + $0x20] sm:$0xf]
                  %3370 = vst [vmem:[%s3352 + $0x40] sm:$0xf] %v3369
                  %v3371 = vld [vmem:[%s3351 + $0x24] sm:$0xf]
                  %3372 = vst [vmem:[%s3352 + $0x44] sm:$0xf] %v3371
                  %v3373 = vld [vmem:[%s3351 + $0x28] sm:$0xf]
                  %3374 = vst [vmem:[%s3352 + $0x48] sm:$0xf] %v3373
                  %v3375 = vld [vmem:[%s3351 + $0x2c] sm:$0xf]
                  %3376 = vst [vmem:[%s3352 + $0x4c] sm:$0xf] %v3375
                  %v3377 = vld [vmem:[%s3351 + $0x30] sm:$0xf]
                  %3378 = vst [vmem:[%s3352 + $0x60] sm:$0xf] %v3377
                  %v3379 = vld [vmem:[%s3351 + $0x34] sm:$0xf]
                  %3380 = vst [vmem:[%s3352 + $0x64] sm:$0xf] %v3379
                  %v3381 = vld [vmem:[%s3351 + $0x38] sm:$0xf]
                  %3382 = vst [vmem:[%s3352 + $0x68] sm:$0xf] %v3381
                  %v3383 = vld [vmem:[%s3351 + $0x3c] sm:$0xf]
                  %3384 = vst [vmem:[%s3352 + $0x6c] sm:$0xf] %v3383
                $region206: #{gpt_forward.8} parent=193 // loop_footer
                  %s3350 = sadd.s32 1, %s3346
                $region207: #{gpt_forward.8} parent=193 // loop_footer_branch
                  %3345 = sbr.rel target = $region203
                $region208: #{gpt_forward.8} parent=193 // loop_exit
                  _
              $region194: #{gpt_forward.8} parent=178 // pred_fallthru
                _
            $region179: #{gpt_forward.8} parent=174 // pred_fallthru
              _
            // Predicated region
            $region180: #{gpt_forward.8} parent=174 // pred_check
              _
            $region181: #{gpt_forward.8} parent=174 // pred_check_branch
              %3292 = sbr.rel (0) target = $region183
            $region182: #{gpt_forward.8} parent=174 // pred_region
              loop: start=0, step=1, limit=1
              $region184: #{gpt_forward.8} parent=182 // loop_pre_header
                _
              $region185: #{gpt_forward.8} parent=182 // loop_header
                %s3295 = sphi 0, %s3299
                %p3296 = scmp.ge.s32.totalorder %s3295, 1
                %s3300 = sphi %s3278, %s3278
                %s3301 = sphi %s3286, %s3286
              $region186: #{gpt_forward.8} parent=182 // loop_header_branch
                %3298 = sbr.rel (%p3296) target = $region190
              $region187: #{gpt_forward.8} parent=182 // loop_body
                %v3302 = vld [vmem:[%s3300] sm:$0xf]
                %3303 = vst [vmem:[%s3301] sm:$0xf] %v3302
                %v3304 = vld [vmem:[%s3300 + $0x4] sm:$0xf]
                %3305 = vst [vmem:[%s3301 + $0x4] sm:$0xf] %v3304
                %v3306 = vld [vmem:[%s3300 + $0x8] sm:$0xf]
                %3307 = vst [vmem:[%s3301 + $0x8] sm:$0xf] %v3306
                %v3308 = vld [vmem:[%s3300 + $0xc] sm:$0xf]
                %3309 = vst [vmem:[%s3301 + $0xc] sm:$0xf] %v3308
                %v3310 = vld [vmem:[%s3300 + $0x10] sm:$0xf]
                %3311 = vst [vmem:[%s3301 + $0x20] sm:$0xf] %v3310
                %v3312 = vld [vmem:[%s3300 + $0x14] sm:$0xf]
                %3313 = vst [vmem:[%s3301 + $0x24] sm:$0xf] %v3312
                %v3314 = vld [vmem:[%s3300 + $0x18] sm:$0xf]
                %3315 = vst [vmem:[%s3301 + $0x28] sm:$0xf] %v3314
                %v3316 = vld [vmem:[%s3300 + $0x1c] sm:$0xf]
                %3317 = vst [vmem:[%s3301 + $0x2c] sm:$0xf] %v3316
                %v3318 = vld [vmem:[%s3300 + $0x20] sm:$0xf]
                %3319 = vst [vmem:[%s3301 + $0x40] sm:$0xf] %v3318
                %v3320 = vld [vmem:[%s3300 + $0x24] sm:$0xf]
                %3321 = vst [vmem:[%s3301 + $0x44] sm:$0xf] %v3320
                %v3322 = vld [vmem:[%s3300 + $0x28] sm:$0xf]
                %3323 = vst [vmem:[%s3301 + $0x48] sm:$0xf] %v3322
                %v3324 = vld [vmem:[%s3300 + $0x2c] sm:$0xf]
                %3325 = vst [vmem:[%s3301 + $0x4c] sm:$0xf] %v3324
                %v3326 = vld [vmem:[%s3300 + $0x30] sm:$0xf]
                %3327 = vst [vmem:[%s3301 + $0x60] sm:$0xf] %v3326
                %v3328 = vld [vmem:[%s3300 + $0x34] sm:$0xf]
                %3329 = vst [vmem:[%s3301 + $0x64] sm:$0xf] %v3328
                %v3330 = vld [vmem:[%s3300 + $0x38] sm:$0xf]
                %3331 = vst [vmem:[%s3301 + $0x68] sm:$0xf] %v3330
                %v3332 = vld [vmem:[%s3300 + $0x3c] sm:$0xf]
                %3333 = vst [vmem:[%s3301 + $0x6c] sm:$0xf] %v3332
              $region188: #{gpt_forward.8} parent=182 // loop_footer
                %s3299 = sadd.s32 1, %s3295
              $region189: #{gpt_forward.8} parent=182 // loop_footer_branch
                %3294 = sbr.rel target = $region185
              $region190: #{gpt_forward.8} parent=182 // loop_exit
                _
            $region183: #{gpt_forward.8} parent=174 // pred_fallthru
              _
          $region175: #{gpt_forward.8} parent=170 // pred_fallthru
            _
          %3385 = vnop
        $region171: #{gpt_forward.8} parent=142 // pred_fallthru
          _
      $region143: #{gpt_forward.8} parent=5 // pred_fallthru
        _
      %p3386 = scmp.le.s32.totalorder 2, %s9
      // Predicated region
      $region209: #{gpt_forward.8} parent=5 // pred_check
        %p3387 = pneg %p3386
      $region210: #{gpt_forward.8} parent=5 // pred_check_branch
        %3389 = sbr.rel (%p3387) target = $region212
      $region211: #{gpt_forward.8} parent=5 // pred_region
        %s3390 = ssub.s32 %s9, 2
        // Predicated region
        $region213: #{gpt_forward.8} parent=211 // pred_check
          %p3391 = pneg %p151
        $region214: #{gpt_forward.8} parent=211 // pred_check_branch
          %3393 = sbr.rel (%p3391) target = $region216
        $region215: #{gpt_forward.8} parent=211 // pred_region
          %s3394 = sand.u32 %s136, 1
          %s3395 = sand.u32 %s136, 1
          %s3396 = smul.addr %s3395, 64
          %s3397 = scalar_lea.vmem [#allocation8], %s3396
        $region216: #{gpt_forward.8} parent=211 // pred_fallthru
          _
      $region212: #{gpt_forward.8} parent=5 // pred_fallthru
        _
    $region6: #{gpt_forward.8} parent=1 // loop_footer
      %s13 = sadd.s32 1, %s9
    $region7: #{gpt_forward.8} parent=1 // loop_footer_branch
      %8 = sbr.rel target = $region3
    $region8: #{gpt_forward.8} parent=1 // loop_exit
      _

</llo_original>
